<compile_context>
chip_gen: v7x
topology: tpu7x:2x2x1
jax: 0.10.0
libtpu: 0.0.40
codegen_flags: <defaults>
</compile_context>

<pallas_src>
import functools

import jax
import jax.numpy as jnp
from jax.experimental import pallas as pl
from jax.experimental.pallas import tpu as pltpu

NEG_SLOPE = 0.01  # nn.LeakyReLU default negative_slope


def _round_up(x, m):
    return (x + m - 1) // m * m


def _apply_act(y, act):
    if act == "lrelu":
        return jnp.where(y >= 0, y, NEG_SLOPE * y)
    if act == "relu":
        return jnp.maximum(y, 0.0)
    return y


# ----------------------------------------------------------------------------
# 1x1 conv == batched matmul kernel (bf16 operands, f32 accumulation,
# fused bias / activation / optional residual, optional split-K second input),
# tiled over (B, N).
# ----------------------------------------------------------------------------
def _mm_kernel(*refs, act, two_inputs, has_res):
    refs = list(refs)
    x1_ref = refs.pop(0)
    x2_ref = refs.pop(0) if two_inputs else None
    res_ref = refs.pop(0) if has_res else None
    w1_ref = refs.pop(0)
    w2_ref = refs.pop(0) if two_inputs else None
    b_ref = refs.pop(0)
    o_ref = refs.pop(0)

    y = jnp.dot(x1_ref[0], w1_ref[...], preferred_element_type=jnp.float32)
    if two_inputs:
        y = y + jnp.dot(x2_ref[0], w2_ref[...], preferred_element_type=jnp.float32)
    y = y + b_ref[...]
    y = _apply_act(y, act)
    if has_res:
        y = y + res_ref[0].astype(jnp.float32)
    o_ref[0] = y.astype(o_ref.dtype)


def matmul_bias_act(x1, w, b, *, x2=None, act=None, residual=None,
                    out_dtype=jnp.bfloat16, tile_target=2048):
    """y = act(x1 @ w[:K1] (+ x2 @ w[K1:]) + b) (+ residual).

    x1: [B, N, K1], x2: [B, N, K2] (optional split-K input), w: [K1(+K2), M].
    """
    B, N, K1 = x1.shape
    M = w.shape[-1]

    def prep(x, wpart):
        K = x.shape[-1]
        xb = x.astype(jnp.bfloat16)
        wb = wpart.astype(jnp.bfloat16)
        if K < 8:  # pad tiny contraction dims (e.g. RGB input)
            xb = jnp.pad(xb, ((0, 0), (0, 0), (0, 8 - K)))
            wb = jnp.pad(wb, ((0, 8 - K), (0, 0)))
        return xb, wb

    if x2 is not None:
        K2 = x2.shape[-1]
        assert w.shape[0] == K1 + K2
        x1b, w1b = prep(x1, w[:K1])
        x2b, w2b = prep(x2, w[K1:])
    else:
        x1b, w1b = prep(x1, w)
        x2b, w2b = None, None

    # Robust N tiling: hard row cap + padded grid (no silent whole-axis blocks).
    tn = min(tile_target, _round_up(N, 16))
    Np = _round_up(N, tn)

    def pad_n(a):
        return a if a.shape[1] == Np else jnp.pad(
            a, ((0, 0), (0, Np - a.shape[1]), (0, 0)))

    b2 = b.reshape(1, M).astype(jnp.float32)

    args, in_specs = [], []
    args.append(pad_n(x1b))
    in_specs.append(pl.BlockSpec((1, tn, x1b.shape[-1]), lambda i, j: (i, j, 0)))
    if x2b is not None:
        args.append(pad_n(x2b))
        in_specs.append(pl.BlockSpec((1, tn, x2b.shape[-1]), lambda i, j: (i, j, 0)))
    if residual is not None:
        args.append(pad_n(residual.astype(jnp.bfloat16)))
        in_specs.append(pl.BlockSpec((1, tn, M), lambda i, j: (i, j, 0)))
    args.append(w1b)
    in_specs.append(pl.BlockSpec(w1b.shape, lambda i, j: (0, 0)))
    if w2b is not None:
        args.append(w2b)
        in_specs.append(pl.BlockSpec(w2b.shape, lambda i, j: (0, 0)))
    args.append(b2)
    in_specs.append(pl.BlockSpec((1, M), lambda i, j: (0, 0)))

    out = pl.pallas_call(
        functools.partial(_mm_kernel, act=act, two_inputs=x2 is not None,
                          has_res=residual is not None),
        out_shape=jax.ShapeDtypeStruct((B, Np, M), out_dtype),
        grid=(B, Np // tn),
        in_specs=in_specs,
        out_specs=pl.BlockSpec((1, tn, M), lambda i, j: (i, j, 0)),
        compiler_params=pltpu.CompilerParams(
            dimension_semantics=("parallel", "parallel")),
    )(*args)
    return out if Np == N else out[:, :N]


# ----------------------------------------------------------------------------
# 3x3 convs: width-3 mini-im2col slab + aligned dy shifts + 3 matmuls per block.
# Padded row stride Wp = round_up(W, 16) so the in-kernel slice offsets dy*Wp are
# bf16-sublane-tile aligned (and junk columns are zero when W % 16 == 0).
# Row-block grid axis with duplicated halo rows keeps per-block VMEM bounded.
# ----------------------------------------------------------------------------
def _pick_row_block(H, Wp, K3, budget_bytes=2 << 20):
    """Largest divisor of H whose (R+2)*Wp*K3 bf16 input slab fits the budget."""
    for R in range(H, 0, -1):
        if H % R == 0 and (R + 2) * Wp * K3 * 2 <= budget_bytes:
            return R
    return 1


def _build_conv_slab(x, H, W, R, Wp):
    """[B, H*W, C] -> width-3 im2col row-block slab [B, nblk, (R+2)*Wp, 3C] bf16."""
    B, _, C = x.shape
    xi = x.reshape(B, H, W, C).astype(jnp.bfloat16)
    # 1 pad row top/bottom, 1 pad col left, (Wp + 1 - W) pad cols right.
    P = jnp.pad(xi, ((0, 0), (1, 1), (1, Wp + 1 - W), (0, 0)))     # [B,H+2,Wp+2,C]
    Q = jnp.concatenate([P[:, :, 0:Wp], P[:, :, 1:Wp + 1], P[:, :, 2:Wp + 2]],
                        axis=-1)                                    # [B,H+2,Wp,3C]
    nblk = H // R
    Qb = jnp.stack([Q[:, j * R:j * R + R + 2] for j in range(nblk)], axis=1)
    return Qb.reshape(B, nblk, (R + 2) * Wp, 3 * C), nblk


def _unslab(out, B, H, W, R, Wp, nblk, C):
    """[B, nblk, R*Wp, C] -> [B, H*W, C] (drop the junk pad columns)."""
    out = out.reshape(B, nblk, R, Wp, C).reshape(B, H, Wp, C)
    return out[:, :, :W, :].reshape(B, H * W, C)


def _conv3x3_kernel(x_ref, w_ref, b_ref, o_ref, *, R, Wp, act):
    n = R * Wp
    Cout = w_ref.shape[-1]
    acc = jnp.zeros((n, Cout), jnp.float32)
    for dy in range(3):  # aligned sublane offsets (Wp % 16 == 0)
        acc = acc + jnp.dot(x_ref[0, 0, dy * Wp:dy * Wp + n, :], w_ref[dy],
                            preferred_element_type=jnp.float32)
    y = _apply_act(acc + b_ref[...], act)
    o_ref[0, 0] = y.astype(o_ref.dtype)


def _dual_conv3x3_kernel(x_ref, w_ref, b_ref, fold_ref, o_ref, *, R, Wp):
    """lrelu(conv3x3(glob,wg)+bg) + lrelu(conv3x3(loc,wl)+bl), block-diag fused."""
    n = R * Wp
    C2 = w_ref.shape[-1]
    acc = jnp.zeros((n, C2), jnp.float32)
    for dy in range(3):
        acc = acc + jnp.dot(x_ref[0, 0, dy * Wp:dy * Wp + n, :], w_ref[dy],
                            preferred_element_type=jnp.float32)
    y = acc + b_ref[...]
    y = jnp.where(y >= 0, y, NEG_SLOPE * y)
    # halves-sum via a [[I];[I]] fold matmul (MXU) instead of lane slicing.
    o_ref[0, 0] = jnp.dot(y.astype(jnp.bfloat16), fold_ref[...],
                          preferred_element_type=jnp.float32).astype(o_ref.dtype)


def _conv3x3_relu_proj_kernel(x_ref, w_ref, b_ref, w2_ref, o_ref, *, R, Wp):
    """Final block: conv3x3 (BN folded) -> ReLU -> 1x1 projection to 1 channel."""
    n = R * Wp
    Cmid = w_ref.shape[-1]
    acc = jnp.zeros((n, Cmid), jnp.float32)
    for dy in range(3):
        acc = acc + jnp.dot(x_ref[0, 0, dy * Wp:dy * Wp + n, :], w_ref[dy],
                            preferred_element_type=jnp.float32)
    y = jnp.maximum(acc + b_ref[...], 0.0)
    # TODO(synk): output last dim is 1 -> masked stores; a lane-dense (R, Wp)
    # store would need an in-kernel relayout Mosaic may not lower; kept as-is.
    o_ref[0, 0] = jnp.dot(y.astype(jnp.bfloat16), w2_ref[...],
                          preferred_element_type=jnp.float32).astype(o_ref.dtype)


def conv3x3(x, w, b, H, W, act=None):
    """3x3 conv (padding=1). x: [B, H*W, Cin], w: [9*Cin, Cout] ((ky,kx,cin) rows)."""
    B, _, Cin = x.shape
    Cout = w.shape[-1]
    Wp = _round_up(W, 16)
    K3 = 3 * Cin
    R = _pick_row_block(H, Wp, K3)
    slab, nblk = _build_conv_slab(x, H, W, R, Wp)
    n = R * Wp
    wd = w.reshape(3, K3, Cout).astype(jnp.bfloat16)
    out = pl.pallas_call(
        functools.partial(_conv3x3_kernel, R=R, Wp=Wp, act=act),
        out_shape=jax.ShapeDtypeStruct((B, nblk, n, Cout), jnp.bfloat16),
        grid=(B, nblk),
        in_specs=[
            pl.BlockSpec((1, 1, (R + 2) * Wp, K3), lambda i, j: (i, j, 0, 0)),
            pl.BlockSpec((3, K3, Cout), lambda i, j: (0, 0, 0)),
            pl.BlockSpec((1, Cout), lambda i, j: (0, 0)),
        ],
        out_specs=pl.BlockSpec((1, 1, n, Cout), lambda i, j: (i, j, 0, 0)),
        compiler_params=pltpu.CompilerParams(
            dimension_semantics=("parallel", "parallel")),
    )(slab, wd, b.reshape(1, Cout).astype(jnp.float32))
    return _unslab(out, B, H, W, R, Wp, nblk, Cout)


def dual_conv3x3(local, glob, p_g2l, p_l2l, H, W):
    """Fused FCB local path: one conv on [glob|local] with block-diag weights."""
    B, _, hc = local.shape
    C2 = 2 * hc
    x = jnp.concatenate([glob, local], axis=-1)                     # [B, HW, 2hc]
    wg = p_g2l["w"].reshape(3, 3, hc, hc)
    wl = p_l2l["w"].reshape(3, 3, hc, hc)
    zero = jnp.zeros_like(wg)
    wd = jnp.concatenate([
        jnp.concatenate([wg, zero], axis=-1),    # glob cin rows -> g2l out cols
        jnp.concatenate([zero, wl], axis=-1),    # local cin rows -> l2l out cols
    ], axis=2).reshape(3, 3 * C2, C2).astype(jnp.bfloat16)
    bcat = jnp.concatenate([p_g2l["b"], p_l2l["b"]]).reshape(1, C2).astype(jnp.float32)
    fold = jnp.concatenate([jnp.eye(hc), jnp.eye(hc)], axis=0).astype(jnp.bfloat16)

    Wp = _round_up(W, 16)
    K3 = 3 * C2
    R = _pick_row_block(H, Wp, K3)
    slab, nblk = _build_conv_slab(x, H, W, R, Wp)
    n = R * Wp
    out = pl.pallas_call(
        functools.partial(_dual_conv3x3_kernel, R=R, Wp=Wp),
        out_shape=jax.ShapeDtypeStruct((B, nblk, n, hc), jnp.bfloat16),
        grid=(B, nblk),
        in_specs=[
            pl.BlockSpec((1, 1, (R + 2) * Wp, K3), lambda i, j: (i, j, 0, 0)),
            pl.BlockSpec((3, K3, C2), lambda i, j: (0, 0, 0)),
            pl.BlockSpec((1, C2), lambda i, j: (0, 0)),
            pl.BlockSpec((C2, hc), lambda i, j: (0, 0)),
        ],
        out_specs=pl.BlockSpec((1, 1, n, hc), lambda i, j: (i, j, 0, 0)),
        compiler_params=pltpu.CompilerParams(
            dimension_semantics=("parallel", "parallel")),
    )(slab, wd, bcat, fold)
    return _unslab(out, B, H, W, R, Wp, nblk, hc)


def conv3x3_relu_proj(x, w1, b1, w2, H, W):
    """conv3x3 (BN folded, no bias in torch) -> ReLU -> 1x1 proj to 1 channel."""
    B, _, Cin = x.shape
    Cmid = w1.shape[-1]
    Wp = _round_up(W, 16)
    K3 = 3 * Cin
    R = _pick_row_block(H, Wp, K3)
    slab, nblk = _build_conv_slab(x, H, W, R, Wp)
    n = R * Wp
    wd = w1.reshape(3, K3, Cmid).astype(jnp.bfloat16)
    out = pl.pallas_call(
        functools.partial(_conv3x3_relu_proj_kernel, R=R, Wp=Wp),
        out_shape=jax.ShapeDtypeStruct((B, nblk, n, 1), jnp.float32),
        grid=(B, nblk),
        in_specs=[
            pl.BlockSpec((1, 1, (R + 2) * Wp, K3), lambda i, j: (i, j, 0, 0)),
            pl.BlockSpec((3, K3, Cmid), lambda i, j: (0, 0, 0)),
            pl.BlockSpec((1, Cmid), lambda i, j: (0, 0)),
            pl.BlockSpec((Cmid, 1), lambda i, j: (0, 0)),
        ],
        out_specs=pl.BlockSpec((1, 1, n, 1), lambda i, j: (i, j, 0, 0)),
        compiler_params=pltpu.CompilerParams(
            dimension_semantics=("parallel", "parallel")),
    )(slab, wd, b1.reshape(1, Cmid).astype(jnp.float32), w2.astype(jnp.bfloat16))
    return _unslab(out, B, H, W, R, Wp, nblk, 1)


# ----------------------------------------------------------------------------
# Fused local->global path: 1x1 conv -> non-local attention pooling ->
# 2x (1x1 conv + LeakyReLU) -> broadcast residual -> + g2g (spectral branch).
# ----------------------------------------------------------------------------
def _l2g_nla_kernel(loc_ref, g2g_ref, wl_ref, bl_ref, wa_ref, ba_ref,
                    w1_ref, b1_ref, w2_ref, b2_ref, o_ref):
    loc = loc_ref[0]                                               # [HW, hc] bf16
    y = jnp.dot(loc, wl_ref[...], preferred_element_type=jnp.float32) + bl_ref[...]
    # attention logits on the VPU (an M=1 MXU matmul wastes a full systolic pass)
    logits = jnp.sum(y * wa_ref[...], axis=-1, keepdims=True) + ba_ref[...]
    m = jnp.max(logits, axis=0, keepdims=True)
    e = jnp.exp(logits - m)
    probs = e / jnp.sum(e, axis=0, keepdims=True)                  # softmax over HW
    pooled = jnp.sum(y * probs, axis=0, keepdims=True)             # [1, hc]
    t = jnp.dot(pooled.astype(jnp.bfloat16), w1_ref[...],
                preferred_element_type=jnp.float32) + b1_ref[...]
    t = jnp.where(t >= 0, t, NEG_SLOPE * t)
    t = jnp.dot(t.astype(jnp.bfloat16), w2_ref[...],
                preferred_element_type=jnp.float32) + b2_ref[...]
    t = jnp.where(t >= 0, t, NEG_SLOPE * t)
    out = y + t + g2g_ref[0].astype(jnp.float32)                   # broadcast add
    o_ref[0] = out.astype(o_ref.dtype)


def l2g_nla_add(local, g2g, p_l2g, p_nla):
    B, HW, hc = local.shape
    bf16, f32 = jnp.bfloat16, jnp.float32
    # TODO(synk): tile over HW (online softmax) when H*W grows enough to pressure
    # v7x VMEM; one full-HW block per batch is fine at these sizes.
    return pl.pallas_call(
        _l2g_nla_kernel,
        out_shape=jax.ShapeDtypeStruct((B, HW, hc), bf16),
        grid=(B,),
        in_specs=[
            pl.BlockSpec((1, HW, hc), lambda i: (i, 0, 0)),
            pl.BlockSpec((1, HW, hc), lambda i: (i, 0, 0)),
            pl.BlockSpec((hc, hc), lambda i: (0, 0)),
            pl.BlockSpec((1, hc), lambda i: (0, 0)),
            pl.BlockSpec((1, hc), lambda i: (0, 0)),
            pl.BlockSpec((1, 1), lambda i: (0, 0)),
            pl.BlockSpec((hc, hc), lambda i: (0, 0)),
            pl.BlockSpec((1, hc), lambda i: (0, 0)),
            pl.BlockSpec((hc, hc), lambda i: (0, 0)),
            pl.BlockSpec((1, hc), lambda i: (0, 0)),
        ],
        out_specs=pl.BlockSpec((1, HW, hc), lambda i: (i, 0, 0)),
        compiler_params=pltpu.CompilerParams(dimension_semantics=("parallel",)),
    )(local.astype(bf16), g2g.astype(bf16),
      p_l2g["w"].astype(bf16), p_l2g["b"].reshape(1, hc).astype(f32),
      p_nla["att"]["w"].reshape(1, hc).astype(f32),
      p_nla["att"]["b"].reshape(1, 1).astype(f32),
      p_nla["gt1"]["w"].astype(bf16), p_nla["gt1"]["b"].reshape(1, hc).astype(f32),
      p_nla["gt2"]["w"].astype(bf16), p_nla["gt2"]["b"].reshape(1, hc).astype(f32))


# ----------------------------------------------------------------------------
# Module forward passes
# ----------------------------------------------------------------------------
def spectral_transformer(x, p, H, W):
    """rfft2 -> 3x3 conv + lrelu on (re,im) -> irfft2."""
    B, _, hc = x.shape
    xs = x.reshape(B, H, W, hc).astype(jnp.float32)
    # TODO(synk): rfft2/irfft2 have no Pallas equivalent; they run as XLA FFT ops.
    xf = jnp.fft.rfft2(xs, axes=(1, 2))                            # [B, H, Wr, hc]
    Wr = xf.shape[2]
    y = jnp.concatenate([xf.real.astype(jnp.bfloat16),
                         xf.imag.astype(jnp.bfloat16)], axis=-1)
    y = y.reshape(B, H * Wr, 2 * hc)
    y = conv3x3(y, p["w"], p["b"], H, Wr, act="lrelu")             # Pallas conv
    y = y.reshape(B, H, Wr, 2 * hc).astype(jnp.float32)
    yc = jax.lax.complex(y[..., :hc], y[..., hc:])
    out = jnp.fft.irfft2(yc, s=(H, W), axes=(1, 2))
    return out.reshape(B, H * W, hc)


def fcb_forward(x, p, H, W):
    """FourierConvolutionBlock; returns (out_global, out_local) — no concat."""
    C = x.shape[-1]
    hc = C // 2
    local = x[..., :hc]
    glob = x[..., hc:]
    g2g = spectral_transformer(glob, p["g2g"], H, W)
    out_global = l2g_nla_add(local, g2g, p["l2g_conv"], p["nla"])
    out_local = dual_conv3x3(local, glob, p["g2l"], p["l2l"], H, W)
    return out_global, out_local


def sffi_forward(params, x, H, W):
    p = params
    x = x.astype(jnp.bfloat16)

    def conv1x1(feat, pc, residual=None):
        if isinstance(feat, tuple):  # (out_global, out_local) -> split-K matmul
            g, l = feat
            return matmul_bias_act(g, pc["w"], pc["b"], x2=l, residual=residual)
        return matmul_bias_act(feat, pc["w"], pc["b"], residual=residual)

    # first block
    y = conv1x1(x, p["fb_c0"])
    y = conv1x1(fcb_forward(y, p["fb_f0"], H, W), p["fb_c1"])
    first = conv1x1(fcb_forward(y, p["fb_f1"], H, W), p["fb_c2"])
    # second block (residual fused into last 1x1 conv)
    y = conv1x1(fcb_forward(first, p["sb_f0"], H, W), p["sb_c0"])
    second = conv1x1(fcb_forward(y, p["sb_f1"], H, W), p["sb_c1"], residual=first)
    # third block (residual fused into last 1x1 conv)
    y = second
    for i in range(4):
        res = second if i == 3 else None
        y = conv1x1(fcb_forward(y, p[f"tb_f{i}"], H, W), p[f"tb_c{i}"], residual=res)
    third = y
    # fourth block: FCB -> fused [3x3 conv (BN folded) -> ReLU -> 1x1 proj]
    g, l = fcb_forward(third, p["qb_f0"], H, W)
    y_cat = jnp.concatenate([g, l], axis=-1)
    return conv3x3_relu_proj(y_cat, p["qb_c0"]["w"], p["qb_c0"]["b"],
                             p["qb_c1"]["w"], H, W)                 # [B, H*W, 1]


# ----------------------------------------------------------------------------
# Deterministic parameter init (shapes follow the PyTorch module).
# Conv weights stored as (ky, kx, cin, cout) flattened to (k*k*cin, cout);
# porting trained PyTorch weights [cout, cin, kh, kw] requires permute(2,3,1,0).
# ----------------------------------------------------------------------------
def conv_params(key, cin, cout, ksize=1, bias=True, scale=0.05):
    kw, kb = jax.random.split(key)
    w = jax.random.normal(kw, (ksize, ksize, cin, cout), jnp.float32) * scale
    w = w.reshape(ksize * ksize * cin, cout)
    b = (jax.random.normal(kb, (cout,), jnp.float32) * scale
         if bias else jnp.zeros((cout,), jnp.float32))
    return {"w": w, "b": b}


def fcb_params(key, c):
    hc = c // 2
    k = jax.random.split(key, 7)
    return {
        "g2g": conv_params(k[0], 2 * hc, 2 * hc, ksize=3),
        "g2l": conv_params(k[1], hc, hc, ksize=3),
        "l2g_conv": conv_params(k[2], hc, hc, ksize=1),
        "l2l": conv_params(k[3], hc, hc, ksize=3),
        "nla": {
            "att": conv_params(k[4], hc, 1, ksize=1),
            "gt1": conv_params(k[5], hc, hc, ksize=1),
            "gt2": conv_params(k[6], hc, hc, ksize=1),
        },
    }


def sffi_params(key, input_dim, hidden_dim):
    keys = iter(jax.random.split(key, 32))
    p = {}
    p["fb_c0"] = conv_params(next(keys), input_dim, hidden_dim)
    p["fb_f0"] = fcb_params(next(keys), hidden_dim)
    p["fb_c1"] = conv_params(next(keys), hidden_dim, hidden_dim)
    p["fb_f1"] = fcb_params(next(keys), hidden_dim)
    p["fb_c2"] = conv_params(next(keys), hidden_dim, hidden_dim)
    p["sb_f0"] = fcb_params(next(keys), hidden_dim)
    p["sb_c0"] = conv_params(next(keys), hidden_dim, hidden_dim)
    p["sb_f1"] = fcb_params(next(keys), hidden_dim)
    p["sb_c1"] = conv_params(next(keys), hidden_dim, hidden_dim)
    for i in range(4):
        p[f"tb_f{i}"] = fcb_params(next(keys), hidden_dim)
        p[f"tb_c{i}"] = conv_params(next(keys), hidden_dim, hidden_dim)
    p["qb_f0"] = fcb_params(next(keys), hidden_dim)
    c4 = hidden_dim // 4
    qc0 = conv_params(next(keys), hidden_dim, c4, ksize=3, bias=False)
    # TODO(synk): BatchNorm2d reproduced in eval mode (mean=0, var=1, gamma=1,
    # beta=0) and folded into the preceding bias-free conv.
    eps = 1e-5
    gamma = jnp.ones((c4,), jnp.float32)
    beta = jnp.zeros((c4,), jnp.float32)
    r_mean = jnp.zeros((c4,), jnp.float32)
    r_var = jnp.ones((c4,), jnp.float32)
    scale = gamma / jnp.sqrt(r_var + eps)
    p["qb_c0"] = {"w": qc0["w"] * scale[None, :], "b": beta - r_mean * scale}
    p["qb_c1"] = conv_params(next(keys), c4, 1, ksize=1, bias=False)
    return p


# ----------------------------------------------------------------------------
if __name__ == "__main__":
    B, Cin, H, W = 2, 3, 16, 16
    hidden = 32

    key = jax.random.PRNGKey(0)
    kx, kp = jax.random.split(key)
    x_nchw = jax.random.normal(kx, (B, Cin, H, W), jnp.float32)
    # NCHW -> [B, H*W, C]
    x = jnp.transpose(x_nchw, (0, 2, 3, 1)).reshape(B, H * W, Cin)

    params = sffi_params(kp, Cin, hidden)

    fwd = jax.jit(sffi_forward, static_argnums=(2, 3))
    out = jax.block_until_ready(fwd(params, x, H, W))

    # back to NCHW: [B, 1, H, W]
    out_nchw = jnp.transpose(out.reshape(B, H, W, 1), (0, 3, 1, 2))
    assert out_nchw.shape == (B, 1, H, W)
    assert bool(jnp.all(jnp.isfinite(out_nchw)))
    print("KERNEL_OK")
</pallas_src>

<mosaic_0001>
module attributes {stable_mosaic.version = 11 : i64} {
  func.func @_mm_kernel(%arg0: i32, %arg1: i32, %arg2: memref<1x256x8xbf16, #tpu.memory_space<vmem>>, %arg3: memref<8x32xbf16, #tpu.memory_space<vmem>>, %arg4: memref<1x32xf32, #tpu.memory_space<vmem>>, %arg5: memref<1x256x32xbf16, #tpu.memory_space<vmem>>) attributes {dimension_semantics = [#tpu.dimension_semantics<parallel>, #tpu.dimension_semantics<parallel>], iteration_bounds = array<i64: 2, 1>, scalar_prefetch = 0 : i64, scratch_operands = 0 : i64, tpu.core_type = #tpu.core_type<tc>, window_params = [{transform_indices = @transform_0, window_bounds = array<i64: 1, 256, 8>}, {pipeline_mode = #tpu.pipeline_mode<synchronous>, transform_indices = @transform_1, window_bounds = array<i64: 8, 32>}, {pipeline_mode = #tpu.pipeline_mode<synchronous>, transform_indices = @transform_2, window_bounds = array<i64: 1, 32>}, {transform_indices = @transform_3, window_bounds = array<i64: 1, 256, 32>}]} {
    %c0 = arith.constant 0 : index
    %c0_0 = arith.constant 0 : index
    %c0_1 = arith.constant 0 : index
    %0 = vector.load %arg2[%c0, %c0_0, %c0_1] : memref<1x256x8xbf16, #tpu.memory_space<vmem>>, vector<1x256x8xbf16>
    %1 = vector.shape_cast %0 : vector<1x256x8xbf16> to vector<256x8xbf16>
    %c0_2 = arith.constant 0 : index
    %c0_3 = arith.constant 0 : index
    %2 = vector.load %arg3[%c0_2, %c0_3] : memref<8x32xbf16, #tpu.memory_space<vmem>>, vector<8x32xbf16>
    %cst = arith.constant dense<0.000000e+00> : vector<256x32xf32>
    %3 = tpu.matmul %1, %2, %cst {dimension_numbers = #tpu.dot_dimension_numbers<[1], [0], [0], [1], [0, 0, 1, 1], [], []>} : vector<256x8xbf16>, vector<8x32xbf16>, vector<256x32xf32> -> vector<256x32xf32>
    %c0_4 = arith.constant 0 : index
    %c0_5 = arith.constant 0 : index
    %4 = vector.load %arg4[%c0_4, %c0_5] : memref<1x32xf32, #tpu.memory_space<vmem>>, vector<1x32xf32>
    %5 = vector.broadcast %4 : vector<1x32xf32> to vector<256x32xf32>
    %6 = arith.addf %3, %5 : vector<256x32xf32>
    %7 = arith.truncf %6 : vector<256x32xf32> to vector<256x32xbf16>
    %c0_6 = arith.constant 0 : index
    %c0_7 = arith.constant 0 : index
    %c0_8 = arith.constant 0 : index
    %8 = vector.load %arg5[%c0_6, %c0_7, %c0_8] : memref<1x256x32xbf16, #tpu.memory_space<vmem>>, vector<1x256x32xbf16>
    %9 = vector.shape_cast %8 : vector<1x256x32xbf16> to vector<256x32xbf16>
    %10 = vector.shape_cast %7 : vector<256x32xbf16> to vector<1x256x32xbf16>
    tpu.vector_store %arg5[%c0_6, %c0_7, %c0_8], %10 {strides = array<i32>} : memref<1x256x32xbf16, #tpu.memory_space<vmem>>, vector<1x256x32xbf16>,
    return
  }
  func.func @transform_0(%arg0: i32, %arg1: i32) -> (i32, i32, i32) {
    %c0_i32 = arith.constant 0 : i32
    %c0_i32_0 = arith.constant 0 : i32
    return %arg0, %arg1, %c0_i32 : i32, i32, i32
  }
  func.func @transform_1(%arg0: i32, %arg1: i32) -> (i32, i32) {
    %c0_i32 = arith.constant 0 : i32
    %c0_i32_0 = arith.constant 0 : i32
    %c0_i32_1 = arith.constant 0 : i32
    return %c0_i32, %c0_i32_0 : i32, i32
  }
  func.func @transform_2(%arg0: i32, %arg1: i32) -> (i32, i32) {
    %c0_i32 = arith.constant 0 : i32
    %c0_i32_0 = arith.constant 0 : i32
    %c0_i32_1 = arith.constant 0 : i32
    return %c0_i32, %c0_i32_0 : i32, i32
  }
  func.func @transform_3(%arg0: i32, %arg1: i32) -> (i32, i32, i32) {
    %c0_i32 = arith.constant 0 : i32
    %c0_i32_0 = arith.constant 0 : i32
    return %arg0, %arg1, %c0_i32 : i32, i32, i32
  }
}

module attributes {stable_mosaic.version = 11 : i64} {
  func.func @_conv3x3_kernel(%arg0: i32, %arg1: i32, %arg2: memref<1x1x288x96xbf16, #tpu.memory_space<vmem>>, %arg3: memref<3x96x32xbf16, #tpu.memory_space<vmem>>, %arg4: memref<1x32xf32, #tpu.memory_space<vmem>>, %arg5: memref<1x1x256x32xbf16, #tpu.memory_space<vmem>>) attributes {dimension_semantics = [#tpu.dimension_semantics<parallel>, #tpu.dimension_semantics<parallel>], iteration_bounds = array<i64: 2, 1>, scalar_prefetch = 0 : i64, scratch_operands = 0 : i64, tpu.core_type = #tpu.core_type<tc>, window_params = [{transform_indices = @transform_0, window_bounds = array<i64: 1, 1, 288, 96>}, {pipeline_mode = #tpu.pipeline_mode<synchronous>, transform_indices = @transform_1, window_bounds = array<i64: 3, 96, 32>}, {pipeline_mode = #tpu.pipeline_mode<synchronous>, transform_indices = @transform_2, window_bounds = array<i64: 1, 32>}, {transform_indices = @transform_3, window_bounds = array<i64: 1, 1, 256, 32>}]} {
    %cst = arith.constant 0.000000e+00 : f32
    %0 = vector.broadcast %cst : f32 to vector<256x32xf32>
    %c0 = arith.constant 0 : index
    %c0_0 = arith.constant 0 : index
    %c0_1 = arith.constant 0 : index
    %c0_2 = arith.constant 0 : index
    %1 = vector.load %arg2[%c0, %c0_0, %c0_1, %c0_2] : memref<1x1x288x96xbf16, #tpu.memory_space<vmem>>, vector<1x1x256x96xbf16>
    %2 = vector.shape_cast %1 : vector<1x1x256x96xbf16> to vector<256x96xbf16>
    %c0_3 = arith.constant 0 : index
    %c0_4 = arith.constant 0 : index
    %c0_5 = arith.constant 0 : index
    %3 = vector.load %arg3[%c0_3, %c0_4, %c0_5] : memref<3x96x32xbf16, #tpu.memory_space<vmem>>, vector<1x96x32xbf16>
    %4 = vector.shape_cast %3 : vector<1x96x32xbf16> to vector<96x32xbf16>
    %cst_6 = arith.constant dense<0.000000e+00> : vector<256x32xf32>
    %5 = tpu.matmul %2, %4, %cst_6 {dimension_numbers = #tpu.dot_dimension_numbers<[1], [0], [0], [1], [0, 0, 1, 1], [], []>} : vector<256x96xbf16>, vector<96x32xbf16>, vector<256x32xf32> -> vector<256x32xf32>
    %6 = arith.addf %0, %5 : vector<256x32xf32>
    %c0_7 = arith.constant 0 : index
    %c0_8 = arith.constant 0 : index
    %c16 = arith.constant 16 : index
    %c0_9 = arith.constant 0 : index
    %7 = vector.load %arg2[%c0_7, %c0_8, %c16, %c0_9] : memref<1x1x288x96xbf16, #tpu.memory_space<vmem>>, vector<1x1x256x96xbf16>
    %8 = vector.shape_cast %7 : vector<1x1x256x96xbf16> to vector<256x96xbf16>
    %c1 = arith.constant 1 : index
    %c0_10 = arith.constant 0 : index
    %c0_11 = arith.constant 0 : index
    %9 = vector.load %arg3[%c1, %c0_10, %c0_11] : memref<3x96x32xbf16, #tpu.memory_space<vmem>>, vector<1x96x32xbf16>
    %10 = vector.shape_cast %9 : vector<1x96x32xbf16> to vector<96x32xbf16>
    %cst_12 = arith.constant dense<0.000000e+00> : vector<256x32xf32>
    %11 = tpu.matmul %8, %10, %cst_12 {dimension_numbers = #tpu.dot_dimension_numbers<[1], [0], [0], [1], [0, 0, 1, 1], [], []>} : vector<256x96xbf16>, vector<96x32xbf16>, vector<256x32xf32> -> vector<256x32xf32>
    %12 = arith.addf %6, %11 : vector<256x32xf32>
    %c0_13 = arith.constant 0 : index
    %c0_14 = arith.constant 0 : index
    %c32 = arith.constant 32 : index
    %c0_15 = arith.constant 0 : index
    %13 = vector.load %arg2[%c0_13, %c0_14, %c32, %c0_15] : memref<1x1x288x96xbf16, #tpu.memory_space<vmem>>, vector<1x1x256x96xbf16>
    %14 = vector.shape_cast %13 : vector<1x1x256x96xbf16> to vector<256x96xbf16>
    %c2 = arith.constant 2 : index
    %c0_16 = arith.constant 0 : index
    %c0_17 = arith.constant 0 : index
    %15 = vector.load %arg3[%c2, %c0_16, %c0_17] : memref<3x96x32xbf16, #tpu.memory_space<vmem>>, vector<1x96x32xbf16>
    %16 = vector.shape_cast %15 : vector<1x96x32xbf16> to vector<96x32xbf16>
    %cst_18 = arith.constant dense<0.000000e+00> : vector<256x32xf32>
    %17 = tpu.matmul %14, %16, %cst_18 {dimension_numbers = #tpu.dot_dimension_numbers<[1], [0], [0], [1], [0, 0, 1, 1], [], []>} : vector<256x96xbf16>, vector<96x32xbf16>, vector<256x32xf32> -> vector<256x32xf32>
    %18 = arith.addf %12, %17 : vector<256x32xf32>
    %c0_19 = arith.constant 0 : index
    %c0_20 = arith.constant 0 : index
    %19 = vector.load %arg4[%c0_19, %c0_20] : memref<1x32xf32, #tpu.memory_space<vmem>>, vector<1x32xf32>
    %20 = vector.broadcast %19 : vector<1x32xf32> to vector<256x32xf32>
    %21 = arith.addf %18, %20 : vector<256x32xf32>
    %cst_21 = arith.constant 0.000000e+00 : f32
    %22 = vector.broadcast %cst_21 : f32 to vector<256x32xf32>
    %23 = arith.cmpf oge, %21, %22 : vector<256x32xf32>
    %cst_22 = arith.constant 0.00999999977 : f32
    %24 = vector.broadcast %cst_22 : f32 to vector<256x32xf32>
    %25 = arith.mulf %24, %21 : vector<256x32xf32>
    %26 = arith.select %23, %21, %25 : vector<256x32xi1>, vector<256x32xf32>
    %27 = arith.truncf %26 : vector<256x32xf32> to vector<256x32xbf16>
    %c0_23 = arith.constant 0 : index
    %c0_24 = arith.constant 0 : index
    %c0_25 = arith.constant 0 : index
    %c0_26 = arith.constant 0 : index
    %28 = vector.load %arg5[%c0_23, %c0_24, %c0_25, %c0_26] : memref<1x1x256x32xbf16, #tpu.memory_space<vmem>>, vector<1x1x256x32xbf16>
    %29 = vector.shape_cast %28 : vector<1x1x256x32xbf16> to vector<256x32xbf16>
    %30 = vector.shape_cast %27 : vector<256x32xbf16> to vector<1x1x256x32xbf16>
    tpu.vector_store %arg5[%c0_23, %c0_24, %c0_25, %c0_26], %30 {strides = array<i32>} : memref<1x1x256x32xbf16, #tpu.memory_space<vmem>>, vector<1x1x256x32xbf16>,
    return
  }
  func.func @transform_0(%arg0: i32, %arg1: i32) -> (i32, i32, i32, i32) {
    %c0_i32 = arith.constant 0 : i32
    %c0_i32_0 = arith.constant 0 : i32
    %c0_i32_1 = arith.constant 0 : i32
    return %arg0, %arg1, %c0_i32, %c0_i32_0 : i32, i32, i32, i32
  }
  func.func @transform_1(%arg0: i32, %arg1: i32) -> (i32, i32, i32) {
    %c0_i32 = arith.constant 0 : i32
    %c0_i32_0 = arith.constant 0 : i32
    %c0_i32_1 = arith.constant 0 : i32
    %c0_i32_2 = arith.constant 0 : i32
    return %c0_i32, %c0_i32_0, %c0_i32_1 : i32, i32, i32
  }
  func.func @transform_2(%arg0: i32, %arg1: i32) -> (i32, i32) {
    %c0_i32 = arith.constant 0 : i32
    %c0_i32_0 = arith.constant 0 : i32
    %c0_i32_1 = arith.constant 0 : i32
    return %c0_i32, %c0_i32_0 : i32, i32
  }
  func.func @transform_3(%arg0: i32, %arg1: i32) -> (i32, i32, i32, i32) {
    %c0_i32 = arith.constant 0 : i32
    %c0_i32_0 = arith.constant 0 : i32
    %c0_i32_1 = arith.constant 0 : i32
    return %arg0, %arg1, %c0_i32, %c0_i32_0 : i32, i32, i32, i32
  }
}

module attributes {stable_mosaic.version = 11 : i64} {
  func.func @_l2g_nla_kernel(%arg0: i32, %arg1: memref<1x256x16xbf16, #tpu.memory_space<vmem>>, %arg2: memref<1x256x16xbf16, #tpu.memory_space<vmem>>, %arg3: memref<16x16xbf16, #tpu.memory_space<vmem>>, %arg4: memref<1x16xf32, #tpu.memory_space<vmem>>, %arg5: memref<1x16xf32, #tpu.memory_space<vmem>>, %arg6: memref<1x1xf32, #tpu.memory_space<vmem>>, %arg7: memref<16x16xbf16, #tpu.memory_space<vmem>>, %arg8: memref<1x16xf32, #tpu.memory_space<vmem>>, %arg9: memref<16x16xbf16, #tpu.memory_space<vmem>>, %arg10: memref<1x16xf32, #tpu.memory_space<vmem>>, %arg11: memref<1x256x16xbf16, #tpu.memory_space<vmem>>) attributes {dimension_semantics = [#tpu.dimension_semantics<parallel>], iteration_bounds = array<i64: 2>, scalar_prefetch = 0 : i64, scratch_operands = 0 : i64, tpu.core_type = #tpu.core_type<tc>, window_params = [{transform_indices = @transform_0, window_bounds = array<i64: 1, 256, 16>}, {transform_indices = @transform_1, window_bounds = array<i64: 1, 256, 16>}, {pipeline_mode = #tpu.pipeline_mode<synchronous>, transform_indices = @transform_2, window_bounds = array<i64: 16, 16>}, {pipeline_mode = #tpu.pipeline_mode<synchronous>, transform_indices = @transform_3, window_bounds = array<i64: 1, 16>}, {pipeline_mode = #tpu.pipeline_mode<synchronous>, transform_indices = @transform_4, window_bounds = array<i64: 1, 16>}, {pipeline_mode = #tpu.pipeline_mode<synchronous>, transform_indices = @transform_5, window_bounds = array<i64: 1, 1>}, {pipeline_mode = #tpu.pipeline_mode<synchronous>, transform_indices = @transform_6, window_bounds = array<i64: 16, 16>}, {pipeline_mode = #tpu.pipeline_mode<synchronous>, transform_indices = @transform_7, window_bounds = array<i64: 1, 16>}, {pipeline_mode = #tpu.pipeline_mode<synchronous>, transform_indices = @transform_8, window_bounds = array<i64: 16, 16>}, {pipeline_mode = #tpu.pipeline_mode<synchronous>, transform_indices = @transform_9, window_bounds = array<i64: 1, 16>}, {transform_indices = @transform_10, window_bounds = array<i64: 1, 256, 16>}]} {
    %c0 = arith.constant 0 : index
    %c0_0 = arith.constant 0 : index
    %c0_1 = arith.constant 0 : index
    %0 = vector.load %arg1[%c0, %c0_0, %c0_1] : memref<1x256x16xbf16, #tpu.memory_space<vmem>>, vector<1x256x16xbf16>
    %1 = vector.shape_cast %0 : vector<1x256x16xbf16> to vector<256x16xbf16>
    %c0_2 = arith.constant 0 : index
    %c0_3 = arith.constant 0 : index
    %2 = vector.load %arg3[%c0_2, %c0_3] : memref<16x16xbf16, #tpu.memory_space<vmem>>, vector<16x16xbf16>
    %cst = arith.constant dense<0.000000e+00> : vector<256x16xf32>
    %3 = tpu.matmul %1, %2, %cst {dimension_numbers = #tpu.dot_dimension_numbers<[1], [0], [0], [1], [0, 0, 1, 1], [], []>} : vector<256x16xbf16>, vector<16x16xbf16>, vector<256x16xf32> -> vector<256x16xf32>
    %c0_4 = arith.constant 0 : index
    %c0_5 = arith.constant 0 : index
    %4 = vector.load %arg4[%c0_4, %c0_5] : memref<1x16xf32, #tpu.memory_space<vmem>>, vector<1x16xf32>
    %5 = vector.broadcast %4 : vector<1x16xf32> to vector<256x16xf32>
    %6 = arith.addf %3, %5 : vector<256x16xf32>
    %c0_6 = arith.constant 0 : index
    %c0_7 = arith.constant 0 : index
    %7 = vector.load %arg5[%c0_6, %c0_7] : memref<1x16xf32, #tpu.memory_space<vmem>>, vector<1x16xf32>
    %8 = vector.broadcast %7 : vector<1x16xf32> to vector<256x16xf32>
    %9 = arith.mulf %6, %8 : vector<256x16xf32>
    %cst_8 = arith.constant dense<0.000000e+00> : vector<256xf32>
    %10 = vector.multi_reduction <add>, %9, %cst_8 [1] : vector<256x16xf32> to vector<256xf32>
    %11 = vector.shape_cast %10 : vector<256xf32> to vector<256x1xf32>
    %c0_9 = arith.constant 0 : index
    %c0_10 = arith.constant 0 : index
    %12 = vector.load %arg6[%c0_9, %c0_10] : memref<1x1xf32, #tpu.memory_space<vmem>>, vector<1x1xf32>
    %13 = vector.broadcast %12 : vector<1x1xf32> to vector<256x1xf32>
    %14 = arith.addf %11, %13 : vector<256x1xf32>
    %cst_11 = arith.constant dense<0xFF800000> : vector<1xf32>
    %15 = vector.multi_reduction <maximumf>, %14, %cst_11 [0] : vector<256x1xf32> to vector<1xf32>
    %16 = vector.shape_cast %15 : vector<1xf32> to vector<1x1xf32>
    %17 = vector.broadcast %16 : vector<1x1xf32> to vector<256x1xf32>
    %18 = arith.subf %14, %17 : vector<256x1xf32>
    %19 = math.exp %18 : vector<256x1xf32>
    %cst_12 = arith.constant dense<0.000000e+00> : vector<1xf32>
    %20 = vector.multi_reduction <add>, %19, %cst_12 [0] : vector<256x1xf32> to vector<1xf32>
    %21 = vector.shape_cast %20 : vector<1xf32> to vector<1x1xf32>
    %22 = vector.broadcast %21 : vector<1x1xf32> to vector<256x1xf32>
    %23 = arith.divf %19, %22 : vector<256x1xf32>
    %24 = vector.broadcast %23 : vector<256x1xf32> to vector<256x16xf32>
    %25 = arith.mulf %6, %24 : vector<256x16xf32>
    %cst_13 = arith.constant dense<0.000000e+00> : vector<16xf32>
    %26 = vector.multi_reduction <add>, %25, %cst_13 [0] : vector<256x16xf32> to vector<16xf32>
    %27 = vector.shape_cast %26 : vector<16xf32> to vector<1x16xf32>
    %28 = arith.truncf %27 : vector<1x16xf32> to vector<1x16xbf16>
    %c0_14 = arith.constant 0 : index
    %c0_15 = arith.constant 0 : index
    %29 = vector.load %arg7[%c0_14, %c0_15] : memref<16x16xbf16, #tpu.memory_space<vmem>>, vector<16x16xbf16>
    %cst_16 = arith.constant dense<0.000000e+00> : vector<1x16xf32>
    %30 = tpu.matmul %28, %29, %cst_16 {dimension_numbers = #tpu.dot_dimension_numbers<[1], [0], [0], [1], [0, 0, 1, 1], [], []>} : vector<1x16xbf16>, vector<16x16xbf16>, vector<1x16xf32> -> vector<1x16xf32>
    %c0_17 = arith.constant 0 : index
    %c0_18 = arith.constant 0 : index
    %31 = vector.load %arg8[%c0_17, %c0_18] : memref<1x16xf32, #tpu.memory_space<vmem>>, vector<1x16xf32>
    %32 = arith.addf %30, %31 : vector<1x16xf32>
    %cst_19 = arith.constant 0.000000e+00 : f32
    %33 = vector.broadcast %cst_19 : f32 to vector<1x16xf32>
    %34 = arith.cmpf oge, %32, %33 : vector<1x16xf32>
    %cst_20 = arith.constant 0.00999999977 : f32
    %35 = vector.broadcast %cst_20 : f32 to vector<1x16xf32>
    %36 = arith.mulf %35, %32 : vector<1x16xf32>
    %37 = arith.select %34, %32, %36 : vector<1x16xi1>, vector<1x16xf32>
    %38 = arith.truncf %37 : vector<1x16xf32> to vector<1x16xbf16>
    %c0_21 = arith.constant 0 : index
    %c0_22 = arith.constant 0 : index
    %39 = vector.load %arg9[%c0_21, %c0_22] : memref<16x16xbf16, #tpu.memory_space<vmem>>, vector<16x16xbf16>
    %cst_23 = arith.constant dense<0.000000e+00> : vector<1x16xf32>
    %40 = tpu.matmul %38, %39, %cst_23 {dimension_numbers = #tpu.dot_dimension_numbers<[1], [0], [0], [1], [0, 0, 1, 1], [], []>} : vector<1x16xbf16>, vector<16x16xbf16>, vector<1x16xf32> -> vector<1x16xf32>
    %c0_24 = arith.constant 0 : index
    %c0_25 = arith.constant 0 : index
    %41 = vector.load %arg10[%c0_24, %c0_25] : memref<1x16xf32, #tpu.memory_space<vmem>>, vector<1x16xf32>
    %42 = arith.addf %40, %41 : vector<1x16xf32>
    %cst_26 = arith.constant 0.000000e+00 : f32
    %43 = vector.broadcast %cst_26 : f32 to vector<1x16xf32>
    %44 = arith.cmpf oge, %42, %43 : vector<1x16xf32>
    %cst_27 = arith.constant 0.00999999977 : f32
    %45 = vector.broadcast %cst_27 : f32 to vector<1x16xf32>
    %46 = arith.mulf %45, %42 : vector<1x16xf32>
    %47 = arith.select %44, %42, %46 : vector<1x16xi1>, vector<1x16xf32>
    %48 = vector.broadcast %47 : vector<1x16xf32> to vector<256x16xf32>
    %49 = arith.addf %6, %48 : vector<256x16xf32>
    %c0_28 = arith.constant 0 : index
    %c0_29 = arith.constant 0 : index
    %c0_30 = arith.constant 0 : index
    %50 = vector.load %arg2[%c0_28, %c0_29, %c0_30] : memref<1x256x16xbf16, #tpu.memory_space<vmem>>, vector<1x256x16xbf16>
    %51 = vector.shape_cast %50 : vector<1x256x16xbf16> to vector<256x16xbf16>
    %52 = arith.extf %51 : vector<256x16xbf16> to vector<256x16xf32>
    %53 = arith.addf %49, %52 : vector<256x16xf32>
    %54 = arith.truncf %53 : vector<256x16xf32> to vector<256x16xbf16>
    %c0_31 = arith.constant 0 : index
    %c0_32 = arith.constant 0 : index
    %c0_33 = arith.constant 0 : index
    %55 = vector.load %arg11[%c0_31, %c0_32, %c0_33] : memref<1x256x16xbf16, #tpu.memory_space<vmem>>, vector<1x256x16xbf16>
    %56 = vector.shape_cast %55 : vector<1x256x16xbf16> to vector<256x16xbf16>
    %57 = vector.shape_cast %54 : vector<256x16xbf16> to vector<1x256x16xbf16>
    tpu.vector_store %arg11[%c0_31, %c0_32, %c0_33], %57 {strides = array<i32>} : memref<1x256x16xbf16, #tpu.memory_space<vmem>>, vector<1x256x16xbf16>,
    return
  }
  func.func @transform_0(%arg0: i32) -> (i32, i32, i32) {
    %c0_i32 = arith.constant 0 : i32
    %c0_i32_0 = arith.constant 0 : i32
    %c0_i32_1 = arith.constant 0 : i32
    return %arg0, %c0_i32, %c0_i32_0 : i32, i32, i32
  }
  func.func @transform_1(%arg0: i32) -> (i32, i32, i32) {
    %c0_i32 = arith.constant 0 : i32
    %c0_i32_0 = arith.constant 0 : i32
    %c0_i32_1 = arith.constant 0 : i32
    return %arg0, %c0_i32, %c0_i32_0 : i32, i32, i32
  }
  func.func @transform_2(%arg0: i32) -> (i32, i32) {
    %c0_i32 = arith.constant 0 : i32
    %c0_i32_0 = arith.constant 0 : i32
    %c0_i32_1 = arith.constant 0 : i32
    return %c0_i32, %c0_i32_0 : i32, i32
  }
  func.func @transform_3(%arg0: i32) -> (i32, i32) {
    %c0_i32 = arith.constant 0 : i32
    %c0_i32_0 = arith.constant 0 : i32
    %c0_i32_1 = arith.constant 0 : i32
    return %c0_i32, %c0_i32_0 : i32, i32
  }
  func.func @transform_4(%arg0: i32) -> (i32, i32) {
    %c0_i32 = arith.constant 0 : i32
    %c0_i32_0 = arith.constant 0 : i32
    %c0_i32_1 = arith.constant 0 : i32
    return %c0_i32, %c0_i32_0 : i32, i32
  }
  func.func @transform_5(%arg0: i32) -> (i32, i32) {
    %c0_i32 = arith.constant 0 : i32
    %c0_i32_0 = arith.constant 0 : i32
    %c0_i32_1 = arith.constant 0 : i32
    return %c0_i32, %c0_i32_0 : i32, i32
  }
  func.func @transform_6(%arg0: i32) -> (i32, i32) {
    %c0_i32 = arith.constant 0 : i32
    %c0_i32_0 = arith.constant 0 : i32
    %c0_i32_1 = arith.constant 0 : i32
    return %c0_i32, %c0_i32_0 : i32, i32
  }
  func.func @transform_7(%arg0: i32) -> (i32, i32) {
    %c0_i32 = arith.constant 0 : i32
    %c0_i32_0 = arith.constant 0 : i32
    %c0_i32_1 = arith.constant 0 : i32
    return %c0_i32, %c0_i32_0 : i32, i32
  }
  func.func @transform_8(%arg0: i32) -> (i32, i32) {
    %c0_i32 = arith.constant 0 : i32
    %c0_i32_0 = arith.constant 0 : i32
    %c0_i32_1 = arith.constant 0 : i32
    return %c0_i32, %c0_i32_0 : i32, i32
  }
  func.func @transform_9(%arg0: i32) -> (i32, i32) {
    %c0_i32 = arith.constant 0 : i32
    %c0_i32_0 = arith.constant 0 : i32
    %c0_i32_1 = arith.constant 0 : i32
    return %c0_i32, %c0_i32_0 : i32, i32
  }
  func.func @transform_10(%arg0: i32) -> (i32, i32, i32) {
    %c0_i32 = arith.constant 0 : i32
    %c0_i32_0 = arith.constant 0 : i32
    %c0_i32_1 = arith.constant 0 : i32
    return %arg0, %c0_i32, %c0_i32_0 : i32, i32, i32
  }
}

module attributes {stable_mosaic.version = 11 : i64} {
  func.func @_dual_conv3x3_kernel(%arg0: i32, %arg1: i32, %arg2: memref<1x1x288x96xbf16, #tpu.memory_space<vmem>>, %arg3: memref<3x96x32xbf16, #tpu.memory_space<vmem>>, %arg4: memref<1x32xf32, #tpu.memory_space<vmem>>, %arg5: memref<32x16xbf16, #tpu.memory_space<vmem>>, %arg6: memref<1x1x256x16xbf16, #tpu.memory_space<vmem>>) attributes {dimension_semantics = [#tpu.dimension_semantics<parallel>, #tpu.dimension_semantics<parallel>], iteration_bounds = array<i64: 2, 1>, scalar_prefetch = 0 : i64, scratch_operands = 0 : i64, tpu.core_type = #tpu.core_type<tc>, window_params = [{transform_indices = @transform_0, window_bounds = array<i64: 1, 1, 288, 96>}, {pipeline_mode = #tpu.pipeline_mode<synchronous>, transform_indices = @transform_1, window_bounds = array<i64: 3, 96, 32>}, {pipeline_mode = #tpu.pipeline_mode<synchronous>, transform_indices = @transform_2, window_bounds = array<i64: 1, 32>}, {pipeline_mode = #tpu.pipeline_mode<synchronous>, transform_indices = @transform_3, window_bounds = array<i64: 32, 16>}, {transform_indices = @transform_4, window_bounds = array<i64: 1, 1, 256, 16>}]} {
    %cst = arith.constant 0.000000e+00 : f32
    %0 = vector.broadcast %cst : f32 to vector<256x32xf32>
    %c0 = arith.constant 0 : index
    %c0_0 = arith.constant 0 : index
    %c0_1 = arith.constant 0 : index
    %c0_2 = arith.constant 0 : index
    %1 = vector.load %arg2[%c0, %c0_0, %c0_1, %c0_2] : memref<1x1x288x96xbf16, #tpu.memory_space<vmem>>, vector<1x1x256x96xbf16>
    %2 = vector.shape_cast %1 : vector<1x1x256x96xbf16> to vector<256x96xbf16>
    %c0_3 = arith.constant 0 : index
    %c0_4 = arith.constant 0 : index
    %c0_5 = arith.constant 0 : index
    %3 = vector.load %arg3[%c0_3, %c0_4, %c0_5] : memref<3x96x32xbf16, #tpu.memory_space<vmem>>, vector<1x96x32xbf16>
    %4 = vector.shape_cast %3 : vector<1x96x32xbf16> to vector<96x32xbf16>
    %cst_6 = arith.constant dense<0.000000e+00> : vector<256x32xf32>
    %5 = tpu.matmul %2, %4, %cst_6 {dimension_numbers = #tpu.dot_dimension_numbers<[1], [0], [0], [1], [0, 0, 1, 1], [], []>} : vector<256x96xbf16>, vector<96x32xbf16>, vector<256x32xf32> -> vector<256x32xf32>
    %6 = arith.addf %0, %5 : vector<256x32xf32>
    %c0_7 = arith.constant 0 : index
    %c0_8 = arith.constant 0 : index
    %c16 = arith.constant 16 : index
    %c0_9 = arith.constant 0 : index
    %7 = vector.load %arg2[%c0_7, %c0_8, %c16, %c0_9] : memref<1x1x288x96xbf16, #tpu.memory_space<vmem>>, vector<1x1x256x96xbf16>
    %8 = vector.shape_cast %7 : vector<1x1x256x96xbf16> to vector<256x96xbf16>
    %c1 = arith.constant 1 : index
    %c0_10 = arith.constant 0 : index
    %c0_11 = arith.constant 0 : index
    %9 = vector.load %arg3[%c1, %c0_10, %c0_11] : memref<3x96x32xbf16, #tpu.memory_space<vmem>>, vector<1x96x32xbf16>
    %10 = vector.shape_cast %9 : vector<1x96x32xbf16> to vector<96x32xbf16>
    %cst_12 = arith.constant dense<0.000000e+00> : vector<256x32xf32>
    %11 = tpu.matmul %8, %10, %cst_12 {dimension_numbers = #tpu.dot_dimension_numbers<[1], [0], [0], [1], [0, 0, 1, 1], [], []>} : vector<256x96xbf16>, vector<96x32xbf16>, vector<256x32xf32> -> vector<256x32xf32>
    %12 = arith.addf %6, %11 : vector<256x32xf32>
    %c0_13 = arith.constant 0 : index
    %c0_14 = arith.constant 0 : index
    %c32 = arith.constant 32 : index
    %c0_15 = arith.constant 0 : index
    %13 = vector.load %arg2[%c0_13, %c0_14, %c32, %c0_15] : memref<1x1x288x96xbf16, #tpu.memory_space<vmem>>, vector<1x1x256x96xbf16>
    %14 = vector.shape_cast %13 : vector<1x1x256x96xbf16> to vector<256x96xbf16>
    %c2 = arith.constant 2 : index
    %c0_16 = arith.constant 0 : index
    %c0_17 = arith.constant 0 : index
    %15 = vector.load %arg3[%c2, %c0_16, %c0_17] : memref<3x96x32xbf16, #tpu.memory_space<vmem>>, vector<1x96x32xbf16>
    %16 = vector.shape_cast %15 : vector<1x96x32xbf16> to vector<96x32xbf16>
    %cst_18 = arith.constant dense<0.000000e+00> : vector<256x32xf32>
    %17 = tpu.matmul %14, %16, %cst_18 {dimension_numbers = #tpu.dot_dimension_numbers<[1], [0], [0], [1], [0, 0, 1, 1], [], []>} : vector<256x96xbf16>, vector<96x32xbf16>, vector<256x32xf32> -> vector<256x32xf32>
    %18 = arith.addf %12, %17 : vector<256x32xf32>
    %c0_19 = arith.constant 0 : index
    %c0_20 = arith.constant 0 : index
    %19 = vector.load %arg4[%c0_19, %c0_20] : memref<1x32xf32, #tpu.memory_space<vmem>>, vector<1x32xf32>
    %20 = vector.broadcast %19 : vector<1x32xf32> to vector<256x32xf32>
    %21 = arith.addf %18, %20 : vector<256x32xf32>
    %cst_21 = arith.constant 0.000000e+00 : f32
    %22 = vector.broadcast %cst_21 : f32 to vector<256x32xf32>
    %23 = arith.cmpf oge, %21, %22 : vector<256x32xf32>
    %cst_22 = arith.constant 0.00999999977 : f32
    %24 = vector.broadcast %cst_22 : f32 to vector<256x32xf32>
    %25 = arith.mulf %24, %21 : vector<256x32xf32>
    %26 = arith.select %23, %21, %25 : vector<256x32xi1>, vector<256x32xf32>
    %27 = arith.truncf %26 : vector<256x32xf32> to vector<256x32xbf16>
    %c0_23 = arith.constant 0 : index
    %c0_24 = arith.constant 0 : index
    %28 = vector.load %arg5[%c0_23, %c0_24] : memref<32x16xbf16, #tpu.memory_space<vmem>>, vector<32x16xbf16>
    %cst_25 = arith.constant dense<0.000000e+00> : vector<256x16xf32>
    %29 = tpu.matmul %27, %28, %cst_25 {dimension_numbers = #tpu.dot_dimension_numbers<[1], [0], [0], [1], [0, 0, 1, 1], [], []>} : vector<256x32xbf16>, vector<32x16xbf16>, vector<256x16xf32> -> vector<256x16xf32>
    %30 = arith.truncf %29 : vector<256x16xf32> to vector<256x16xbf16>
    %c0_26 = arith.constant 0 : index
    %c0_27 = arith.constant 0 : index
    %c0_28 = arith.constant 0 : index
    %c0_29 = arith.constant 0 : index
    %31 = vector.load %arg6[%c0_26, %c0_27, %c0_28, %c0_29] : memref<1x1x256x16xbf16, #tpu.memory_space<vmem>>, vector<1x1x256x16xbf16>
    %32 = vector.shape_cast %31 : vector<1x1x256x16xbf16> to vector<256x16xbf16>
    %33 = vector.shape_cast %30 : vector<256x16xbf16> to vector<1x1x256x16xbf16>
    tpu.vector_store %arg6[%c0_26, %c0_27, %c0_28, %c0_29], %33 {strides = array<i32>} : memref<1x1x256x16xbf16, #tpu.memory_space<vmem>>, vector<1x1x256x16xbf16>,
    return
  }
  func.func @transform_0(%arg0: i32, %arg1: i32) -> (i32, i32, i32, i32) {
    %c0_i32 = arith.constant 0 : i32
    %c0_i32_0 = arith.constant 0 : i32
    %c0_i32_1 = arith.constant 0 : i32
    return %arg0, %arg1, %c0_i32, %c0_i32_0 : i32, i32, i32, i32
  }
  func.func @transform_1(%arg0: i32, %arg1: i32) -> (i32, i32, i32) {
    %c0_i32 = arith.constant 0 : i32
    %c0_i32_0 = arith.constant 0 : i32
    %c0_i32_1 = arith.constant 0 : i32
    %c0_i32_2 = arith.constant 0 : i32
    return %c0_i32, %c0_i32_0, %c0_i32_1 : i32, i32, i32
  }
  func.func @transform_2(%arg0: i32, %arg1: i32) -> (i32, i32) {
    %c0_i32 = arith.constant 0 : i32
    %c0_i32_0 = arith.constant 0 : i32
    %c0_i32_1 = arith.constant 0 : i32
    return %c0_i32, %c0_i32_0 : i32, i32
  }
  func.func @transform_3(%arg0: i32, %arg1: i32) -> (i32, i32) {
    %c0_i32 = arith.constant 0 : i32
    %c0_i32_0 = arith.constant 0 : i32
    %c0_i32_1 = arith.constant 0 : i32
    return %c0_i32, %c0_i32_0 : i32, i32
  }
  func.func @transform_4(%arg0: i32, %arg1: i32) -> (i32, i32, i32, i32) {
    %c0_i32 = arith.constant 0 : i32
    %c0_i32_0 = arith.constant 0 : i32
    %c0_i32_1 = arith.constant 0 : i32
    return %arg0, %arg1, %c0_i32, %c0_i32_0 : i32, i32, i32, i32
  }
}

module attributes {stable_mosaic.version = 11 : i64} {
  func.func @_mm_kernel(%arg0: i32, %arg1: i32, %arg2: memref<1x256x16xbf16, #tpu.memory_space<vmem>>, %arg3: memref<1x256x16xbf16, #tpu.memory_space<vmem>>, %arg4: memref<1x256x32xbf16, #tpu.memory_space<vmem>>, %arg5: memref<16x32xbf16, #tpu.memory_space<vmem>>, %arg6: memref<16x32xbf16, #tpu.memory_space<vmem>>, %arg7: memref<1x32xf32, #tpu.memory_space<vmem>>, %arg8: memref<1x256x32xbf16, #tpu.memory_space<vmem>>) attributes {dimension_semantics = [#tpu.dimension_semantics<parallel>, #tpu.dimension_semantics<parallel>], iteration_bounds = array<i64: 2, 1>, scalar_prefetch = 0 : i64, scratch_operands = 0 : i64, tpu.core_type = #tpu.core_type<tc>, window_params = [{transform_indices = @transform_0, window_bounds = array<i64: 1, 256, 16>}, {transform_indices = @transform_1, window_bounds = array<i64: 1, 256, 16>}, {transform_indices = @transform_2, window_bounds = array<i64: 1, 256, 32>}, {pipeline_mode = #tpu.pipeline_mode<synchronous>, transform_indices = @transform_3, window_bounds = array<i64: 16, 32>}, {pipeline_mode = #tpu.pipeline_mode<synchronous>, transform_indices = @transform_4, window_bounds = array<i64: 16, 32>}, {pipeline_mode = #tpu.pipeline_mode<synchronous>, transform_indices = @transform_5, window_bounds = array<i64: 1, 32>}, {transform_indices = @transform_6, window_bounds = array<i64: 1, 256, 32>}]} {
    %c0 = arith.constant 0 : index
    %c0_0 = arith.constant 0 : index
    %c0_1 = arith.constant 0 : index
    %0 = vector.load %arg2[%c0, %c0_0, %c0_1] : memref<1x256x16xbf16, #tpu.memory_space<vmem>>, vector<1x256x16xbf16>
    %1 = vector.shape_cast %0 : vector<1x256x16xbf16> to vector<256x16xbf16>
    %c0_2 = arith.constant 0 : index
    %c0_3 = arith.constant 0 : index
    %2 = vector.load %arg5[%c0_2, %c0_3] : memref<16x32xbf16, #tpu.memory_space<vmem>>, vector<16x32xbf16>
    %cst = arith.constant dense<0.000000e+00> : vector<256x32xf32>
    %3 = tpu.matmul %1, %2, %cst {dimension_numbers = #tpu.dot_dimension_numbers<[1], [0], [0], [1], [0, 0, 1, 1], [], []>} : vector<256x16xbf16>, vector<16x32xbf16>, vector<256x32xf32> -> vector<256x32xf32>
    %c0_4 = arith.constant 0 : index
    %c0_5 = arith.constant 0 : index
    %c0_6 = arith.constant 0 : index
    %4 = vector.load %arg3[%c0_4, %c0_5, %c0_6] : memref<1x256x16xbf16, #tpu.memory_space<vmem>>, vector<1x256x16xbf16>
    %5 = vector.shape_cast %4 : vector<1x256x16xbf16> to vector<256x16xbf16>
    %c0_7 = arith.constant 0 : index
    %c0_8 = arith.constant 0 : index
    %6 = vector.load %arg6[%c0_7, %c0_8] : memref<16x32xbf16, #tpu.memory_space<vmem>>, vector<16x32xbf16>
    %cst_9 = arith.constant dense<0.000000e+00> : vector<256x32xf32>
    %7 = tpu.matmul %5, %6, %cst_9 {dimension_numbers = #tpu.dot_dimension_numbers<[1], [0], [0], [1], [0, 0, 1, 1], [], []>} : vector<256x16xbf16>, vector<16x32xbf16>, vector<256x32xf32> -> vector<256x32xf32>
    %8 = arith.addf %3, %7 : vector<256x32xf32>
    %c0_10 = arith.constant 0 : index
    %c0_11 = arith.constant 0 : index
    %9 = vector.load %arg7[%c0_10, %c0_11] : memref<1x32xf32, #tpu.memory_space<vmem>>, vector<1x32xf32>
    %10 = vector.broadcast %9 : vector<1x32xf32> to vector<256x32xf32>
    %11 = arith.addf %8, %10 : vector<256x32xf32>
    %c0_12 = arith.constant 0 : index
    %c0_13 = arith.constant 0 : index
    %c0_14 = arith.constant 0 : index
    %12 = vector.load %arg4[%c0_12, %c0_13, %c0_14] : memref<1x256x32xbf16, #tpu.memory_space<vmem>>, vector<1x256x32xbf16>
    %13 = vector.shape_cast %12 : vector<1x256x32xbf16> to vector<256x32xbf16>
    %14 = arith.extf %13 : vector<256x32xbf16> to vector<256x32xf32>
    %15 = arith.addf %11, %14 : vector<256x32xf32>
    %16 = arith.truncf %15 : vector<256x32xf32> to vector<256x32xbf16>
    %c0_15 = arith.constant 0 : index
    %c0_16 = arith.constant 0 : index
    %c0_17 = arith.constant 0 : index
    %17 = vector.load %arg8[%c0_15, %c0_16, %c0_17] : memref<1x256x32xbf16, #tpu.memory_space<vmem>>, vector<1x256x32xbf16>
    %18 = vector.shape_cast %17 : vector<1x256x32xbf16> to vector<256x32xbf16>
    %19 = vector.shape_cast %16 : vector<256x32xbf16> to vector<1x256x32xbf16>
    tpu.vector_store %arg8[%c0_15, %c0_16, %c0_17], %19 {strides = array<i32>} : memref<1x256x32xbf16, #tpu.memory_space<vmem>>, vector<1x256x32xbf16>,
    return
  }
  func.func @transform_0(%arg0: i32, %arg1: i32) -> (i32, i32, i32) {
    %c0_i32 = arith.constant 0 : i32
    %c0_i32_0 = arith.constant 0 : i32
    return %arg0, %arg1, %c0_i32 : i32, i32, i32
  }
  func.func @transform_1(%arg0: i32, %arg1: i32) -> (i32, i32, i32) {
    %c0_i32 = arith.constant 0 : i32
    %c0_i32_0 = arith.constant 0 : i32
    return %arg0, %arg1, %c0_i32 : i32, i32, i32
  }
  func.func @transform_2(%arg0: i32, %arg1: i32) -> (i32, i32, i32) {
    %c0_i32 = arith.constant 0 : i32
    %c0_i32_0 = arith.constant 0 : i32
    return %arg0, %arg1, %c0_i32 : i32, i32, i32
  }
  func.func @transform_3(%arg0: i32, %arg1: i32) -> (i32, i32) {
    %c0_i32 = arith.constant 0 : i32
    %c0_i32_0 = arith.constant 0 : i32
    %c0_i32_1 = arith.constant 0 : i32
    return %c0_i32, %c0_i32_0 : i32, i32
  }
  func.func @transform_4(%arg0: i32, %arg1: i32) -> (i32, i32) {
    %c0_i32 = arith.constant 0 : i32
    %c0_i32_0 = arith.constant 0 : i32
    %c0_i32_1 = arith.constant 0 : i32
    return %c0_i32, %c0_i32_0 : i32, i32
  }
  func.func @transform_5(%arg0: i32, %arg1: i32) -> (i32, i32) {
    %c0_i32 = arith.constant 0 : i32
    %c0_i32_0 = arith.constant 0 : i32
    %c0_i32_1 = arith.constant 0 : i32
    return %c0_i32, %c0_i32_0 : i32, i32
  }
  func.func @transform_6(%arg0: i32, %arg1: i32) -> (i32, i32, i32) {
    %c0_i32 = arith.constant 0 : i32
    %c0_i32_0 = arith.constant 0 : i32
    return %arg0, %arg1, %c0_i32 : i32, i32, i32
  }
}

module attributes {stable_mosaic.version = 11 : i64} {
  func.func @_mm_kernel(%arg0: i32, %arg1: i32, %arg2: memref<1x256x16xbf16, #tpu.memory_space<vmem>>, %arg3: memref<1x256x16xbf16, #tpu.memory_space<vmem>>, %arg4: memref<16x32xbf16, #tpu.memory_space<vmem>>, %arg5: memref<16x32xbf16, #tpu.memory_space<vmem>>, %arg6: memref<1x32xf32, #tpu.memory_space<vmem>>, %arg7: memref<1x256x32xbf16, #tpu.memory_space<vmem>>) attributes {dimension_semantics = [#tpu.dimension_semantics<parallel>, #tpu.dimension_semantics<parallel>], iteration_bounds = array<i64: 2, 1>, scalar_prefetch = 0 : i64, scratch_operands = 0 : i64, tpu.core_type = #tpu.core_type<tc>, window_params = [{transform_indices = @transform_0, window_bounds = array<i64: 1, 256, 16>}, {transform_indices = @transform_1, window_bounds = array<i64: 1, 256, 16>}, {pipeline_mode = #tpu.pipeline_mode<synchronous>, transform_indices = @transform_2, window_bounds = array<i64: 16, 32>}, {pipeline_mode = #tpu.pipeline_mode<synchronous>, transform_indices = @transform_3, window_bounds = array<i64: 16, 32>}, {pipeline_mode = #tpu.pipeline_mode<synchronous>, transform_indices = @transform_4, window_bounds = array<i64: 1, 32>}, {transform_indices = @transform_5, window_bounds = array<i64: 1, 256, 32>}]} {
    %c0 = arith.constant 0 : index
    %c0_0 = arith.constant 0 : index
    %c0_1 = arith.constant 0 : index
    %0 = vector.load %arg2[%c0, %c0_0, %c0_1] : memref<1x256x16xbf16, #tpu.memory_space<vmem>>, vector<1x256x16xbf16>
    %1 = vector.shape_cast %0 : vector<1x256x16xbf16> to vector<256x16xbf16>
    %c0_2 = arith.constant 0 : index
    %c0_3 = arith.constant 0 : index
    %2 = vector.load %arg4[%c0_2, %c0_3] : memref<16x32xbf16, #tpu.memory_space<vmem>>, vector<16x32xbf16>
    %cst = arith.constant dense<0.000000e+00> : vector<256x32xf32>
    %3 = tpu.matmul %1, %2, %cst {dimension_numbers = #tpu.dot_dimension_numbers<[1], [0], [0], [1], [0, 0, 1, 1], [], []>} : vector<256x16xbf16>, vector<16x32xbf16>, vector<256x32xf32> -> vector<256x32xf32>
    %c0_4 = arith.constant 0 : index
    %c0_5 = arith.constant 0 : index
    %c0_6 = arith.constant 0 : index
    %4 = vector.load %arg3[%c0_4, %c0_5, %c0_6] : memref<1x256x16xbf16, #tpu.memory_space<vmem>>, vector<1x256x16xbf16>
    %5 = vector.shape_cast %4 : vector<1x256x16xbf16> to vector<256x16xbf16>
    %c0_7 = arith.constant 0 : index
    %c0_8 = arith.constant 0 : index
    %6 = vector.load %arg5[%c0_7, %c0_8] : memref<16x32xbf16, #tpu.memory_space<vmem>>, vector<16x32xbf16>
    %cst_9 = arith.constant dense<0.000000e+00> : vector<256x32xf32>
    %7 = tpu.matmul %5, %6, %cst_9 {dimension_numbers = #tpu.dot_dimension_numbers<[1], [0], [0], [1], [0, 0, 1, 1], [], []>} : vector<256x16xbf16>, vector<16x32xbf16>, vector<256x32xf32> -> vector<256x32xf32>
    %8 = arith.addf %3, %7 : vector<256x32xf32>
    %c0_10 = arith.constant 0 : index
    %c0_11 = arith.constant 0 : index
    %9 = vector.load %arg6[%c0_10, %c0_11] : memref<1x32xf32, #tpu.memory_space<vmem>>, vector<1x32xf32>
    %10 = vector.broadcast %9 : vector<1x32xf32> to vector<256x32xf32>
    %11 = arith.addf %8, %10 : vector<256x32xf32>
    %12 = arith.truncf %11 : vector<256x32xf32> to vector<256x32xbf16>
    %c0_12 = arith.constant 0 : index
    %c0_13 = arith.constant 0 : index
    %c0_14 = arith.constant 0 : index
    %13 = vector.load %arg7[%c0_12, %c0_13, %c0_14] : memref<1x256x32xbf16, #tpu.memory_space<vmem>>, vector<1x256x32xbf16>
    %14 = vector.shape_cast %13 : vector<1x256x32xbf16> to vector<256x32xbf16>
    %15 = vector.shape_cast %12 : vector<256x32xbf16> to vector<1x256x32xbf16>
    tpu.vector_store %arg7[%c0_12, %c0_13, %c0_14], %15 {strides = array<i32>} : memref<1x256x32xbf16, #tpu.memory_space<vmem>>, vector<1x256x32xbf16>,
    return
  }
  func.func @transform_0(%arg0: i32, %arg1: i32) -> (i32, i32, i32) {
    %c0_i32 = arith.constant 0 : i32
    %c0_i32_0 = arith.constant 0 : i32
    return %arg0, %arg1, %c0_i32 : i32, i32, i32
  }
  func.func @transform_1(%arg0: i32, %arg1: i32) -> (i32, i32, i32) {
    %c0_i32 = arith.constant 0 : i32
    %c0_i32_0 = arith.constant 0 : i32
    return %arg0, %arg1, %c0_i32 : i32, i32, i32
  }
  func.func @transform_2(%arg0: i32, %arg1: i32) -> (i32, i32) {
    %c0_i32 = arith.constant 0 : i32
    %c0_i32_0 = arith.constant 0 : i32
    %c0_i32_1 = arith.constant 0 : i32
    return %c0_i32, %c0_i32_0 : i32, i32
  }
  func.func @transform_3(%arg0: i32, %arg1: i32) -> (i32, i32) {
    %c0_i32 = arith.constant 0 : i32
    %c0_i32_0 = arith.constant 0 : i32
    %c0_i32_1 = arith.constant 0 : i32
    return %c0_i32, %c0_i32_0 : i32, i32
  }
  func.func @transform_4(%arg0: i32, %arg1: i32) -> (i32, i32) {
    %c0_i32 = arith.constant 0 : i32
    %c0_i32_0 = arith.constant 0 : i32
    %c0_i32_1 = arith.constant 0 : i32
    return %c0_i32, %c0_i32_0 : i32, i32
  }
  func.func @transform_5(%arg0: i32, %arg1: i32) -> (i32, i32, i32) {
    %c0_i32 = arith.constant 0 : i32
    %c0_i32_0 = arith.constant 0 : i32
    return %arg0, %arg1, %c0_i32 : i32, i32, i32
  }
}

module attributes {stable_mosaic.version = 11 : i64} {
  func.func @_conv3x3_relu_proj_kernel(%arg0: i32, %arg1: i32, %arg2: memref<1x1x288x96xbf16, #tpu.memory_space<vmem>>, %arg3: memref<3x96x8xbf16, #tpu.memory_space<vmem>>, %arg4: memref<1x8xf32, #tpu.memory_space<vmem>>, %arg5: memref<8x1xbf16, #tpu.memory_space<vmem>>, %arg6: memref<1x1x256x1xf32, #tpu.memory_space<vmem>>) attributes {dimension_semantics = [#tpu.dimension_semantics<parallel>, #tpu.dimension_semantics<parallel>], iteration_bounds = array<i64: 2, 1>, scalar_prefetch = 0 : i64, scratch_operands = 0 : i64, tpu.core_type = #tpu.core_type<tc>, window_params = [{transform_indices = @transform_0, window_bounds = array<i64: 1, 1, 288, 96>}, {pipeline_mode = #tpu.pipeline_mode<synchronous>, transform_indices = @transform_1, window_bounds = array<i64: 3, 96, 8>}, {pipeline_mode = #tpu.pipeline_mode<synchronous>, transform_indices = @transform_2, window_bounds = array<i64: 1, 8>}, {pipeline_mode = #tpu.pipeline_mode<synchronous>, transform_indices = @transform_3, window_bounds = array<i64: 8, 1>}, {transform_indices = @transform_4, window_bounds = array<i64: 1, 1, 256, 1>}]} {
    %cst = arith.constant 0.000000e+00 : f32
    %0 = vector.broadcast %cst : f32 to vector<256x8xf32>
    %c0 = arith.constant 0 : index
    %c0_0 = arith.constant 0 : index
    %c0_1 = arith.constant 0 : index
    %c0_2 = arith.constant 0 : index
    %1 = vector.load %arg2[%c0, %c0_0, %c0_1, %c0_2] : memref<1x1x288x96xbf16, #tpu.memory_space<vmem>>, vector<1x1x256x96xbf16>
    %2 = vector.shape_cast %1 : vector<1x1x256x96xbf16> to vector<256x96xbf16>
    %c0_3 = arith.constant 0 : index
    %c0_4 = arith.constant 0 : index
    %c0_5 = arith.constant 0 : index
    %3 = vector.load %arg3[%c0_3, %c0_4, %c0_5] : memref<3x96x8xbf16, #tpu.memory_space<vmem>>, vector<1x96x8xbf16>
    %4 = vector.shape_cast %3 : vector<1x96x8xbf16> to vector<96x8xbf16>
    %cst_6 = arith.constant dense<0.000000e+00> : vector<256x8xf32>
    %5 = tpu.matmul %2, %4, %cst_6 {dimension_numbers = #tpu.dot_dimension_numbers<[1], [0], [0], [1], [0, 0, 1, 1], [], []>} : vector<256x96xbf16>, vector<96x8xbf16>, vector<256x8xf32> -> vector<256x8xf32>
    %6 = arith.addf %0, %5 : vector<256x8xf32>
    %c0_7 = arith.constant 0 : index
    %c0_8 = arith.constant 0 : index
    %c16 = arith.constant 16 : index
    %c0_9 = arith.constant 0 : index
    %7 = vector.load %arg2[%c0_7, %c0_8, %c16, %c0_9] : memref<1x1x288x96xbf16, #tpu.memory_space<vmem>>, vector<1x1x256x96xbf16>
    %8 = vector.shape_cast %7 : vector<1x1x256x96xbf16> to vector<256x96xbf16>
    %c1 = arith.constant 1 : index
    %c0_10 = arith.constant 0 : index
    %c0_11 = arith.constant 0 : index
    %9 = vector.load %arg3[%c1, %c0_10, %c0_11] : memref<3x96x8xbf16, #tpu.memory_space<vmem>>, vector<1x96x8xbf16>
    %10 = vector.shape_cast %9 : vector<1x96x8xbf16> to vector<96x8xbf16>
    %cst_12 = arith.constant dense<0.000000e+00> : vector<256x8xf32>
    %11 = tpu.matmul %8, %10, %cst_12 {dimension_numbers = #tpu.dot_dimension_numbers<[1], [0], [0], [1], [0, 0, 1, 1], [], []>} : vector<256x96xbf16>, vector<96x8xbf16>, vector<256x8xf32> -> vector<256x8xf32>
    %12 = arith.addf %6, %11 : vector<256x8xf32>
    %c0_13 = arith.constant 0 : index
    %c0_14 = arith.constant 0 : index
    %c32 = arith.constant 32 : index
    %c0_15 = arith.constant 0 : index
    %13 = vector.load %arg2[%c0_13, %c0_14, %c32, %c0_15] : memref<1x1x288x96xbf16, #tpu.memory_space<vmem>>, vector<1x1x256x96xbf16>
    %14 = vector.shape_cast %13 : vector<1x1x256x96xbf16> to vector<256x96xbf16>
    %c2 = arith.constant 2 : index
    %c0_16 = arith.constant 0 : index
    %c0_17 = arith.constant 0 : index
    %15 = vector.load %arg3[%c2, %c0_16, %c0_17] : memref<3x96x8xbf16, #tpu.memory_space<vmem>>, vector<1x96x8xbf16>
    %16 = vector.shape_cast %15 : vector<1x96x8xbf16> to vector<96x8xbf16>
    %cst_18 = arith.constant dense<0.000000e+00> : vector<256x8xf32>
    %17 = tpu.matmul %14, %16, %cst_18 {dimension_numbers = #tpu.dot_dimension_numbers<[1], [0], [0], [1], [0, 0, 1, 1], [], []>} : vector<256x96xbf16>, vector<96x8xbf16>, vector<256x8xf32> -> vector<256x8xf32>
    %18 = arith.addf %12, %17 : vector<256x8xf32>
    %c0_19 = arith.constant 0 : index
    %c0_20 = arith.constant 0 : index
    %19 = vector.load %arg4[%c0_19, %c0_20] : memref<1x8xf32, #tpu.memory_space<vmem>>, vector<1x8xf32>
    %20 = vector.broadcast %19 : vector<1x8xf32> to vector<256x8xf32>
    %21 = arith.addf %18, %20 : vector<256x8xf32>
    %cst_21 = arith.constant 0.000000e+00 : f32
    %22 = vector.broadcast %cst_21 : f32 to vector<256x8xf32>
    %23 = arith.maximumf %21, %22 : vector<256x8xf32>
    %24 = arith.truncf %23 : vector<256x8xf32> to vector<256x8xbf16>
    %c0_22 = arith.constant 0 : index
    %c0_23 = arith.constant 0 : index
    %25 = vector.load %arg5[%c0_22, %c0_23] : memref<8x1xbf16, #tpu.memory_space<vmem>>, vector<8x1xbf16>
    %cst_24 = arith.constant dense<0.000000e+00> : vector<256x1xf32>
    %26 = tpu.matmul %24, %25, %cst_24 {dimension_numbers = #tpu.dot_dimension_numbers<[1], [0], [0], [1], [0, 0, 1, 1], [], []>} : vector<256x8xbf16>, vector<8x1xbf16>, vector<256x1xf32> -> vector<256x1xf32>
    %c0_25 = arith.constant 0 : index
    %c0_26 = arith.constant 0 : index
    %c0_27 = arith.constant 0 : index
    %c0_28 = arith.constant 0 : index
    %27 = vector.load %arg6[%c0_25, %c0_26, %c0_27, %c0_28] : memref<1x1x256x1xf32, #tpu.memory_space<vmem>>, vector<1x1x256x1xf32>
    %28 = vector.shape_cast %27 : vector<1x1x256x1xf32> to vector<256x1xf32>
    %29 = vector.shape_cast %26 : vector<256x1xf32> to vector<1x1x256x1xf32>
    tpu.vector_store %arg6[%c0_25, %c0_26, %c0_27, %c0_28], %29 {strides = array<i32>} : memref<1x1x256x1xf32, #tpu.memory_space<vmem>>, vector<1x1x256x1xf32>,
    return
  }
  func.func @transform_0(%arg0: i32, %arg1: i32) -> (i32, i32, i32, i32) {
    %c0_i32 = arith.constant 0 : i32
    %c0_i32_0 = arith.constant 0 : i32
    %c0_i32_1 = arith.constant 0 : i32
    return %arg0, %arg1, %c0_i32, %c0_i32_0 : i32, i32, i32, i32
  }
  func.func @transform_1(%arg0: i32, %arg1: i32) -> (i32, i32, i32) {
    %c0_i32 = arith.constant 0 : i32
    %c0_i32_0 = arith.constant 0 : i32
    %c0_i32_1 = arith.constant 0 : i32
    %c0_i32_2 = arith.constant 0 : i32
    return %c0_i32, %c0_i32_0, %c0_i32_1 : i32, i32, i32
  }
  func.func @transform_2(%arg0: i32, %arg1: i32) -> (i32, i32) {
    %c0_i32 = arith.constant 0 : i32
    %c0_i32_0 = arith.constant 0 : i32
    %c0_i32_1 = arith.constant 0 : i32
    return %c0_i32, %c0_i32_0 : i32, i32
  }
  func.func @transform_3(%arg0: i32, %arg1: i32) -> (i32, i32) {
    %c0_i32 = arith.constant 0 : i32
    %c0_i32_0 = arith.constant 0 : i32
    %c0_i32_1 = arith.constant 0 : i32
    return %c0_i32, %c0_i32_0 : i32, i32
  }
  func.func @transform_4(%arg0: i32, %arg1: i32) -> (i32, i32, i32, i32) {
    %c0_i32 = arith.constant 0 : i32
    %c0_i32_0 = arith.constant 0 : i32
    %c0_i32_1 = arith.constant 0 : i32
    return %arg0, %arg1, %c0_i32, %c0_i32_0 : i32, i32, i32, i32
  }
}

</mosaic_0001>

<llo_original>
// kernel: sffi_forward.37
$region0: #{sffi_forward.37}
  #allocation0 [shape = 'u32[]', space=smem, size = 0x4, offset = 0x4, fixed_abs, tag = 'smem constant byte address 0x4 - core index']
  #allocation1 [shape = 'u32[144,128]{1,0:T(1,128)}', space=vmem, size = 0x12000, scoped, tag = 'internal scratch']
  %s0 = inlined_call_operand.vmem [shape: bf16[2,256,8], index: 0, kind: input, shape index: {}]
  %s1 = inlined_call_operand.vmem [shape: bf16[8,32], index: 1, kind: input, shape index: {}]
  %s2 = inlined_call_operand.vmem [shape: f32[1,32], index: 2, kind: input, shape index: {}]
  %s3 = inlined_call_operand.vmem [shape: bf16[2,256,32], index: 3, kind: output, shape index: {}]
  %s4 = sld [smem:[#allocation0]]
  $region45: #{sffi_forward.37} parent=0
    _
  %s6 = ssub.s32 1, %s4
  %s7 = scalar_select 0, %s6, %s4
  loop: start=0, step=1, limit=4
  $region2: #{sffi_forward.37} parent=0 // loop_pre_header
    _
  $region3: #{sffi_forward.37} parent=0 // loop_header
    %s9 = sphi 0, %s13
    %p10 = scmp.ge.s32.totalorder %s9, 4
    %s16 = sphi 0, %s28
    %s17 = sphi 0, %s24
    %s18 = sphi 0, %s16
    %s19 = sphi 0, %s17
    %s20 = sphi 0, %s18
    %s21 = sphi 0, %s19
    %s33 = sphi 0, %s35
    %s36 = sphi 0, %s33
    %s37 = sphi 0, %s36
    %s53 = sphi 0, %s37
    %s57 = sphi 0, %s57
    %s59 = sphi 0, %s57
    %s60 = sphi 0, %s59
    %s74 = sphi 0, %s60
    %s78 = sphi 0, %s78
    %s80 = sphi 0, %s78
    %s81 = sphi 0, %s80
    %s95 = sphi 0, %s81
    %s103 = sphi 0, %s105
    %s106 = sphi 0, %s103
    %s107 = sphi 0, %s106
    %s123 = sphi 0, %s107
  $region4: #{sffi_forward.37} parent=0 // loop_header_branch
    %12 = sbr.rel (%p10) target = $region8
  $region5: #{sffi_forward.37} parent=0 // loop_body
    %s14 = ssub.s32 %s9, 1
    %s15 = ssub.s32 %s9, 2
    %s22 = sadd.s32 1, %s17
    %p23 = scmp.ge.s32.totalorder %s22, 1
    %s24 = scalar_select %p23, 0, %s22
    %s25 = sadd.s32 1, %s16
    %s26 = scalar_select %p23, %s25, %s16
    %p27 = scmp.ge.s32.totalorder %s26, 2
    %s28 = scalar_select %p27, 0, %s26
    %s29 = ssub.s32 %s16, %s28
    %s30 = ssub.s32 %s17, %s24
    %s31 = sor.u32 %s29, %s30
    %p32 = scmp.eq.s32.totalorder %s31, 0
    %s34 = sadd.s32 %s33, 1
    %s35 = scalar_select %p32, %s33, %s34
    %p38 = pneg %p32
    %p39 = scmp.eq.s32.totalorder %s9, 1
    %p40 = por %p38, %p39
    %p41 = scmp.ne.s32.totalorder %s33, %s36
    %p42 = scmp.eq.s32.totalorder %s9, 0
    %p43 = por %p41, %p42
    %p44 = scmp.ne.s32.totalorder %s33, %s36
    %p45 = scmp.eq.s32.totalorder %s14, 1
    %p46 = por %p44, %p45
    %p47 = scmp.ne.s32.totalorder %s36, %s37
    %p48 = scmp.eq.s32.totalorder %s14, 0
    %p49 = por %p47, %p48
    %p50 = scmp.ne.s32.totalorder %s36, %s37
    %p51 = scmp.eq.s32.totalorder %s15, 1
    %p52 = por %p50, %p51
    %p54 = scmp.ne.s32.totalorder %s37, %s53
    %p55 = scmp.eq.s32.totalorder %s15, 0
    %p56 = por %p54, %p55
    %s58 = sadd.s32 %s57, 1
    %p61 = scmp.eq.s32.totalorder %s9, 1
    %p62 = scmp.ne.s32.totalorder %s57, %s59
    %p63 = scmp.eq.s32.totalorder %s9, 0
    %p64 = por %p62, %p63
    %p65 = scmp.ne.s32.totalorder %s57, %s59
    %p66 = scmp.eq.s32.totalorder %s14, 1
    %p67 = por %p65, %p66
    %p68 = scmp.ne.s32.totalorder %s59, %s60
    %p69 = scmp.eq.s32.totalorder %s14, 0
    %p70 = por %p68, %p69
    %p71 = scmp.ne.s32.totalorder %s59, %s60
    %p72 = scmp.eq.s32.totalorder %s15, 1
    %p73 = por %p71, %p72
    %p75 = scmp.ne.s32.totalorder %s60, %s74
    %p76 = scmp.eq.s32.totalorder %s15, 0
    %p77 = por %p75, %p76
    %s79 = sadd.s32 %s78, 1
    %p82 = scmp.eq.s32.totalorder %s9, 1
    %p83 = scmp.ne.s32.totalorder %s78, %s80
    %p84 = scmp.eq.s32.totalorder %s9, 0
    %p85 = por %p83, %p84
    %p86 = scmp.ne.s32.totalorder %s78, %s80
    %p87 = scmp.eq.s32.totalorder %s14, 1
    %p88 = por %p86, %p87
    %p89 = scmp.ne.s32.totalorder %s80, %s81
    %p90 = scmp.eq.s32.totalorder %s14, 0
    %p91 = por %p89, %p90
    %p92 = scmp.ne.s32.totalorder %s80, %s81
    %p93 = scmp.eq.s32.totalorder %s15, 1
    %p94 = por %p92, %p93
    %p96 = scmp.ne.s32.totalorder %s81, %s95
    %p97 = scmp.eq.s32.totalorder %s15, 0
    %p98 = por %p96, %p97
    %s99 = ssub.s32 %s16, %s28
    %s100 = ssub.s32 %s17, %s24
    %s101 = sor.u32 %s99, %s100
    %p102 = scmp.eq.s32.totalorder %s101, 0
    %s104 = sadd.s32 %s103, 1
    %s105 = scalar_select %p102, %s103, %s104
    %p108 = pneg %p102
    %p109 = scmp.eq.s32.totalorder %s9, 1
    %p110 = por %p108, %p109
    %p111 = scmp.ne.s32.totalorder %s103, %s106
    %p112 = scmp.eq.s32.totalorder %s9, 0
    %p113 = por %p111, %p112
    %p114 = scmp.ne.s32.totalorder %s103, %s106
    %p115 = scmp.eq.s32.totalorder %s14, 1
    %p116 = por %p114, %p115
    %p117 = scmp.ne.s32.totalorder %s106, %s107
    %p118 = scmp.eq.s32.totalorder %s14, 0
    %p119 = por %p117, %p118
    %p120 = scmp.ne.s32.totalorder %s106, %s107
    %p121 = scmp.eq.s32.totalorder %s15, 1
    %p122 = por %p120, %p121
    %p124 = scmp.ne.s32.totalorder %s107, %s123
    %p125 = scmp.eq.s32.totalorder %s15, 0
    %p126 = por %p124, %p125
    %p127 = scmp.le.s32.totalorder 1, %s9
    %p128 = scmp.lt.s32.totalorder %s9, 3
    %p129 = pnand %p127, %p128
    %p130 = pneg %p129
    // Predicated region
    $region9: #{sffi_forward.37} parent=5 // pred_check
      _
    $region10: #{sffi_forward.37} parent=5 // pred_check_branch
      %132 = sbr.rel (%p129) target = $region12
    $region11: #{sffi_forward.37} parent=5 // pred_region
      %s133 = ssub.s32 %s9, 1
      // Predicated region
      $region13: #{sffi_forward.37} parent=11 // pred_check
        %p134 = pneg %p70
      $region14: #{sffi_forward.37} parent=11 // pred_check_branch
        %136 = sbr.rel (%p134) target = $region16
      $region15: #{sffi_forward.37} parent=11 // pred_region
        _
      $region16: #{sffi_forward.37} parent=11 // pred_fallthru
        _
      // Predicated region
      $region17: #{sffi_forward.37} parent=11 // pred_check
        %p137 = pneg %p91
      $region18: #{sffi_forward.37} parent=11 // pred_check_branch
        %139 = sbr.rel (%p137) target = $region20
      $region19: #{sffi_forward.37} parent=11 // pred_region
        _
      $region20: #{sffi_forward.37} parent=11 // pred_fallthru
        _
    $region12: #{sffi_forward.37} parent=5 // pred_fallthru
      _
    %p140 = scmp.lt.s32.totalorder %s9, 2
    // Predicated region
    $region21: #{sffi_forward.37} parent=5 // pred_check
      %p141 = pneg %p140
    $region22: #{sffi_forward.37} parent=5 // pred_check_branch
      %143 = sbr.rel (%p141) target = $region24
    $region23: #{sffi_forward.37} parent=5 // pred_region
      // Predicated region
      $region25: #{sffi_forward.37} parent=23 // pred_check
        %p144 = pneg %p43
      $region26: #{sffi_forward.37} parent=23 // pred_check_branch
        %146 = sbr.rel (%p144) target = $region28
      $region27: #{sffi_forward.37} parent=23 // pred_region
        %s147 = smul.u32 32, %s17
        %p148 = scmp.lt.s32.totalorder %s16, 1
        %s149 = scalar_select %p148, %s16, 1
        %p150 = scmp.lt.s32.totalorder %s147, 31
        %s151 = scalar_select %p150, %s147, 31
        %s152 = smul.addr %s149, 32
        %s153 = sadd.s32 %s151, %s152
        %s154 = smul.addr %s153, 4
        %s155 = scalar_lea.vmem %s0, %s154
        %s156 = smul.u32 32, %s17
      $region28: #{sffi_forward.37} parent=23 // pred_fallthru
        _
    $region24: #{sffi_forward.37} parent=5 // pred_fallthru
      _
    %p157 = scmp.le.s32.totalorder 1, %s9
    %p158 = scmp.lt.s32.totalorder %s9, 3
    %p159 = pnand %p157, %p158
    %p160 = pneg %p159
    // Predicated region
    $region29: #{sffi_forward.37} parent=5 // pred_check
      _
    $region30: #{sffi_forward.37} parent=5 // pred_check_branch
      %162 = sbr.rel (%p159) target = $region32
    $region31: #{sffi_forward.37} parent=5 // pred_region
      %s163 = ssub.s32 %s9, 1
      %s164 = smul.u32 32, %s19
      %p165 = scmp.lt.s32.totalorder %s18, 1
      %s166 = scalar_select %p165, %s18, 1
      %p167 = scmp.lt.s32.totalorder %s164, 31
      %s168 = scalar_select %p167, %s164, 31
      %s169 = smul.addr %s166, 32
      %s170 = sadd.s32 %s168, %s169
      %s171 = smul.addr %s170, 4
      %s172 = scalar_lea.vmem %s0, %s171
      %p173 = pneg %p49
      %p174 = pneg %p46
      %p175 = pneg %p70
      %p176 = pneg %p67
      %p177 = pneg %p91
      %p178 = pneg %p88
      %p179 = pneg %p119
      %p180 = pneg %p116
      %s181 = smul.u32 32, %s19
      %p182 = scmp.lt.s32.totalorder %s18, 1
      %s183 = scalar_select %p182, %s18, 1
      %p184 = scmp.lt.s32.totalorder %s181, 31
      %s185 = scalar_select %p184, %s181, 31
      %s186 = smul.addr %s183, 32
      %s187 = sadd.s32 %s185, %s186
      %s188 = smul.addr %s187, 4
      %s189 = scalar_lea.vmem %s3, %s188
      %s190 = smul.u32 32, %s19
      %p191 = scmp.lt.s32.totalorder %s18, 1
      %s192 = scalar_select %p191, %s18, 1
      %p193 = scmp.lt.s32.totalorder %s190, 31
      %s194 = scalar_select %p193, %s190, 31
      %s195 = smul.addr %s192, 32
      %s196 = sadd.s32 %s194, %s195
      %s197 = smul.addr %s196, 4
      %s198 = scalar_lea.vmem %s0, %s197
      %s199 = smul.u32 32, %s19
      %s200 = smul.u32 32, %s19
      %p201 = scmp.lt.s32.totalorder %s18, 1
      %s202 = scalar_select %p201, %s18, 1
      %p203 = scmp.lt.s32.totalorder %s200, 31
      %s204 = scalar_select %p203, %s200, 31
      %s205 = smul.addr %s202, 32
      %s206 = sadd.s32 %s204, %s205
      %s207 = smul.addr %s206, 4
      %s208 = scalar_lea.vmem %s3, %s207
      %s209 = smul.u32 32, %s19
      %v211 = vld [vmem:[%s198] sm:$0xf]
      %v212 = vld [vmem:[%s198 + $0x4] sm:$0xf]
      %v213 = vld [vmem:[%s198 + $0x8] sm:$0xf]
      %v214 = vld [vmem:[%s198 + $0xc] sm:$0xf]
      %v215 = vld [vmem:[%s198 + $0x10] sm:$0xf]
      %v216 = vld [vmem:[%s198 + $0x14] sm:$0xf]
      %v217 = vld [vmem:[%s198 + $0x18] sm:$0xf]
      %v218 = vld [vmem:[%s198 + $0x1c] sm:$0xf]
      %v219 = vld [vmem:[%s198 + $0x20] sm:$0xf]
      %v220 = vld [vmem:[%s198 + $0x24] sm:$0xf]
      %v221 = vld [vmem:[%s198 + $0x28] sm:$0xf]
      %v222 = vld [vmem:[%s198 + $0x2c] sm:$0xf]
      %v223 = vld [vmem:[%s198 + $0x30] sm:$0xf]
      %v224 = vld [vmem:[%s198 + $0x34] sm:$0xf]
      %v225 = vld [vmem:[%s198 + $0x38] sm:$0xf]
      %v226 = vld [vmem:[%s198 + $0x3c] sm:$0xf]
      %v227 = vld [vmem:[%s198 + $0x40] sm:$0xf]
      %v228 = vld [vmem:[%s198 + $0x44] sm:$0xf]
      %v229 = vld [vmem:[%s198 + $0x48] sm:$0xf]
      %v230 = vld [vmem:[%s198 + $0x4c] sm:$0xf]
      %v231 = vld [vmem:[%s198 + $0x50] sm:$0xf]
      %v232 = vld [vmem:[%s198 + $0x54] sm:$0xf]
      %v233 = vld [vmem:[%s198 + $0x58] sm:$0xf]
      %v234 = vld [vmem:[%s198 + $0x5c] sm:$0xf]
      %v235 = vld [vmem:[%s198 + $0x60] sm:$0xf]
      %v236 = vld [vmem:[%s198 + $0x64] sm:$0xf]
      %v237 = vld [vmem:[%s198 + $0x68] sm:$0xf]
      %v238 = vld [vmem:[%s198 + $0x6c] sm:$0xf]
      %v239 = vld [vmem:[%s198 + $0x70] sm:$0xf]
      %v240 = vld [vmem:[%s198 + $0x74] sm:$0xf]
      %v241 = vld [vmem:[%s198 + $0x78] sm:$0xf]
      %v242 = vld [vmem:[%s198 + $0x7c] sm:$0xf]
      %v243 = vld [vmem:[%s1] sm:$0xf]
      %v244 = vld [vmem:[%s2] sm:$0x1]
      %v246 = vlaneseq
      %v247 = vshrl.u32 %v246, 7
      %v248 = vsub.s32 0, %v247
      %v249 = vrot.slane %v244, %v248
      %v283 = vunpack.c.l.b16 %v211
      %v284 = vunpack.c.l.b16 %v212
      %v285 = vunpack.c.l.b16 %v213
      %v286 = vunpack.c.l.b16 %v214
      %v287 = vunpack.c.l.b16 %v215
      %v288 = vunpack.c.l.b16 %v216
      %v289 = vunpack.c.l.b16 %v217
      %v290 = vunpack.c.l.b16 %v218
      %v291 = vunpack.c.l.b16 %v219
      %v292 = vunpack.c.l.b16 %v220
      %v293 = vunpack.c.l.b16 %v221
      %v294 = vunpack.c.l.b16 %v222
      %v295 = vunpack.c.l.b16 %v223
      %v296 = vunpack.c.l.b16 %v224
      %v297 = vunpack.c.l.b16 %v225
      %v298 = vunpack.c.l.b16 %v226
      %v299 = vunpack.c.l.b16 %v227
      %v300 = vunpack.c.l.b16 %v228
      %v301 = vunpack.c.l.b16 %v229
      %v302 = vunpack.c.l.b16 %v230
      %v303 = vunpack.c.l.b16 %v231
      %v304 = vunpack.c.l.b16 %v232
      %v305 = vunpack.c.l.b16 %v233
      %v306 = vunpack.c.l.b16 %v234
      %v307 = vunpack.c.l.b16 %v235
      %v308 = vunpack.c.l.b16 %v236
      %v309 = vunpack.c.l.b16 %v237
      %v310 = vunpack.c.l.b16 %v238
      %v311 = vunpack.c.l.b16 %v239
      %v312 = vunpack.c.l.b16 %v240
      %v313 = vunpack.c.l.b16 %v241
      %v314 = vunpack.c.l.b16 %v242
      %v315 = vpack.c.b16 %v284, %v283
      %v316 = vpack.c.b16 %v286, %v285
      %v317 = vpack.c.b16 %v288, %v287
      %v318 = vpack.c.b16 %v290, %v289
      %v319 = vpack.c.b16 %v292, %v291
      %v320 = vpack.c.b16 %v294, %v293
      %v321 = vpack.c.b16 %v296, %v295
      %v322 = vpack.c.b16 %v298, %v297
      %v323 = vpack.c.b16 %v300, %v299
      %v324 = vpack.c.b16 %v302, %v301
      %v325 = vpack.c.b16 %v304, %v303
      %v326 = vpack.c.b16 %v306, %v305
      %v327 = vpack.c.b16 %v308, %v307
      %v328 = vpack.c.b16 %v310, %v309
      %v329 = vpack.c.b16 %v312, %v311
      %v330 = vpack.c.b16 %v314, %v313
      %vm331 = vcmask 64512
      %v333 = vsel %vm331, %v315, 0
      %v336 = vsel %vm331, %v316, 0
      %v339 = vsel %vm331, %v317, 0
      %v342 = vsel %vm331, %v318, 0
      %v345 = vsel %vm331, %v319, 0
      %v348 = vsel %vm331, %v320, 0
      %v351 = vsel %vm331, %v321, 0
      %v354 = vsel %vm331, %v322, 0
      %v357 = vsel %vm331, %v323, 0
      %v360 = vsel %vm331, %v324, 0
      %v363 = vsel %vm331, %v325, 0
      %v366 = vsel %vm331, %v326, 0
      %v369 = vsel %vm331, %v327, 0
      %v372 = vsel %vm331, %v328, 0
      %v375 = vsel %vm331, %v329, 0
      %v378 = vsel %vm331, %v330, 0
      %vm380 = vcmask 1043456
      %v382 = vsel %vm380, %v243, 0
      %384 = vmatprep.subr.bf16.mxu0 0
      %385 = vmatpush1.bf16.msra.mxu0 %v382
      %386 = vmatprep.subr.bf16.mxu0 0
      %387 = vmatpush1.bf16.msra.mxu0 0
      %388 = vmatprep.subr.bf16.mxu0 0
      %389 = vmatpush1.bf16.msra.mxu0 0
      %390 = vmatprep.subr.bf16.mxu0 0
      %391 = vmatpush1.bf16.msra.mxu0 0
      %392 = vmatprep.subr.bf16.mxu0 0
      %393 = vmatpush1.bf16.msra.mxu0 0
      %394 = vmatprep.subr.bf16.mxu0 0
      %395 = vmatpush1.bf16.msra.mxu0 0
      %396 = vmatprep.subr.bf16.mxu0 0
      %397 = vmatpush1.bf16.msra.mxu0 0
      %398 = vmatprep.subr.bf16.mxu0 0
      %399 = vmatpush1.bf16.msra.mxu0 0
      %400 = vmatprep.subr.bf16.mxu0 0
      %401 = vmatpush1.bf16.msra.mxu0 0
      %402 = vmatprep.subr.bf16.mxu0 0
      %403 = vmatpush1.bf16.msra.mxu0 0
      %404 = vmatprep.subr.bf16.mxu0 0
      %405 = vmatpush1.bf16.msra.mxu0 0
      %406 = vmatprep.subr.bf16.mxu0 0
      %407 = vmatpush1.bf16.msra.mxu0 0
      %408 = vmatprep.subr.bf16.mxu0 0
      %409 = vmatpush1.bf16.msra.mxu0 0
      %410 = vmatprep.subr.bf16.mxu0 0
      %411 = vmatpush1.bf16.msra.mxu0 0
      %412 = vmatprep.subr.bf16.mxu0 0
      %413 = vmatpush1.bf16.msra.mxu0 0
      %414 = vmatprep.subr.bf16.mxu0 0
      %415 = vmatpush1.bf16.msra.mxu0 0
      %416 = vmatprep.mubr.bf16.mxu0 0
      %417 = vmatmul.mubr.bf16.gmra.mrb[0].mxu0 %v333
      %v418 = vpop.f32.mrb[0].mxu0
      %v419 = vadd.f32 %v249, %v418
      %v420 = vpop.f32.mrb[0].mxu0
      %v421 = vpop.f32.mrb[0].mxu0
      %v422 = vadd.f32 %v249, %v421
      %v423 = vpop.f32.mrb[0].mxu0
      %424 = vmatprep.mubr.bf16.mxu0 0
      %425 = vmatmul.mubr.bf16.gmra.mrb[0].mxu0 %v336
      %v426 = vpop.f32.mrb[0].mxu0
      %v427 = vadd.f32 %v249, %v426
      %v428 = vpop.f32.mrb[0].mxu0
      %v429 = vpop.f32.mrb[0].mxu0
      %v430 = vadd.f32 %v249, %v429
      %v431 = vpop.f32.mrb[0].mxu0
      %432 = vmatprep.mubr.bf16.mxu0 0
      %433 = vmatmul.mubr.bf16.gmra.mrb[0].mxu0 %v339
      %v434 = vpop.f32.mrb[0].mxu0
      %v435 = vadd.f32 %v249, %v434
      %v436 = vpop.f32.mrb[0].mxu0
      %v437 = vpop.f32.mrb[0].mxu0
      %v438 = vadd.f32 %v249, %v437
      %v439 = vpop.f32.mrb[0].mxu0
      %440 = vmatprep.mubr.bf16.mxu0 0
      %441 = vmatmul.mubr.bf16.gmra.mrb[0].mxu0 %v342
      %v442 = vpop.f32.mrb[0].mxu0
      %v443 = vadd.f32 %v249, %v442
      %v444 = vpop.f32.mrb[0].mxu0
      %v445 = vpop.f32.mrb[0].mxu0
      %v446 = vadd.f32 %v249, %v445
      %v447 = vpop.f32.mrb[0].mxu0
      %448 = vmatprep.mubr.bf16.mxu0 0
      %449 = vmatmul.mubr.bf16.gmra.mrb[0].mxu0 %v345
      %v450 = vpop.f32.mrb[0].mxu0
      %v451 = vadd.f32 %v249, %v450
      %v452 = vpop.f32.mrb[0].mxu0
      %v453 = vpop.f32.mrb[0].mxu0
      %v454 = vadd.f32 %v249, %v453
      %v455 = vpop.f32.mrb[0].mxu0
      %456 = vmatprep.mubr.bf16.mxu0 0
      %457 = vmatmul.mubr.bf16.gmra.mrb[0].mxu0 %v348
      %v458 = vpop.f32.mrb[0].mxu0
      %v459 = vadd.f32 %v249, %v458
      %v460 = vpop.f32.mrb[0].mxu0
      %v461 = vpop.f32.mrb[0].mxu0
      %v462 = vadd.f32 %v249, %v461
      %v463 = vpop.f32.mrb[0].mxu0
      %464 = vmatprep.mubr.bf16.mxu0 0
      %465 = vmatmul.mubr.bf16.gmra.mrb[0].mxu0 %v351
      %v466 = vpop.f32.mrb[0].mxu0
      %v467 = vadd.f32 %v249, %v466
      %v468 = vpop.f32.mrb[0].mxu0
      %v469 = vpop.f32.mrb[0].mxu0
      %v470 = vadd.f32 %v249, %v469
      %v471 = vpop.f32.mrb[0].mxu0
      %472 = vmatprep.mubr.bf16.mxu0 0
      %473 = vmatmul.mubr.bf16.gmra.mrb[0].mxu0 %v354
      %v474 = vpop.f32.mrb[0].mxu0
      %v475 = vadd.f32 %v249, %v474
      %v476 = vpop.f32.mrb[0].mxu0
      %v477 = vpop.f32.mrb[0].mxu0
      %v478 = vadd.f32 %v249, %v477
      %v479 = vpop.f32.mrb[0].mxu0
      %480 = vmatprep.mubr.bf16.mxu0 0
      %481 = vmatmul.mubr.bf16.gmra.mrb[0].mxu0 %v357
      %v482 = vpop.f32.mrb[0].mxu0
      %v483 = vadd.f32 %v249, %v482
      %v484 = vpop.f32.mrb[0].mxu0
      %v485 = vpop.f32.mrb[0].mxu0
      %v486 = vadd.f32 %v249, %v485
      %v487 = vpop.f32.mrb[0].mxu0
      %488 = vmatprep.mubr.bf16.mxu0 0
      %489 = vmatmul.mubr.bf16.gmra.mrb[0].mxu0 %v360
      %v490 = vpop.f32.mrb[0].mxu0
      %v491 = vadd.f32 %v249, %v490
      %v492 = vpop.f32.mrb[0].mxu0
      %v493 = vpop.f32.mrb[0].mxu0
      %v494 = vadd.f32 %v249, %v493
      %v495 = vpop.f32.mrb[0].mxu0
      %496 = vmatprep.mubr.bf16.mxu0 0
      %497 = vmatmul.mubr.bf16.gmra.mrb[0].mxu0 %v363
      %v498 = vpop.f32.mrb[0].mxu0
      %v499 = vadd.f32 %v249, %v498
      %v500 = vpop.f32.mrb[0].mxu0
      %v501 = vpop.f32.mrb[0].mxu0
      %v502 = vadd.f32 %v249, %v501
      %v503 = vpop.f32.mrb[0].mxu0
      %504 = vmatprep.mubr.bf16.mxu0 0
      %505 = vmatmul.mubr.bf16.gmra.mrb[0].mxu0 %v366
      %v506 = vpop.f32.mrb[0].mxu0
      %v507 = vadd.f32 %v249, %v506
      %v508 = vpop.f32.mrb[0].mxu0
      %v509 = vpop.f32.mrb[0].mxu0
      %v510 = vadd.f32 %v249, %v509
      %v511 = vpop.f32.mrb[0].mxu0
      %512 = vmatprep.mubr.bf16.mxu0 0
      %513 = vmatmul.mubr.bf16.gmra.mrb[0].mxu0 %v369
      %v514 = vpop.f32.mrb[0].mxu0
      %v515 = vadd.f32 %v249, %v514
      %v516 = vpop.f32.mrb[0].mxu0
      %v517 = vpop.f32.mrb[0].mxu0
      %v518 = vadd.f32 %v249, %v517
      %v519 = vpop.f32.mrb[0].mxu0
      %520 = vmatprep.mubr.bf16.mxu0 0
      %521 = vmatmul.mubr.bf16.gmra.mrb[0].mxu0 %v372
      %v522 = vpop.f32.mrb[0].mxu0
      %v523 = vadd.f32 %v249, %v522
      %v524 = vpop.f32.mrb[0].mxu0
      %v525 = vpop.f32.mrb[0].mxu0
      %v526 = vadd.f32 %v249, %v525
      %v527 = vpop.f32.mrb[0].mxu0
      %528 = vmatprep.mubr.bf16.mxu0 0
      %529 = vmatmul.mubr.bf16.gmra.mrb[0].mxu0 %v375
      %v530 = vpop.f32.mrb[0].mxu0
      %v531 = vadd.f32 %v249, %v530
      %v532 = vpop.f32.mrb[0].mxu0
      %v533 = vpop.f32.mrb[0].mxu0
      %v534 = vadd.f32 %v249, %v533
      %v535 = vpop.f32.mrb[0].mxu0
      %536 = vmatprep.mubr.bf16.mxu0 0
      %537 = vmatmul.mubr.bf16.gmra.mrb[0].mxu0 %v378
      %v538 = vpop.f32.mrb[0].mxu0
      %v539 = vadd.f32 %v249, %v538
      %v540 = vpop.f32.mrb[0].mxu0
      %v541 = vpop.f32.mrb[0].mxu0
      %v542 = vadd.f32 %v249, %v541
      %v543 = vpop.f32.mrb[0].mxu0
      %544 = vdwg.mxu0
      %v545 = vpack.c.bf16 %v422, %v419
      %v546 = vpack.c.bf16 %v430, %v427
      %v547 = vpack.c.bf16 %v438, %v435
      %v548 = vpack.c.bf16 %v446, %v443
      %v549 = vpack.c.bf16 %v454, %v451
      %v550 = vpack.c.bf16 %v462, %v459
      %v551 = vpack.c.bf16 %v470, %v467
      %v552 = vpack.c.bf16 %v478, %v475
      %v553 = vpack.c.bf16 %v486, %v483
      %v554 = vpack.c.bf16 %v494, %v491
      %v555 = vpack.c.bf16 %v502, %v499
      %v556 = vpack.c.bf16 %v510, %v507
      %v557 = vpack.c.bf16 %v518, %v515
      %v558 = vpack.c.bf16 %v526, %v523
      %v559 = vpack.c.bf16 %v534, %v531
      %v560 = vpack.c.bf16 %v542, %v539
      %v577 = vunpack.c.l.b16 %v545
      %v578 = vunpack.c.h.b16 %v545
      %v579 = vunpack.c.l.b16 %v546
      %v580 = vunpack.c.h.b16 %v546
      %v581 = vunpack.c.l.b16 %v547
      %v582 = vunpack.c.h.b16 %v547
      %v583 = vunpack.c.l.b16 %v548
      %v584 = vunpack.c.h.b16 %v548
      %v585 = vunpack.c.l.b16 %v549
      %v586 = vunpack.c.h.b16 %v549
      %v587 = vunpack.c.l.b16 %v550
      %v588 = vunpack.c.h.b16 %v550
      %v589 = vunpack.c.l.b16 %v551
      %v590 = vunpack.c.h.b16 %v551
      %v591 = vunpack.c.l.b16 %v552
      %v592 = vunpack.c.h.b16 %v552
      %v593 = vunpack.c.l.b16 %v553
      %v594 = vunpack.c.h.b16 %v553
      %v595 = vunpack.c.l.b16 %v554
      %v596 = vunpack.c.h.b16 %v554
      %v597 = vunpack.c.l.b16 %v555
      %v598 = vunpack.c.h.b16 %v555
      %v599 = vunpack.c.l.b16 %v556
      %v600 = vunpack.c.h.b16 %v556
      %v601 = vunpack.c.l.b16 %v557
      %v602 = vunpack.c.h.b16 %v557
      %v603 = vunpack.c.l.b16 %v558
      %v604 = vunpack.c.h.b16 %v558
      %v605 = vunpack.c.l.b16 %v559
      %v606 = vunpack.c.h.b16 %v559
      %v607 = vunpack.c.l.b16 %v560
      %v608 = vunpack.c.h.b16 %v560
      %v609 = vpack.c.b16 %v577, %v577
      %v610 = vpack.c.b16 %v578, %v578
      %v611 = vpack.c.b16 %v579, %v579
      %v612 = vpack.c.b16 %v580, %v580
      %v613 = vpack.c.b16 %v581, %v581
      %v614 = vpack.c.b16 %v582, %v582
      %v615 = vpack.c.b16 %v583, %v583
      %v616 = vpack.c.b16 %v584, %v584
      %v617 = vpack.c.b16 %v585, %v585
      %v618 = vpack.c.b16 %v586, %v586
      %v619 = vpack.c.b16 %v587, %v587
      %v620 = vpack.c.b16 %v588, %v588
      %v621 = vpack.c.b16 %v589, %v589
      %v622 = vpack.c.b16 %v590, %v590
      %v623 = vpack.c.b16 %v591, %v591
      %v624 = vpack.c.b16 %v592, %v592
      %v625 = vpack.c.b16 %v593, %v593
      %v626 = vpack.c.b16 %v594, %v594
      %v627 = vpack.c.b16 %v595, %v595
      %v628 = vpack.c.b16 %v596, %v596
      %v629 = vpack.c.b16 %v597, %v597
      %v630 = vpack.c.b16 %v598, %v598
      %v631 = vpack.c.b16 %v599, %v599
      %v632 = vpack.c.b16 %v600, %v600
      %v633 = vpack.c.b16 %v601, %v601
      %v634 = vpack.c.b16 %v602, %v602
      %v635 = vpack.c.b16 %v603, %v603
      %v636 = vpack.c.b16 %v604, %v604
      %v637 = vpack.c.b16 %v605, %v605
      %v638 = vpack.c.b16 %v606, %v606
      %v639 = vpack.c.b16 %v607, %v607
      %v640 = vpack.c.b16 %v608, %v608
      %vm673 = vcmask 257024
      %674 = vst.msk [vmem:[%s208] sm:$0xf] %vm673, %v609
      %675 = vst.msk [vmem:[%s208 + $0x4] sm:$0xf] %vm673, %v610
      %676 = vst.msk [vmem:[%s208 + $0x8] sm:$0xf] %vm673, %v611
      %677 = vst.msk [vmem:[%s208 + $0xc] sm:$0xf] %vm673, %v612
      %678 = vst.msk [vmem:[%s208 + $0x10] sm:$0xf] %vm673, %v613
      %679 = vst.msk [vmem:[%s208 + $0x14] sm:$0xf] %vm673, %v614
      %680 = vst.msk [vmem:[%s208 + $0x18] sm:$0xf] %vm673, %v615
      %681 = vst.msk [vmem:[%s208 + $0x1c] sm:$0xf] %vm673, %v616
      %682 = vst.msk [vmem:[%s208 + $0x20] sm:$0xf] %vm673, %v617
      %683 = vst.msk [vmem:[%s208 + $0x24] sm:$0xf] %vm673, %v618
      %684 = vst.msk [vmem:[%s208 + $0x28] sm:$0xf] %vm673, %v619
      %685 = vst.msk [vmem:[%s208 + $0x2c] sm:$0xf] %vm673, %v620
      %686 = vst.msk [vmem:[%s208 + $0x30] sm:$0xf] %vm673, %v621
      %687 = vst.msk [vmem:[%s208 + $0x34] sm:$0xf] %vm673, %v622
      %688 = vst.msk [vmem:[%s208 + $0x38] sm:$0xf] %vm673, %v623
      %689 = vst.msk [vmem:[%s208 + $0x3c] sm:$0xf] %vm673, %v624
      %690 = vst.msk [vmem:[%s208 + $0x40] sm:$0xf] %vm673, %v625
      %691 = vst.msk [vmem:[%s208 + $0x44] sm:$0xf] %vm673, %v626
      %692 = vst.msk [vmem:[%s208 + $0x48] sm:$0xf] %vm673, %v627
      %693 = vst.msk [vmem:[%s208 + $0x4c] sm:$0xf] %vm673, %v628
      %694 = vst.msk [vmem:[%s208 + $0x50] sm:$0xf] %vm673, %v629
      %695 = vst.msk [vmem:[%s208 + $0x54] sm:$0xf] %vm673, %v630
      %696 = vst.msk [vmem:[%s208 + $0x58] sm:$0xf] %vm673, %v631
      %697 = vst.msk [vmem:[%s208 + $0x5c] sm:$0xf] %vm673, %v632
      %698 = vst.msk [vmem:[%s208 + $0x60] sm:$0xf] %vm673, %v633
      %699 = vst.msk [vmem:[%s208 + $0x64] sm:$0xf] %vm673, %v634
      %700 = vst.msk [vmem:[%s208 + $0x68] sm:$0xf] %vm673, %v635
      %701 = vst.msk [vmem:[%s208 + $0x6c] sm:$0xf] %vm673, %v636
      %702 = vst.msk [vmem:[%s208 + $0x70] sm:$0xf] %vm673, %v637
      %703 = vst.msk [vmem:[%s208 + $0x74] sm:$0xf] %vm673, %v638
      %704 = vst.msk [vmem:[%s208 + $0x78] sm:$0xf] %vm673, %v639
      %705 = vst.msk [vmem:[%s208 + $0x7c] sm:$0xf] %vm673, %v640
      %s706 = smul.u32 32, %s19
      %p707 = scmp.lt.s32.totalorder %s18, 1
      %s708 = scalar_select %p707, %s18, 1
      %p709 = scmp.lt.s32.totalorder %s706, 31
      %s710 = scalar_select %p709, %s706, 31
      %s711 = smul.addr %s708, 32
      %s712 = sadd.s32 %s710, %s711
      %s713 = smul.addr %s712, 4
      %s714 = scalar_lea.vmem %s3, %s713
      // Predicated region
      $region33: #{sffi_forward.37} parent=31 // pred_check
        %p715 = pneg %p116
      $region34: #{sffi_forward.37} parent=31 // pred_check_branch
        %717 = sbr.rel (%p715) target = $region36
      $region35: #{sffi_forward.37} parent=31 // pred_region
        %s718 = smul.u32 32, %s19
      $region36: #{sffi_forward.37} parent=31 // pred_fallthru
        _
    $region32: #{sffi_forward.37} parent=5 // pred_fallthru
      _
    %p719 = scmp.le.s32.totalorder 2, %s9
    // Predicated region
    $region37: #{sffi_forward.37} parent=5 // pred_check
      %p720 = pneg %p719
    $region38: #{sffi_forward.37} parent=5 // pred_check_branch
      %722 = sbr.rel (%p720) target = $region40
    $region39: #{sffi_forward.37} parent=5 // pred_region
      %s723 = ssub.s32 %s9, 2
      // Predicated region
      $region41: #{sffi_forward.37} parent=39 // pred_check
        %p724 = pneg %p122
      $region42: #{sffi_forward.37} parent=39 // pred_check_branch
        %726 = sbr.rel (%p724) target = $region44
      $region43: #{sffi_forward.37} parent=39 // pred_region
        %s727 = smul.u32 32, %s21
        %p728 = scmp.lt.s32.totalorder %s20, 1
        %s729 = scalar_select %p728, %s20, 1
        %p730 = scmp.lt.s32.totalorder %s727, 31
        %s731 = scalar_select %p730, %s727, 31
        %s732 = smul.addr %s729, 32
        %s733 = sadd.s32 %s731, %s732
        %s734 = smul.addr %s733, 4
        %s735 = scalar_lea.vmem %s3, %s734
      $region44: #{sffi_forward.37} parent=39 // pred_fallthru
        _
    $region40: #{sffi_forward.37} parent=5 // pred_fallthru
      _
  $region6: #{sffi_forward.37} parent=0 // loop_footer
    %s13 = sadd.s32 1, %s9
  $region7: #{sffi_forward.37} parent=0 // loop_footer_branch
    %8 = sbr.rel target = $region3
  $region8: #{sffi_forward.37} parent=0 // loop_exit
    _

// kernel: sffi_forward.38
$region0: #{sffi_forward.38}
  #allocation0 [shape = 'u32[]', space=smem, size = 0x4, offset = 0x4, fixed_abs, tag = 'smem constant byte address 0x4 - core index']
  #allocation1 [shape = 'u32[144,128]{1,0:T(1,128)}', space=vmem, size = 0x12000, scoped, tag = 'internal scratch']
  %s0 = inlined_call_operand.vmem [shape: bf16[2,1,288,96], index: 0, kind: input, shape index: {}]
  %s1 = inlined_call_operand.vmem [shape: bf16[3,96,32], index: 1, kind: input, shape index: {}]
  %s2 = inlined_call_operand.vmem [shape: f32[1,32], index: 2, kind: input, shape index: {}]
  %s3 = inlined_call_operand.vmem [shape: bf16[2,1,256,32], index: 3, kind: output, shape index: {}]
  %s4 = sld [smem:[#allocation0]]
  $region45: #{sffi_forward.38} parent=0
    _
  %s6 = ssub.s32 1, %s4
  %s7 = scalar_select 0, %s6, %s4
  loop: start=0, step=1, limit=4
  $region2: #{sffi_forward.38} parent=0 // loop_pre_header
    _
  $region3: #{sffi_forward.38} parent=0 // loop_header
    %s9 = sphi 0, %s13
    %p10 = scmp.ge.s32.totalorder %s9, 4
    %s16 = sphi 0, %s28
    %s17 = sphi 0, %s24
    %s18 = sphi 0, %s16
    %s19 = sphi 0, %s17
    %s20 = sphi 0, %s18
    %s21 = sphi 0, %s19
    %s33 = sphi 0, %s35
    %s36 = sphi 0, %s33
    %s37 = sphi 0, %s36
    %s53 = sphi 0, %s37
    %s57 = sphi 0, %s57
    %s59 = sphi 0, %s57
    %s60 = sphi 0, %s59
    %s74 = sphi 0, %s60
    %s78 = sphi 0, %s78
    %s80 = sphi 0, %s78
    %s81 = sphi 0, %s80
    %s95 = sphi 0, %s81
    %s103 = sphi 0, %s105
    %s106 = sphi 0, %s103
    %s107 = sphi 0, %s106
    %s123 = sphi 0, %s107
  $region4: #{sffi_forward.38} parent=0 // loop_header_branch
    %12 = sbr.rel (%p10) target = $region8
  $region5: #{sffi_forward.38} parent=0 // loop_body
    %s14 = ssub.s32 %s9, 1
    %s15 = ssub.s32 %s9, 2
    %s22 = sadd.s32 1, %s17
    %p23 = scmp.ge.s32.totalorder %s22, 1
    %s24 = scalar_select %p23, 0, %s22
    %s25 = sadd.s32 1, %s16
    %s26 = scalar_select %p23, %s25, %s16
    %p27 = scmp.ge.s32.totalorder %s26, 2
    %s28 = scalar_select %p27, 0, %s26
    %s29 = ssub.s32 %s16, %s28
    %s30 = ssub.s32 %s17, %s24
    %s31 = sor.u32 %s29, %s30
    %p32 = scmp.eq.s32.totalorder %s31, 0
    %s34 = sadd.s32 %s33, 1
    %s35 = scalar_select %p32, %s33, %s34
    %p38 = pneg %p32
    %p39 = scmp.eq.s32.totalorder %s9, 1
    %p40 = por %p38, %p39
    %p41 = scmp.ne.s32.totalorder %s33, %s36
    %p42 = scmp.eq.s32.totalorder %s9, 0
    %p43 = por %p41, %p42
    %p44 = scmp.ne.s32.totalorder %s33, %s36
    %p45 = scmp.eq.s32.totalorder %s14, 1
    %p46 = por %p44, %p45
    %p47 = scmp.ne.s32.totalorder %s36, %s37
    %p48 = scmp.eq.s32.totalorder %s14, 0
    %p49 = por %p47, %p48
    %p50 = scmp.ne.s32.totalorder %s36, %s37
    %p51 = scmp.eq.s32.totalorder %s15, 1
    %p52 = por %p50, %p51
    %p54 = scmp.ne.s32.totalorder %s37, %s53
    %p55 = scmp.eq.s32.totalorder %s15, 0
    %p56 = por %p54, %p55
    %s58 = sadd.s32 %s57, 1
    %p61 = scmp.eq.s32.totalorder %s9, 1
    %p62 = scmp.ne.s32.totalorder %s57, %s59
    %p63 = scmp.eq.s32.totalorder %s9, 0
    %p64 = por %p62, %p63
    %p65 = scmp.ne.s32.totalorder %s57, %s59
    %p66 = scmp.eq.s32.totalorder %s14, 1
    %p67 = por %p65, %p66
    %p68 = scmp.ne.s32.totalorder %s59, %s60
    %p69 = scmp.eq.s32.totalorder %s14, 0
    %p70 = por %p68, %p69
    %p71 = scmp.ne.s32.totalorder %s59, %s60
    %p72 = scmp.eq.s32.totalorder %s15, 1
    %p73 = por %p71, %p72
    %p75 = scmp.ne.s32.totalorder %s60, %s74
    %p76 = scmp.eq.s32.totalorder %s15, 0
    %p77 = por %p75, %p76
    %s79 = sadd.s32 %s78, 1
    %p82 = scmp.eq.s32.totalorder %s9, 1
    %p83 = scmp.ne.s32.totalorder %s78, %s80
    %p84 = scmp.eq.s32.totalorder %s9, 0
    %p85 = por %p83, %p84
    %p86 = scmp.ne.s32.totalorder %s78, %s80
    %p87 = scmp.eq.s32.totalorder %s14, 1
    %p88 = por %p86, %p87
    %p89 = scmp.ne.s32.totalorder %s80, %s81
    %p90 = scmp.eq.s32.totalorder %s14, 0
    %p91 = por %p89, %p90
    %p92 = scmp.ne.s32.totalorder %s80, %s81
    %p93 = scmp.eq.s32.totalorder %s15, 1
    %p94 = por %p92, %p93
    %p96 = scmp.ne.s32.totalorder %s81, %s95
    %p97 = scmp.eq.s32.totalorder %s15, 0
    %p98 = por %p96, %p97
    %s99 = ssub.s32 %s16, %s28
    %s100 = ssub.s32 %s17, %s24
    %s101 = sor.u32 %s99, %s100
    %p102 = scmp.eq.s32.totalorder %s101, 0
    %s104 = sadd.s32 %s103, 1
    %s105 = scalar_select %p102, %s103, %s104
    %p108 = pneg %p102
    %p109 = scmp.eq.s32.totalorder %s9, 1
    %p110 = por %p108, %p109
    %p111 = scmp.ne.s32.totalorder %s103, %s106
    %p112 = scmp.eq.s32.totalorder %s9, 0
    %p113 = por %p111, %p112
    %p114 = scmp.ne.s32.totalorder %s103, %s106
    %p115 = scmp.eq.s32.totalorder %s14, 1
    %p116 = por %p114, %p115
    %p117 = scmp.ne.s32.totalorder %s106, %s107
    %p118 = scmp.eq.s32.totalorder %s14, 0
    %p119 = por %p117, %p118
    %p120 = scmp.ne.s32.totalorder %s106, %s107
    %p121 = scmp.eq.s32.totalorder %s15, 1
    %p122 = por %p120, %p121
    %p124 = scmp.ne.s32.totalorder %s107, %s123
    %p125 = scmp.eq.s32.totalorder %s15, 0
    %p126 = por %p124, %p125
    %p127 = scmp.le.s32.totalorder 1, %s9
    %p128 = scmp.lt.s32.totalorder %s9, 3
    %p129 = pnand %p127, %p128
    %p130 = pneg %p129
    // Predicated region
    $region9: #{sffi_forward.38} parent=5 // pred_check
      _
    $region10: #{sffi_forward.38} parent=5 // pred_check_branch
      %132 = sbr.rel (%p129) target = $region12
    $region11: #{sffi_forward.38} parent=5 // pred_region
      %s133 = ssub.s32 %s9, 1
      // Predicated region
      $region13: #{sffi_forward.38} parent=11 // pred_check
        %p134 = pneg %p70
      $region14: #{sffi_forward.38} parent=11 // pred_check_branch
        %136 = sbr.rel (%p134) target = $region16
      $region15: #{sffi_forward.38} parent=11 // pred_region
        _
      $region16: #{sffi_forward.38} parent=11 // pred_fallthru
        _
      // Predicated region
      $region17: #{sffi_forward.38} parent=11 // pred_check
        %p137 = pneg %p91
      $region18: #{sffi_forward.38} parent=11 // pred_check_branch
        %139 = sbr.rel (%p137) target = $region20
      $region19: #{sffi_forward.38} parent=11 // pred_region
        _
      $region20: #{sffi_forward.38} parent=11 // pred_fallthru
        _
    $region12: #{sffi_forward.38} parent=5 // pred_fallthru
      _
    %p140 = scmp.lt.s32.totalorder %s9, 2
    // Predicated region
    $region21: #{sffi_forward.38} parent=5 // pred_check
      %p141 = pneg %p140
    $region22: #{sffi_forward.38} parent=5 // pred_check_branch
      %143 = sbr.rel (%p141) target = $region24
    $region23: #{sffi_forward.38} parent=5 // pred_region
      // Predicated region
      $region25: #{sffi_forward.38} parent=23 // pred_check
        %p144 = pneg %p43
      $region26: #{sffi_forward.38} parent=23 // pred_check_branch
        %146 = sbr.rel (%p144) target = $region28
      $region27: #{sffi_forward.38} parent=23 // pred_region
        %p147 = scmp.lt.s32.totalorder %s16, 1
        %s148 = scalar_select %p147, %s16, 1
        %p149 = scmp.lt.s32.totalorder %s17, 0
        %s150 = scalar_select %p149, %s17, 0
        %s151 = smul.addr %s150, 36
        %s152 = smul.addr %s148, 36
        %s153 = sadd.s32 %s151, %s152
        %s154 = smul.addr %s153, 4
        %s155 = scalar_lea.vmem %s0, %s154
      $region28: #{sffi_forward.38} parent=23 // pred_fallthru
        _
    $region24: #{sffi_forward.38} parent=5 // pred_fallthru
      _
    %p156 = scmp.le.s32.totalorder 1, %s9
    %p157 = scmp.lt.s32.totalorder %s9, 3
    %p158 = pnand %p156, %p157
    %p159 = pneg %p158
    // Predicated region
    $region29: #{sffi_forward.38} parent=5 // pred_check
      _
    $region30: #{sffi_forward.38} parent=5 // pred_check_branch
      %161 = sbr.rel (%p158) target = $region32
    $region31: #{sffi_forward.38} parent=5 // pred_region
      %s162 = ssub.s32 %s9, 1
      %p163 = scmp.lt.s32.totalorder %s18, 1
      %s164 = scalar_select %p163, %s18, 1
      %p165 = scmp.lt.s32.totalorder %s19, 0
      %s166 = scalar_select %p165, %s19, 0
      %s167 = smul.addr %s166, 36
      %s168 = smul.addr %s164, 36
      %s169 = sadd.s32 %s167, %s168
      %s170 = smul.addr %s169, 4
      %s171 = scalar_lea.vmem %s0, %s170
      %p172 = pneg %p49
      %p173 = pneg %p46
      %p174 = pneg %p70
      %p175 = pneg %p67
      %p176 = pneg %p91
      %p177 = pneg %p88
      %p178 = pneg %p119
      %p179 = pneg %p116
      %p180 = scmp.lt.s32.totalorder %s18, 1
      %s181 = scalar_select %p180, %s18, 1
      %p182 = scmp.lt.s32.totalorder %s19, 0
      %s183 = scalar_select %p182, %s19, 0
      %s184 = smul.addr %s183, 32
      %s185 = smul.addr %s181, 32
      %s186 = sadd.s32 %s184, %s185
      %s187 = smul.addr %s186, 4
      %s188 = scalar_lea.vmem %s3, %s187
      %p189 = scmp.lt.s32.totalorder %s18, 1
      %s190 = scalar_select %p189, %s18, 1
      %p191 = scmp.lt.s32.totalorder %s19, 0
      %s192 = scalar_select %p191, %s19, 0
      %s193 = smul.addr %s192, 36
      %s194 = smul.addr %s190, 36
      %s195 = sadd.s32 %s193, %s194
      %s196 = smul.addr %s195, 4
      %s197 = scalar_lea.vmem %s0, %s196
      %p198 = scmp.lt.s32.totalorder %s18, 1
      %s199 = scalar_select %p198, %s18, 1
      %p200 = scmp.lt.s32.totalorder %s19, 0
      %s201 = scalar_select %p200, %s19, 0
      %s202 = smul.addr %s201, 32
      %s203 = smul.addr %s199, 32
      %s204 = sadd.s32 %s202, %s203
      %s205 = smul.addr %s204, 4
      %s206 = scalar_lea.vmem %s3, %s205
      %v208 = vld [vmem:[%s197] sm:$0xf]
      %v209 = vld [vmem:[%s197 + $0x4] sm:$0xf]
      %v210 = vld [vmem:[%s197 + $0x8] sm:$0xf]
      %v211 = vld [vmem:[%s197 + $0xc] sm:$0xf]
      %v212 = vld [vmem:[%s197 + $0x10] sm:$0xf]
      %v213 = vld [vmem:[%s197 + $0x14] sm:$0xf]
      %v214 = vld [vmem:[%s197 + $0x18] sm:$0xf]
      %v215 = vld [vmem:[%s197 + $0x1c] sm:$0xf]
      %v216 = vld [vmem:[%s197 + $0x20] sm:$0xf]
      %v217 = vld [vmem:[%s197 + $0x24] sm:$0xf]
      %v218 = vld [vmem:[%s197 + $0x28] sm:$0xf]
      %v219 = vld [vmem:[%s197 + $0x2c] sm:$0xf]
      %v220 = vld [vmem:[%s197 + $0x30] sm:$0xf]
      %v221 = vld [vmem:[%s197 + $0x34] sm:$0xf]
      %v222 = vld [vmem:[%s197 + $0x38] sm:$0xf]
      %v223 = vld [vmem:[%s197 + $0x3c] sm:$0xf]
      %v224 = vld [vmem:[%s197 + $0x40] sm:$0xf]
      %v225 = vld [vmem:[%s197 + $0x44] sm:$0xf]
      %v226 = vld [vmem:[%s197 + $0x48] sm:$0xf]
      %v227 = vld [vmem:[%s197 + $0x4c] sm:$0xf]
      %v228 = vld [vmem:[%s197 + $0x50] sm:$0xf]
      %v229 = vld [vmem:[%s197 + $0x54] sm:$0xf]
      %v230 = vld [vmem:[%s197 + $0x58] sm:$0xf]
      %v231 = vld [vmem:[%s197 + $0x5c] sm:$0xf]
      %v232 = vld [vmem:[%s197 + $0x60] sm:$0xf]
      %v233 = vld [vmem:[%s197 + $0x64] sm:$0xf]
      %v234 = vld [vmem:[%s197 + $0x68] sm:$0xf]
      %v235 = vld [vmem:[%s197 + $0x6c] sm:$0xf]
      %v236 = vld [vmem:[%s197 + $0x70] sm:$0xf]
      %v237 = vld [vmem:[%s197 + $0x74] sm:$0xf]
      %v238 = vld [vmem:[%s197 + $0x78] sm:$0xf]
      %v239 = vld [vmem:[%s197 + $0x7c] sm:$0xf]
      %v240 = vld [vmem:[%s1] sm:$0xf]
      %v241 = vld [vmem:[%s1 + $0x4] sm:$0xf]
      %v242 = vld [vmem:[%s1 + $0x8] sm:$0xf]
      %v243 = vld [vmem:[%s1 + $0xc] sm:$0xf]
      %v244 = vld [vmem:[%s1 + $0x10] sm:$0xf]
      %v245 = vld [vmem:[%s1 + $0x14] sm:$0xf]
      %v246 = vld [vmem:[%s1 + $0x18] sm:$0xf]
      %v247 = vld [vmem:[%s1 + $0x1c] sm:$0xf]
      %v248 = vld [vmem:[%s1 + $0x20] sm:$0xf]
      %v249 = vld [vmem:[%s1 + $0x24] sm:$0xf]
      %v250 = vld [vmem:[%s1 + $0x28] sm:$0xf]
      %v251 = vld [vmem:[%s1 + $0x2c] sm:$0xf]
      %v252 = vld [vmem:[%s197 + $0x80] sm:$0xf]
      %v253 = vld [vmem:[%s197 + $0x84] sm:$0xf]
      %s254 = scalar_lea.vmem %s1, 48
      %v255 = vld [vmem:[%s254] sm:$0xf]
      %v256 = vld [vmem:[%s254 + $0x4] sm:$0xf]
      %v257 = vld [vmem:[%s254 + $0x8] sm:$0xf]
      %v258 = vld [vmem:[%s254 + $0xc] sm:$0xf]
      %v259 = vld [vmem:[%s254 + $0x10] sm:$0xf]
      %v260 = vld [vmem:[%s254 + $0x14] sm:$0xf]
      %v261 = vld [vmem:[%s254 + $0x18] sm:$0xf]
      %v262 = vld [vmem:[%s254 + $0x1c] sm:$0xf]
      %v263 = vld [vmem:[%s254 + $0x20] sm:$0xf]
      %v264 = vld [vmem:[%s254 + $0x24] sm:$0xf]
      %v265 = vld [vmem:[%s254 + $0x28] sm:$0xf]
      %v266 = vld [vmem:[%s254 + $0x2c] sm:$0xf]
      %v299 = vunpack.c.l.b16 %v210
      %v300 = vunpack.c.l.b16 %v211
      %v301 = vunpack.c.l.b16 %v212
      %v302 = vunpack.c.l.b16 %v213
      %v303 = vunpack.c.l.b16 %v214
      %v304 = vunpack.c.l.b16 %v215
      %v305 = vunpack.c.l.b16 %v216
      %v306 = vunpack.c.l.b16 %v217
      %v307 = vunpack.c.l.b16 %v218
      %v308 = vunpack.c.l.b16 %v219
      %v309 = vunpack.c.l.b16 %v220
      %v310 = vunpack.c.l.b16 %v221
      %v311 = vunpack.c.l.b16 %v222
      %v312 = vunpack.c.l.b16 %v223
      %v313 = vunpack.c.l.b16 %v224
      %v314 = vunpack.c.l.b16 %v225
      %v315 = vunpack.c.l.b16 %v226
      %v316 = vunpack.c.l.b16 %v227
      %v317 = vunpack.c.l.b16 %v228
      %v318 = vunpack.c.l.b16 %v229
      %v319 = vunpack.c.l.b16 %v230
      %v320 = vunpack.c.l.b16 %v231
      %v321 = vunpack.c.l.b16 %v232
      %v322 = vunpack.c.l.b16 %v233
      %v323 = vunpack.c.l.b16 %v234
      %v324 = vunpack.c.l.b16 %v235
      %v325 = vunpack.c.l.b16 %v236
      %v326 = vunpack.c.l.b16 %v237
      %v327 = vunpack.c.l.b16 %v238
      %v328 = vunpack.c.l.b16 %v239
      %v329 = vunpack.c.l.b16 %v252
      %v330 = vunpack.c.l.b16 %v253
      %v331 = vpack.c.b16 %v300, %v299
      %v332 = vpack.c.b16 %v302, %v301
      %v333 = vpack.c.b16 %v304, %v303
      %v334 = vpack.c.b16 %v306, %v305
      %v335 = vpack.c.b16 %v308, %v307
      %v336 = vpack.c.b16 %v310, %v309
      %v337 = vpack.c.b16 %v312, %v311
      %v338 = vpack.c.b16 %v314, %v313
      %v339 = vpack.c.b16 %v316, %v315
      %v340 = vpack.c.b16 %v318, %v317
      %v341 = vpack.c.b16 %v320, %v319
      %v342 = vpack.c.b16 %v322, %v321
      %v343 = vpack.c.b16 %v324, %v323
      %v344 = vpack.c.b16 %v326, %v325
      %v345 = vpack.c.b16 %v328, %v327
      %v346 = vpack.c.b16 %v330, %v329
      %v359 = vunpack.c.l.b16 %v255
      %v360 = vunpack.c.l.b16 %v256
      %v361 = vunpack.c.l.b16 %v257
      %v362 = vunpack.c.l.b16 %v258
      %v363 = vunpack.c.l.b16 %v259
      %v364 = vunpack.c.l.b16 %v260
      %v365 = vunpack.c.l.b16 %v261
      %v366 = vunpack.c.l.b16 %v262
      %v367 = vunpack.c.l.b16 %v263
      %v368 = vunpack.c.l.b16 %v264
      %v369 = vunpack.c.l.b16 %v265
      %v370 = vunpack.c.l.b16 %v266
      %v371 = vpack.c.b16 %v360, %v359
      %v372 = vpack.c.b16 %v362, %v361
      %v373 = vpack.c.b16 %v364, %v363
      %v374 = vpack.c.b16 %v366, %v365
      %v375 = vpack.c.b16 %v368, %v367
      %v376 = vpack.c.b16 %v370, %v369
      %vm383 = vcmask 785408
      %v385 = vsel %vm383, %v331, 0
      %v388 = vsel %vm383, %v332, 0
      %v391 = vsel %vm383, %v333, 0
      %v394 = vsel %vm383, %v334, 0
      %v397 = vsel %vm383, %v335, 0
      %v400 = vsel %vm383, %v336, 0
      %v403 = vsel %vm383, %v337, 0
      %v406 = vsel %vm383, %v338, 0
      %v409 = vsel %vm383, %v339, 0
      %v412 = vsel %vm383, %v340, 0
      %v415 = vsel %vm383, %v341, 0
      %v418 = vsel %vm383, %v342, 0
      %v421 = vsel %vm383, %v343, 0
      %v424 = vsel %vm383, %v344, 0
      %v427 = vsel %vm383, %v345, 0
      %v430 = vsel %vm383, %v346, 0
      %432 = vmatprep.subr.bf16.mxu0 0
      %433 = vmatpush1.bf16.msra.mxu0 %v371
      %434 = vmatprep.subr.bf16.mxu0 0
      %435 = vmatpush1.bf16.msra.mxu0 %v372
      %436 = vmatprep.subr.bf16.mxu0 0
      %437 = vmatpush1.bf16.msra.mxu0 %v373
      %438 = vmatprep.subr.bf16.mxu0 0
      %439 = vmatpush1.bf16.msra.mxu0 %v374
      %440 = vmatprep.subr.bf16.mxu0 0
      %441 = vmatpush1.bf16.msra.mxu0 %v375
      %442 = vmatprep.subr.bf16.mxu0 0
      %443 = vmatpush1.bf16.msra.mxu0 %v376
      %444 = vmatprep.subr.bf16.mxu0 0
      %445 = vmatpush1.bf16.msra.mxu0 0
      %446 = vmatprep.subr.bf16.mxu0 0
      %447 = vmatpush1.bf16.msra.mxu0 0
      %448 = vmatprep.subr.bf16.mxu0 0
      %449 = vmatpush1.bf16.msra.mxu0 0
      %450 = vmatprep.subr.bf16.mxu0 0
      %451 = vmatpush1.bf16.msra.mxu0 0
      %452 = vmatprep.subr.bf16.mxu0 0
      %453 = vmatpush1.bf16.msra.mxu0 0
      %454 = vmatprep.subr.bf16.mxu0 0
      %455 = vmatpush1.bf16.msra.mxu0 0
      %456 = vmatprep.subr.bf16.mxu0 0
      %457 = vmatpush1.bf16.msra.mxu0 0
      %458 = vmatprep.subr.bf16.mxu0 0
      %459 = vmatpush1.bf16.msra.mxu0 0
      %460 = vmatprep.subr.bf16.mxu0 0
      %461 = vmatpush1.bf16.msra.mxu0 0
      %462 = vmatprep.subr.bf16.mxu0 0
      %463 = vmatpush1.bf16.msra.mxu0 0
      %464 = vmatprep.mubr.bf16.mxu0 0
      %465 = vmatmul.mubr.bf16.gmra.mrb[0].mxu0 %v385
      %v466 = vpop.f32.mrb[0].mxu0
      %v467 = vadd.f32 0.0, %v466
      %v468 = vpop.f32.mrb[0].mxu0
      %v469 = vpop.f32.mrb[0].mxu0
      %v470 = vadd.f32 0.0, %v469
      %v471 = vpop.f32.mrb[0].mxu0
      %472 = vmatprep.mubr.bf16.mxu0 0
      %473 = vmatmul.mubr.bf16.gmra.mrb[0].mxu0 %v388
      %v474 = vpop.f32.mrb[0].mxu0
      %v475 = vadd.f32 0.0, %v474
      %v476 = vpop.f32.mrb[0].mxu0
      %v477 = vpop.f32.mrb[0].mxu0
      %v478 = vadd.f32 0.0, %v477
      %v479 = vpop.f32.mrb[0].mxu0
      %480 = vmatprep.mubr.bf16.mxu0 0
      %481 = vmatmul.mubr.bf16.gmra.mrb[0].mxu0 %v391
      %v482 = vpop.f32.mrb[0].mxu0
      %v483 = vadd.f32 0.0, %v482
      %v484 = vpop.f32.mrb[0].mxu0
      %v485 = vpop.f32.mrb[0].mxu0
      %v486 = vadd.f32 0.0, %v485
      %v487 = vpop.f32.mrb[0].mxu0
      %488 = vmatprep.mubr.bf16.mxu0 0
      %489 = vmatmul.mubr.bf16.gmra.mrb[0].mxu0 %v394
      %v490 = vpop.f32.mrb[0].mxu0
      %v491 = vadd.f32 0.0, %v490
      %v492 = vpop.f32.mrb[0].mxu0
      %v493 = vpop.f32.mrb[0].mxu0
      %v494 = vadd.f32 0.0, %v493
      %v495 = vpop.f32.mrb[0].mxu0
      %496 = vmatprep.mubr.bf16.mxu0 0
      %497 = vmatmul.mubr.bf16.gmra.mrb[0].mxu0 %v397
      %v498 = vpop.f32.mrb[0].mxu0
      %v499 = vadd.f32 0.0, %v498
      %v500 = vpop.f32.mrb[0].mxu0
      %v501 = vpop.f32.mrb[0].mxu0
      %v502 = vadd.f32 0.0, %v501
      %v503 = vpop.f32.mrb[0].mxu0
      %504 = vmatprep.mubr.bf16.mxu0 0
      %505 = vmatmul.mubr.bf16.gmra.mrb[0].mxu0 %v400
      %v506 = vpop.f32.mrb[0].mxu0
      %v507 = vadd.f32 0.0, %v506
      %v508 = vpop.f32.mrb[0].mxu0
      %v509 = vpop.f32.mrb[0].mxu0
      %v510 = vadd.f32 0.0, %v509
      %v511 = vpop.f32.mrb[0].mxu0
      %512 = vmatprep.mubr.bf16.mxu0 0
      %513 = vmatmul.mubr.bf16.gmra.mrb[0].mxu0 %v403
      %v514 = vpop.f32.mrb[0].mxu0
      %v515 = vadd.f32 0.0, %v514
      %v516 = vpop.f32.mrb[0].mxu0
      %v517 = vpop.f32.mrb[0].mxu0
      %v518 = vadd.f32 0.0, %v517
      %v519 = vpop.f32.mrb[0].mxu0
      %520 = vmatprep.mubr.bf16.mxu0 0
      %521 = vmatmul.mubr.bf16.gmra.mrb[0].mxu0 %v406
      %v522 = vpop.f32.mrb[0].mxu0
      %v523 = vadd.f32 0.0, %v522
      %v524 = vpop.f32.mrb[0].mxu0
      %v525 = vpop.f32.mrb[0].mxu0
      %v526 = vadd.f32 0.0, %v525
      %v527 = vpop.f32.mrb[0].mxu0
      %528 = vmatprep.mubr.bf16.mxu0 0
      %529 = vmatmul.mubr.bf16.gmra.mrb[0].mxu0 %v409
      %v530 = vpop.f32.mrb[0].mxu0
      %v531 = vadd.f32 0.0, %v530
      %v532 = vpop.f32.mrb[0].mxu0
      %v533 = vpop.f32.mrb[0].mxu0
      %v534 = vadd.f32 0.0, %v533
      %v535 = vpop.f32.mrb[0].mxu0
      %536 = vmatprep.mubr.bf16.mxu0 0
      %537 = vmatmul.mubr.bf16.gmra.mrb[0].mxu0 %v412
      %v538 = vpop.f32.mrb[0].mxu0
      %v539 = vadd.f32 0.0, %v538
      %v540 = vpop.f32.mrb[0].mxu0
      %v541 = vpop.f32.mrb[0].mxu0
      %v542 = vadd.f32 0.0, %v541
      %v543 = vpop.f32.mrb[0].mxu0
      %544 = vmatprep.mubr.bf16.mxu0 0
      %545 = vmatmul.mubr.bf16.gmra.mrb[0].mxu0 %v415
      %v546 = vpop.f32.mrb[0].mxu0
      %v547 = vadd.f32 0.0, %v546
      %v548 = vpop.f32.mrb[0].mxu0
      %v549 = vpop.f32.mrb[0].mxu0
      %v550 = vadd.f32 0.0, %v549
      %v551 = vpop.f32.mrb[0].mxu0
      %552 = vmatprep.mubr.bf16.mxu0 0
      %553 = vmatmul.mubr.bf16.gmra.mrb[0].mxu0 %v418
      %v554 = vpop.f32.mrb[0].mxu0
      %v555 = vadd.f32 0.0, %v554
      %v556 = vpop.f32.mrb[0].mxu0
      %v557 = vpop.f32.mrb[0].mxu0
      %v558 = vadd.f32 0.0, %v557
      %v559 = vpop.f32.mrb[0].mxu0
      %560 = vmatprep.mubr.bf16.mxu0 0
      %561 = vmatmul.mubr.bf16.gmra.mrb[0].mxu0 %v421
      %v562 = vpop.f32.mrb[0].mxu0
      %v563 = vadd.f32 0.0, %v562
      %v564 = vpop.f32.mrb[0].mxu0
      %v565 = vpop.f32.mrb[0].mxu0
      %v566 = vadd.f32 0.0, %v565
      %v567 = vpop.f32.mrb[0].mxu0
      %568 = vmatprep.mubr.bf16.mxu0 0
      %569 = vmatmul.mubr.bf16.gmra.mrb[0].mxu0 %v424
      %v570 = vpop.f32.mrb[0].mxu0
      %v571 = vadd.f32 0.0, %v570
      %v572 = vpop.f32.mrb[0].mxu0
      %v573 = vpop.f32.mrb[0].mxu0
      %v574 = vadd.f32 0.0, %v573
      %v575 = vpop.f32.mrb[0].mxu0
      %576 = vmatprep.mubr.bf16.mxu0 0
      %577 = vmatmul.mubr.bf16.gmra.mrb[0].mxu0 %v427
      %v578 = vpop.f32.mrb[0].mxu0
      %v579 = vadd.f32 0.0, %v578
      %v580 = vpop.f32.mrb[0].mxu0
      %v581 = vpop.f32.mrb[0].mxu0
      %v582 = vadd.f32 0.0, %v581
      %v583 = vpop.f32.mrb[0].mxu0
      %584 = vmatprep.mubr.bf16.mxu0 0
      %585 = vmatmul.mubr.bf16.gmra.mrb[0].mxu0 %v430
      %v586 = vpop.f32.mrb[0].mxu0
      %v587 = vadd.f32 0.0, %v586
      %v588 = vpop.f32.mrb[0].mxu0
      %v589 = vpop.f32.mrb[0].mxu0
      %v590 = vadd.f32 0.0, %v589
      %v591 = vpop.f32.mrb[0].mxu0
      %592 = vdwg.mxu0
      %v595 = vunpack.c.l.b16 %v208
      %v596 = vunpack.c.l.b16 %v209
      %v597 = vpack.c.b16 %v596, %v595
      %v610 = vunpack.c.l.b16 %v240
      %v611 = vunpack.c.l.b16 %v241
      %v612 = vunpack.c.l.b16 %v242
      %v613 = vunpack.c.l.b16 %v243
      %v614 = vunpack.c.l.b16 %v244
      %v615 = vunpack.c.l.b16 %v245
      %v616 = vunpack.c.l.b16 %v246
      %v617 = vunpack.c.l.b16 %v247
      %v618 = vunpack.c.l.b16 %v248
      %v619 = vunpack.c.l.b16 %v249
      %v620 = vunpack.c.l.b16 %v250
      %v621 = vunpack.c.l.b16 %v251
      %v622 = vpack.c.b16 %v611, %v610
      %v623 = vpack.c.b16 %v613, %v612
      %v624 = vpack.c.b16 %v615, %v614
      %v625 = vpack.c.b16 %v617, %v616
      %v626 = vpack.c.b16 %v619, %v618
      %v627 = vpack.c.b16 %v621, %v620
      %v635 = vsel %vm383, %v597, 0
      %637 = vmatprep.subr.bf16.mxu0 0
      %638 = vmatpush1.bf16.msra.mxu0 %v622
      %639 = vmatprep.subr.bf16.mxu0 0
      %640 = vmatpush1.bf16.msra.mxu0 %v623
      %641 = vmatprep.subr.bf16.mxu0 0
      %642 = vmatpush1.bf16.msra.mxu0 %v624
      %643 = vmatprep.subr.bf16.mxu0 0
      %644 = vmatpush1.bf16.msra.mxu0 %v625
      %645 = vmatprep.subr.bf16.mxu0 0
      %646 = vmatpush1.bf16.msra.mxu0 %v626
      %647 = vmatprep.subr.bf16.mxu0 0
      %648 = vmatpush1.bf16.msra.mxu0 %v627
      %649 = vmatprep.subr.bf16.mxu0 0
      %650 = vmatpush1.bf16.msra.mxu0 0
      %651 = vmatprep.subr.bf16.mxu0 0
      %652 = vmatpush1.bf16.msra.mxu0 0
      %653 = vmatprep.subr.bf16.mxu0 0
      %654 = vmatpush1.bf16.msra.mxu0 0
      %655 = vmatprep.subr.bf16.mxu0 0
      %656 = vmatpush1.bf16.msra.mxu0 0
      %657 = vmatprep.subr.bf16.mxu0 0
      %658 = vmatpush1.bf16.msra.mxu0 0
      %659 = vmatprep.subr.bf16.mxu0 0
      %660 = vmatpush1.bf16.msra.mxu0 0
      %661 = vmatprep.subr.bf16.mxu0 0
      %662 = vmatpush1.bf16.msra.mxu0 0
      %663 = vmatprep.subr.bf16.mxu0 0
      %664 = vmatpush1.bf16.msra.mxu0 0
      %665 = vmatprep.subr.bf16.mxu0 0
      %666 = vmatpush1.bf16.msra.mxu0 0
      %667 = vmatprep.subr.bf16.mxu0 0
      %668 = vmatpush1.bf16.msra.mxu0 0
      %669 = vmatprep.mubr.bf16.mxu0 0
      %670 = vmatmul.mubr.bf16.gmra.mrb[0].mxu0 %v635
      %v671 = vpop.f32.mrb[0].mxu0
      %v672 = vadd.f32 %v467, %v671
      %v673 = vpop.f32.mrb[0].mxu0
      %v674 = vpop.f32.mrb[0].mxu0
      %v675 = vadd.f32 %v470, %v674
      %v676 = vpop.f32.mrb[0].mxu0
      %677 = vmatprep.mubr.bf16.mxu0 0
      %678 = vmatmul.mubr.bf16.gmra.mrb[0].mxu0 %v385
      %v679 = vpop.f32.mrb[0].mxu0
      %v680 = vadd.f32 %v475, %v679
      %v681 = vpop.f32.mrb[0].mxu0
      %v682 = vpop.f32.mrb[0].mxu0
      %v683 = vadd.f32 %v478, %v682
      %v684 = vpop.f32.mrb[0].mxu0
      %685 = vmatprep.mubr.bf16.mxu0 0
      %686 = vmatmul.mubr.bf16.gmra.mrb[0].mxu0 %v388
      %v687 = vpop.f32.mrb[0].mxu0
      %v688 = vadd.f32 %v483, %v687
      %v689 = vpop.f32.mrb[0].mxu0
      %v690 = vpop.f32.mrb[0].mxu0
      %v691 = vadd.f32 %v486, %v690
      %v692 = vpop.f32.mrb[0].mxu0
      %693 = vmatprep.mubr.bf16.mxu0 0
      %694 = vmatmul.mubr.bf16.gmra.mrb[0].mxu0 %v391
      %v695 = vpop.f32.mrb[0].mxu0
      %v696 = vadd.f32 %v491, %v695
      %v697 = vpop.f32.mrb[0].mxu0
      %v698 = vpop.f32.mrb[0].mxu0
      %v699 = vadd.f32 %v494, %v698
      %v700 = vpop.f32.mrb[0].mxu0
      %701 = vmatprep.mubr.bf16.mxu0 0
      %702 = vmatmul.mubr.bf16.gmra.mrb[0].mxu0 %v394
      %v703 = vpop.f32.mrb[0].mxu0
      %v704 = vadd.f32 %v499, %v703
      %v705 = vpop.f32.mrb[0].mxu0
      %v706 = vpop.f32.mrb[0].mxu0
      %v707 = vadd.f32 %v502, %v706
      %v708 = vpop.f32.mrb[0].mxu0
      %709 = vmatprep.mubr.bf16.mxu0 0
      %710 = vmatmul.mubr.bf16.gmra.mrb[0].mxu0 %v397
      %v711 = vpop.f32.mrb[0].mxu0
      %v712 = vadd.f32 %v507, %v711
      %v713 = vpop.f32.mrb[0].mxu0
      %v714 = vpop.f32.mrb[0].mxu0
      %v715 = vadd.f32 %v510, %v714
      %v716 = vpop.f32.mrb[0].mxu0
      %717 = vmatprep.mubr.bf16.mxu0 0
      %718 = vmatmul.mubr.bf16.gmra.mrb[0].mxu0 %v400
      %v719 = vpop.f32.mrb[0].mxu0
      %v720 = vadd.f32 %v515, %v719
      %v721 = vpop.f32.mrb[0].mxu0
      %v722 = vpop.f32.mrb[0].mxu0
      %v723 = vadd.f32 %v518, %v722
      %v724 = vpop.f32.mrb[0].mxu0
      %725 = vmatprep.mubr.bf16.mxu0 0
      %726 = vmatmul.mubr.bf16.gmra.mrb[0].mxu0 %v403
      %v727 = vpop.f32.mrb[0].mxu0
      %v728 = vadd.f32 %v523, %v727
      %v729 = vpop.f32.mrb[0].mxu0
      %v730 = vpop.f32.mrb[0].mxu0
      %v731 = vadd.f32 %v526, %v730
      %v732 = vpop.f32.mrb[0].mxu0
      %733 = vmatprep.mubr.bf16.mxu0 0
      %734 = vmatmul.mubr.bf16.gmra.mrb[0].mxu0 %v406
      %v735 = vpop.f32.mrb[0].mxu0
      %v736 = vadd.f32 %v531, %v735
      %v737 = vpop.f32.mrb[0].mxu0
      %v738 = vpop.f32.mrb[0].mxu0
      %v739 = vadd.f32 %v534, %v738
      %v740 = vpop.f32.mrb[0].mxu0
      %741 = vmatprep.mubr.bf16.mxu0 0
      %742 = vmatmul.mubr.bf16.gmra.mrb[0].mxu0 %v409
      %v743 = vpop.f32.mrb[0].mxu0
      %v744 = vadd.f32 %v539, %v743
      %v745 = vpop.f32.mrb[0].mxu0
      %v746 = vpop.f32.mrb[0].mxu0
      %v747 = vadd.f32 %v542, %v746
      %v748 = vpop.f32.mrb[0].mxu0
      %749 = vmatprep.mubr.bf16.mxu0 0
      %750 = vmatmul.mubr.bf16.gmra.mrb[0].mxu0 %v412
      %v751 = vpop.f32.mrb[0].mxu0
      %v752 = vadd.f32 %v547, %v751
      %v753 = vpop.f32.mrb[0].mxu0
      %v754 = vpop.f32.mrb[0].mxu0
      %v755 = vadd.f32 %v550, %v754
      %v756 = vpop.f32.mrb[0].mxu0
      %757 = vmatprep.mubr.bf16.mxu0 0
      %758 = vmatmul.mubr.bf16.gmra.mrb[0].mxu0 %v415
      %v759 = vpop.f32.mrb[0].mxu0
      %v760 = vadd.f32 %v555, %v759
      %v761 = vpop.f32.mrb[0].mxu0
      %v762 = vpop.f32.mrb[0].mxu0
      %v763 = vadd.f32 %v558, %v762
      %v764 = vpop.f32.mrb[0].mxu0
      %765 = vmatprep.mubr.bf16.mxu0 0
      %766 = vmatmul.mubr.bf16.gmra.mrb[0].mxu0 %v418
      %v767 = vpop.f32.mrb[0].mxu0
      %v768 = vadd.f32 %v563, %v767
      %v769 = vpop.f32.mrb[0].mxu0
      %v770 = vpop.f32.mrb[0].mxu0
      %v771 = vadd.f32 %v566, %v770
      %v772 = vpop.f32.mrb[0].mxu0
      %773 = vmatprep.mubr.bf16.mxu0 0
      %774 = vmatmul.mubr.bf16.gmra.mrb[0].mxu0 %v421
      %v775 = vpop.f32.mrb[0].mxu0
      %v776 = vadd.f32 %v571, %v775
      %v777 = vpop.f32.mrb[0].mxu0
      %v778 = vpop.f32.mrb[0].mxu0
      %v779 = vadd.f32 %v574, %v778
      %v780 = vpop.f32.mrb[0].mxu0
      %781 = vmatprep.mubr.bf16.mxu0 0
      %782 = vmatmul.mubr.bf16.gmra.mrb[0].mxu0 %v424
      %v783 = vpop.f32.mrb[0].mxu0
      %v784 = vadd.f32 %v579, %v783
      %v785 = vpop.f32.mrb[0].mxu0
      %v786 = vpop.f32.mrb[0].mxu0
      %v787 = vadd.f32 %v582, %v786
      %v788 = vpop.f32.mrb[0].mxu0
      %789 = vmatprep.mubr.bf16.mxu0 0
      %790 = vmatmul.mubr.bf16.gmra.mrb[0].mxu0 %v427
      %v791 = vpop.f32.mrb[0].mxu0
      %v792 = vadd.f32 %v587, %v791
      %v793 = vpop.f32.mrb[0].mxu0
      %v794 = vpop.f32.mrb[0].mxu0
      %v795 = vadd.f32 %v590, %v794
      %v796 = vpop.f32.mrb[0].mxu0
      %797 = vdwg.mxu0
      %v798 = vld [vmem:[%s197 + $0x10] sm:$0xf]
      %v799 = vld [vmem:[%s197 + $0x14] sm:$0xf]
      %v800 = vld [vmem:[%s197 + $0x18] sm:$0xf]
      %v801 = vld [vmem:[%s197 + $0x1c] sm:$0xf]
      %v802 = vld [vmem:[%s197 + $0x20] sm:$0xf]
      %v803 = vld [vmem:[%s197 + $0x24] sm:$0xf]
      %v804 = vld [vmem:[%s197 + $0x28] sm:$0xf]
      %v805 = vld [vmem:[%s197 + $0x2c] sm:$0xf]
      %v806 = vld [vmem:[%s197 + $0x30] sm:$0xf]
      %v807 = vld [vmem:[%s197 + $0x34] sm:$0xf]
      %v808 = vld [vmem:[%s197 + $0x38] sm:$0xf]
      %v809 = vld [vmem:[%s197 + $0x3c] sm:$0xf]
      %v810 = vld [vmem:[%s197 + $0x40] sm:$0xf]
      %v811 = vld [vmem:[%s197 + $0x44] sm:$0xf]
      %v812 = vld [vmem:[%s197 + $0x48] sm:$0xf]
      %v813 = vld [vmem:[%s197 + $0x4c] sm:$0xf]
      %v814 = vld [vmem:[%s197 + $0x50] sm:$0xf]
      %v815 = vld [vmem:[%s197 + $0x54] sm:$0xf]
      %v816 = vld [vmem:[%s197 + $0x58] sm:$0xf]
      %v817 = vld [vmem:[%s197 + $0x5c] sm:$0xf]
      %v818 = vld [vmem:[%s197 + $0x60] sm:$0xf]
      %v819 = vld [vmem:[%s197 + $0x64] sm:$0xf]
      %v820 = vld [vmem:[%s197 + $0x68] sm:$0xf]
      %v821 = vld [vmem:[%s197 + $0x6c] sm:$0xf]
      %v822 = vld [vmem:[%s197 + $0x70] sm:$0xf]
      %v823 = vld [vmem:[%s197 + $0x74] sm:$0xf]
      %v824 = vld [vmem:[%s197 + $0x78] sm:$0xf]
      %v825 = vld [vmem:[%s197 + $0x7c] sm:$0xf]
      %v826 = vld [vmem:[%s197 + $0x80] sm:$0xf]
      %v827 = vld [vmem:[%s197 + $0x84] sm:$0xf]
      %v828 = vld [vmem:[%s197 + $0x88] sm:$0xf]
      %v829 = vld [vmem:[%s197 + $0x8c] sm:$0xf]
      %s830 = scalar_lea.vmem %s1, 96
      %v831 = vld [vmem:[%s830] sm:$0xf]
      %v832 = vld [vmem:[%s830 + $0x4] sm:$0xf]
      %v833 = vld [vmem:[%s830 + $0x8] sm:$0xf]
      %v834 = vld [vmem:[%s830 + $0xc] sm:$0xf]
      %v835 = vld [vmem:[%s830 + $0x10] sm:$0xf]
      %v836 = vld [vmem:[%s830 + $0x14] sm:$0xf]
      %v837 = vld [vmem:[%s830 + $0x18] sm:$0xf]
      %v838 = vld [vmem:[%s830 + $0x1c] sm:$0xf]
      %v839 = vld [vmem:[%s830 + $0x20] sm:$0xf]
      %v840 = vld [vmem:[%s830 + $0x24] sm:$0xf]
      %v841 = vld [vmem:[%s830 + $0x28] sm:$0xf]
      %v842 = vld [vmem:[%s830 + $0x2c] sm:$0xf]
      %v875 = vunpack.c.l.b16 %v798
      %v876 = vunpack.c.l.b16 %v799
      %v877 = vunpack.c.l.b16 %v800
      %v878 = vunpack.c.l.b16 %v801
      %v879 = vunpack.c.l.b16 %v802
      %v880 = vunpack.c.l.b16 %v803
      %v881 = vunpack.c.l.b16 %v804
      %v882 = vunpack.c.l.b16 %v805
      %v883 = vunpack.c.l.b16 %v806
      %v884 = vunpack.c.l.b16 %v807
      %v885 = vunpack.c.l.b16 %v808
      %v886 = vunpack.c.l.b16 %v809
      %v887 = vunpack.c.l.b16 %v810
      %v888 = vunpack.c.l.b16 %v811
      %v889 = vunpack.c.l.b16 %v812
      %v890 = vunpack.c.l.b16 %v813
      %v891 = vunpack.c.l.b16 %v814
      %v892 = vunpack.c.l.b16 %v815
      %v893 = vunpack.c.l.b16 %v816
      %v894 = vunpack.c.l.b16 %v817
      %v895 = vunpack.c.l.b16 %v818
      %v896 = vunpack.c.l.b16 %v819
      %v897 = vunpack.c.l.b16 %v820
      %v898 = vunpack.c.l.b16 %v821
      %v899 = vunpack.c.l.b16 %v822
      %v900 = vunpack.c.l.b16 %v823
      %v901 = vunpack.c.l.b16 %v824
      %v902 = vunpack.c.l.b16 %v825
      %v903 = vunpack.c.l.b16 %v826
      %v904 = vunpack.c.l.b16 %v827
      %v905 = vunpack.c.l.b16 %v828
      %v906 = vunpack.c.l.b16 %v829
      %v907 = vpack.c.b16 %v876, %v875
      %v908 = vpack.c.b16 %v878, %v877
      %v909 = vpack.c.b16 %v880, %v879
      %v910 = vpack.c.b16 %v882, %v881
      %v911 = vpack.c.b16 %v884, %v883
      %v912 = vpack.c.b16 %v886, %v885
      %v913 = vpack.c.b16 %v888, %v887
      %v914 = vpack.c.b16 %v890, %v889
      %v915 = vpack.c.b16 %v892, %v891
      %v916 = vpack.c.b16 %v894, %v893
      %v917 = vpack.c.b16 %v896, %v895
      %v918 = vpack.c.b16 %v898, %v897
      %v919 = vpack.c.b16 %v900, %v899
      %v920 = vpack.c.b16 %v902, %v901
      %v921 = vpack.c.b16 %v904, %v903
      %v922 = vpack.c.b16 %v906, %v905
      %v935 = vunpack.c.l.b16 %v831
      %v936 = vunpack.c.l.b16 %v832
      %v937 = vunpack.c.l.b16 %v833
      %v938 = vunpack.c.l.b16 %v834
      %v939 = vunpack.c.l.b16 %v835
      %v940 = vunpack.c.l.b16 %v836
      %v941 = vunpack.c.l.b16 %v837
      %v942 = vunpack.c.l.b16 %v838
      %v943 = vunpack.c.l.b16 %v839
      %v944 = vunpack.c.l.b16 %v840
      %v945 = vunpack.c.l.b16 %v841
      %v946 = vunpack.c.l.b16 %v842
      %v947 = vpack.c.b16 %v936, %v935
      %v948 = vpack.c.b16 %v938, %v937
      %v949 = vpack.c.b16 %v940, %v939
      %v950 = vpack.c.b16 %v942, %v941
      %v951 = vpack.c.b16 %v944, %v943
      %v952 = vpack.c.b16 %v946, %v945
      %v960 = vsel %vm383, %v907, 0
      %v963 = vsel %vm383, %v908, 0
      %v966 = vsel %vm383, %v909, 0
      %v969 = vsel %vm383, %v910, 0
      %v972 = vsel %vm383, %v911, 0
      %v975 = vsel %vm383, %v912, 0
      %v978 = vsel %vm383, %v913, 0
      %v981 = vsel %vm383, %v914, 0
      %v984 = vsel %vm383, %v915, 0
      %v987 = vsel %vm383, %v916, 0
      %v990 = vsel %vm383, %v917, 0
      %v993 = vsel %vm383, %v918, 0
      %v996 = vsel %vm383, %v919, 0
      %v999 = vsel %vm383, %v920, 0
      %v1002 = vsel %vm383, %v921, 0
      %v1005 = vsel %vm383, %v922, 0
      %1007 = vmatprep.subr.bf16.mxu0 0
      %1008 = vmatpush1.bf16.msra.mxu0 %v947
      %1009 = vmatprep.subr.bf16.mxu0 0
      %1010 = vmatpush1.bf16.msra.mxu0 %v948
      %1011 = vmatprep.subr.bf16.mxu0 0
      %1012 = vmatpush1.bf16.msra.mxu0 %v949
      %1013 = vmatprep.subr.bf16.mxu0 0
      %1014 = vmatpush1.bf16.msra.mxu0 %v950
      %1015 = vmatprep.subr.bf16.mxu0 0
      %1016 = vmatpush1.bf16.msra.mxu0 %v951
      %1017 = vmatprep.subr.bf16.mxu0 0
      %1018 = vmatpush1.bf16.msra.mxu0 %v952
      %1019 = vmatprep.subr.bf16.mxu0 0
      %1020 = vmatpush1.bf16.msra.mxu0 0
      %1021 = vmatprep.subr.bf16.mxu0 0
      %1022 = vmatpush1.bf16.msra.mxu0 0
      %1023 = vmatprep.subr.bf16.mxu0 0
      %1024 = vmatpush1.bf16.msra.mxu0 0
      %1025 = vmatprep.subr.bf16.mxu0 0
      %1026 = vmatpush1.bf16.msra.mxu0 0
      %1027 = vmatprep.subr.bf16.mxu0 0
      %1028 = vmatpush1.bf16.msra.mxu0 0
      %1029 = vmatprep.subr.bf16.mxu0 0
      %1030 = vmatpush1.bf16.msra.mxu0 0
      %1031 = vmatprep.subr.bf16.mxu0 0
      %1032 = vmatpush1.bf16.msra.mxu0 0
      %1033 = vmatprep.subr.bf16.mxu0 0
      %1034 = vmatpush1.bf16.msra.mxu0 0
      %1035 = vmatprep.subr.bf16.mxu0 0
      %1036 = vmatpush1.bf16.msra.mxu0 0
      %1037 = vmatprep.subr.bf16.mxu0 0
      %1038 = vmatpush1.bf16.msra.mxu0 0
      %1039 = vmatprep.mubr.bf16.mxu0 0
      %1040 = vmatmul.mubr.bf16.gmra.mrb[0].mxu0 %v960
      %v1041 = vpop.f32.mrb[0].mxu0
      %v1042 = vadd.f32 0.0, %v1041
      %v1043 = vpop.f32.mrb[0].mxu0
      %v1044 = vpop.f32.mrb[0].mxu0
      %v1045 = vadd.f32 0.0, %v1044
      %v1046 = vpop.f32.mrb[0].mxu0
      %1047 = vmatprep.mubr.bf16.mxu0 0
      %1048 = vmatmul.mubr.bf16.gmra.mrb[0].mxu0 %v963
      %v1049 = vpop.f32.mrb[0].mxu0
      %v1050 = vadd.f32 0.0, %v1049
      %v1051 = vpop.f32.mrb[0].mxu0
      %v1052 = vpop.f32.mrb[0].mxu0
      %v1053 = vadd.f32 0.0, %v1052
      %v1054 = vpop.f32.mrb[0].mxu0
      %1055 = vmatprep.mubr.bf16.mxu0 0
      %1056 = vmatmul.mubr.bf16.gmra.mrb[0].mxu0 %v966
      %v1057 = vpop.f32.mrb[0].mxu0
      %v1058 = vadd.f32 0.0, %v1057
      %v1059 = vpop.f32.mrb[0].mxu0
      %v1060 = vpop.f32.mrb[0].mxu0
      %v1061 = vadd.f32 0.0, %v1060
      %v1062 = vpop.f32.mrb[0].mxu0
      %1063 = vmatprep.mubr.bf16.mxu0 0
      %1064 = vmatmul.mubr.bf16.gmra.mrb[0].mxu0 %v969
      %v1065 = vpop.f32.mrb[0].mxu0
      %v1066 = vadd.f32 0.0, %v1065
      %v1067 = vpop.f32.mrb[0].mxu0
      %v1068 = vpop.f32.mrb[0].mxu0
      %v1069 = vadd.f32 0.0, %v1068
      %v1070 = vpop.f32.mrb[0].mxu0
      %1071 = vmatprep.mubr.bf16.mxu0 0
      %1072 = vmatmul.mubr.bf16.gmra.mrb[0].mxu0 %v972
      %v1073 = vpop.f32.mrb[0].mxu0
      %v1074 = vadd.f32 0.0, %v1073
      %v1075 = vpop.f32.mrb[0].mxu0
      %v1076 = vpop.f32.mrb[0].mxu0
      %v1077 = vadd.f32 0.0, %v1076
      %v1078 = vpop.f32.mrb[0].mxu0
      %1079 = vmatprep.mubr.bf16.mxu0 0
      %1080 = vmatmul.mubr.bf16.gmra.mrb[0].mxu0 %v975
      %v1081 = vpop.f32.mrb[0].mxu0
      %v1082 = vadd.f32 0.0, %v1081
      %v1083 = vpop.f32.mrb[0].mxu0
      %v1084 = vpop.f32.mrb[0].mxu0
      %v1085 = vadd.f32 0.0, %v1084
      %v1086 = vpop.f32.mrb[0].mxu0
      %1087 = vmatprep.mubr.bf16.mxu0 0
      %1088 = vmatmul.mubr.bf16.gmra.mrb[0].mxu0 %v978
      %v1089 = vpop.f32.mrb[0].mxu0
      %v1090 = vadd.f32 0.0, %v1089
      %v1091 = vpop.f32.mrb[0].mxu0
      %v1092 = vpop.f32.mrb[0].mxu0
      %v1093 = vadd.f32 0.0, %v1092
      %v1094 = vpop.f32.mrb[0].mxu0
      %1095 = vmatprep.mubr.bf16.mxu0 0
      %1096 = vmatmul.mubr.bf16.gmra.mrb[0].mxu0 %v981
      %v1097 = vpop.f32.mrb[0].mxu0
      %v1098 = vadd.f32 0.0, %v1097
      %v1099 = vpop.f32.mrb[0].mxu0
      %v1100 = vpop.f32.mrb[0].mxu0
      %v1101 = vadd.f32 0.0, %v1100
      %v1102 = vpop.f32.mrb[0].mxu0
      %1103 = vmatprep.mubr.bf16.mxu0 0
      %1104 = vmatmul.mubr.bf16.gmra.mrb[0].mxu0 %v984
      %v1105 = vpop.f32.mrb[0].mxu0
      %v1106 = vadd.f32 0.0, %v1105
      %v1107 = vpop.f32.mrb[0].mxu0
      %v1108 = vpop.f32.mrb[0].mxu0
      %v1109 = vadd.f32 0.0, %v1108
      %v1110 = vpop.f32.mrb[0].mxu0
      %1111 = vmatprep.mubr.bf16.mxu0 0
      %1112 = vmatmul.mubr.bf16.gmra.mrb[0].mxu0 %v987
      %v1113 = vpop.f32.mrb[0].mxu0
      %v1114 = vadd.f32 0.0, %v1113
      %v1115 = vpop.f32.mrb[0].mxu0
      %v1116 = vpop.f32.mrb[0].mxu0
      %v1117 = vadd.f32 0.0, %v1116
      %v1118 = vpop.f32.mrb[0].mxu0
      %1119 = vmatprep.mubr.bf16.mxu0 0
      %1120 = vmatmul.mubr.bf16.gmra.mrb[0].mxu0 %v990
      %v1121 = vpop.f32.mrb[0].mxu0
      %v1122 = vadd.f32 0.0, %v1121
      %v1123 = vpop.f32.mrb[0].mxu0
      %v1124 = vpop.f32.mrb[0].mxu0
      %v1125 = vadd.f32 0.0, %v1124
      %v1126 = vpop.f32.mrb[0].mxu0
      %1127 = vmatprep.mubr.bf16.mxu0 0
      %1128 = vmatmul.mubr.bf16.gmra.mrb[0].mxu0 %v993
      %v1129 = vpop.f32.mrb[0].mxu0
      %v1130 = vadd.f32 0.0, %v1129
      %v1131 = vpop.f32.mrb[0].mxu0
      %v1132 = vpop.f32.mrb[0].mxu0
      %v1133 = vadd.f32 0.0, %v1132
      %v1134 = vpop.f32.mrb[0].mxu0
      %1135 = vmatprep.mubr.bf16.mxu0 0
      %1136 = vmatmul.mubr.bf16.gmra.mrb[0].mxu0 %v996
      %v1137 = vpop.f32.mrb[0].mxu0
      %v1138 = vadd.f32 0.0, %v1137
      %v1139 = vpop.f32.mrb[0].mxu0
      %v1140 = vpop.f32.mrb[0].mxu0
      %v1141 = vadd.f32 0.0, %v1140
      %v1142 = vpop.f32.mrb[0].mxu0
      %1143 = vmatprep.mubr.bf16.mxu0 0
      %1144 = vmatmul.mubr.bf16.gmra.mrb[0].mxu0 %v999
      %v1145 = vpop.f32.mrb[0].mxu0
      %v1146 = vadd.f32 0.0, %v1145
      %v1147 = vpop.f32.mrb[0].mxu0
      %v1148 = vpop.f32.mrb[0].mxu0
      %v1149 = vadd.f32 0.0, %v1148
      %v1150 = vpop.f32.mrb[0].mxu0
      %1151 = vmatprep.mubr.bf16.mxu0 0
      %1152 = vmatmul.mubr.bf16.gmra.mrb[0].mxu0 %v1002
      %v1153 = vpop.f32.mrb[0].mxu0
      %v1154 = vadd.f32 0.0, %v1153
      %v1155 = vpop.f32.mrb[0].mxu0
      %v1156 = vpop.f32.mrb[0].mxu0
      %v1157 = vadd.f32 0.0, %v1156
      %v1158 = vpop.f32.mrb[0].mxu0
      %1159 = vmatprep.mubr.bf16.mxu0 0
      %1160 = vmatmul.mubr.bf16.gmra.mrb[0].mxu0 %v1005
      %v1161 = vpop.f32.mrb[0].mxu0
      %v1162 = vadd.f32 0.0, %v1161
      %v1163 = vpop.f32.mrb[0].mxu0
      %v1164 = vpop.f32.mrb[0].mxu0
      %v1165 = vadd.f32 0.0, %v1164
      %v1166 = vpop.f32.mrb[0].mxu0
      %1167 = vdwg.mxu0
      %v1168 = vadd.f32 %v672, %v1042
      %v1169 = vadd.f32 %v675, %v1045
      %v1170 = vadd.f32 %v680, %v1050
      %v1171 = vadd.f32 %v683, %v1053
      %v1172 = vadd.f32 %v688, %v1058
      %v1173 = vadd.f32 %v691, %v1061
      %v1174 = vadd.f32 %v696, %v1066
      %v1175 = vadd.f32 %v699, %v1069
      %v1176 = vadd.f32 %v704, %v1074
      %v1177 = vadd.f32 %v707, %v1077
      %v1178 = vadd.f32 %v712, %v1082
      %v1179 = vadd.f32 %v715, %v1085
      %v1180 = vadd.f32 %v720, %v1090
      %v1181 = vadd.f32 %v723, %v1093
      %v1182 = vadd.f32 %v728, %v1098
      %v1183 = vadd.f32 %v731, %v1101
      %v1184 = vadd.f32 %v736, %v1106
      %v1185 = vadd.f32 %v739, %v1109
      %v1186 = vadd.f32 %v744, %v1114
      %v1187 = vadd.f32 %v747, %v1117
      %v1188 = vadd.f32 %v752, %v1122
      %v1189 = vadd.f32 %v755, %v1125
      %v1190 = vadd.f32 %v760, %v1130
      %v1191 = vadd.f32 %v763, %v1133
      %v1192 = vadd.f32 %v768, %v1138
      %v1193 = vadd.f32 %v771, %v1141
      %v1194 = vadd.f32 %v776, %v1146
      %v1195 = vadd.f32 %v779, %v1149
      %v1196 = vadd.f32 %v784, %v1154
      %v1197 = vadd.f32 %v787, %v1157
      %v1198 = vadd.f32 %v792, %v1162
      %v1199 = vadd.f32 %v795, %v1165
      %v1200 = vld [vmem:[%s2] sm:$0x1]
      %v1202 = vlaneseq
      %v1203 = vshrl.u32 %v1202, 7
      %v1204 = vsub.s32 0, %v1203
      %v1205 = vrot.slane %v1200, %v1204
      %v1207 = vadd.f32 %v1168, %v1205
      %v1208 = vadd.f32 %v1169, %v1205
      %v1209 = vadd.f32 %v1170, %v1205
      %v1210 = vadd.f32 %v1171, %v1205
      %v1211 = vadd.f32 %v1172, %v1205
      %v1212 = vadd.f32 %v1173, %v1205
      %v1213 = vadd.f32 %v1174, %v1205
      %v1214 = vadd.f32 %v1175, %v1205
      %v1215 = vadd.f32 %v1176, %v1205
      %v1216 = vadd.f32 %v1177, %v1205
      %v1217 = vadd.f32 %v1178, %v1205
      %v1218 = vadd.f32 %v1179, %v1205
      %v1219 = vadd.f32 %v1180, %v1205
      %v1220 = vadd.f32 %v1181, %v1205
      %v1221 = vadd.f32 %v1182, %v1205
      %v1222 = vadd.f32 %v1183, %v1205
      %v1223 = vadd.f32 %v1184, %v1205
      %v1224 = vadd.f32 %v1185, %v1205
      %v1225 = vadd.f32 %v1186, %v1205
      %v1226 = vadd.f32 %v1187, %v1205
      %v1227 = vadd.f32 %v1188, %v1205
      %v1228 = vadd.f32 %v1189, %v1205
      %v1229 = vadd.f32 %v1190, %v1205
      %v1230 = vadd.f32 %v1191, %v1205
      %v1231 = vadd.f32 %v1192, %v1205
      %v1232 = vadd.f32 %v1193, %v1205
      %v1233 = vadd.f32 %v1194, %v1205
      %v1234 = vadd.f32 %v1195, %v1205
      %v1235 = vadd.f32 %v1196, %v1205
      %v1236 = vadd.f32 %v1197, %v1205
      %v1237 = vadd.f32 %v1198, %v1205
      %v1238 = vadd.f32 %v1199, %v1205
      %vm1239 = vcmp.ge.f32.partialorder %v1207, 0.0
      %vm1240 = vcmp.ge.f32.partialorder %v1208, 0.0
      %vm1241 = vcmp.ge.f32.partialorder %v1209, 0.0
      %vm1242 = vcmp.ge.f32.partialorder %v1210, 0.0
      %vm1243 = vcmp.ge.f32.partialorder %v1211, 0.0
      %vm1244 = vcmp.ge.f32.partialorder %v1212, 0.0
      %vm1245 = vcmp.ge.f32.partialorder %v1213, 0.0
      %vm1246 = vcmp.ge.f32.partialorder %v1214, 0.0
      %vm1247 = vcmp.ge.f32.partialorder %v1215, 0.0
      %vm1248 = vcmp.ge.f32.partialorder %v1216, 0.0
      %vm1249 = vcmp.ge.f32.partialorder %v1217, 0.0
      %vm1250 = vcmp.ge.f32.partialorder %v1218, 0.0
      %vm1251 = vcmp.ge.f32.partialorder %v1219, 0.0
      %vm1252 = vcmp.ge.f32.partialorder %v1220, 0.0
      %vm1253 = vcmp.ge.f32.partialorder %v1221, 0.0
      %vm1254 = vcmp.ge.f32.partialorder %v1222, 0.0
      %vm1255 = vcmp.ge.f32.partialorder %v1223, 0.0
      %vm1256 = vcmp.ge.f32.partialorder %v1224, 0.0
      %vm1257 = vcmp.ge.f32.partialorder %v1225, 0.0
      %vm1258 = vcmp.ge.f32.partialorder %v1226, 0.0
      %vm1259 = vcmp.ge.f32.partialorder %v1227, 0.0
      %vm1260 = vcmp.ge.f32.partialorder %v1228, 0.0
      %vm1261 = vcmp.ge.f32.partialorder %v1229, 0.0
      %vm1262 = vcmp.ge.f32.partialorder %v1230, 0.0
      %vm1263 = vcmp.ge.f32.partialorder %v1231, 0.0
      %vm1264 = vcmp.ge.f32.partialorder %v1232, 0.0
      %vm1265 = vcmp.ge.f32.partialorder %v1233, 0.0
      %vm1266 = vcmp.ge.f32.partialorder %v1234, 0.0
      %vm1267 = vcmp.ge.f32.partialorder %v1235, 0.0
      %vm1268 = vcmp.ge.f32.partialorder %v1236, 0.0
      %vm1269 = vcmp.ge.f32.partialorder %v1237, 0.0
      %vm1270 = vcmp.ge.f32.partialorder %v1238, 0.0
      %v1271 = vmul.f32 %v1207, 0.01
      %v1272 = vmul.f32 %v1208, 0.01
      %v1273 = vmul.f32 %v1209, 0.01
      %v1274 = vmul.f32 %v1210, 0.01
      %v1275 = vmul.f32 %v1211, 0.01
      %v1276 = vmul.f32 %v1212, 0.01
      %v1277 = vmul.f32 %v1213, 0.01
      %v1278 = vmul.f32 %v1214, 0.01
      %v1279 = vmul.f32 %v1215, 0.01
      %v1280 = vmul.f32 %v1216, 0.01
      %v1281 = vmul.f32 %v1217, 0.01
      %v1282 = vmul.f32 %v1218, 0.01
      %v1283 = vmul.f32 %v1219, 0.01
      %v1284 = vmul.f32 %v1220, 0.01
      %v1285 = vmul.f32 %v1221, 0.01
      %v1286 = vmul.f32 %v1222, 0.01
      %v1287 = vmul.f32 %v1223, 0.01
      %v1288 = vmul.f32 %v1224, 0.01
      %v1289 = vmul.f32 %v1225, 0.01
      %v1290 = vmul.f32 %v1226, 0.01
      %v1291 = vmul.f32 %v1227, 0.01
      %v1292 = vmul.f32 %v1228, 0.01
      %v1293 = vmul.f32 %v1229, 0.01
      %v1294 = vmul.f32 %v1230, 0.01
      %v1295 = vmul.f32 %v1231, 0.01
      %v1296 = vmul.f32 %v1232, 0.01
      %v1297 = vmul.f32 %v1233, 0.01
      %v1298 = vmul.f32 %v1234, 0.01
      %v1299 = vmul.f32 %v1235, 0.01
      %v1300 = vmul.f32 %v1236, 0.01
      %v1301 = vmul.f32 %v1237, 0.01
      %v1302 = vmul.f32 %v1238, 0.01
      %v1303 = vsel %vm1239, %v1207, %v1271
      %v1304 = vsel %vm1240, %v1208, %v1272
      %v1305 = vsel %vm1241, %v1209, %v1273
      %v1306 = vsel %vm1242, %v1210, %v1274
      %v1307 = vsel %vm1243, %v1211, %v1275
      %v1308 = vsel %vm1244, %v1212, %v1276
      %v1309 = vsel %vm1245, %v1213, %v1277
      %v1310 = vsel %vm1246, %v1214, %v1278
      %v1311 = vsel %vm1247, %v1215, %v1279
      %v1312 = vsel %vm1248, %v1216, %v1280
      %v1313 = vsel %vm1249, %v1217, %v1281
      %v1314 = vsel %vm1250, %v1218, %v1282
      %v1315 = vsel %vm1251, %v1219, %v1283
      %v1316 = vsel %vm1252, %v1220, %v1284
      %v1317 = vsel %vm1253, %v1221, %v1285
      %v1318 = vsel %vm1254, %v1222, %v1286
      %v1319 = vsel %vm1255, %v1223, %v1287
      %v1320 = vsel %vm1256, %v1224, %v1288
      %v1321 = vsel %vm1257, %v1225, %v1289
      %v1322 = vsel %vm1258, %v1226, %v1290
      %v1323 = vsel %vm1259, %v1227, %v1291
      %v1324 = vsel %vm1260, %v1228, %v1292
      %v1325 = vsel %vm1261, %v1229, %v1293
      %v1326 = vsel %vm1262, %v1230, %v1294
      %v1327 = vsel %vm1263, %v1231, %v1295
      %v1328 = vsel %vm1264, %v1232, %v1296
      %v1329 = vsel %vm1265, %v1233, %v1297
      %v1330 = vsel %vm1266, %v1234, %v1298
      %v1331 = vsel %vm1267, %v1235, %v1299
      %v1332 = vsel %vm1268, %v1236, %v1300
      %v1333 = vsel %vm1269, %v1237, %v1301
      %v1334 = vsel %vm1270, %v1238, %v1302
      %v1335 = vpack.c.bf16 %v1304, %v1303
      %v1336 = vpack.c.bf16 %v1306, %v1305
      %v1337 = vpack.c.bf16 %v1308, %v1307
      %v1338 = vpack.c.bf16 %v1310, %v1309
      %v1339 = vpack.c.bf16 %v1312, %v1311
      %v1340 = vpack.c.bf16 %v1314, %v1313
      %v1341 = vpack.c.bf16 %v1316, %v1315
      %v1342 = vpack.c.bf16 %v1318, %v1317
      %v1343 = vpack.c.bf16 %v1320, %v1319
      %v1344 = vpack.c.bf16 %v1322, %v1321
      %v1345 = vpack.c.bf16 %v1324, %v1323
      %v1346 = vpack.c.bf16 %v1326, %v1325
      %v1347 = vpack.c.bf16 %v1328, %v1327
      %v1348 = vpack.c.bf16 %v1330, %v1329
      %v1349 = vpack.c.bf16 %v1332, %v1331
      %v1350 = vpack.c.bf16 %v1334, %v1333
      %v1367 = vunpack.c.l.b16 %v1335
      %v1368 = vunpack.c.h.b16 %v1335
      %v1369 = vunpack.c.l.b16 %v1336
      %v1370 = vunpack.c.h.b16 %v1336
      %v1371 = vunpack.c.l.b16 %v1337
      %v1372 = vunpack.c.h.b16 %v1337
      %v1373 = vunpack.c.l.b16 %v1338
      %v1374 = vunpack.c.h.b16 %v1338
      %v1375 = vunpack.c.l.b16 %v1339
      %v1376 = vunpack.c.h.b16 %v1339
      %v1377 = vunpack.c.l.b16 %v1340
      %v1378 = vunpack.c.h.b16 %v1340
      %v1379 = vunpack.c.l.b16 %v1341
      %v1380 = vunpack.c.h.b16 %v1341
      %v1381 = vunpack.c.l.b16 %v1342
      %v1382 = vunpack.c.h.b16 %v1342
      %v1383 = vunpack.c.l.b16 %v1343
      %v1384 = vunpack.c.h.b16 %v1343
      %v1385 = vunpack.c.l.b16 %v1344
      %v1386 = vunpack.c.h.b16 %v1344
      %v1387 = vunpack.c.l.b16 %v1345
      %v1388 = vunpack.c.h.b16 %v1345
      %v1389 = vunpack.c.l.b16 %v1346
      %v1390 = vunpack.c.h.b16 %v1346
      %v1391 = vunpack.c.l.b16 %v1347
      %v1392 = vunpack.c.h.b16 %v1347
      %v1393 = vunpack.c.l.b16 %v1348
      %v1394 = vunpack.c.h.b16 %v1348
      %v1395 = vunpack.c.l.b16 %v1349
      %v1396 = vunpack.c.h.b16 %v1349
      %v1397 = vunpack.c.l.b16 %v1350
      %v1398 = vunpack.c.h.b16 %v1350
      %v1399 = vpack.c.b16 %v1367, %v1367
      %v1400 = vpack.c.b16 %v1368, %v1368
      %v1401 = vpack.c.b16 %v1369, %v1369
      %v1402 = vpack.c.b16 %v1370, %v1370
      %v1403 = vpack.c.b16 %v1371, %v1371
      %v1404 = vpack.c.b16 %v1372, %v1372
      %v1405 = vpack.c.b16 %v1373, %v1373
      %v1406 = vpack.c.b16 %v1374, %v1374
      %v1407 = vpack.c.b16 %v1375, %v1375
      %v1408 = vpack.c.b16 %v1376, %v1376
      %v1409 = vpack.c.b16 %v1377, %v1377
      %v1410 = vpack.c.b16 %v1378, %v1378
      %v1411 = vpack.c.b16 %v1379, %v1379
      %v1412 = vpack.c.b16 %v1380, %v1380
      %v1413 = vpack.c.b16 %v1381, %v1381
      %v1414 = vpack.c.b16 %v1382, %v1382
      %v1415 = vpack.c.b16 %v1383, %v1383
      %v1416 = vpack.c.b16 %v1384, %v1384
      %v1417 = vpack.c.b16 %v1385, %v1385
      %v1418 = vpack.c.b16 %v1386, %v1386
      %v1419 = vpack.c.b16 %v1387, %v1387
      %v1420 = vpack.c.b16 %v1388, %v1388
      %v1421 = vpack.c.b16 %v1389, %v1389
      %v1422 = vpack.c.b16 %v1390, %v1390
      %v1423 = vpack.c.b16 %v1391, %v1391
      %v1424 = vpack.c.b16 %v1392, %v1392
      %v1425 = vpack.c.b16 %v1393, %v1393
      %v1426 = vpack.c.b16 %v1394, %v1394
      %v1427 = vpack.c.b16 %v1395, %v1395
      %v1428 = vpack.c.b16 %v1396, %v1396
      %v1429 = vpack.c.b16 %v1397, %v1397
      %v1430 = vpack.c.b16 %v1398, %v1398
      %vm1463 = vcmask 257024
      %1464 = vst.msk [vmem:[%s206] sm:$0xf] %vm1463, %v1399
      %1465 = vst.msk [vmem:[%s206 + $0x4] sm:$0xf] %vm1463, %v1400
      %1466 = vst.msk [vmem:[%s206 + $0x8] sm:$0xf] %vm1463, %v1401
      %1467 = vst.msk [vmem:[%s206 + $0xc] sm:$0xf] %vm1463, %v1402
      %1468 = vst.msk [vmem:[%s206 + $0x10] sm:$0xf] %vm1463, %v1403
      %1469 = vst.msk [vmem:[%s206 + $0x14] sm:$0xf] %vm1463, %v1404
      %1470 = vst.msk [vmem:[%s206 + $0x18] sm:$0xf] %vm1463, %v1405
      %1471 = vst.msk [vmem:[%s206 + $0x1c] sm:$0xf] %vm1463, %v1406
      %1472 = vst.msk [vmem:[%s206 + $0x20] sm:$0xf] %vm1463, %v1407
      %1473 = vst.msk [vmem:[%s206 + $0x24] sm:$0xf] %vm1463, %v1408
      %1474 = vst.msk [vmem:[%s206 + $0x28] sm:$0xf] %vm1463, %v1409
      %1475 = vst.msk [vmem:[%s206 + $0x2c] sm:$0xf] %vm1463, %v1410
      %1476 = vst.msk [vmem:[%s206 + $0x30] sm:$0xf] %vm1463, %v1411
      %1477 = vst.msk [vmem:[%s206 + $0x34] sm:$0xf] %vm1463, %v1412
      %1478 = vst.msk [vmem:[%s206 + $0x38] sm:$0xf] %vm1463, %v1413
      %1479 = vst.msk [vmem:[%s206 + $0x3c] sm:$0xf] %vm1463, %v1414
      %1480 = vst.msk [vmem:[%s206 + $0x40] sm:$0xf] %vm1463, %v1415
      %1481 = vst.msk [vmem:[%s206 + $0x44] sm:$0xf] %vm1463, %v1416
      %1482 = vst.msk [vmem:[%s206 + $0x48] sm:$0xf] %vm1463, %v1417
      %1483 = vst.msk [vmem:[%s206 + $0x4c] sm:$0xf] %vm1463, %v1418
      %1484 = vst.msk [vmem:[%s206 + $0x50] sm:$0xf] %vm1463, %v1419
      %1485 = vst.msk [vmem:[%s206 + $0x54] sm:$0xf] %vm1463, %v1420
      %1486 = vst.msk [vmem:[%s206 + $0x58] sm:$0xf] %vm1463, %v1421
      %1487 = vst.msk [vmem:[%s206 + $0x5c] sm:$0xf] %vm1463, %v1422
      %1488 = vst.msk [vmem:[%s206 + $0x60] sm:$0xf] %vm1463, %v1423
      %1489 = vst.msk [vmem:[%s206 + $0x64] sm:$0xf] %vm1463, %v1424
      %1490 = vst.msk [vmem:[%s206 + $0x68] sm:$0xf] %vm1463, %v1425
      %1491 = vst.msk [vmem:[%s206 + $0x6c] sm:$0xf] %vm1463, %v1426
      %1492 = vst.msk [vmem:[%s206 + $0x70] sm:$0xf] %vm1463, %v1427
      %1493 = vst.msk [vmem:[%s206 + $0x74] sm:$0xf] %vm1463, %v1428
      %1494 = vst.msk [vmem:[%s206 + $0x78] sm:$0xf] %vm1463, %v1429
      %1495 = vst.msk [vmem:[%s206 + $0x7c] sm:$0xf] %vm1463, %v1430
      %p1496 = scmp.lt.s32.totalorder %s18, 1
      %s1497 = scalar_select %p1496, %s18, 1
      %p1498 = scmp.lt.s32.totalorder %s19, 0
      %s1499 = scalar_select %p1498, %s19, 0
      %s1500 = smul.addr %s1499, 32
      %s1501 = smul.addr %s1497, 32
      %s1502 = sadd.s32 %s1500, %s1501
      %s1503 = smul.addr %s1502, 4
      %s1504 = scalar_lea.vmem %s3, %s1503
      // Predicated region
      $region33: #{sffi_forward.38} parent=31 // pred_check
        %p1505 = pneg %p116
      $region34: #{sffi_forward.38} parent=31 // pred_check_branch
        %1507 = sbr.rel (%p1505) target = $region36
      $region35: #{sffi_forward.38} parent=31 // pred_region
        _
      $region36: #{sffi_forward.38} parent=31 // pred_fallthru
        _
    $region32: #{sffi_forward.38} parent=5 // pred_fallthru
      _
    %p1508 = scmp.le.s32.totalorder 2, %s9
    // Predicated region
    $region37: #{sffi_forward.38} parent=5 // pred_check
      %p1509 = pneg %p1508
    $region38: #{sffi_forward.38} parent=5 // pred_check_branch
      %1511 = sbr.rel (%p1509) target = $region40
    $region39: #{sffi_forward.38} parent=5 // pred_region
      %s1512 = ssub.s32 %s9, 2
      // Predicated region
      $region41: #{sffi_forward.38} parent=39 // pred_check
        %p1513 = pneg %p122
      $region42: #{sffi_forward.38} parent=39 // pred_check_branch
        %1515 = sbr.rel (%p1513) target = $region44
      $region43: #{sffi_forward.38} parent=39 // pred_region
        %p1516 = scmp.lt.s32.totalorder %s20, 1
        %s1517 = scalar_select %p1516, %s20, 1
        %p1518 = scmp.lt.s32.totalorder %s21, 0
        %s1519 = scalar_select %p1518, %s21, 0
        %s1520 = smul.addr %s1519, 32
        %s1521 = smul.addr %s1517, 32
        %s1522 = sadd.s32 %s1520, %s1521
        %s1523 = smul.addr %s1522, 4
        %s1524 = scalar_lea.vmem %s3, %s1523
      $region44: #{sffi_forward.38} parent=39 // pred_fallthru
        _
    $region40: #{sffi_forward.38} parent=5 // pred_fallthru
      _
  $region6: #{sffi_forward.38} parent=0 // loop_footer
    %s13 = sadd.s32 1, %s9
  $region7: #{sffi_forward.38} parent=0 // loop_footer_branch
    %8 = sbr.rel target = $region3
  $region8: #{sffi_forward.38} parent=0 // loop_exit
    _

// kernel: reverse.18
$region0: #{reverse.18}
  #allocation0 [shape = 's32[1]{0}', space=sflag, size = 0x4, scoped, tag = 'scoped memory for reverse.18']
  %s0 = inlined_call_operand.vmem [shape: f32[2,16,16,7], index: 0, kind: input, shape index: {}]
  %s1 = inlined_call_operand.vmem [shape: f32[2,16,16,7], index: 1, kind: output, shape index: {}]
  %s2 = scalar_lea.vmem %s0, 96
  %v3 = vld [vmem:[%s2] sm:$0xff]
  %4 = vst [vmem:[%s1] sm:$0xff] %v3
  %s5 = scalar_lea.vmem %s0, 208
  %v6 = vld [vmem:[%s5] sm:$0xff]
  %s7 = scalar_lea.vmem %s1, 112
  %8 = vst [vmem:[%s7] sm:$0xff] %v6
  %s9 = scalar_lea.vmem %s0, 80
  %v10 = vld [vmem:[%s9] sm:$0xff]
  %s11 = scalar_lea.vmem %s1, 16
  %12 = vst [vmem:[%s11] sm:$0xff] %v10
  %s13 = scalar_lea.vmem %s0, 192
  %v14 = vld [vmem:[%s13] sm:$0xff]
  %s15 = scalar_lea.vmem %s1, 128
  %16 = vst [vmem:[%s15] sm:$0xff] %v14
  %s17 = scalar_lea.vmem %s0, 64
  %v18 = vld [vmem:[%s17] sm:$0xff]
  %s19 = scalar_lea.vmem %s1, 32
  %20 = vst [vmem:[%s19] sm:$0xff] %v18
  %s21 = scalar_lea.vmem %s0, 176
  %v22 = vld [vmem:[%s21] sm:$0xff]
  %s23 = scalar_lea.vmem %s1, 144
  %24 = vst [vmem:[%s23] sm:$0xff] %v22
  %s25 = scalar_lea.vmem %s0, 48
  %v26 = vld [vmem:[%s25] sm:$0xff]
  %s27 = scalar_lea.vmem %s1, 48
  %28 = vst [vmem:[%s27] sm:$0xff] %v26
  %s29 = scalar_lea.vmem %s0, 160
  %v30 = vld [vmem:[%s29] sm:$0xff]
  %s31 = scalar_lea.vmem %s1, 160
  %32 = vst [vmem:[%s31] sm:$0xff] %v30
  %s33 = scalar_lea.vmem %s0, 32
  %v34 = vld [vmem:[%s33] sm:$0xff]
  %s35 = scalar_lea.vmem %s1, 64
  %36 = vst [vmem:[%s35] sm:$0xff] %v34
  %s37 = scalar_lea.vmem %s0, 144
  %v38 = vld [vmem:[%s37] sm:$0xff]
  %s39 = scalar_lea.vmem %s1, 176
  %40 = vst [vmem:[%s39] sm:$0xff] %v38
  %s41 = scalar_lea.vmem %s0, 16
  %v42 = vld [vmem:[%s41] sm:$0xff]
  %s43 = scalar_lea.vmem %s1, 80
  %44 = vst [vmem:[%s43] sm:$0xff] %v42
  %s45 = scalar_lea.vmem %s0, 128
  %v46 = vld [vmem:[%s45] sm:$0xff]
  %s47 = scalar_lea.vmem %s1, 192
  %48 = vst [vmem:[%s47] sm:$0xff] %v46
  %v49 = vld [vmem:[%s0] sm:$0xff]
  %s50 = scalar_lea.vmem %s1, 96
  %51 = vst [vmem:[%s50] sm:$0xff] %v49
  %s52 = scalar_lea.vmem %s0, 112
  %v53 = vld [vmem:[%s52] sm:$0xff]
  %s54 = scalar_lea.vmem %s1, 208
  %55 = vst [vmem:[%s54] sm:$0xff] %v53
  %s56 = scalar_lea.vmem %s0, 104
  %v57 = vld [vmem:[%s56] sm:$0xff]
  %s58 = scalar_lea.vmem %s1, 8
  %59 = vst [vmem:[%s58] sm:$0xff] %v57
  %s60 = scalar_lea.vmem %s0, 216
  %v61 = vld [vmem:[%s60] sm:$0xff]
  %s62 = scalar_lea.vmem %s1, 120
  %63 = vst [vmem:[%s62] sm:$0xff] %v61
  %s64 = scalar_lea.vmem %s0, 88
  %v65 = vld [vmem:[%s64] sm:$0xff]
  %s66 = scalar_lea.vmem %s1, 24
  %67 = vst [vmem:[%s66] sm:$0xff] %v65
  %s68 = scalar_lea.vmem %s0, 200
  %v69 = vld [vmem:[%s68] sm:$0xff]
  %s70 = scalar_lea.vmem %s1, 136
  %71 = vst [vmem:[%s70] sm:$0xff] %v69
  %s72 = scalar_lea.vmem %s0, 72
  %v73 = vld [vmem:[%s72] sm:$0xff]
  %s74 = scalar_lea.vmem %s1, 40
  %75 = vst [vmem:[%s74] sm:$0xff] %v73
  %s76 = scalar_lea.vmem %s0, 184
  %v77 = vld [vmem:[%s76] sm:$0xff]
  %s78 = scalar_lea.vmem %s1, 152
  %79 = vst [vmem:[%s78] sm:$0xff] %v77
  %s80 = scalar_lea.vmem %s0, 56
  %v81 = vld [vmem:[%s80] sm:$0xff]
  %s82 = scalar_lea.vmem %s1, 56
  %83 = vst [vmem:[%s82] sm:$0xff] %v81
  %s84 = scalar_lea.vmem %s0, 168
  %v85 = vld [vmem:[%s84] sm:$0xff]
  %s86 = scalar_lea.vmem %s1, 168
  %87 = vst [vmem:[%s86] sm:$0xff] %v85
  %s88 = scalar_lea.vmem %s0, 40
  %v89 = vld [vmem:[%s88] sm:$0xff]
  %s90 = scalar_lea.vmem %s1, 72
  %91 = vst [vmem:[%s90] sm:$0xff] %v89
  %s92 = scalar_lea.vmem %s0, 152
  %v93 = vld [vmem:[%s92] sm:$0xff]
  %s94 = scalar_lea.vmem %s1, 184
  %95 = vst [vmem:[%s94] sm:$0xff] %v93
  %s96 = scalar_lea.vmem %s0, 24
  %v97 = vld [vmem:[%s96] sm:$0xff]
  %s98 = scalar_lea.vmem %s1, 88
  %99 = vst [vmem:[%s98] sm:$0xff] %v97
  %s100 = scalar_lea.vmem %s0, 136
  %v101 = vld [vmem:[%s100] sm:$0xff]
  %s102 = scalar_lea.vmem %s1, 200
  %103 = vst [vmem:[%s102] sm:$0xff] %v101
  %s104 = scalar_lea.vmem %s0, 8
  %v105 = vld [vmem:[%s104] sm:$0xff]
  %s106 = scalar_lea.vmem %s1, 104
  %107 = vst [vmem:[%s106] sm:$0xff] %v105
  %s108 = scalar_lea.vmem %s0, 120
  %v109 = vld [vmem:[%s108] sm:$0xff]
  %s110 = scalar_lea.vmem %s1, 216
  %111 = vst [vmem:[%s110] sm:$0xff] %v109

// kernel: sffi_forward.39
$region0: #{sffi_forward.39}
  #allocation0 [shape = 'u32[]', space=smem, size = 0x4, offset = 0x4, fixed_abs, tag = 'smem constant byte address 0x4 - core index']
  #allocation1 [shape = 'u32[144,128]{1,0:T(1,128)}', space=vmem, size = 0x12000, scoped, tag = 'internal scratch']
  #allocation2 [shape = 'f32[1,1]{1,0:T(1,128)S(1)}', space=vmem, size = 0x200, scoped, tag = 'scoped memory for sffi_forward.39']
  %s0 = inlined_call_operand.vmem [shape: bf16[2,256,16], index: 0, kind: input, shape index: {}]
  %s1 = inlined_call_operand.vmem [shape: bf16[2,256,16], index: 1, kind: input, shape index: {}]
  %s2 = inlined_call_operand.vmem [shape: bf16[16,16], index: 2, kind: input, shape index: {}]
  %s3 = inlined_call_operand.vmem [shape: f32[1,16], index: 3, kind: input, shape index: {}]
  %s4 = inlined_call_operand.vmem [shape: f32[1,16], index: 4, kind: input, shape index: {}]
  %s5 = inlined_call_operand.<no memory space> [shape: f32[1,1], index: 5, kind: input, shape index: {}]
  %s6 = inlined_call_operand.vmem [shape: bf16[16,16], index: 6, kind: input, shape index: {}]
  %s7 = inlined_call_operand.vmem [shape: f32[1,16], index: 7, kind: input, shape index: {}]
  %s8 = inlined_call_operand.vmem [shape: bf16[16,16], index: 8, kind: input, shape index: {}]
  %s9 = inlined_call_operand.vmem [shape: f32[1,16], index: 9, kind: input, shape index: {}]
  %s10 = inlined_call_operand.vmem [shape: bf16[2,256,16], index: 10, kind: output, shape index: {}]
  %s11 = sld [smem:[#allocation0]]
  $region73: #{sffi_forward.39} parent=0
    _
  %s13 = ssub.s32 1, %s11
  %s14 = scalar_select 0, %s13, %s11
  %v15 = vstv %s5
  %16 = vst [vmem:[#allocation2] sm:$0x1] %v15
  loop: start=0, step=1, limit=4
  $region2: #{sffi_forward.39} parent=0 // loop_pre_header
    _
  $region3: #{sffi_forward.39} parent=0 // loop_header
    %s18 = sphi 0, %s22
    %p19 = scmp.ge.s32.totalorder %s18, 4
    %s28 = sphi 0, %s30
    %s31 = sphi 0, %s28
    %s32 = sphi 0, %s31
    %s48 = sphi 0, %s32
    %s54 = sphi 0, %s56
    %s57 = sphi 0, %s54
    %s58 = sphi 0, %s57
    %s74 = sphi 0, %s58
    %s78 = sphi 0, %s78
    %s80 = sphi 0, %s78
    %s81 = sphi 0, %s80
    %s95 = sphi 0, %s81
    %s99 = sphi 0, %s99
    %s101 = sphi 0, %s99
    %s102 = sphi 0, %s101
    %s116 = sphi 0, %s102
    %s120 = sphi 0, %s120
    %s122 = sphi 0, %s120
    %s123 = sphi 0, %s122
    %s137 = sphi 0, %s123
    %s141 = sphi 0, %s141
    %s143 = sphi 0, %s141
    %s144 = sphi 0, %s143
    %s158 = sphi 0, %s144
    %s162 = sphi 0, %s162
    %s164 = sphi 0, %s162
    %s165 = sphi 0, %s164
    %s179 = sphi 0, %s165
    %s183 = sphi 0, %s183
    %s185 = sphi 0, %s183
    %s186 = sphi 0, %s185
    %s200 = sphi 0, %s186
    %s204 = sphi 0, %s204
    %s206 = sphi 0, %s204
    %s207 = sphi 0, %s206
    %s221 = sphi 0, %s207
    %s225 = sphi 0, %s225
    %s227 = sphi 0, %s225
    %s228 = sphi 0, %s227
    %s242 = sphi 0, %s228
    %s248 = sphi 0, %s250
    %s251 = sphi 0, %s248
    %s252 = sphi 0, %s251
    %s268 = sphi 0, %s252
  $region4: #{sffi_forward.39} parent=0 // loop_header_branch
    %21 = sbr.rel (%p19) target = $region8
  $region5: #{sffi_forward.39} parent=0 // loop_body
    %s23 = ssub.s32 %s18, 1
    %s24 = ssub.s32 %s18, 2
    %s25 = sadd.s32 %s18, 1
    %s26 = ssub.s32 %s18, %s25
    %p27 = scmp.eq.s32.totalorder %s26, 0
    %s29 = sadd.s32 %s28, 1
    %s30 = scalar_select %p27, %s28, %s29
    %p33 = pneg %p27
    %p34 = scmp.eq.s32.totalorder %s18, 1
    %p35 = por %p33, %p34
    %p36 = scmp.ne.s32.totalorder %s28, %s31
    %p37 = scmp.eq.s32.totalorder %s18, 0
    %p38 = por %p36, %p37
    %p39 = scmp.ne.s32.totalorder %s28, %s31
    %p40 = scmp.eq.s32.totalorder %s23, 1
    %p41 = por %p39, %p40
    %p42 = scmp.ne.s32.totalorder %s31, %s32
    %p43 = scmp.eq.s32.totalorder %s23, 0
    %p44 = por %p42, %p43
    %p45 = scmp.ne.s32.totalorder %s31, %s32
    %p46 = scmp.eq.s32.totalorder %s24, 1
    %p47 = por %p45, %p46
    %p49 = scmp.ne.s32.totalorder %s32, %s48
    %p50 = scmp.eq.s32.totalorder %s24, 0
    %p51 = por %p49, %p50
    %s52 = ssub.s32 %s18, %s25
    %p53 = scmp.eq.s32.totalorder %s52, 0
    %s55 = sadd.s32 %s54, 1
    %s56 = scalar_select %p53, %s54, %s55
    %p59 = pneg %p53
    %p60 = scmp.eq.s32.totalorder %s18, 1
    %p61 = por %p59, %p60
    %p62 = scmp.ne.s32.totalorder %s54, %s57
    %p63 = scmp.eq.s32.totalorder %s18, 0
    %p64 = por %p62, %p63
    %p65 = scmp.ne.s32.totalorder %s54, %s57
    %p66 = scmp.eq.s32.totalorder %s23, 1
    %p67 = por %p65, %p66
    %p68 = scmp.ne.s32.totalorder %s57, %s58
    %p69 = scmp.eq.s32.totalorder %s23, 0
    %p70 = por %p68, %p69
    %p71 = scmp.ne.s32.totalorder %s57, %s58
    %p72 = scmp.eq.s32.totalorder %s24, 1
    %p73 = por %p71, %p72
    %p75 = scmp.ne.s32.totalorder %s58, %s74
    %p76 = scmp.eq.s32.totalorder %s24, 0
    %p77 = por %p75, %p76
    %s79 = sadd.s32 %s78, 1
    %p82 = scmp.eq.s32.totalorder %s18, 1
    %p83 = scmp.ne.s32.totalorder %s78, %s80
    %p84 = scmp.eq.s32.totalorder %s18, 0
    %p85 = por %p83, %p84
    %p86 = scmp.ne.s32.totalorder %s78, %s80
    %p87 = scmp.eq.s32.totalorder %s23, 1
    %p88 = por %p86, %p87
    %p89 = scmp.ne.s32.totalorder %s80, %s81
    %p90 = scmp.eq.s32.totalorder %s23, 0
    %p91 = por %p89, %p90
    %p92 = scmp.ne.s32.totalorder %s80, %s81
    %p93 = scmp.eq.s32.totalorder %s24, 1
    %p94 = por %p92, %p93
    %p96 = scmp.ne.s32.totalorder %s81, %s95
    %p97 = scmp.eq.s32.totalorder %s24, 0
    %p98 = por %p96, %p97
    %s100 = sadd.s32 %s99, 1
    %p103 = scmp.eq.s32.totalorder %s18, 1
    %p104 = scmp.ne.s32.totalorder %s99, %s101
    %p105 = scmp.eq.s32.totalorder %s18, 0
    %p106 = por %p104, %p105
    %p107 = scmp.ne.s32.totalorder %s99, %s101
    %p108 = scmp.eq.s32.totalorder %s23, 1
    %p109 = por %p107, %p108
    %p110 = scmp.ne.s32.totalorder %s101, %s102
    %p111 = scmp.eq.s32.totalorder %s23, 0
    %p112 = por %p110, %p111
    %p113 = scmp.ne.s32.totalorder %s101, %s102
    %p114 = scmp.eq.s32.totalorder %s24, 1
    %p115 = por %p113, %p114
    %p117 = scmp.ne.s32.totalorder %s102, %s116
    %p118 = scmp.eq.s32.totalorder %s24, 0
    %p119 = por %p117, %p118
    %s121 = sadd.s32 %s120, 1
    %p124 = scmp.eq.s32.totalorder %s18, 1
    %p125 = scmp.ne.s32.totalorder %s120, %s122
    %p126 = scmp.eq.s32.totalorder %s18, 0
    %p127 = por %p125, %p126
    %p128 = scmp.ne.s32.totalorder %s120, %s122
    %p129 = scmp.eq.s32.totalorder %s23, 1
    %p130 = por %p128, %p129
    %p131 = scmp.ne.s32.totalorder %s122, %s123
    %p132 = scmp.eq.s32.totalorder %s23, 0
    %p133 = por %p131, %p132
    %p134 = scmp.ne.s32.totalorder %s122, %s123
    %p135 = scmp.eq.s32.totalorder %s24, 1
    %p136 = por %p134, %p135
    %p138 = scmp.ne.s32.totalorder %s123, %s137
    %p139 = scmp.eq.s32.totalorder %s24, 0
    %p140 = por %p138, %p139
    %s142 = sadd.s32 %s141, 1
    %p145 = scmp.eq.s32.totalorder %s18, 1
    %p146 = scmp.ne.s32.totalorder %s141, %s143
    %p147 = scmp.eq.s32.totalorder %s18, 0
    %p148 = por %p146, %p147
    %p149 = scmp.ne.s32.totalorder %s141, %s143
    %p150 = scmp.eq.s32.totalorder %s23, 1
    %p151 = por %p149, %p150
    %p152 = scmp.ne.s32.totalorder %s143, %s144
    %p153 = scmp.eq.s32.totalorder %s23, 0
    %p154 = por %p152, %p153
    %p155 = scmp.ne.s32.totalorder %s143, %s144
    %p156 = scmp.eq.s32.totalorder %s24, 1
    %p157 = por %p155, %p156
    %p159 = scmp.ne.s32.totalorder %s144, %s158
    %p160 = scmp.eq.s32.totalorder %s24, 0
    %p161 = por %p159, %p160
    %s163 = sadd.s32 %s162, 1
    %p166 = scmp.eq.s32.totalorder %s18, 1
    %p167 = scmp.ne.s32.totalorder %s162, %s164
    %p168 = scmp.eq.s32.totalorder %s18, 0
    %p169 = por %p167, %p168
    %p170 = scmp.ne.s32.totalorder %s162, %s164
    %p171 = scmp.eq.s32.totalorder %s23, 1
    %p172 = por %p170, %p171
    %p173 = scmp.ne.s32.totalorder %s164, %s165
    %p174 = scmp.eq.s32.totalorder %s23, 0
    %p175 = por %p173, %p174
    %p176 = scmp.ne.s32.totalorder %s164, %s165
    %p177 = scmp.eq.s32.totalorder %s24, 1
    %p178 = por %p176, %p177
    %p180 = scmp.ne.s32.totalorder %s165, %s179
    %p181 = scmp.eq.s32.totalorder %s24, 0
    %p182 = por %p180, %p181
    %s184 = sadd.s32 %s183, 1
    %p187 = scmp.eq.s32.totalorder %s18, 1
    %p188 = scmp.ne.s32.totalorder %s183, %s185
    %p189 = scmp.eq.s32.totalorder %s18, 0
    %p190 = por %p188, %p189
    %p191 = scmp.ne.s32.totalorder %s183, %s185
    %p192 = scmp.eq.s32.totalorder %s23, 1
    %p193 = por %p191, %p192
    %p194 = scmp.ne.s32.totalorder %s185, %s186
    %p195 = scmp.eq.s32.totalorder %s23, 0
    %p196 = por %p194, %p195
    %p197 = scmp.ne.s32.totalorder %s185, %s186
    %p198 = scmp.eq.s32.totalorder %s24, 1
    %p199 = por %p197, %p198
    %p201 = scmp.ne.s32.totalorder %s186, %s200
    %p202 = scmp.eq.s32.totalorder %s24, 0
    %p203 = por %p201, %p202
    %s205 = sadd.s32 %s204, 1
    %p208 = scmp.eq.s32.totalorder %s18, 1
    %p209 = scmp.ne.s32.totalorder %s204, %s206
    %p210 = scmp.eq.s32.totalorder %s18, 0
    %p211 = por %p209, %p210
    %p212 = scmp.ne.s32.totalorder %s204, %s206
    %p213 = scmp.eq.s32.totalorder %s23, 1
    %p214 = por %p212, %p213
    %p215 = scmp.ne.s32.totalorder %s206, %s207
    %p216 = scmp.eq.s32.totalorder %s23, 0
    %p217 = por %p215, %p216
    %p218 = scmp.ne.s32.totalorder %s206, %s207
    %p219 = scmp.eq.s32.totalorder %s24, 1
    %p220 = por %p218, %p219
    %p222 = scmp.ne.s32.totalorder %s207, %s221
    %p223 = scmp.eq.s32.totalorder %s24, 0
    %p224 = por %p222, %p223
    %s226 = sadd.s32 %s225, 1
    %p229 = scmp.eq.s32.totalorder %s18, 1
    %p230 = scmp.ne.s32.totalorder %s225, %s227
    %p231 = scmp.eq.s32.totalorder %s18, 0
    %p232 = por %p230, %p231
    %p233 = scmp.ne.s32.totalorder %s225, %s227
    %p234 = scmp.eq.s32.totalorder %s23, 1
    %p235 = por %p233, %p234
    %p236 = scmp.ne.s32.totalorder %s227, %s228
    %p237 = scmp.eq.s32.totalorder %s23, 0
    %p238 = por %p236, %p237
    %p239 = scmp.ne.s32.totalorder %s227, %s228
    %p240 = scmp.eq.s32.totalorder %s24, 1
    %p241 = por %p239, %p240
    %p243 = scmp.ne.s32.totalorder %s228, %s242
    %p244 = scmp.eq.s32.totalorder %s24, 0
    %p245 = por %p243, %p244
    %s246 = ssub.s32 %s18, %s25
    %p247 = scmp.eq.s32.totalorder %s246, 0
    %s249 = sadd.s32 %s248, 1
    %s250 = scalar_select %p247, %s248, %s249
    %p253 = pneg %p247
    %p254 = scmp.eq.s32.totalorder %s18, 1
    %p255 = por %p253, %p254
    %p256 = scmp.ne.s32.totalorder %s248, %s251
    %p257 = scmp.eq.s32.totalorder %s18, 0
    %p258 = por %p256, %p257
    %p259 = scmp.ne.s32.totalorder %s248, %s251
    %p260 = scmp.eq.s32.totalorder %s23, 1
    %p261 = por %p259, %p260
    %p262 = scmp.ne.s32.totalorder %s251, %s252
    %p263 = scmp.eq.s32.totalorder %s23, 0
    %p264 = por %p262, %p263
    %p265 = scmp.ne.s32.totalorder %s251, %s252
    %p266 = scmp.eq.s32.totalorder %s24, 1
    %p267 = por %p265, %p266
    %p269 = scmp.ne.s32.totalorder %s252, %s268
    %p270 = scmp.eq.s32.totalorder %s24, 0
    %p271 = por %p269, %p270
    %p272 = scmp.le.s32.totalorder 1, %s18
    %p273 = scmp.lt.s32.totalorder %s18, 3
    %p274 = pnand %p272, %p273
    %p275 = pneg %p274
    // Predicated region
    $region9: #{sffi_forward.39} parent=5 // pred_check
      _
    $region10: #{sffi_forward.39} parent=5 // pred_check_branch
      %277 = sbr.rel (%p274) target = $region12
    $region11: #{sffi_forward.39} parent=5 // pred_region
      %s278 = ssub.s32 %s18, 1
      // Predicated region
      $region13: #{sffi_forward.39} parent=11 // pred_check
        %p279 = pneg %p91
      $region14: #{sffi_forward.39} parent=11 // pred_check_branch
        %281 = sbr.rel (%p279) target = $region16
      $region15: #{sffi_forward.39} parent=11 // pred_region
        _
      $region16: #{sffi_forward.39} parent=11 // pred_fallthru
        _
      // Predicated region
      $region17: #{sffi_forward.39} parent=11 // pred_check
        %p282 = pneg %p112
      $region18: #{sffi_forward.39} parent=11 // pred_check_branch
        %284 = sbr.rel (%p282) target = $region20
      $region19: #{sffi_forward.39} parent=11 // pred_region
        _
      $region20: #{sffi_forward.39} parent=11 // pred_fallthru
        _
      // Predicated region
      $region21: #{sffi_forward.39} parent=11 // pred_check
        %p285 = pneg %p133
      $region22: #{sffi_forward.39} parent=11 // pred_check_branch
        %287 = sbr.rel (%p285) target = $region24
      $region23: #{sffi_forward.39} parent=11 // pred_region
        _
      $region24: #{sffi_forward.39} parent=11 // pred_fallthru
        _
      // Predicated region
      $region25: #{sffi_forward.39} parent=11 // pred_check
        %p288 = pneg %p154
      $region26: #{sffi_forward.39} parent=11 // pred_check_branch
        %290 = sbr.rel (%p288) target = $region28
      $region27: #{sffi_forward.39} parent=11 // pred_region
        _
      $region28: #{sffi_forward.39} parent=11 // pred_fallthru
        _
      // Predicated region
      $region29: #{sffi_forward.39} parent=11 // pred_check
        %p291 = pneg %p175
      $region30: #{sffi_forward.39} parent=11 // pred_check_branch
        %293 = sbr.rel (%p291) target = $region32
      $region31: #{sffi_forward.39} parent=11 // pred_region
        _
      $region32: #{sffi_forward.39} parent=11 // pred_fallthru
        _
      // Predicated region
      $region33: #{sffi_forward.39} parent=11 // pred_check
        %p294 = pneg %p196
      $region34: #{sffi_forward.39} parent=11 // pred_check_branch
        %296 = sbr.rel (%p294) target = $region36
      $region35: #{sffi_forward.39} parent=11 // pred_region
        _
      $region36: #{sffi_forward.39} parent=11 // pred_fallthru
        _
      // Predicated region
      $region37: #{sffi_forward.39} parent=11 // pred_check
        %p297 = pneg %p217
      $region38: #{sffi_forward.39} parent=11 // pred_check_branch
        %299 = sbr.rel (%p297) target = $region40
      $region39: #{sffi_forward.39} parent=11 // pred_region
        _
      $region40: #{sffi_forward.39} parent=11 // pred_fallthru
        _
      // Predicated region
      $region41: #{sffi_forward.39} parent=11 // pred_check
        %p300 = pneg %p238
      $region42: #{sffi_forward.39} parent=11 // pred_check_branch
        %302 = sbr.rel (%p300) target = $region44
      $region43: #{sffi_forward.39} parent=11 // pred_region
        _
      $region44: #{sffi_forward.39} parent=11 // pred_fallthru
        _
    $region12: #{sffi_forward.39} parent=5 // pred_fallthru
      _
    %p303 = scmp.lt.s32.totalorder %s18, 2
    // Predicated region
    $region45: #{sffi_forward.39} parent=5 // pred_check
      %p304 = pneg %p303
    $region46: #{sffi_forward.39} parent=5 // pred_check_branch
      %306 = sbr.rel (%p304) target = $region48
    $region47: #{sffi_forward.39} parent=5 // pred_region
      // Predicated region
      $region49: #{sffi_forward.39} parent=47 // pred_check
        %p307 = pneg %p38
      $region50: #{sffi_forward.39} parent=47 // pred_check_branch
        %309 = sbr.rel (%p307) target = $region52
      $region51: #{sffi_forward.39} parent=47 // pred_region
        %p310 = scmp.lt.s32.totalorder %s18, 1
        %s311 = scalar_select %p310, %s18, 1
        %s312 = smul.addr %s311, 32
        %s313 = smul.addr %s312, 4
        %s314 = scalar_lea.vmem %s0, %s313
      $region52: #{sffi_forward.39} parent=47 // pred_fallthru
        _
      // Predicated region
      $region53: #{sffi_forward.39} parent=47 // pred_check
        %p315 = pneg %p64
      $region54: #{sffi_forward.39} parent=47 // pred_check_branch
        %317 = sbr.rel (%p315) target = $region56
      $region55: #{sffi_forward.39} parent=47 // pred_region
        %p318 = scmp.lt.s32.totalorder %s18, 1
        %s319 = scalar_select %p318, %s18, 1
        %s320 = smul.addr %s319, 32
        %s321 = smul.addr %s320, 4
        %s322 = scalar_lea.vmem %s1, %s321
      $region56: #{sffi_forward.39} parent=47 // pred_fallthru
        _
    $region48: #{sffi_forward.39} parent=5 // pred_fallthru
      _
    %p323 = scmp.le.s32.totalorder 1, %s18
    %p324 = scmp.lt.s32.totalorder %s18, 3
    %p325 = pnand %p323, %p324
    %p326 = pneg %p325
    // Predicated region
    $region57: #{sffi_forward.39} parent=5 // pred_check
      _
    $region58: #{sffi_forward.39} parent=5 // pred_check_branch
      %328 = sbr.rel (%p325) target = $region60
    $region59: #{sffi_forward.39} parent=5 // pred_region
      %s329 = ssub.s32 %s18, 1
      %p330 = scmp.lt.s32.totalorder %s23, 1
      %s331 = scalar_select %p330, %s23, 1
      %s332 = smul.addr %s331, 32
      %s333 = smul.addr %s332, 4
      %s334 = scalar_lea.vmem %s0, %s333
      %p335 = pneg %p44
      %p336 = pneg %p41
      %p337 = scmp.lt.s32.totalorder %s23, 1
      %s338 = scalar_select %p337, %s23, 1
      %s339 = smul.addr %s338, 32
      %s340 = smul.addr %s339, 4
      %s341 = scalar_lea.vmem %s1, %s340
      %p342 = pneg %p70
      %p343 = pneg %p67
      %p344 = pneg %p91
      %p345 = pneg %p88
      %p346 = pneg %p112
      %p347 = pneg %p109
      %p348 = pneg %p133
      %p349 = pneg %p130
      %p350 = pneg %p154
      %p351 = pneg %p151
      %p352 = pneg %p175
      %p353 = pneg %p172
      %p354 = pneg %p196
      %p355 = pneg %p193
      %p356 = pneg %p217
      %p357 = pneg %p214
      %p358 = pneg %p238
      %p359 = pneg %p235
      %p360 = pneg %p264
      %p361 = pneg %p261
      %p362 = scmp.lt.s32.totalorder %s23, 1
      %s363 = scalar_select %p362, %s23, 1
      %s364 = smul.addr %s363, 32
      %s365 = smul.addr %s364, 4
      %s366 = scalar_lea.vmem %s10, %s365
      %p367 = scmp.lt.s32.totalorder %s23, 1
      %s368 = scalar_select %p367, %s23, 1
      %s369 = smul.addr %s368, 32
      %s370 = smul.addr %s369, 4
      %s371 = scalar_lea.vmem %s0, %s370
      %p372 = scmp.lt.s32.totalorder %s23, 1
      %s373 = scalar_select %p372, %s23, 1
      %s374 = smul.addr %s373, 32
      %s375 = smul.addr %s374, 4
      %s376 = scalar_lea.vmem %s1, %s375
      %p377 = scmp.lt.s32.totalorder %s23, 1
      %s378 = scalar_select %p377, %s23, 1
      %s379 = smul.addr %s378, 32
      %s380 = smul.addr %s379, 4
      %s381 = scalar_lea.vmem %s10, %s380
      %v383 = vld [vmem:[%s371] sm:$0xf]
      %v384 = vld [vmem:[%s371 + $0x4] sm:$0xf]
      %v385 = vld [vmem:[%s371 + $0x8] sm:$0xf]
      %v386 = vld [vmem:[%s371 + $0xc] sm:$0xf]
      %v387 = vld [vmem:[%s371 + $0x10] sm:$0xf]
      %v388 = vld [vmem:[%s371 + $0x14] sm:$0xf]
      %v389 = vld [vmem:[%s371 + $0x18] sm:$0xf]
      %v390 = vld [vmem:[%s371 + $0x1c] sm:$0xf]
      %v391 = vld [vmem:[%s371 + $0x20] sm:$0xf]
      %v392 = vld [vmem:[%s371 + $0x24] sm:$0xf]
      %v393 = vld [vmem:[%s371 + $0x28] sm:$0xf]
      %v394 = vld [vmem:[%s371 + $0x2c] sm:$0xf]
      %v395 = vld [vmem:[%s371 + $0x30] sm:$0xf]
      %v396 = vld [vmem:[%s371 + $0x34] sm:$0xf]
      %v397 = vld [vmem:[%s371 + $0x38] sm:$0xf]
      %v398 = vld [vmem:[%s371 + $0x3c] sm:$0xf]
      %v399 = vld [vmem:[%s371 + $0x40] sm:$0xf]
      %v400 = vld [vmem:[%s371 + $0x44] sm:$0xf]
      %v401 = vld [vmem:[%s371 + $0x48] sm:$0xf]
      %v402 = vld [vmem:[%s371 + $0x4c] sm:$0xf]
      %v403 = vld [vmem:[%s371 + $0x50] sm:$0xf]
      %v404 = vld [vmem:[%s371 + $0x54] sm:$0xf]
      %v405 = vld [vmem:[%s371 + $0x58] sm:$0xf]
      %v406 = vld [vmem:[%s371 + $0x5c] sm:$0xf]
      %v407 = vld [vmem:[%s371 + $0x60] sm:$0xf]
      %v408 = vld [vmem:[%s371 + $0x64] sm:$0xf]
      %v409 = vld [vmem:[%s371 + $0x68] sm:$0xf]
      %v410 = vld [vmem:[%s371 + $0x6c] sm:$0xf]
      %v411 = vld [vmem:[%s371 + $0x70] sm:$0xf]
      %v412 = vld [vmem:[%s371 + $0x74] sm:$0xf]
      %v413 = vld [vmem:[%s371 + $0x78] sm:$0xf]
      %v414 = vld [vmem:[%s371 + $0x7c] sm:$0xf]
      %v415 = vld [vmem:[%s2] sm:$0xf]
      %v416 = vld [vmem:[%s2 + $0x4] sm:$0xf]
      %v417 = vld [vmem:[%s3] sm:$0x1]
      %v419 = vlaneseq
      %v420 = vshrl.u32 %v419, 7
      %v421 = vsub.s32 0, %v420
      %v422 = vrot.slane %v417, %v421
      %v456 = vunpack.c.l.b16 %v383
      %v457 = vunpack.c.l.b16 %v384
      %v458 = vunpack.c.l.b16 %v385
      %v459 = vunpack.c.l.b16 %v386
      %v460 = vunpack.c.l.b16 %v387
      %v461 = vunpack.c.l.b16 %v388
      %v462 = vunpack.c.l.b16 %v389
      %v463 = vunpack.c.l.b16 %v390
      %v464 = vunpack.c.l.b16 %v391
      %v465 = vunpack.c.l.b16 %v392
      %v466 = vunpack.c.l.b16 %v393
      %v467 = vunpack.c.l.b16 %v394
      %v468 = vunpack.c.l.b16 %v395
      %v469 = vunpack.c.l.b16 %v396
      %v470 = vunpack.c.l.b16 %v397
      %v471 = vunpack.c.l.b16 %v398
      %v472 = vunpack.c.l.b16 %v399
      %v473 = vunpack.c.l.b16 %v400
      %v474 = vunpack.c.l.b16 %v401
      %v475 = vunpack.c.l.b16 %v402
      %v476 = vunpack.c.l.b16 %v403
      %v477 = vunpack.c.l.b16 %v404
      %v478 = vunpack.c.l.b16 %v405
      %v479 = vunpack.c.l.b16 %v406
      %v480 = vunpack.c.l.b16 %v407
      %v481 = vunpack.c.l.b16 %v408
      %v482 = vunpack.c.l.b16 %v409
      %v483 = vunpack.c.l.b16 %v410
      %v484 = vunpack.c.l.b16 %v411
      %v485 = vunpack.c.l.b16 %v412
      %v486 = vunpack.c.l.b16 %v413
      %v487 = vunpack.c.l.b16 %v414
      %v488 = vpack.c.b16 %v457, %v456
      %v489 = vpack.c.b16 %v459, %v458
      %v490 = vpack.c.b16 %v461, %v460
      %v491 = vpack.c.b16 %v463, %v462
      %v492 = vpack.c.b16 %v465, %v464
      %v493 = vpack.c.b16 %v467, %v466
      %v494 = vpack.c.b16 %v469, %v468
      %v495 = vpack.c.b16 %v471, %v470
      %v496 = vpack.c.b16 %v473, %v472
      %v497 = vpack.c.b16 %v475, %v474
      %v498 = vpack.c.b16 %v477, %v476
      %v499 = vpack.c.b16 %v479, %v478
      %v500 = vpack.c.b16 %v481, %v480
      %v501 = vpack.c.b16 %v483, %v482
      %v502 = vpack.c.b16 %v485, %v484
      %v503 = vpack.c.b16 %v487, %v486
      %v506 = vunpack.c.l.b16 %v415
      %v507 = vunpack.c.l.b16 %v416
      %v508 = vpack.c.b16 %v507, %v506
      %vm510 = vcmask 130048
      %v512 = vsel %vm510, %v488, 0
      %v515 = vsel %vm510, %v489, 0
      %v518 = vsel %vm510, %v490, 0
      %v521 = vsel %vm510, %v491, 0
      %v524 = vsel %vm510, %v492, 0
      %v527 = vsel %vm510, %v493, 0
      %v530 = vsel %vm510, %v494, 0
      %v533 = vsel %vm510, %v495, 0
      %v536 = vsel %vm510, %v496, 0
      %v539 = vsel %vm510, %v497, 0
      %v542 = vsel %vm510, %v498, 0
      %v545 = vsel %vm510, %v499, 0
      %v548 = vsel %vm510, %v500, 0
      %v551 = vsel %vm510, %v501, 0
      %v554 = vsel %vm510, %v502, 0
      %v557 = vsel %vm510, %v503, 0
      %559 = vmatprep.subr.bf16.mxu0 0
      %560 = vmatpush1.bf16.msra.mxu0 %v508
      %561 = vmatprep.subr.bf16.mxu0 0
      %562 = vmatpush1.bf16.msra.mxu0 0
      %563 = vmatprep.subr.bf16.mxu0 0
      %564 = vmatpush1.bf16.msra.mxu0 0
      %565 = vmatprep.subr.bf16.mxu0 0
      %566 = vmatpush1.bf16.msra.mxu0 0
      %567 = vmatprep.subr.bf16.mxu0 0
      %568 = vmatpush1.bf16.msra.mxu0 0
      %569 = vmatprep.subr.bf16.mxu0 0
      %570 = vmatpush1.bf16.msra.mxu0 0
      %571 = vmatprep.subr.bf16.mxu0 0
      %572 = vmatpush1.bf16.msra.mxu0 0
      %573 = vmatprep.subr.bf16.mxu0 0
      %574 = vmatpush1.bf16.msra.mxu0 0
      %575 = vmatprep.subr.bf16.mxu0 0
      %576 = vmatpush1.bf16.msra.mxu0 0
      %577 = vmatprep.subr.bf16.mxu0 0
      %578 = vmatpush1.bf16.msra.mxu0 0
      %579 = vmatprep.subr.bf16.mxu0 0
      %580 = vmatpush1.bf16.msra.mxu0 0
      %581 = vmatprep.subr.bf16.mxu0 0
      %582 = vmatpush1.bf16.msra.mxu0 0
      %583 = vmatprep.subr.bf16.mxu0 0
      %584 = vmatpush1.bf16.msra.mxu0 0
      %585 = vmatprep.subr.bf16.mxu0 0
      %586 = vmatpush1.bf16.msra.mxu0 0
      %587 = vmatprep.subr.bf16.mxu0 0
      %588 = vmatpush1.bf16.msra.mxu0 0
      %589 = vmatprep.subr.bf16.mxu0 0
      %590 = vmatpush1.bf16.msra.mxu0 0
      %591 = vmatprep.mubr.bf16.mxu0 0
      %592 = vmatmul.mubr.bf16.gmra.mrb[0].mxu0 %v512
      %v593 = vpop.f32.mrb[0].mxu0
      %v594 = vadd.f32 %v422, %v593
      %v595 = vpop.f32.mrb[0].mxu0
      %v596 = vpop.f32.mrb[0].mxu0
      %v597 = vadd.f32 %v422, %v596
      %v598 = vpop.f32.mrb[0].mxu0
      %599 = vmatprep.mubr.bf16.mxu0 0
      %600 = vmatmul.mubr.bf16.gmra.mrb[0].mxu0 %v515
      %v601 = vpop.f32.mrb[0].mxu0
      %v602 = vadd.f32 %v422, %v601
      %v603 = vpop.f32.mrb[0].mxu0
      %v604 = vpop.f32.mrb[0].mxu0
      %v605 = vadd.f32 %v422, %v604
      %v606 = vpop.f32.mrb[0].mxu0
      %607 = vmatprep.mubr.bf16.mxu0 0
      %608 = vmatmul.mubr.bf16.gmra.mrb[0].mxu0 %v518
      %v609 = vpop.f32.mrb[0].mxu0
      %v610 = vadd.f32 %v422, %v609
      %v611 = vpop.f32.mrb[0].mxu0
      %v612 = vpop.f32.mrb[0].mxu0
      %v613 = vadd.f32 %v422, %v612
      %v614 = vpop.f32.mrb[0].mxu0
      %615 = vmatprep.mubr.bf16.mxu0 0
      %616 = vmatmul.mubr.bf16.gmra.mrb[0].mxu0 %v521
      %v617 = vpop.f32.mrb[0].mxu0
      %v618 = vadd.f32 %v422, %v617
      %v619 = vpop.f32.mrb[0].mxu0
      %v620 = vpop.f32.mrb[0].mxu0
      %v621 = vadd.f32 %v422, %v620
      %v622 = vpop.f32.mrb[0].mxu0
      %623 = vmatprep.mubr.bf16.mxu0 0
      %624 = vmatmul.mubr.bf16.gmra.mrb[0].mxu0 %v524
      %v625 = vpop.f32.mrb[0].mxu0
      %v626 = vadd.f32 %v422, %v625
      %v627 = vpop.f32.mrb[0].mxu0
      %v628 = vpop.f32.mrb[0].mxu0
      %v629 = vadd.f32 %v422, %v628
      %v630 = vpop.f32.mrb[0].mxu0
      %631 = vmatprep.mubr.bf16.mxu0 0
      %632 = vmatmul.mubr.bf16.gmra.mrb[0].mxu0 %v527
      %v633 = vpop.f32.mrb[0].mxu0
      %v634 = vadd.f32 %v422, %v633
      %v635 = vpop.f32.mrb[0].mxu0
      %v636 = vpop.f32.mrb[0].mxu0
      %v637 = vadd.f32 %v422, %v636
      %v638 = vpop.f32.mrb[0].mxu0
      %639 = vmatprep.mubr.bf16.mxu0 0
      %640 = vmatmul.mubr.bf16.gmra.mrb[0].mxu0 %v530
      %v641 = vpop.f32.mrb[0].mxu0
      %v642 = vadd.f32 %v422, %v641
      %v643 = vpop.f32.mrb[0].mxu0
      %v644 = vpop.f32.mrb[0].mxu0
      %v645 = vadd.f32 %v422, %v644
      %v646 = vpop.f32.mrb[0].mxu0
      %647 = vmatprep.mubr.bf16.mxu0 0
      %648 = vmatmul.mubr.bf16.gmra.mrb[0].mxu0 %v533
      %v649 = vpop.f32.mrb[0].mxu0
      %v650 = vadd.f32 %v422, %v649
      %v651 = vpop.f32.mrb[0].mxu0
      %v652 = vpop.f32.mrb[0].mxu0
      %v653 = vadd.f32 %v422, %v652
      %v654 = vpop.f32.mrb[0].mxu0
      %655 = vmatprep.mubr.bf16.mxu0 0
      %656 = vmatmul.mubr.bf16.gmra.mrb[0].mxu0 %v536
      %v657 = vpop.f32.mrb[0].mxu0
      %v658 = vadd.f32 %v422, %v657
      %v659 = vpop.f32.mrb[0].mxu0
      %v660 = vpop.f32.mrb[0].mxu0
      %v661 = vadd.f32 %v422, %v660
      %v662 = vpop.f32.mrb[0].mxu0
      %663 = vmatprep.mubr.bf16.mxu0 0
      %664 = vmatmul.mubr.bf16.gmra.mrb[0].mxu0 %v539
      %v665 = vpop.f32.mrb[0].mxu0
      %v666 = vadd.f32 %v422, %v665
      %v667 = vpop.f32.mrb[0].mxu0
      %v668 = vpop.f32.mrb[0].mxu0
      %v669 = vadd.f32 %v422, %v668
      %v670 = vpop.f32.mrb[0].mxu0
      %671 = vmatprep.mubr.bf16.mxu0 0
      %672 = vmatmul.mubr.bf16.gmra.mrb[0].mxu0 %v542
      %v673 = vpop.f32.mrb[0].mxu0
      %v674 = vadd.f32 %v422, %v673
      %v675 = vpop.f32.mrb[0].mxu0
      %v676 = vpop.f32.mrb[0].mxu0
      %v677 = vadd.f32 %v422, %v676
      %v678 = vpop.f32.mrb[0].mxu0
      %679 = vmatprep.mubr.bf16.mxu0 0
      %680 = vmatmul.mubr.bf16.gmra.mrb[0].mxu0 %v545
      %v681 = vpop.f32.mrb[0].mxu0
      %v682 = vadd.f32 %v422, %v681
      %v683 = vpop.f32.mrb[0].mxu0
      %v684 = vpop.f32.mrb[0].mxu0
      %v685 = vadd.f32 %v422, %v684
      %v686 = vpop.f32.mrb[0].mxu0
      %687 = vmatprep.mubr.bf16.mxu0 0
      %688 = vmatmul.mubr.bf16.gmra.mrb[0].mxu0 %v548
      %v689 = vpop.f32.mrb[0].mxu0
      %v690 = vadd.f32 %v422, %v689
      %v691 = vpop.f32.mrb[0].mxu0
      %v692 = vpop.f32.mrb[0].mxu0
      %v693 = vadd.f32 %v422, %v692
      %v694 = vpop.f32.mrb[0].mxu0
      %695 = vmatprep.mubr.bf16.mxu0 0
      %696 = vmatmul.mubr.bf16.gmra.mrb[0].mxu0 %v551
      %v697 = vpop.f32.mrb[0].mxu0
      %v698 = vadd.f32 %v422, %v697
      %v699 = vpop.f32.mrb[0].mxu0
      %v700 = vpop.f32.mrb[0].mxu0
      %v701 = vadd.f32 %v422, %v700
      %v702 = vpop.f32.mrb[0].mxu0
      %703 = vmatprep.mubr.bf16.mxu0 0
      %704 = vmatmul.mubr.bf16.gmra.mrb[0].mxu0 %v554
      %v705 = vpop.f32.mrb[0].mxu0
      %v706 = vadd.f32 %v422, %v705
      %v707 = vpop.f32.mrb[0].mxu0
      %v708 = vpop.f32.mrb[0].mxu0
      %v709 = vadd.f32 %v422, %v708
      %v710 = vpop.f32.mrb[0].mxu0
      %711 = vmatprep.mubr.bf16.mxu0 0
      %712 = vmatmul.mubr.bf16.gmra.mrb[0].mxu0 %v557
      %v713 = vpop.f32.mrb[0].mxu0
      %v714 = vadd.f32 %v422, %v713
      %v715 = vpop.f32.mrb[0].mxu0
      %v716 = vpop.f32.mrb[0].mxu0
      %v717 = vadd.f32 %v422, %v716
      %v718 = vpop.f32.mrb[0].mxu0
      %719 = vdwg.mxu0
      %v720 = vld [vmem:[%s4] sm:$0x1]
      %v722 = vlaneseq
      %v723 = vshrl.u32 %v722, 7
      %v724 = vsub.s32 0, %v723
      %v725 = vrot.slane %v720, %v724
      %v727 = vmul.f32 %v594, %v725
      %v728 = vmul.f32 %v597, %v725
      %v729 = vmul.f32 %v602, %v725
      %v730 = vmul.f32 %v605, %v725
      %v731 = vmul.f32 %v610, %v725
      %v732 = vmul.f32 %v613, %v725
      %v733 = vmul.f32 %v618, %v725
      %v734 = vmul.f32 %v621, %v725
      %v735 = vmul.f32 %v626, %v725
      %v736 = vmul.f32 %v629, %v725
      %v737 = vmul.f32 %v634, %v725
      %v738 = vmul.f32 %v637, %v725
      %v739 = vmul.f32 %v642, %v725
      %v740 = vmul.f32 %v645, %v725
      %v741 = vmul.f32 %v650, %v725
      %v742 = vmul.f32 %v653, %v725
      %v743 = vmul.f32 %v658, %v725
      %v744 = vmul.f32 %v661, %v725
      %v745 = vmul.f32 %v666, %v725
      %v746 = vmul.f32 %v669, %v725
      %v747 = vmul.f32 %v674, %v725
      %v748 = vmul.f32 %v677, %v725
      %v749 = vmul.f32 %v682, %v725
      %v750 = vmul.f32 %v685, %v725
      %v751 = vmul.f32 %v690, %v725
      %v752 = vmul.f32 %v693, %v725
      %v753 = vmul.f32 %v698, %v725
      %v754 = vmul.f32 %v701, %v725
      %v755 = vmul.f32 %v706, %v725
      %v756 = vmul.f32 %v709, %v725
      %v757 = vmul.f32 %v714, %v725
      %v758 = vmul.f32 %v717, %v725
      %v759 = vsel %vm510, %v727, 0.0
      %760 = vadd.xlane.f32.xlu0 %v759
      %v761 = vpop.xlane.xlu0 %760
      %v762 = vsel %vm510, %v728, 0.0
      %763 = vadd.xlane.f32.xlu0 %v762
      %v764 = vpop.xlane.xlu0 %763
      %v765 = vsel %vm510, %v729, 0.0
      %766 = vadd.xlane.f32.xlu0 %v765
      %v767 = vpop.xlane.xlu0 %766
      %v768 = vsel %vm510, %v730, 0.0
      %769 = vadd.xlane.f32.xlu0 %v768
      %v770 = vpop.xlane.xlu0 %769
      %v771 = vsel %vm510, %v731, 0.0
      %772 = vadd.xlane.f32.xlu0 %v771
      %v773 = vpop.xlane.xlu0 %772
      %v774 = vsel %vm510, %v732, 0.0
      %775 = vadd.xlane.f32.xlu0 %v774
      %v776 = vpop.xlane.xlu0 %775
      %v777 = vsel %vm510, %v733, 0.0
      %778 = vadd.xlane.f32.xlu0 %v777
      %v779 = vpop.xlane.xlu0 %778
      %v780 = vsel %vm510, %v734, 0.0
      %781 = vadd.xlane.f32.xlu0 %v780
      %v782 = vpop.xlane.xlu0 %781
      %v783 = vsel %vm510, %v735, 0.0
      %784 = vadd.xlane.f32.xlu0 %v783
      %v785 = vpop.xlane.xlu0 %784
      %v786 = vsel %vm510, %v736, 0.0
      %787 = vadd.xlane.f32.xlu0 %v786
      %v788 = vpop.xlane.xlu0 %787
      %v789 = vsel %vm510, %v737, 0.0
      %790 = vadd.xlane.f32.xlu0 %v789
      %v791 = vpop.xlane.xlu0 %790
      %v792 = vsel %vm510, %v738, 0.0
      %793 = vadd.xlane.f32.xlu0 %v792
      %v794 = vpop.xlane.xlu0 %793
      %v795 = vsel %vm510, %v739, 0.0
      %796 = vadd.xlane.f32.xlu0 %v795
      %v797 = vpop.xlane.xlu0 %796
      %v798 = vsel %vm510, %v740, 0.0
      %799 = vadd.xlane.f32.xlu0 %v798
      %v800 = vpop.xlane.xlu0 %799
      %v801 = vsel %vm510, %v741, 0.0
      %802 = vadd.xlane.f32.xlu0 %v801
      %v803 = vpop.xlane.xlu0 %802
      %v804 = vsel %vm510, %v742, 0.0
      %805 = vadd.xlane.f32.xlu0 %v804
      %v806 = vpop.xlane.xlu0 %805
      %v807 = vsel %vm510, %v743, 0.0
      %808 = vadd.xlane.f32.xlu0 %v807
      %v809 = vpop.xlane.xlu0 %808
      %v810 = vsel %vm510, %v744, 0.0
      %811 = vadd.xlane.f32.xlu0 %v810
      %v812 = vpop.xlane.xlu0 %811
      %v813 = vsel %vm510, %v745, 0.0
      %814 = vadd.xlane.f32.xlu0 %v813
      %v815 = vpop.xlane.xlu0 %814
      %v816 = vsel %vm510, %v746, 0.0
      %817 = vadd.xlane.f32.xlu0 %v816
      %v818 = vpop.xlane.xlu0 %817
      %v819 = vsel %vm510, %v747, 0.0
      %820 = vadd.xlane.f32.xlu0 %v819
      %v821 = vpop.xlane.xlu0 %820
      %v822 = vsel %vm510, %v748, 0.0
      %823 = vadd.xlane.f32.xlu0 %v822
      %v824 = vpop.xlane.xlu0 %823
      %v825 = vsel %vm510, %v749, 0.0
      %826 = vadd.xlane.f32.xlu0 %v825
      %v827 = vpop.xlane.xlu0 %826
      %v828 = vsel %vm510, %v750, 0.0
      %829 = vadd.xlane.f32.xlu0 %v828
      %v830 = vpop.xlane.xlu0 %829
      %v831 = vsel %vm510, %v751, 0.0
      %832 = vadd.xlane.f32.xlu0 %v831
      %v833 = vpop.xlane.xlu0 %832
      %v834 = vsel %vm510, %v752, 0.0
      %835 = vadd.xlane.f32.xlu0 %v834
      %v836 = vpop.xlane.xlu0 %835
      %v837 = vsel %vm510, %v753, 0.0
      %838 = vadd.xlane.f32.xlu0 %v837
      %v839 = vpop.xlane.xlu0 %838
      %v840 = vsel %vm510, %v754, 0.0
      %841 = vadd.xlane.f32.xlu0 %v840
      %v842 = vpop.xlane.xlu0 %841
      %v843 = vsel %vm510, %v755, 0.0
      %844 = vadd.xlane.f32.xlu0 %v843
      %v845 = vpop.xlane.xlu0 %844
      %v846 = vsel %vm510, %v756, 0.0
      %847 = vadd.xlane.f32.xlu0 %v846
      %v848 = vpop.xlane.xlu0 %847
      %v849 = vsel %vm510, %v757, 0.0
      %850 = vadd.xlane.f32.xlu0 %v849
      %v851 = vpop.xlane.xlu0 %850
      %v852 = vsel %vm510, %v758, 0.0
      %853 = vadd.xlane.f32.xlu0 %v852
      %v854 = vpop.xlane.xlu0 %853
      %v855 = vld [vmem:[#allocation2] sm:$0x1]
      %v857 = vlaneseq
      %v858 = vshrl.u32 %v857, 7
      %v859 = vsub.s32 0, %v858
      %v860 = vrot.slane %v855, %v859
      %v862 = vadd.f32 %v761, %v860
      %v863 = vadd.f32 %v764, %v860
      %v864 = vadd.f32 %v767, %v860
      %v865 = vadd.f32 %v770, %v860
      %v866 = vadd.f32 %v773, %v860
      %v867 = vadd.f32 %v776, %v860
      %v868 = vadd.f32 %v779, %v860
      %v869 = vadd.f32 %v782, %v860
      %v870 = vadd.f32 %v785, %v860
      %v871 = vadd.f32 %v788, %v860
      %v872 = vadd.f32 %v791, %v860
      %v873 = vadd.f32 %v794, %v860
      %v874 = vadd.f32 %v797, %v860
      %v875 = vadd.f32 %v800, %v860
      %v876 = vadd.f32 %v803, %v860
      %v877 = vadd.f32 %v806, %v860
      %v878 = vadd.f32 %v809, %v860
      %v879 = vadd.f32 %v812, %v860
      %v880 = vadd.f32 %v815, %v860
      %v881 = vadd.f32 %v818, %v860
      %v882 = vadd.f32 %v821, %v860
      %v883 = vadd.f32 %v824, %v860
      %v884 = vadd.f32 %v827, %v860
      %v885 = vadd.f32 %v830, %v860
      %v886 = vadd.f32 %v833, %v860
      %v887 = vadd.f32 %v836, %v860
      %v888 = vadd.f32 %v839, %v860
      %v889 = vadd.f32 %v842, %v860
      %v890 = vadd.f32 %v845, %v860
      %v891 = vadd.f32 %v848, %v860
      %v892 = vadd.f32 %v851, %v860
      %v893 = vadd.f32 %v854, %v860
      %vm894 = vcmask 7168
      %v895 = vsel %vm894, %v862, -inf
      %v896 = vsel %vm894, %v863, -inf
      %v897 = vsel %vm894, %v864, -inf
      %v898 = vsel %vm894, %v865, -inf
      %v899 = vsel %vm894, %v866, -inf
      %v900 = vmax.f32 %v895, %v899
      %v901 = vsel %vm894, %v867, -inf
      %v902 = vmax.f32 %v896, %v901
      %v903 = vsel %vm894, %v868, -inf
      %v904 = vmax.f32 %v897, %v903
      %v905 = vsel %vm894, %v869, -inf
      %v906 = vmax.f32 %v898, %v905
      %v907 = vsel %vm894, %v870, -inf
      %v908 = vmax.f32 %v900, %v907
      %v909 = vsel %vm894, %v871, -inf
      %v910 = vmax.f32 %v902, %v909
      %v911 = vsel %vm894, %v872, -inf
      %v912 = vmax.f32 %v904, %v911
      %v913 = vsel %vm894, %v873, -inf
      %v914 = vmax.f32 %v906, %v913
      %v915 = vsel %vm894, %v874, -inf
      %v916 = vmax.f32 %v908, %v915
      %v917 = vsel %vm894, %v875, -inf
      %v918 = vmax.f32 %v910, %v917
      %v919 = vsel %vm894, %v876, -inf
      %v920 = vmax.f32 %v912, %v919
      %v921 = vsel %vm894, %v877, -inf
      %v922 = vmax.f32 %v914, %v921
      %v923 = vsel %vm894, %v878, -inf
      %v924 = vmax.f32 %v916, %v923
      %v925 = vsel %vm894, %v879, -inf
      %v926 = vmax.f32 %v918, %v925
      %v927 = vsel %vm894, %v880, -inf
      %v928 = vmax.f32 %v920, %v927
      %v929 = vsel %vm894, %v881, -inf
      %v930 = vmax.f32 %v922, %v929
      %v931 = vsel %vm894, %v882, -inf
      %v932 = vmax.f32 %v924, %v931
      %v933 = vsel %vm894, %v883, -inf
      %v934 = vmax.f32 %v926, %v933
      %v935 = vsel %vm894, %v884, -inf
      %v936 = vmax.f32 %v928, %v935
      %v937 = vsel %vm894, %v885, -inf
      %v938 = vmax.f32 %v930, %v937
      %v939 = vsel %vm894, %v886, -inf
      %v940 = vmax.f32 %v932, %v939
      %v941 = vsel %vm894, %v887, -inf
      %v942 = vmax.f32 %v934, %v941
      %v943 = vsel %vm894, %v888, -inf
      %v944 = vmax.f32 %v936, %v943
      %v945 = vsel %vm894, %v889, -inf
      %v946 = vmax.f32 %v938, %v945
      %v947 = vsel %vm894, %v890, -inf
      %v948 = vmax.f32 %v940, %v947
      %v949 = vsel %vm894, %v891, -inf
      %v950 = vmax.f32 %v942, %v949
      %v951 = vsel %vm894, %v892, -inf
      %v952 = vmax.f32 %v944, %v951
      %v953 = vsel %vm894, %v893, -inf
      %v954 = vmax.f32 %v946, %v953
      %v955 = vmax.f32 %v948, %v950
      %v956 = vmax.f32 %v952, %v954
      %v957 = vmax.f32 %v955, %v956
      %v958 = vrot.slane %v957, 4
      %v959 = vmax.f32 %v957, %v958
      %v960 = vrot.slane %v959, 2
      %v961 = vmax.f32 %v959, %v960
      %v962 = vrot.slane %v961, 1
      %v963 = vmax.f32 %v961, %v962
      %v964 = vsub.f32 %v862, %v963
      %v965 = vsub.f32 %v863, %v963
      %v966 = vsub.f32 %v864, %v963
      %v967 = vsub.f32 %v865, %v963
      %v968 = vsub.f32 %v866, %v963
      %v969 = vsub.f32 %v867, %v963
      %v970 = vsub.f32 %v868, %v963
      %v971 = vsub.f32 %v869, %v963
      %v972 = vsub.f32 %v870, %v963
      %v973 = vsub.f32 %v871, %v963
      %v974 = vsub.f32 %v872, %v963
      %v975 = vsub.f32 %v873, %v963
      %v976 = vsub.f32 %v874, %v963
      %v977 = vsub.f32 %v875, %v963
      %v978 = vsub.f32 %v876, %v963
      %v979 = vsub.f32 %v877, %v963
      %v980 = vsub.f32 %v878, %v963
      %v981 = vsub.f32 %v879, %v963
      %v982 = vsub.f32 %v880, %v963
      %v983 = vsub.f32 %v881, %v963
      %v984 = vsub.f32 %v882, %v963
      %v985 = vsub.f32 %v883, %v963
      %v986 = vsub.f32 %v884, %v963
      %v987 = vsub.f32 %v885, %v963
      %v988 = vsub.f32 %v886, %v963
      %v989 = vsub.f32 %v887, %v963
      %v990 = vsub.f32 %v888, %v963
      %v991 = vsub.f32 %v889, %v963
      %v992 = vsub.f32 %v890, %v963
      %v993 = vsub.f32 %v891, %v963
      %v994 = vsub.f32 %v892, %v963
      %v995 = vsub.f32 %v893, %v963
      %v996 = vmul.f32 %v964, 1.442695
      %v997 = vpow.pop %v996
      %v998 = vmul.f32 %v965, 1.442695
      %v999 = vpow.pop %v998
      %v1000 = vmul.f32 %v966, 1.442695
      %v1001 = vpow.pop %v1000
      %v1002 = vmul.f32 %v967, 1.442695
      %v1003 = vpow.pop %v1002
      %v1004 = vmul.f32 %v968, 1.442695
      %v1005 = vpow.pop %v1004
      %v1006 = vmul.f32 %v969, 1.442695
      %v1007 = vpow.pop %v1006
      %v1008 = vmul.f32 %v970, 1.442695
      %v1009 = vpow.pop %v1008
      %v1010 = vmul.f32 %v971, 1.442695
      %v1011 = vpow.pop %v1010
      %v1012 = vmul.f32 %v972, 1.442695
      %v1013 = vpow.pop %v1012
      %v1014 = vmul.f32 %v973, 1.442695
      %v1015 = vpow.pop %v1014
      %v1016 = vmul.f32 %v974, 1.442695
      %v1017 = vpow.pop %v1016
      %v1018 = vmul.f32 %v975, 1.442695
      %v1019 = vpow.pop %v1018
      %v1020 = vmul.f32 %v976, 1.442695
      %v1021 = vpow.pop %v1020
      %v1022 = vmul.f32 %v977, 1.442695
      %v1023 = vpow.pop %v1022
      %v1024 = vmul.f32 %v978, 1.442695
      %v1025 = vpow.pop %v1024
      %v1026 = vmul.f32 %v979, 1.442695
      %v1027 = vpow.pop %v1026
      %v1028 = vmul.f32 %v980, 1.442695
      %v1029 = vpow.pop %v1028
      %v1030 = vmul.f32 %v981, 1.442695
      %v1031 = vpow.pop %v1030
      %v1032 = vmul.f32 %v982, 1.442695
      %v1033 = vpow.pop %v1032
      %v1034 = vmul.f32 %v983, 1.442695
      %v1035 = vpow.pop %v1034
      %v1036 = vmul.f32 %v984, 1.442695
      %v1037 = vpow.pop %v1036
      %v1038 = vmul.f32 %v985, 1.442695
      %v1039 = vpow.pop %v1038
      %v1040 = vmul.f32 %v986, 1.442695
      %v1041 = vpow.pop %v1040
      %v1042 = vmul.f32 %v987, 1.442695
      %v1043 = vpow.pop %v1042
      %v1044 = vmul.f32 %v988, 1.442695
      %v1045 = vpow.pop %v1044
      %v1046 = vmul.f32 %v989, 1.442695
      %v1047 = vpow.pop %v1046
      %v1048 = vmul.f32 %v990, 1.442695
      %v1049 = vpow.pop %v1048
      %v1050 = vmul.f32 %v991, 1.442695
      %v1051 = vpow.pop %v1050
      %v1052 = vmul.f32 %v992, 1.442695
      %v1053 = vpow.pop %v1052
      %v1054 = vmul.f32 %v993, 1.442695
      %v1055 = vpow.pop %v1054
      %v1056 = vmul.f32 %v994, 1.442695
      %v1057 = vpow.pop %v1056
      %v1058 = vmul.f32 %v995, 1.442695
      %v1059 = vpow.pop %v1058
      %v1060 = vsel %vm894, %v997, 0.0
      %v1061 = vsel %vm894, %v999, 0.0
      %v1062 = vadd.f32 %v1060, %v1061
      %v1063 = vsel %vm894, %v1001, 0.0
      %v1064 = vadd.f32 %v1062, %v1063
      %v1065 = vsel %vm894, %v1003, 0.0
      %v1066 = vadd.f32 %v1064, %v1065
      %v1067 = vsel %vm894, %v1005, 0.0
      %v1068 = vadd.f32 %v1066, %v1067
      %v1069 = vsel %vm894, %v1007, 0.0
      %v1070 = vadd.f32 %v1068, %v1069
      %v1071 = vsel %vm894, %v1009, 0.0
      %v1072 = vadd.f32 %v1070, %v1071
      %v1073 = vsel %vm894, %v1011, 0.0
      %v1074 = vadd.f32 %v1072, %v1073
      %v1075 = vsel %vm894, %v1013, 0.0
      %v1076 = vadd.f32 %v1074, %v1075
      %v1077 = vsel %vm894, %v1015, 0.0
      %v1078 = vadd.f32 %v1076, %v1077
      %v1079 = vsel %vm894, %v1017, 0.0
      %v1080 = vadd.f32 %v1078, %v1079
      %v1081 = vsel %vm894, %v1019, 0.0
      %v1082 = vadd.f32 %v1080, %v1081
      %v1083 = vsel %vm894, %v1021, 0.0
      %v1084 = vadd.f32 %v1082, %v1083
      %v1085 = vsel %vm894, %v1023, 0.0
      %v1086 = vadd.f32 %v1084, %v1085
      %v1087 = vsel %vm894, %v1025, 0.0
      %v1088 = vadd.f32 %v1086, %v1087
      %v1089 = vsel %vm894, %v1027, 0.0
      %v1090 = vadd.f32 %v1088, %v1089
      %v1091 = vsel %vm894, %v1029, 0.0
      %v1092 = vadd.f32 %v1090, %v1091
      %v1093 = vsel %vm894, %v1031, 0.0
      %v1094 = vadd.f32 %v1092, %v1093
      %v1095 = vsel %vm894, %v1033, 0.0
      %v1096 = vadd.f32 %v1094, %v1095
      %v1097 = vsel %vm894, %v1035, 0.0
      %v1098 = vadd.f32 %v1096, %v1097
      %v1099 = vsel %vm894, %v1037, 0.0
      %v1100 = vadd.f32 %v1098, %v1099
      %v1101 = vsel %vm894, %v1039, 0.0
      %v1102 = vadd.f32 %v1100, %v1101
      %v1103 = vsel %vm894, %v1041, 0.0
      %v1104 = vadd.f32 %v1102, %v1103
      %v1105 = vsel %vm894, %v1043, 0.0
      %v1106 = vadd.f32 %v1104, %v1105
      %v1107 = vsel %vm894, %v1045, 0.0
      %v1108 = vadd.f32 %v1106, %v1107
      %v1109 = vsel %vm894, %v1047, 0.0
      %v1110 = vadd.f32 %v1108, %v1109
      %v1111 = vsel %vm894, %v1049, 0.0
      %v1112 = vadd.f32 %v1110, %v1111
      %v1113 = vsel %vm894, %v1051, 0.0
      %v1114 = vadd.f32 %v1112, %v1113
      %v1115 = vsel %vm894, %v1053, 0.0
      %v1116 = vadd.f32 %v1114, %v1115
      %v1117 = vsel %vm894, %v1055, 0.0
      %v1118 = vadd.f32 %v1116, %v1117
      %v1119 = vsel %vm894, %v1057, 0.0
      %v1120 = vadd.f32 %v1118, %v1119
      %v1121 = vsel %vm894, %v1059, 0.0
      %v1122 = vadd.f32 %v1120, %v1121
      %v1123 = vrot.slane %v1122, 4
      %v1124 = vadd.f32 %v1122, %v1123
      %v1125 = vrot.slane %v1124, 2
      %v1126 = vadd.f32 %v1124, %v1125
      %v1127 = vrot.slane %v1126, 1
      %v1128 = vadd.f32 %v1126, %v1127
      %v1129 = vrcp.pop %v1128
      %v1130 = vmul.f32 %v997, %v1129
      %v1131 = vmul.f32 %v999, %v1129
      %v1132 = vmul.f32 %v1001, %v1129
      %v1133 = vmul.f32 %v1003, %v1129
      %v1134 = vmul.f32 %v1005, %v1129
      %v1135 = vmul.f32 %v1007, %v1129
      %v1136 = vmul.f32 %v1009, %v1129
      %v1137 = vmul.f32 %v1011, %v1129
      %v1138 = vmul.f32 %v1013, %v1129
      %v1139 = vmul.f32 %v1015, %v1129
      %v1140 = vmul.f32 %v1017, %v1129
      %v1141 = vmul.f32 %v1019, %v1129
      %v1142 = vmul.f32 %v1021, %v1129
      %v1143 = vmul.f32 %v1023, %v1129
      %v1144 = vmul.f32 %v1025, %v1129
      %v1145 = vmul.f32 %v1027, %v1129
      %v1146 = vmul.f32 %v1029, %v1129
      %v1147 = vmul.f32 %v1031, %v1129
      %v1148 = vmul.f32 %v1033, %v1129
      %v1149 = vmul.f32 %v1035, %v1129
      %v1150 = vmul.f32 %v1037, %v1129
      %v1151 = vmul.f32 %v1039, %v1129
      %v1152 = vmul.f32 %v1041, %v1129
      %v1153 = vmul.f32 %v1043, %v1129
      %v1154 = vmul.f32 %v1045, %v1129
      %v1155 = vmul.f32 %v1047, %v1129
      %v1156 = vmul.f32 %v1049, %v1129
      %v1157 = vmul.f32 %v1051, %v1129
      %v1158 = vmul.f32 %v1053, %v1129
      %v1159 = vmul.f32 %v1055, %v1129
      %v1160 = vmul.f32 %v1057, %v1129
      %v1161 = vmul.f32 %v1059, %v1129
      %1163 = vset.pattern.permute.xlu0 0
      %1164 = vperm.xlu0 %1163, %v1130
      %v1165 = vpop.permute.xlu0 %1164
      %1168 = vset.pattern.permute.xlu0 0
      %1169 = vperm.xlu0 %1168, %v1131
      %v1170 = vpop.permute.xlu0 %1169
      %1173 = vset.pattern.permute.xlu0 0
      %1174 = vperm.xlu0 %1173, %v1132
      %v1175 = vpop.permute.xlu0 %1174
      %1178 = vset.pattern.permute.xlu0 0
      %1179 = vperm.xlu0 %1178, %v1133
      %v1180 = vpop.permute.xlu0 %1179
      %1183 = vset.pattern.permute.xlu0 0
      %1184 = vperm.xlu0 %1183, %v1134
      %v1185 = vpop.permute.xlu0 %1184
      %1188 = vset.pattern.permute.xlu0 0
      %1189 = vperm.xlu0 %1188, %v1135
      %v1190 = vpop.permute.xlu0 %1189
      %1193 = vset.pattern.permute.xlu0 0
      %1194 = vperm.xlu0 %1193, %v1136
      %v1195 = vpop.permute.xlu0 %1194
      %1198 = vset.pattern.permute.xlu0 0
      %1199 = vperm.xlu0 %1198, %v1137
      %v1200 = vpop.permute.xlu0 %1199
      %1203 = vset.pattern.permute.xlu0 0
      %1204 = vperm.xlu0 %1203, %v1138
      %v1205 = vpop.permute.xlu0 %1204
      %1208 = vset.pattern.permute.xlu0 0
      %1209 = vperm.xlu0 %1208, %v1139
      %v1210 = vpop.permute.xlu0 %1209
      %1213 = vset.pattern.permute.xlu0 0
      %1214 = vperm.xlu0 %1213, %v1140
      %v1215 = vpop.permute.xlu0 %1214
      %1218 = vset.pattern.permute.xlu0 0
      %1219 = vperm.xlu0 %1218, %v1141
      %v1220 = vpop.permute.xlu0 %1219
      %1223 = vset.pattern.permute.xlu0 0
      %1224 = vperm.xlu0 %1223, %v1142
      %v1225 = vpop.permute.xlu0 %1224
      %1228 = vset.pattern.permute.xlu0 0
      %1229 = vperm.xlu0 %1228, %v1143
      %v1230 = vpop.permute.xlu0 %1229
      %1233 = vset.pattern.permute.xlu0 0
      %1234 = vperm.xlu0 %1233, %v1144
      %v1235 = vpop.permute.xlu0 %1234
      %1238 = vset.pattern.permute.xlu0 0
      %1239 = vperm.xlu0 %1238, %v1145
      %v1240 = vpop.permute.xlu0 %1239
      %1243 = vset.pattern.permute.xlu0 0
      %1244 = vperm.xlu0 %1243, %v1146
      %v1245 = vpop.permute.xlu0 %1244
      %1248 = vset.pattern.permute.xlu0 0
      %1249 = vperm.xlu0 %1248, %v1147
      %v1250 = vpop.permute.xlu0 %1249
      %1253 = vset.pattern.permute.xlu0 0
      %1254 = vperm.xlu0 %1253, %v1148
      %v1255 = vpop.permute.xlu0 %1254
      %1258 = vset.pattern.permute.xlu0 0
      %1259 = vperm.xlu0 %1258, %v1149
      %v1260 = vpop.permute.xlu0 %1259
      %1263 = vset.pattern.permute.xlu0 0
      %1264 = vperm.xlu0 %1263, %v1150
      %v1265 = vpop.permute.xlu0 %1264
      %1268 = vset.pattern.permute.xlu0 0
      %1269 = vperm.xlu0 %1268, %v1151
      %v1270 = vpop.permute.xlu0 %1269
      %1273 = vset.pattern.permute.xlu0 0
      %1274 = vperm.xlu0 %1273, %v1152
      %v1275 = vpop.permute.xlu0 %1274
      %1278 = vset.pattern.permute.xlu0 0
      %1279 = vperm.xlu0 %1278, %v1153
      %v1280 = vpop.permute.xlu0 %1279
      %1283 = vset.pattern.permute.xlu0 0
      %1284 = vperm.xlu0 %1283, %v1154
      %v1285 = vpop.permute.xlu0 %1284
      %1288 = vset.pattern.permute.xlu0 0
      %1289 = vperm.xlu0 %1288, %v1155
      %v1290 = vpop.permute.xlu0 %1289
      %1293 = vset.pattern.permute.xlu0 0
      %1294 = vperm.xlu0 %1293, %v1156
      %v1295 = vpop.permute.xlu0 %1294
      %1298 = vset.pattern.permute.xlu0 0
      %1299 = vperm.xlu0 %1298, %v1157
      %v1300 = vpop.permute.xlu0 %1299
      %1303 = vset.pattern.permute.xlu0 0
      %1304 = vperm.xlu0 %1303, %v1158
      %v1305 = vpop.permute.xlu0 %1304
      %1308 = vset.pattern.permute.xlu0 0
      %1309 = vperm.xlu0 %1308, %v1159
      %v1310 = vpop.permute.xlu0 %1309
      %1313 = vset.pattern.permute.xlu0 0
      %1314 = vperm.xlu0 %1313, %v1160
      %v1315 = vpop.permute.xlu0 %1314
      %1318 = vset.pattern.permute.xlu0 0
      %1319 = vperm.xlu0 %1318, %v1161
      %v1320 = vpop.permute.xlu0 %1319
      %v1322 = vmul.f32 %v594, %v1165
      %v1323 = vmul.f32 %v597, %v1170
      %v1324 = vmul.f32 %v602, %v1175
      %v1325 = vmul.f32 %v605, %v1180
      %v1326 = vmul.f32 %v610, %v1185
      %v1327 = vmul.f32 %v613, %v1190
      %v1328 = vmul.f32 %v618, %v1195
      %v1329 = vmul.f32 %v621, %v1200
      %v1330 = vmul.f32 %v626, %v1205
      %v1331 = vmul.f32 %v629, %v1210
      %v1332 = vmul.f32 %v634, %v1215
      %v1333 = vmul.f32 %v637, %v1220
      %v1334 = vmul.f32 %v642, %v1225
      %v1335 = vmul.f32 %v645, %v1230
      %v1336 = vmul.f32 %v650, %v1235
      %v1337 = vmul.f32 %v653, %v1240
      %v1338 = vmul.f32 %v658, %v1245
      %v1339 = vmul.f32 %v661, %v1250
      %v1340 = vmul.f32 %v666, %v1255
      %v1341 = vmul.f32 %v669, %v1260
      %v1342 = vmul.f32 %v674, %v1265
      %v1343 = vmul.f32 %v677, %v1270
      %v1344 = vmul.f32 %v682, %v1275
      %v1345 = vmul.f32 %v685, %v1280
      %v1346 = vmul.f32 %v690, %v1285
      %v1347 = vmul.f32 %v693, %v1290
      %v1348 = vmul.f32 %v698, %v1295
      %v1349 = vmul.f32 %v701, %v1300
      %v1350 = vmul.f32 %v706, %v1305
      %v1351 = vmul.f32 %v709, %v1310
      %v1352 = vmul.f32 %v714, %v1315
      %v1353 = vmul.f32 %v717, %v1320
      %v1354 = vsel %vm510, %v1322, 0.0
      %v1355 = vsel %vm510, %v1323, 0.0
      %v1356 = vadd.f32 %v1354, %v1355
      %v1357 = vsel %vm510, %v1324, 0.0
      %v1358 = vadd.f32 %v1356, %v1357
      %v1359 = vsel %vm510, %v1325, 0.0
      %v1360 = vadd.f32 %v1358, %v1359
      %v1361 = vsel %vm510, %v1326, 0.0
      %v1362 = vadd.f32 %v1360, %v1361
      %v1363 = vsel %vm510, %v1327, 0.0
      %v1364 = vadd.f32 %v1362, %v1363
      %v1365 = vsel %vm510, %v1328, 0.0
      %v1366 = vadd.f32 %v1364, %v1365
      %v1367 = vsel %vm510, %v1329, 0.0
      %v1368 = vadd.f32 %v1366, %v1367
      %v1369 = vsel %vm510, %v1330, 0.0
      %v1370 = vadd.f32 %v1368, %v1369
      %v1371 = vsel %vm510, %v1331, 0.0
      %v1372 = vadd.f32 %v1370, %v1371
      %v1373 = vsel %vm510, %v1332, 0.0
      %v1374 = vadd.f32 %v1372, %v1373
      %v1375 = vsel %vm510, %v1333, 0.0
      %v1376 = vadd.f32 %v1374, %v1375
      %v1377 = vsel %vm510, %v1334, 0.0
      %v1378 = vadd.f32 %v1376, %v1377
      %v1379 = vsel %vm510, %v1335, 0.0
      %v1380 = vadd.f32 %v1378, %v1379
      %v1381 = vsel %vm510, %v1336, 0.0
      %v1382 = vadd.f32 %v1380, %v1381
      %v1383 = vsel %vm510, %v1337, 0.0
      %v1384 = vadd.f32 %v1382, %v1383
      %v1385 = vsel %vm510, %v1338, 0.0
      %v1386 = vadd.f32 %v1384, %v1385
      %v1387 = vsel %vm510, %v1339, 0.0
      %v1388 = vadd.f32 %v1386, %v1387
      %v1389 = vsel %vm510, %v1340, 0.0
      %v1390 = vadd.f32 %v1388, %v1389
      %v1391 = vsel %vm510, %v1341, 0.0
      %v1392 = vadd.f32 %v1390, %v1391
      %v1393 = vsel %vm510, %v1342, 0.0
      %v1394 = vadd.f32 %v1392, %v1393
      %v1395 = vsel %vm510, %v1343, 0.0
      %v1396 = vadd.f32 %v1394, %v1395
      %v1397 = vsel %vm510, %v1344, 0.0
      %v1398 = vadd.f32 %v1396, %v1397
      %v1399 = vsel %vm510, %v1345, 0.0
      %v1400 = vadd.f32 %v1398, %v1399
      %v1401 = vsel %vm510, %v1346, 0.0
      %v1402 = vadd.f32 %v1400, %v1401
      %v1403 = vsel %vm510, %v1347, 0.0
      %v1404 = vadd.f32 %v1402, %v1403
      %v1405 = vsel %vm510, %v1348, 0.0
      %v1406 = vadd.f32 %v1404, %v1405
      %v1407 = vsel %vm510, %v1349, 0.0
      %v1408 = vadd.f32 %v1406, %v1407
      %v1409 = vsel %vm510, %v1350, 0.0
      %v1410 = vadd.f32 %v1408, %v1409
      %v1411 = vsel %vm510, %v1351, 0.0
      %v1412 = vadd.f32 %v1410, %v1411
      %v1413 = vsel %vm510, %v1352, 0.0
      %v1414 = vadd.f32 %v1412, %v1413
      %v1415 = vsel %vm510, %v1353, 0.0
      %v1416 = vadd.f32 %v1414, %v1415
      %v1417 = vrot.slane %v1416, 4
      %v1418 = vadd.f32 %v1416, %v1417
      %v1419 = vrot.slane %v1418, 2
      %v1420 = vadd.f32 %v1418, %v1419
      %v1421 = vrot.slane %v1420, 1
      %v1422 = vadd.f32 %v1420, %v1421
      %v1423 = vpack.c.bf16 %v1422, %v1422
      %v1424 = vld [vmem:[%s6] sm:$0xf]
      %v1425 = vld [vmem:[%s6 + $0x4] sm:$0xf]
      %v1426 = vld [vmem:[%s7] sm:$0x1]
      %v1429 = vunpack.c.l.b16 %v1424
      %v1430 = vunpack.c.l.b16 %v1425
      %v1431 = vpack.c.b16 %v1430, %v1429
      %v1434 = vsel %vm510, %v1423, 0
      %1436 = vmatprep.subr.bf16.mxu0 0
      %1437 = vmatpush1.bf16.msra.mxu0 %v1431
      %1438 = vmatprep.subr.bf16.mxu0 0
      %1439 = vmatpush1.bf16.msra.mxu0 0
      %1440 = vmatprep.subr.bf16.mxu0 0
      %1441 = vmatpush1.bf16.msra.mxu0 0
      %1442 = vmatprep.subr.bf16.mxu0 0
      %1443 = vmatpush1.bf16.msra.mxu0 0
      %1444 = vmatprep.subr.bf16.mxu0 0
      %1445 = vmatpush1.bf16.msra.mxu0 0
      %1446 = vmatprep.subr.bf16.mxu0 0
      %1447 = vmatpush1.bf16.msra.mxu0 0
      %1448 = vmatprep.subr.bf16.mxu0 0
      %1449 = vmatpush1.bf16.msra.mxu0 0
      %1450 = vmatprep.subr.bf16.mxu0 0
      %1451 = vmatpush1.bf16.msra.mxu0 0
      %1452 = vmatprep.subr.bf16.mxu0 0
      %1453 = vmatpush1.bf16.msra.mxu0 0
      %1454 = vmatprep.subr.bf16.mxu0 0
      %1455 = vmatpush1.bf16.msra.mxu0 0
      %1456 = vmatprep.subr.bf16.mxu0 0
      %1457 = vmatpush1.bf16.msra.mxu0 0
      %1458 = vmatprep.subr.bf16.mxu0 0
      %1459 = vmatpush1.bf16.msra.mxu0 0
      %1460 = vmatprep.subr.bf16.mxu0 0
      %1461 = vmatpush1.bf16.msra.mxu0 0
      %1462 = vmatprep.subr.bf16.mxu0 0
      %1463 = vmatpush1.bf16.msra.mxu0 0
      %1464 = vmatprep.subr.bf16.mxu0 0
      %1465 = vmatpush1.bf16.msra.mxu0 0
      %1466 = vmatprep.subr.bf16.mxu0 0
      %1467 = vmatpush1.bf16.msra.mxu0 0
      %1468 = vmatprep.mubr.bf16.mxu0 0
      %1469 = vmatmul.mubr.bf16.gmra.mrb[0].mxu0 %v1434
      %v1470 = vpop.f32.mrb[0].mxu0
      %v1471 = vadd.f32 %v1426, %v1470
      %v1472 = vpop.f32.mrb[0].mxu0
      %v1473 = vpop.f32.mrb[0].mxu0
      %v1474 = vpop.f32.mrb[0].mxu0
      %1475 = vdwg.mxu0
      %vm1476 = vcmp.ge.f32.partialorder %v1471, 0.0
      %v1477 = vmul.f32 %v1471, 0.01
      %v1478 = vsel %vm1476, %v1471, %v1477
      %v1479 = vpack.c.bf16 %v1478, %v1478
      %v1480 = vld [vmem:[%s8] sm:$0xf]
      %v1481 = vld [vmem:[%s8 + $0x4] sm:$0xf]
      %v1482 = vld [vmem:[%s9] sm:$0x1]
      %v1485 = vunpack.c.l.b16 %v1480
      %v1486 = vunpack.c.l.b16 %v1481
      %v1487 = vpack.c.b16 %v1486, %v1485
      %v1490 = vsel %vm510, %v1479, 0
      %1492 = vmatprep.subr.bf16.mxu0 0
      %1493 = vmatpush1.bf16.msra.mxu0 %v1487
      %1494 = vmatprep.subr.bf16.mxu0 0
      %1495 = vmatpush1.bf16.msra.mxu0 0
      %1496 = vmatprep.subr.bf16.mxu0 0
      %1497 = vmatpush1.bf16.msra.mxu0 0
      %1498 = vmatprep.subr.bf16.mxu0 0
      %1499 = vmatpush1.bf16.msra.mxu0 0
      %1500 = vmatprep.subr.bf16.mxu0 0
      %1501 = vmatpush1.bf16.msra.mxu0 0
      %1502 = vmatprep.subr.bf16.mxu0 0
      %1503 = vmatpush1.bf16.msra.mxu0 0
      %1504 = vmatprep.subr.bf16.mxu0 0
      %1505 = vmatpush1.bf16.msra.mxu0 0
      %1506 = vmatprep.subr.bf16.mxu0 0
      %1507 = vmatpush1.bf16.msra.mxu0 0
      %1508 = vmatprep.subr.bf16.mxu0 0
      %1509 = vmatpush1.bf16.msra.mxu0 0
      %1510 = vmatprep.subr.bf16.mxu0 0
      %1511 = vmatpush1.bf16.msra.mxu0 0
      %1512 = vmatprep.subr.bf16.mxu0 0
      %1513 = vmatpush1.bf16.msra.mxu0 0
      %1514 = vmatprep.subr.bf16.mxu0 0
      %1515 = vmatpush1.bf16.msra.mxu0 0
      %1516 = vmatprep.subr.bf16.mxu0 0
      %1517 = vmatpush1.bf16.msra.mxu0 0
      %1518 = vmatprep.subr.bf16.mxu0 0
      %1519 = vmatpush1.bf16.msra.mxu0 0
      %1520 = vmatprep.subr.bf16.mxu0 0
      %1521 = vmatpush1.bf16.msra.mxu0 0
      %1522 = vmatprep.subr.bf16.mxu0 0
      %1523 = vmatpush1.bf16.msra.mxu0 0
      %1524 = vmatprep.mubr.bf16.mxu0 0
      %1525 = vmatmul.mubr.bf16.gmra.mrb[0].mxu0 %v1490
      %v1526 = vpop.f32.mrb[0].mxu0
      %v1527 = vadd.f32 %v1482, %v1526
      %v1528 = vpop.f32.mrb[0].mxu0
      %v1529 = vpop.f32.mrb[0].mxu0
      %v1530 = vpop.f32.mrb[0].mxu0
      %1531 = vdwg.mxu0
      %vm1532 = vcmp.ge.f32.partialorder %v1527, 0.0
      %v1533 = vmul.f32 %v1527, 0.01
      %v1534 = vsel %vm1532, %v1527, %v1533
      %v1535 = vlaneseq
      %v1536 = vshrl.u32 %v1535, 7
      %v1537 = vsub.s32 0, %v1536
      %v1538 = vrot.slane %v1534, %v1537
      %v1539 = vadd.f32 %v594, %v1538
      %v1540 = vadd.f32 %v597, %v1538
      %v1541 = vadd.f32 %v602, %v1538
      %v1542 = vadd.f32 %v605, %v1538
      %v1543 = vadd.f32 %v610, %v1538
      %v1544 = vadd.f32 %v613, %v1538
      %v1545 = vadd.f32 %v618, %v1538
      %v1546 = vadd.f32 %v621, %v1538
      %v1547 = vadd.f32 %v626, %v1538
      %v1548 = vadd.f32 %v629, %v1538
      %v1549 = vadd.f32 %v634, %v1538
      %v1550 = vadd.f32 %v637, %v1538
      %v1551 = vadd.f32 %v642, %v1538
      %v1552 = vadd.f32 %v645, %v1538
      %v1553 = vadd.f32 %v650, %v1538
      %v1554 = vadd.f32 %v653, %v1538
      %v1555 = vadd.f32 %v658, %v1538
      %v1556 = vadd.f32 %v661, %v1538
      %v1557 = vadd.f32 %v666, %v1538
      %v1558 = vadd.f32 %v669, %v1538
      %v1559 = vadd.f32 %v674, %v1538
      %v1560 = vadd.f32 %v677, %v1538
      %v1561 = vadd.f32 %v682, %v1538
      %v1562 = vadd.f32 %v685, %v1538
      %v1563 = vadd.f32 %v690, %v1538
      %v1564 = vadd.f32 %v693, %v1538
      %v1565 = vadd.f32 %v698, %v1538
      %v1566 = vadd.f32 %v701, %v1538
      %v1567 = vadd.f32 %v706, %v1538
      %v1568 = vadd.f32 %v709, %v1538
      %v1569 = vadd.f32 %v714, %v1538
      %v1570 = vadd.f32 %v717, %v1538
      %v1571 = vld [vmem:[%s376] sm:$0xf]
      %v1572 = vld [vmem:[%s376 + $0x4] sm:$0xf]
      %v1573 = vld [vmem:[%s376 + $0x8] sm:$0xf]
      %v1574 = vld [vmem:[%s376 + $0xc] sm:$0xf]
      %v1575 = vld [vmem:[%s376 + $0x10] sm:$0xf]
      %v1576 = vld [vmem:[%s376 + $0x14] sm:$0xf]
      %v1577 = vld [vmem:[%s376 + $0x18] sm:$0xf]
      %v1578 = vld [vmem:[%s376 + $0x1c] sm:$0xf]
      %v1579 = vld [vmem:[%s376 + $0x20] sm:$0xf]
      %v1580 = vld [vmem:[%s376 + $0x24] sm:$0xf]
      %v1581 = vld [vmem:[%s376 + $0x28] sm:$0xf]
      %v1582 = vld [vmem:[%s376 + $0x2c] sm:$0xf]
      %v1583 = vld [vmem:[%s376 + $0x30] sm:$0xf]
      %v1584 = vld [vmem:[%s376 + $0x34] sm:$0xf]
      %v1585 = vld [vmem:[%s376 + $0x38] sm:$0xf]
      %v1586 = vld [vmem:[%s376 + $0x3c] sm:$0xf]
      %v1587 = vld [vmem:[%s376 + $0x40] sm:$0xf]
      %v1588 = vld [vmem:[%s376 + $0x44] sm:$0xf]
      %v1589 = vld [vmem:[%s376 + $0x48] sm:$0xf]
      %v1590 = vld [vmem:[%s376 + $0x4c] sm:$0xf]
      %v1591 = vld [vmem:[%s376 + $0x50] sm:$0xf]
      %v1592 = vld [vmem:[%s376 + $0x54] sm:$0xf]
      %v1593 = vld [vmem:[%s376 + $0x58] sm:$0xf]
      %v1594 = vld [vmem:[%s376 + $0x5c] sm:$0xf]
      %v1595 = vld [vmem:[%s376 + $0x60] sm:$0xf]
      %v1596 = vld [vmem:[%s376 + $0x64] sm:$0xf]
      %v1597 = vld [vmem:[%s376 + $0x68] sm:$0xf]
      %v1598 = vld [vmem:[%s376 + $0x6c] sm:$0xf]
      %v1599 = vld [vmem:[%s376 + $0x70] sm:$0xf]
      %v1600 = vld [vmem:[%s376 + $0x74] sm:$0xf]
      %v1601 = vld [vmem:[%s376 + $0x78] sm:$0xf]
      %v1602 = vld [vmem:[%s376 + $0x7c] sm:$0xf]
      %v1603 = vunpack.c.l.bf16 %v1571
      %v1604 = vunpack.c.l.bf16 %v1572
      %v1605 = vunpack.c.l.bf16 %v1573
      %v1606 = vunpack.c.l.bf16 %v1574
      %v1607 = vunpack.c.l.bf16 %v1575
      %v1608 = vunpack.c.l.bf16 %v1576
      %v1609 = vunpack.c.l.bf16 %v1577
      %v1610 = vunpack.c.l.bf16 %v1578
      %v1611 = vunpack.c.l.bf16 %v1579
      %v1612 = vunpack.c.l.bf16 %v1580
      %v1613 = vunpack.c.l.bf16 %v1581
      %v1614 = vunpack.c.l.bf16 %v1582
      %v1615 = vunpack.c.l.bf16 %v1583
      %v1616 = vunpack.c.l.bf16 %v1584
      %v1617 = vunpack.c.l.bf16 %v1585
      %v1618 = vunpack.c.l.bf16 %v1586
      %v1619 = vunpack.c.l.bf16 %v1587
      %v1620 = vunpack.c.l.bf16 %v1588
      %v1621 = vunpack.c.l.bf16 %v1589
      %v1622 = vunpack.c.l.bf16 %v1590
      %v1623 = vunpack.c.l.bf16 %v1591
      %v1624 = vunpack.c.l.bf16 %v1592
      %v1625 = vunpack.c.l.bf16 %v1593
      %v1626 = vunpack.c.l.bf16 %v1594
      %v1627 = vunpack.c.l.bf16 %v1595
      %v1628 = vunpack.c.l.bf16 %v1596
      %v1629 = vunpack.c.l.bf16 %v1597
      %v1630 = vunpack.c.l.bf16 %v1598
      %v1631 = vunpack.c.l.bf16 %v1599
      %v1632 = vunpack.c.l.bf16 %v1600
      %v1633 = vunpack.c.l.bf16 %v1601
      %v1634 = vunpack.c.l.bf16 %v1602
      %v1635 = vadd.f32 %v1539, %v1603
      %v1636 = vadd.f32 %v1540, %v1604
      %v1637 = vadd.f32 %v1541, %v1605
      %v1638 = vadd.f32 %v1542, %v1606
      %v1639 = vadd.f32 %v1543, %v1607
      %v1640 = vadd.f32 %v1544, %v1608
      %v1641 = vadd.f32 %v1545, %v1609
      %v1642 = vadd.f32 %v1546, %v1610
      %v1643 = vadd.f32 %v1547, %v1611
      %v1644 = vadd.f32 %v1548, %v1612
      %v1645 = vadd.f32 %v1549, %v1613
      %v1646 = vadd.f32 %v1550, %v1614
      %v1647 = vadd.f32 %v1551, %v1615
      %v1648 = vadd.f32 %v1552, %v1616
      %v1649 = vadd.f32 %v1553, %v1617
      %v1650 = vadd.f32 %v1554, %v1618
      %v1651 = vadd.f32 %v1555, %v1619
      %v1652 = vadd.f32 %v1556, %v1620
      %v1653 = vadd.f32 %v1557, %v1621
      %v1654 = vadd.f32 %v1558, %v1622
      %v1655 = vadd.f32 %v1559, %v1623
      %v1656 = vadd.f32 %v1560, %v1624
      %v1657 = vadd.f32 %v1561, %v1625
      %v1658 = vadd.f32 %v1562, %v1626
      %v1659 = vadd.f32 %v1563, %v1627
      %v1660 = vadd.f32 %v1564, %v1628
      %v1661 = vadd.f32 %v1565, %v1629
      %v1662 = vadd.f32 %v1566, %v1630
      %v1663 = vadd.f32 %v1567, %v1631
      %v1664 = vadd.f32 %v1568, %v1632
      %v1665 = vadd.f32 %v1569, %v1633
      %v1666 = vadd.f32 %v1570, %v1634
      %v1667 = vpack.c.bf16 %v1636, %v1635
      %v1668 = vpack.c.bf16 %v1638, %v1637
      %v1669 = vpack.c.bf16 %v1640, %v1639
      %v1670 = vpack.c.bf16 %v1642, %v1641
      %v1671 = vpack.c.bf16 %v1644, %v1643
      %v1672 = vpack.c.bf16 %v1646, %v1645
      %v1673 = vpack.c.bf16 %v1648, %v1647
      %v1674 = vpack.c.bf16 %v1650, %v1649
      %v1675 = vpack.c.bf16 %v1652, %v1651
      %v1676 = vpack.c.bf16 %v1654, %v1653
      %v1677 = vpack.c.bf16 %v1656, %v1655
      %v1678 = vpack.c.bf16 %v1658, %v1657
      %v1679 = vpack.c.bf16 %v1660, %v1659
      %v1680 = vpack.c.bf16 %v1662, %v1661
      %v1681 = vpack.c.bf16 %v1664, %v1663
      %v1682 = vpack.c.bf16 %v1666, %v1665
      %v1699 = vunpack.c.l.b16 %v1667
      %v1700 = vunpack.c.h.b16 %v1667
      %v1701 = vunpack.c.l.b16 %v1668
      %v1702 = vunpack.c.h.b16 %v1668
      %v1703 = vunpack.c.l.b16 %v1669
      %v1704 = vunpack.c.h.b16 %v1669
      %v1705 = vunpack.c.l.b16 %v1670
      %v1706 = vunpack.c.h.b16 %v1670
      %v1707 = vunpack.c.l.b16 %v1671
      %v1708 = vunpack.c.h.b16 %v1671
      %v1709 = vunpack.c.l.b16 %v1672
      %v1710 = vunpack.c.h.b16 %v1672
      %v1711 = vunpack.c.l.b16 %v1673
      %v1712 = vunpack.c.h.b16 %v1673
      %v1713 = vunpack.c.l.b16 %v1674
      %v1714 = vunpack.c.h.b16 %v1674
      %v1715 = vunpack.c.l.b16 %v1675
      %v1716 = vunpack.c.h.b16 %v1675
      %v1717 = vunpack.c.l.b16 %v1676
      %v1718 = vunpack.c.h.b16 %v1676
      %v1719 = vunpack.c.l.b16 %v1677
      %v1720 = vunpack.c.h.b16 %v1677
      %v1721 = vunpack.c.l.b16 %v1678
      %v1722 = vunpack.c.h.b16 %v1678
      %v1723 = vunpack.c.l.b16 %v1679
      %v1724 = vunpack.c.h.b16 %v1679
      %v1725 = vunpack.c.l.b16 %v1680
      %v1726 = vunpack.c.h.b16 %v1680
      %v1727 = vunpack.c.l.b16 %v1681
      %v1728 = vunpack.c.h.b16 %v1681
      %v1729 = vunpack.c.l.b16 %v1682
      %v1730 = vunpack.c.h.b16 %v1682
      %v1731 = vpack.c.b16 %v1699, %v1699
      %v1732 = vpack.c.b16 %v1700, %v1700
      %v1733 = vpack.c.b16 %v1701, %v1701
      %v1734 = vpack.c.b16 %v1702, %v1702
      %v1735 = vpack.c.b16 %v1703, %v1703
      %v1736 = vpack.c.b16 %v1704, %v1704
      %v1737 = vpack.c.b16 %v1705, %v1705
      %v1738 = vpack.c.b16 %v1706, %v1706
      %v1739 = vpack.c.b16 %v1707, %v1707
      %v1740 = vpack.c.b16 %v1708, %v1708
      %v1741 = vpack.c.b16 %v1709, %v1709
      %v1742 = vpack.c.b16 %v1710, %v1710
      %v1743 = vpack.c.b16 %v1711, %v1711
      %v1744 = vpack.c.b16 %v1712, %v1712
      %v1745 = vpack.c.b16 %v1713, %v1713
      %v1746 = vpack.c.b16 %v1714, %v1714
      %v1747 = vpack.c.b16 %v1715, %v1715
      %v1748 = vpack.c.b16 %v1716, %v1716
      %v1749 = vpack.c.b16 %v1717, %v1717
      %v1750 = vpack.c.b16 %v1718, %v1718
      %v1751 = vpack.c.b16 %v1719, %v1719
      %v1752 = vpack.c.b16 %v1720, %v1720
      %v1753 = vpack.c.b16 %v1721, %v1721
      %v1754 = vpack.c.b16 %v1722, %v1722
      %v1755 = vpack.c.b16 %v1723, %v1723
      %v1756 = vpack.c.b16 %v1724, %v1724
      %v1757 = vpack.c.b16 %v1725, %v1725
      %v1758 = vpack.c.b16 %v1726, %v1726
      %v1759 = vpack.c.b16 %v1727, %v1727
      %v1760 = vpack.c.b16 %v1728, %v1728
      %v1761 = vpack.c.b16 %v1729, %v1729
      %v1762 = vpack.c.b16 %v1730, %v1730
      %vm1795 = vcmask 125952
      %1796 = vst.msk [vmem:[%s381] sm:$0xf] %vm1795, %v1731
      %1797 = vst.msk [vmem:[%s381 + $0x4] sm:$0xf] %vm1795, %v1732
      %1798 = vst.msk [vmem:[%s381 + $0x8] sm:$0xf] %vm1795, %v1733
      %1799 = vst.msk [vmem:[%s381 + $0xc] sm:$0xf] %vm1795, %v1734
      %1800 = vst.msk [vmem:[%s381 + $0x10] sm:$0xf] %vm1795, %v1735
      %1801 = vst.msk [vmem:[%s381 + $0x14] sm:$0xf] %vm1795, %v1736
      %1802 = vst.msk [vmem:[%s381 + $0x18] sm:$0xf] %vm1795, %v1737
      %1803 = vst.msk [vmem:[%s381 + $0x1c] sm:$0xf] %vm1795, %v1738
      %1804 = vst.msk [vmem:[%s381 + $0x20] sm:$0xf] %vm1795, %v1739
      %1805 = vst.msk [vmem:[%s381 + $0x24] sm:$0xf] %vm1795, %v1740
      %1806 = vst.msk [vmem:[%s381 + $0x28] sm:$0xf] %vm1795, %v1741
      %1807 = vst.msk [vmem:[%s381 + $0x2c] sm:$0xf] %vm1795, %v1742
      %1808 = vst.msk [vmem:[%s381 + $0x30] sm:$0xf] %vm1795, %v1743
      %1809 = vst.msk [vmem:[%s381 + $0x34] sm:$0xf] %vm1795, %v1744
      %1810 = vst.msk [vmem:[%s381 + $0x38] sm:$0xf] %vm1795, %v1745
      %1811 = vst.msk [vmem:[%s381 + $0x3c] sm:$0xf] %vm1795, %v1746
      %1812 = vst.msk [vmem:[%s381 + $0x40] sm:$0xf] %vm1795, %v1747
      %1813 = vst.msk [vmem:[%s381 + $0x44] sm:$0xf] %vm1795, %v1748
      %1814 = vst.msk [vmem:[%s381 + $0x48] sm:$0xf] %vm1795, %v1749
      %1815 = vst.msk [vmem:[%s381 + $0x4c] sm:$0xf] %vm1795, %v1750
      %1816 = vst.msk [vmem:[%s381 + $0x50] sm:$0xf] %vm1795, %v1751
      %1817 = vst.msk [vmem:[%s381 + $0x54] sm:$0xf] %vm1795, %v1752
      %1818 = vst.msk [vmem:[%s381 + $0x58] sm:$0xf] %vm1795, %v1753
      %1819 = vst.msk [vmem:[%s381 + $0x5c] sm:$0xf] %vm1795, %v1754
      %1820 = vst.msk [vmem:[%s381 + $0x60] sm:$0xf] %vm1795, %v1755
      %1821 = vst.msk [vmem:[%s381 + $0x64] sm:$0xf] %vm1795, %v1756
      %1822 = vst.msk [vmem:[%s381 + $0x68] sm:$0xf] %vm1795, %v1757
      %1823 = vst.msk [vmem:[%s381 + $0x6c] sm:$0xf] %vm1795, %v1758
      %1824 = vst.msk [vmem:[%s381 + $0x70] sm:$0xf] %vm1795, %v1759
      %1825 = vst.msk [vmem:[%s381 + $0x74] sm:$0xf] %vm1795, %v1760
      %1826 = vst.msk [vmem:[%s381 + $0x78] sm:$0xf] %vm1795, %v1761
      %1827 = vst.msk [vmem:[%s381 + $0x7c] sm:$0xf] %vm1795, %v1762
      %p1828 = scmp.lt.s32.totalorder %s23, 1
      %s1829 = scalar_select %p1828, %s23, 1
      %s1830 = smul.addr %s1829, 32
      %s1831 = smul.addr %s1830, 4
      %s1832 = scalar_lea.vmem %s10, %s1831
      // Predicated region
      $region61: #{sffi_forward.39} parent=59 // pred_check
        %p1833 = pneg %p261
      $region62: #{sffi_forward.39} parent=59 // pred_check_branch
        %1835 = sbr.rel (%p1833) target = $region64
      $region63: #{sffi_forward.39} parent=59 // pred_region
        _
      $region64: #{sffi_forward.39} parent=59 // pred_fallthru
        _
    $region60: #{sffi_forward.39} parent=5 // pred_fallthru
      _
    %p1836 = scmp.le.s32.totalorder 2, %s18
    // Predicated region
    $region65: #{sffi_forward.39} parent=5 // pred_check
      %p1837 = pneg %p1836
    $region66: #{sffi_forward.39} parent=5 // pred_check_branch
      %1839 = sbr.rel (%p1837) target = $region68
    $region67: #{sffi_forward.39} parent=5 // pred_region
      %s1840 = ssub.s32 %s18, 2
      // Predicated region
      $region69: #{sffi_forward.39} parent=67 // pred_check
        %p1841 = pneg %p267
      $region70: #{sffi_forward.39} parent=67 // pred_check_branch
        %1843 = sbr.rel (%p1841) target = $region72
      $region71: #{sffi_forward.39} parent=67 // pred_region
        %p1844 = scmp.lt.s32.totalorder %s24, 1
        %s1845 = scalar_select %p1844, %s24, 1
        %s1846 = smul.addr %s1845, 32
        %s1847 = smul.addr %s1846, 4
        %s1848 = scalar_lea.vmem %s10, %s1847
      $region72: #{sffi_forward.39} parent=67 // pred_fallthru
        _
    $region68: #{sffi_forward.39} parent=5 // pred_fallthru
      _
  $region6: #{sffi_forward.39} parent=0 // loop_footer
    %s22 = sadd.s32 1, %s18
  $region7: #{sffi_forward.39} parent=0 // loop_footer_branch
    %17 = sbr.rel target = $region3
  $region8: #{sffi_forward.39} parent=0 // loop_exit
    _

// kernel: sffi_forward.41
$region0: #{sffi_forward.41}
  #allocation0 [shape = 'u32[]', space=smem, size = 0x4, offset = 0x4, fixed_abs, tag = 'smem constant byte address 0x4 - core index']
  #allocation1 [shape = 'u32[144,128]{1,0:T(1,128)}', space=vmem, size = 0x12000, scoped, tag = 'internal scratch']
  %s0 = inlined_call_operand.vmem [shape: bf16[2,256,16], index: 0, kind: input, shape index: {}]
  %s1 = inlined_call_operand.vmem [shape: bf16[2,256,16], index: 1, kind: input, shape index: {}]
  %s2 = inlined_call_operand.vmem [shape: bf16[16,32], index: 2, kind: input, shape index: {}]
  %s3 = inlined_call_operand.vmem [shape: bf16[16,32], index: 3, kind: input, shape index: {}]
  %s4 = inlined_call_operand.vmem [shape: f32[1,32], index: 4, kind: input, shape index: {}]
  %s5 = inlined_call_operand.vmem [shape: bf16[2,256,32], index: 5, kind: output, shape index: {}]
  %s6 = sld [smem:[#allocation0]]
  $region53: #{sffi_forward.41} parent=0
    _
  %s8 = ssub.s32 1, %s6
  %s9 = scalar_select 0, %s8, %s6
  loop: start=0, step=1, limit=4
  $region2: #{sffi_forward.41} parent=0 // loop_pre_header
    _
  $region3: #{sffi_forward.41} parent=0 // loop_header
    %s11 = sphi 0, %s15
    %p12 = scmp.ge.s32.totalorder %s11, 4
    %s18 = sphi 0, %s30
    %s19 = sphi 0, %s26
    %s20 = sphi 0, %s18
    %s21 = sphi 0, %s19
    %s22 = sphi 0, %s20
    %s23 = sphi 0, %s21
    %s35 = sphi 0, %s37
    %s38 = sphi 0, %s35
    %s39 = sphi 0, %s38
    %s55 = sphi 0, %s39
    %s63 = sphi 0, %s65
    %s66 = sphi 0, %s63
    %s67 = sphi 0, %s66
    %s83 = sphi 0, %s67
    %s87 = sphi 0, %s87
    %s89 = sphi 0, %s87
    %s90 = sphi 0, %s89
    %s104 = sphi 0, %s90
    %s108 = sphi 0, %s108
    %s110 = sphi 0, %s108
    %s111 = sphi 0, %s110
    %s125 = sphi 0, %s111
    %s129 = sphi 0, %s129
    %s131 = sphi 0, %s129
    %s132 = sphi 0, %s131
    %s146 = sphi 0, %s132
    %s154 = sphi 0, %s156
    %s157 = sphi 0, %s154
    %s158 = sphi 0, %s157
    %s174 = sphi 0, %s158
  $region4: #{sffi_forward.41} parent=0 // loop_header_branch
    %14 = sbr.rel (%p12) target = $region8
  $region5: #{sffi_forward.41} parent=0 // loop_body
    %s16 = ssub.s32 %s11, 1
    %s17 = ssub.s32 %s11, 2
    %s24 = sadd.s32 1, %s19
    %p25 = scmp.ge.s32.totalorder %s24, 1
    %s26 = scalar_select %p25, 0, %s24
    %s27 = sadd.s32 1, %s18
    %s28 = scalar_select %p25, %s27, %s18
    %p29 = scmp.ge.s32.totalorder %s28, 2
    %s30 = scalar_select %p29, 0, %s28
    %s31 = ssub.s32 %s18, %s30
    %s32 = ssub.s32 %s19, %s26
    %s33 = sor.u32 %s31, %s32
    %p34 = scmp.eq.s32.totalorder %s33, 0
    %s36 = sadd.s32 %s35, 1
    %s37 = scalar_select %p34, %s35, %s36
    %p40 = pneg %p34
    %p41 = scmp.eq.s32.totalorder %s11, 1
    %p42 = por %p40, %p41
    %p43 = scmp.ne.s32.totalorder %s35, %s38
    %p44 = scmp.eq.s32.totalorder %s11, 0
    %p45 = por %p43, %p44
    %p46 = scmp.ne.s32.totalorder %s35, %s38
    %p47 = scmp.eq.s32.totalorder %s16, 1
    %p48 = por %p46, %p47
    %p49 = scmp.ne.s32.totalorder %s38, %s39
    %p50 = scmp.eq.s32.totalorder %s16, 0
    %p51 = por %p49, %p50
    %p52 = scmp.ne.s32.totalorder %s38, %s39
    %p53 = scmp.eq.s32.totalorder %s17, 1
    %p54 = por %p52, %p53
    %p56 = scmp.ne.s32.totalorder %s39, %s55
    %p57 = scmp.eq.s32.totalorder %s17, 0
    %p58 = por %p56, %p57
    %s59 = ssub.s32 %s18, %s30
    %s60 = ssub.s32 %s19, %s26
    %s61 = sor.u32 %s59, %s60
    %p62 = scmp.eq.s32.totalorder %s61, 0
    %s64 = sadd.s32 %s63, 1
    %s65 = scalar_select %p62, %s63, %s64
    %p68 = pneg %p62
    %p69 = scmp.eq.s32.totalorder %s11, 1
    %p70 = por %p68, %p69
    %p71 = scmp.ne.s32.totalorder %s63, %s66
    %p72 = scmp.eq.s32.totalorder %s11, 0
    %p73 = por %p71, %p72
    %p74 = scmp.ne.s32.totalorder %s63, %s66
    %p75 = scmp.eq.s32.totalorder %s16, 1
    %p76 = por %p74, %p75
    %p77 = scmp.ne.s32.totalorder %s66, %s67
    %p78 = scmp.eq.s32.totalorder %s16, 0
    %p79 = por %p77, %p78
    %p80 = scmp.ne.s32.totalorder %s66, %s67
    %p81 = scmp.eq.s32.totalorder %s17, 1
    %p82 = por %p80, %p81
    %p84 = scmp.ne.s32.totalorder %s67, %s83
    %p85 = scmp.eq.s32.totalorder %s17, 0
    %p86 = por %p84, %p85
    %s88 = sadd.s32 %s87, 1
    %p91 = scmp.eq.s32.totalorder %s11, 1
    %p92 = scmp.ne.s32.totalorder %s87, %s89
    %p93 = scmp.eq.s32.totalorder %s11, 0
    %p94 = por %p92, %p93
    %p95 = scmp.ne.s32.totalorder %s87, %s89
    %p96 = scmp.eq.s32.totalorder %s16, 1
    %p97 = por %p95, %p96
    %p98 = scmp.ne.s32.totalorder %s89, %s90
    %p99 = scmp.eq.s32.totalorder %s16, 0
    %p100 = por %p98, %p99
    %p101 = scmp.ne.s32.totalorder %s89, %s90
    %p102 = scmp.eq.s32.totalorder %s17, 1
    %p103 = por %p101, %p102
    %p105 = scmp.ne.s32.totalorder %s90, %s104
    %p106 = scmp.eq.s32.totalorder %s17, 0
    %p107 = por %p105, %p106
    %s109 = sadd.s32 %s108, 1
    %p112 = scmp.eq.s32.totalorder %s11, 1
    %p113 = scmp.ne.s32.totalorder %s108, %s110
    %p114 = scmp.eq.s32.totalorder %s11, 0
    %p115 = por %p113, %p114
    %p116 = scmp.ne.s32.totalorder %s108, %s110
    %p117 = scmp.eq.s32.totalorder %s16, 1
    %p118 = por %p116, %p117
    %p119 = scmp.ne.s32.totalorder %s110, %s111
    %p120 = scmp.eq.s32.totalorder %s16, 0
    %p121 = por %p119, %p120
    %p122 = scmp.ne.s32.totalorder %s110, %s111
    %p123 = scmp.eq.s32.totalorder %s17, 1
    %p124 = por %p122, %p123
    %p126 = scmp.ne.s32.totalorder %s111, %s125
    %p127 = scmp.eq.s32.totalorder %s17, 0
    %p128 = por %p126, %p127
    %s130 = sadd.s32 %s129, 1
    %p133 = scmp.eq.s32.totalorder %s11, 1
    %p134 = scmp.ne.s32.totalorder %s129, %s131
    %p135 = scmp.eq.s32.totalorder %s11, 0
    %p136 = por %p134, %p135
    %p137 = scmp.ne.s32.totalorder %s129, %s131
    %p138 = scmp.eq.s32.totalorder %s16, 1
    %p139 = por %p137, %p138
    %p140 = scmp.ne.s32.totalorder %s131, %s132
    %p141 = scmp.eq.s32.totalorder %s16, 0
    %p142 = por %p140, %p141
    %p143 = scmp.ne.s32.totalorder %s131, %s132
    %p144 = scmp.eq.s32.totalorder %s17, 1
    %p145 = por %p143, %p144
    %p147 = scmp.ne.s32.totalorder %s132, %s146
    %p148 = scmp.eq.s32.totalorder %s17, 0
    %p149 = por %p147, %p148
    %s150 = ssub.s32 %s18, %s30
    %s151 = ssub.s32 %s19, %s26
    %s152 = sor.u32 %s150, %s151
    %p153 = scmp.eq.s32.totalorder %s152, 0
    %s155 = sadd.s32 %s154, 1
    %s156 = scalar_select %p153, %s154, %s155
    %p159 = pneg %p153
    %p160 = scmp.eq.s32.totalorder %s11, 1
    %p161 = por %p159, %p160
    %p162 = scmp.ne.s32.totalorder %s154, %s157
    %p163 = scmp.eq.s32.totalorder %s11, 0
    %p164 = por %p162, %p163
    %p165 = scmp.ne.s32.totalorder %s154, %s157
    %p166 = scmp.eq.s32.totalorder %s16, 1
    %p167 = por %p165, %p166
    %p168 = scmp.ne.s32.totalorder %s157, %s158
    %p169 = scmp.eq.s32.totalorder %s16, 0
    %p170 = por %p168, %p169
    %p171 = scmp.ne.s32.totalorder %s157, %s158
    %p172 = scmp.eq.s32.totalorder %s17, 1
    %p173 = por %p171, %p172
    %p175 = scmp.ne.s32.totalorder %s158, %s174
    %p176 = scmp.eq.s32.totalorder %s17, 0
    %p177 = por %p175, %p176
    %p178 = scmp.le.s32.totalorder 1, %s11
    %p179 = scmp.lt.s32.totalorder %s11, 3
    %p180 = pnand %p178, %p179
    %p181 = pneg %p180
    // Predicated region
    $region9: #{sffi_forward.41} parent=5 // pred_check
      _
    $region10: #{sffi_forward.41} parent=5 // pred_check_branch
      %183 = sbr.rel (%p180) target = $region12
    $region11: #{sffi_forward.41} parent=5 // pred_region
      %s184 = ssub.s32 %s11, 1
      // Predicated region
      $region13: #{sffi_forward.41} parent=11 // pred_check
        %p185 = pneg %p100
      $region14: #{sffi_forward.41} parent=11 // pred_check_branch
        %187 = sbr.rel (%p185) target = $region16
      $region15: #{sffi_forward.41} parent=11 // pred_region
        _
      $region16: #{sffi_forward.41} parent=11 // pred_fallthru
        _
      // Predicated region
      $region17: #{sffi_forward.41} parent=11 // pred_check
        %p188 = pneg %p121
      $region18: #{sffi_forward.41} parent=11 // pred_check_branch
        %190 = sbr.rel (%p188) target = $region20
      $region19: #{sffi_forward.41} parent=11 // pred_region
        _
      $region20: #{sffi_forward.41} parent=11 // pred_fallthru
        _
      // Predicated region
      $region21: #{sffi_forward.41} parent=11 // pred_check
        %p191 = pneg %p142
      $region22: #{sffi_forward.41} parent=11 // pred_check_branch
        %193 = sbr.rel (%p191) target = $region24
      $region23: #{sffi_forward.41} parent=11 // pred_region
        _
      $region24: #{sffi_forward.41} parent=11 // pred_fallthru
        _
    $region12: #{sffi_forward.41} parent=5 // pred_fallthru
      _
    %p194 = scmp.lt.s32.totalorder %s11, 2
    // Predicated region
    $region25: #{sffi_forward.41} parent=5 // pred_check
      %p195 = pneg %p194
    $region26: #{sffi_forward.41} parent=5 // pred_check_branch
      %197 = sbr.rel (%p195) target = $region28
    $region27: #{sffi_forward.41} parent=5 // pred_region
      // Predicated region
      $region29: #{sffi_forward.41} parent=27 // pred_check
        %p198 = pneg %p45
      $region30: #{sffi_forward.41} parent=27 // pred_check_branch
        %200 = sbr.rel (%p198) target = $region32
      $region31: #{sffi_forward.41} parent=27 // pred_region
        %s201 = smul.u32 32, %s19
        %p202 = scmp.lt.s32.totalorder %s18, 1
        %s203 = scalar_select %p202, %s18, 1
        %p204 = scmp.lt.s32.totalorder %s201, 31
        %s205 = scalar_select %p204, %s201, 31
        %s206 = smul.addr %s203, 32
        %s207 = sadd.s32 %s205, %s206
        %s208 = smul.addr %s207, 4
        %s209 = scalar_lea.vmem %s0, %s208
        %s210 = smul.u32 32, %s19
      $region32: #{sffi_forward.41} parent=27 // pred_fallthru
        _
      // Predicated region
      $region33: #{sffi_forward.41} parent=27 // pred_check
        %p211 = pneg %p73
      $region34: #{sffi_forward.41} parent=27 // pred_check_branch
        %213 = sbr.rel (%p211) target = $region36
      $region35: #{sffi_forward.41} parent=27 // pred_region
        %s214 = smul.u32 32, %s19
        %p215 = scmp.lt.s32.totalorder %s18, 1
        %s216 = scalar_select %p215, %s18, 1
        %p217 = scmp.lt.s32.totalorder %s214, 31
        %s218 = scalar_select %p217, %s214, 31
        %s219 = smul.addr %s216, 32
        %s220 = sadd.s32 %s218, %s219
        %s221 = smul.addr %s220, 4
        %s222 = scalar_lea.vmem %s1, %s221
        %s223 = smul.u32 32, %s19
      $region36: #{sffi_forward.41} parent=27 // pred_fallthru
        _
    $region28: #{sffi_forward.41} parent=5 // pred_fallthru
      _
    %p224 = scmp.le.s32.totalorder 1, %s11
    %p225 = scmp.lt.s32.totalorder %s11, 3
    %p226 = pnand %p224, %p225
    %p227 = pneg %p226
    // Predicated region
    $region37: #{sffi_forward.41} parent=5 // pred_check
      _
    $region38: #{sffi_forward.41} parent=5 // pred_check_branch
      %229 = sbr.rel (%p226) target = $region40
    $region39: #{sffi_forward.41} parent=5 // pred_region
      %s230 = ssub.s32 %s11, 1
      %s231 = smul.u32 32, %s21
      %p232 = scmp.lt.s32.totalorder %s20, 1
      %s233 = scalar_select %p232, %s20, 1
      %p234 = scmp.lt.s32.totalorder %s231, 31
      %s235 = scalar_select %p234, %s231, 31
      %s236 = smul.addr %s233, 32
      %s237 = sadd.s32 %s235, %s236
      %s238 = smul.addr %s237, 4
      %s239 = scalar_lea.vmem %s0, %s238
      %p240 = pneg %p51
      %p241 = pneg %p48
      %s242 = smul.u32 32, %s21
      %p243 = scmp.lt.s32.totalorder %s20, 1
      %s244 = scalar_select %p243, %s20, 1
      %p245 = scmp.lt.s32.totalorder %s242, 31
      %s246 = scalar_select %p245, %s242, 31
      %s247 = smul.addr %s244, 32
      %s248 = sadd.s32 %s246, %s247
      %s249 = smul.addr %s248, 4
      %s250 = scalar_lea.vmem %s1, %s249
      %p251 = pneg %p79
      %p252 = pneg %p76
      %p253 = pneg %p100
      %p254 = pneg %p97
      %p255 = pneg %p121
      %p256 = pneg %p118
      %p257 = pneg %p142
      %p258 = pneg %p139
      %p259 = pneg %p170
      %p260 = pneg %p167
      %s261 = smul.u32 32, %s21
      %p262 = scmp.lt.s32.totalorder %s20, 1
      %s263 = scalar_select %p262, %s20, 1
      %p264 = scmp.lt.s32.totalorder %s261, 31
      %s265 = scalar_select %p264, %s261, 31
      %s266 = smul.addr %s263, 32
      %s267 = sadd.s32 %s265, %s266
      %s268 = smul.addr %s267, 4
      %s269 = scalar_lea.vmem %s5, %s268
      %s270 = smul.u32 32, %s21
      %p271 = scmp.lt.s32.totalorder %s20, 1
      %s272 = scalar_select %p271, %s20, 1
      %p273 = scmp.lt.s32.totalorder %s270, 31
      %s274 = scalar_select %p273, %s270, 31
      %s275 = smul.addr %s272, 32
      %s276 = sadd.s32 %s274, %s275
      %s277 = smul.addr %s276, 4
      %s278 = scalar_lea.vmem %s0, %s277
      %s279 = smul.u32 32, %s21
      %s280 = smul.u32 32, %s21
      %p281 = scmp.lt.s32.totalorder %s20, 1
      %s282 = scalar_select %p281, %s20, 1
      %p283 = scmp.lt.s32.totalorder %s280, 31
      %s284 = scalar_select %p283, %s280, 31
      %s285 = smul.addr %s282, 32
      %s286 = sadd.s32 %s284, %s285
      %s287 = smul.addr %s286, 4
      %s288 = scalar_lea.vmem %s1, %s287
      %s289 = smul.u32 32, %s21
      %s290 = smul.u32 32, %s21
      %p291 = scmp.lt.s32.totalorder %s20, 1
      %s292 = scalar_select %p291, %s20, 1
      %p293 = scmp.lt.s32.totalorder %s290, 31
      %s294 = scalar_select %p293, %s290, 31
      %s295 = smul.addr %s292, 32
      %s296 = sadd.s32 %s294, %s295
      %s297 = smul.addr %s296, 4
      %s298 = scalar_lea.vmem %s5, %s297
      %s299 = smul.u32 32, %s21
      %v301 = vld [vmem:[%s278] sm:$0xf]
      %v302 = vld [vmem:[%s278 + $0x4] sm:$0xf]
      %v303 = vld [vmem:[%s278 + $0x8] sm:$0xf]
      %v304 = vld [vmem:[%s278 + $0xc] sm:$0xf]
      %v305 = vld [vmem:[%s278 + $0x10] sm:$0xf]
      %v306 = vld [vmem:[%s278 + $0x14] sm:$0xf]
      %v307 = vld [vmem:[%s278 + $0x18] sm:$0xf]
      %v308 = vld [vmem:[%s278 + $0x1c] sm:$0xf]
      %v309 = vld [vmem:[%s278 + $0x20] sm:$0xf]
      %v310 = vld [vmem:[%s278 + $0x24] sm:$0xf]
      %v311 = vld [vmem:[%s278 + $0x28] sm:$0xf]
      %v312 = vld [vmem:[%s278 + $0x2c] sm:$0xf]
      %v313 = vld [vmem:[%s278 + $0x30] sm:$0xf]
      %v314 = vld [vmem:[%s278 + $0x34] sm:$0xf]
      %v315 = vld [vmem:[%s278 + $0x38] sm:$0xf]
      %v316 = vld [vmem:[%s278 + $0x3c] sm:$0xf]
      %v317 = vld [vmem:[%s278 + $0x40] sm:$0xf]
      %v318 = vld [vmem:[%s278 + $0x44] sm:$0xf]
      %v319 = vld [vmem:[%s278 + $0x48] sm:$0xf]
      %v320 = vld [vmem:[%s278 + $0x4c] sm:$0xf]
      %v321 = vld [vmem:[%s278 + $0x50] sm:$0xf]
      %v322 = vld [vmem:[%s278 + $0x54] sm:$0xf]
      %v323 = vld [vmem:[%s278 + $0x58] sm:$0xf]
      %v324 = vld [vmem:[%s278 + $0x5c] sm:$0xf]
      %v325 = vld [vmem:[%s278 + $0x60] sm:$0xf]
      %v326 = vld [vmem:[%s278 + $0x64] sm:$0xf]
      %v327 = vld [vmem:[%s278 + $0x68] sm:$0xf]
      %v328 = vld [vmem:[%s278 + $0x6c] sm:$0xf]
      %v329 = vld [vmem:[%s278 + $0x70] sm:$0xf]
      %v330 = vld [vmem:[%s278 + $0x74] sm:$0xf]
      %v331 = vld [vmem:[%s278 + $0x78] sm:$0xf]
      %v332 = vld [vmem:[%s278 + $0x7c] sm:$0xf]
      %v333 = vld [vmem:[%s2] sm:$0xf]
      %v334 = vld [vmem:[%s2 + $0x4] sm:$0xf]
      %v335 = vld [vmem:[%s288] sm:$0xf]
      %v336 = vld [vmem:[%s288 + $0x4] sm:$0xf]
      %v337 = vld [vmem:[%s288 + $0x8] sm:$0xf]
      %v338 = vld [vmem:[%s288 + $0xc] sm:$0xf]
      %v339 = vld [vmem:[%s288 + $0x10] sm:$0xf]
      %v340 = vld [vmem:[%s288 + $0x14] sm:$0xf]
      %v341 = vld [vmem:[%s288 + $0x18] sm:$0xf]
      %v342 = vld [vmem:[%s288 + $0x1c] sm:$0xf]
      %v343 = vld [vmem:[%s288 + $0x20] sm:$0xf]
      %v344 = vld [vmem:[%s288 + $0x24] sm:$0xf]
      %v345 = vld [vmem:[%s288 + $0x28] sm:$0xf]
      %v346 = vld [vmem:[%s288 + $0x2c] sm:$0xf]
      %v347 = vld [vmem:[%s288 + $0x30] sm:$0xf]
      %v348 = vld [vmem:[%s288 + $0x34] sm:$0xf]
      %v349 = vld [vmem:[%s288 + $0x38] sm:$0xf]
      %v350 = vld [vmem:[%s288 + $0x3c] sm:$0xf]
      %v351 = vld [vmem:[%s288 + $0x40] sm:$0xf]
      %v352 = vld [vmem:[%s288 + $0x44] sm:$0xf]
      %v353 = vld [vmem:[%s288 + $0x48] sm:$0xf]
      %v354 = vld [vmem:[%s288 + $0x4c] sm:$0xf]
      %v355 = vld [vmem:[%s288 + $0x50] sm:$0xf]
      %v356 = vld [vmem:[%s288 + $0x54] sm:$0xf]
      %v357 = vld [vmem:[%s288 + $0x58] sm:$0xf]
      %v358 = vld [vmem:[%s288 + $0x5c] sm:$0xf]
      %v359 = vld [vmem:[%s288 + $0x60] sm:$0xf]
      %v360 = vld [vmem:[%s288 + $0x64] sm:$0xf]
      %v361 = vld [vmem:[%s288 + $0x68] sm:$0xf]
      %v362 = vld [vmem:[%s288 + $0x6c] sm:$0xf]
      %v363 = vld [vmem:[%s288 + $0x70] sm:$0xf]
      %v364 = vld [vmem:[%s288 + $0x74] sm:$0xf]
      %v365 = vld [vmem:[%s288 + $0x78] sm:$0xf]
      %v366 = vld [vmem:[%s288 + $0x7c] sm:$0xf]
      %v367 = vld [vmem:[%s3] sm:$0xf]
      %v368 = vld [vmem:[%s3 + $0x4] sm:$0xf]
      %v401 = vunpack.c.l.b16 %v335
      %v402 = vunpack.c.l.b16 %v336
      %v403 = vunpack.c.l.b16 %v337
      %v404 = vunpack.c.l.b16 %v338
      %v405 = vunpack.c.l.b16 %v339
      %v406 = vunpack.c.l.b16 %v340
      %v407 = vunpack.c.l.b16 %v341
      %v408 = vunpack.c.l.b16 %v342
      %v409 = vunpack.c.l.b16 %v343
      %v410 = vunpack.c.l.b16 %v344
      %v411 = vunpack.c.l.b16 %v345
      %v412 = vunpack.c.l.b16 %v346
      %v413 = vunpack.c.l.b16 %v347
      %v414 = vunpack.c.l.b16 %v348
      %v415 = vunpack.c.l.b16 %v349
      %v416 = vunpack.c.l.b16 %v350
      %v417 = vunpack.c.l.b16 %v351
      %v418 = vunpack.c.l.b16 %v352
      %v419 = vunpack.c.l.b16 %v353
      %v420 = vunpack.c.l.b16 %v354
      %v421 = vunpack.c.l.b16 %v355
      %v422 = vunpack.c.l.b16 %v356
      %v423 = vunpack.c.l.b16 %v357
      %v424 = vunpack.c.l.b16 %v358
      %v425 = vunpack.c.l.b16 %v359
      %v426 = vunpack.c.l.b16 %v360
      %v427 = vunpack.c.l.b16 %v361
      %v428 = vunpack.c.l.b16 %v362
      %v429 = vunpack.c.l.b16 %v363
      %v430 = vunpack.c.l.b16 %v364
      %v431 = vunpack.c.l.b16 %v365
      %v432 = vunpack.c.l.b16 %v366
      %v433 = vpack.c.b16 %v402, %v401
      %v434 = vpack.c.b16 %v404, %v403
      %v435 = vpack.c.b16 %v406, %v405
      %v436 = vpack.c.b16 %v408, %v407
      %v437 = vpack.c.b16 %v410, %v409
      %v438 = vpack.c.b16 %v412, %v411
      %v439 = vpack.c.b16 %v414, %v413
      %v440 = vpack.c.b16 %v416, %v415
      %v441 = vpack.c.b16 %v418, %v417
      %v442 = vpack.c.b16 %v420, %v419
      %v443 = vpack.c.b16 %v422, %v421
      %v444 = vpack.c.b16 %v424, %v423
      %v445 = vpack.c.b16 %v426, %v425
      %v446 = vpack.c.b16 %v428, %v427
      %v447 = vpack.c.b16 %v430, %v429
      %v448 = vpack.c.b16 %v432, %v431
      %v451 = vunpack.c.l.b16 %v367
      %v452 = vunpack.c.l.b16 %v368
      %v453 = vpack.c.b16 %v452, %v451
      %vm455 = vcmask 130048
      %v457 = vsel %vm455, %v433, 0
      %v460 = vsel %vm455, %v434, 0
      %v463 = vsel %vm455, %v435, 0
      %v466 = vsel %vm455, %v436, 0
      %v469 = vsel %vm455, %v437, 0
      %v472 = vsel %vm455, %v438, 0
      %v475 = vsel %vm455, %v439, 0
      %v478 = vsel %vm455, %v440, 0
      %v481 = vsel %vm455, %v441, 0
      %v484 = vsel %vm455, %v442, 0
      %v487 = vsel %vm455, %v443, 0
      %v490 = vsel %vm455, %v444, 0
      %v493 = vsel %vm455, %v445, 0
      %v496 = vsel %vm455, %v446, 0
      %v499 = vsel %vm455, %v447, 0
      %v502 = vsel %vm455, %v448, 0
      %504 = vmatprep.subr.bf16.mxu0 0
      %505 = vmatpush1.bf16.msra.mxu0 %v453
      %506 = vmatprep.subr.bf16.mxu0 0
      %507 = vmatpush1.bf16.msra.mxu0 0
      %508 = vmatprep.subr.bf16.mxu0 0
      %509 = vmatpush1.bf16.msra.mxu0 0
      %510 = vmatprep.subr.bf16.mxu0 0
      %511 = vmatpush1.bf16.msra.mxu0 0
      %512 = vmatprep.subr.bf16.mxu0 0
      %513 = vmatpush1.bf16.msra.mxu0 0
      %514 = vmatprep.subr.bf16.mxu0 0
      %515 = vmatpush1.bf16.msra.mxu0 0
      %516 = vmatprep.subr.bf16.mxu0 0
      %517 = vmatpush1.bf16.msra.mxu0 0
      %518 = vmatprep.subr.bf16.mxu0 0
      %519 = vmatpush1.bf16.msra.mxu0 0
      %520 = vmatprep.subr.bf16.mxu0 0
      %521 = vmatpush1.bf16.msra.mxu0 0
      %522 = vmatprep.subr.bf16.mxu0 0
      %523 = vmatpush1.bf16.msra.mxu0 0
      %524 = vmatprep.subr.bf16.mxu0 0
      %525 = vmatpush1.bf16.msra.mxu0 0
      %526 = vmatprep.subr.bf16.mxu0 0
      %527 = vmatpush1.bf16.msra.mxu0 0
      %528 = vmatprep.subr.bf16.mxu0 0
      %529 = vmatpush1.bf16.msra.mxu0 0
      %530 = vmatprep.subr.bf16.mxu0 0
      %531 = vmatpush1.bf16.msra.mxu0 0
      %532 = vmatprep.subr.bf16.mxu0 0
      %533 = vmatpush1.bf16.msra.mxu0 0
      %534 = vmatprep.subr.bf16.mxu0 0
      %535 = vmatpush1.bf16.msra.mxu0 0
      %536 = vmatprep.mubr.bf16.mxu0 0
      %537 = vmatmul.mubr.bf16.gmra.mrb[0].mxu0 %v457
      %v538 = vpop.f32.mrb[0].mxu0
      %v539 = vadd.f32 0.0, %v538
      %v540 = vpop.f32.mrb[0].mxu0
      %v541 = vpop.f32.mrb[0].mxu0
      %v542 = vadd.f32 0.0, %v541
      %v543 = vpop.f32.mrb[0].mxu0
      %544 = vmatprep.mubr.bf16.mxu0 0
      %545 = vmatmul.mubr.bf16.gmra.mrb[0].mxu0 %v460
      %v546 = vpop.f32.mrb[0].mxu0
      %v547 = vadd.f32 0.0, %v546
      %v548 = vpop.f32.mrb[0].mxu0
      %v549 = vpop.f32.mrb[0].mxu0
      %v550 = vadd.f32 0.0, %v549
      %v551 = vpop.f32.mrb[0].mxu0
      %552 = vmatprep.mubr.bf16.mxu0 0
      %553 = vmatmul.mubr.bf16.gmra.mrb[0].mxu0 %v463
      %v554 = vpop.f32.mrb[0].mxu0
      %v555 = vadd.f32 0.0, %v554
      %v556 = vpop.f32.mrb[0].mxu0
      %v557 = vpop.f32.mrb[0].mxu0
      %v558 = vadd.f32 0.0, %v557
      %v559 = vpop.f32.mrb[0].mxu0
      %560 = vmatprep.mubr.bf16.mxu0 0
      %561 = vmatmul.mubr.bf16.gmra.mrb[0].mxu0 %v466
      %v562 = vpop.f32.mrb[0].mxu0
      %v563 = vadd.f32 0.0, %v562
      %v564 = vpop.f32.mrb[0].mxu0
      %v565 = vpop.f32.mrb[0].mxu0
      %v566 = vadd.f32 0.0, %v565
      %v567 = vpop.f32.mrb[0].mxu0
      %568 = vmatprep.mubr.bf16.mxu0 0
      %569 = vmatmul.mubr.bf16.gmra.mrb[0].mxu0 %v469
      %v570 = vpop.f32.mrb[0].mxu0
      %v571 = vadd.f32 0.0, %v570
      %v572 = vpop.f32.mrb[0].mxu0
      %v573 = vpop.f32.mrb[0].mxu0
      %v574 = vadd.f32 0.0, %v573
      %v575 = vpop.f32.mrb[0].mxu0
      %576 = vmatprep.mubr.bf16.mxu0 0
      %577 = vmatmul.mubr.bf16.gmra.mrb[0].mxu0 %v472
      %v578 = vpop.f32.mrb[0].mxu0
      %v579 = vadd.f32 0.0, %v578
      %v580 = vpop.f32.mrb[0].mxu0
      %v581 = vpop.f32.mrb[0].mxu0
      %v582 = vadd.f32 0.0, %v581
      %v583 = vpop.f32.mrb[0].mxu0
      %584 = vmatprep.mubr.bf16.mxu0 0
      %585 = vmatmul.mubr.bf16.gmra.mrb[0].mxu0 %v475
      %v586 = vpop.f32.mrb[0].mxu0
      %v587 = vadd.f32 0.0, %v586
      %v588 = vpop.f32.mrb[0].mxu0
      %v589 = vpop.f32.mrb[0].mxu0
      %v590 = vadd.f32 0.0, %v589
      %v591 = vpop.f32.mrb[0].mxu0
      %592 = vmatprep.mubr.bf16.mxu0 0
      %593 = vmatmul.mubr.bf16.gmra.mrb[0].mxu0 %v478
      %v594 = vpop.f32.mrb[0].mxu0
      %v595 = vadd.f32 0.0, %v594
      %v596 = vpop.f32.mrb[0].mxu0
      %v597 = vpop.f32.mrb[0].mxu0
      %v598 = vadd.f32 0.0, %v597
      %v599 = vpop.f32.mrb[0].mxu0
      %600 = vmatprep.mubr.bf16.mxu0 0
      %601 = vmatmul.mubr.bf16.gmra.mrb[0].mxu0 %v481
      %v602 = vpop.f32.mrb[0].mxu0
      %v603 = vadd.f32 0.0, %v602
      %v604 = vpop.f32.mrb[0].mxu0
      %v605 = vpop.f32.mrb[0].mxu0
      %v606 = vadd.f32 0.0, %v605
      %v607 = vpop.f32.mrb[0].mxu0
      %608 = vmatprep.mubr.bf16.mxu0 0
      %609 = vmatmul.mubr.bf16.gmra.mrb[0].mxu0 %v484
      %v610 = vpop.f32.mrb[0].mxu0
      %v611 = vadd.f32 0.0, %v610
      %v612 = vpop.f32.mrb[0].mxu0
      %v613 = vpop.f32.mrb[0].mxu0
      %v614 = vadd.f32 0.0, %v613
      %v615 = vpop.f32.mrb[0].mxu0
      %616 = vmatprep.mubr.bf16.mxu0 0
      %617 = vmatmul.mubr.bf16.gmra.mrb[0].mxu0 %v487
      %v618 = vpop.f32.mrb[0].mxu0
      %v619 = vadd.f32 0.0, %v618
      %v620 = vpop.f32.mrb[0].mxu0
      %v621 = vpop.f32.mrb[0].mxu0
      %v622 = vadd.f32 0.0, %v621
      %v623 = vpop.f32.mrb[0].mxu0
      %624 = vmatprep.mubr.bf16.mxu0 0
      %625 = vmatmul.mubr.bf16.gmra.mrb[0].mxu0 %v490
      %v626 = vpop.f32.mrb[0].mxu0
      %v627 = vadd.f32 0.0, %v626
      %v628 = vpop.f32.mrb[0].mxu0
      %v629 = vpop.f32.mrb[0].mxu0
      %v630 = vadd.f32 0.0, %v629
      %v631 = vpop.f32.mrb[0].mxu0
      %632 = vmatprep.mubr.bf16.mxu0 0
      %633 = vmatmul.mubr.bf16.gmra.mrb[0].mxu0 %v493
      %v634 = vpop.f32.mrb[0].mxu0
      %v635 = vadd.f32 0.0, %v634
      %v636 = vpop.f32.mrb[0].mxu0
      %v637 = vpop.f32.mrb[0].mxu0
      %v638 = vadd.f32 0.0, %v637
      %v639 = vpop.f32.mrb[0].mxu0
      %640 = vmatprep.mubr.bf16.mxu0 0
      %641 = vmatmul.mubr.bf16.gmra.mrb[0].mxu0 %v496
      %v642 = vpop.f32.mrb[0].mxu0
      %v643 = vadd.f32 0.0, %v642
      %v644 = vpop.f32.mrb[0].mxu0
      %v645 = vpop.f32.mrb[0].mxu0
      %v646 = vadd.f32 0.0, %v645
      %v647 = vpop.f32.mrb[0].mxu0
      %648 = vmatprep.mubr.bf16.mxu0 0
      %649 = vmatmul.mubr.bf16.gmra.mrb[0].mxu0 %v499
      %v650 = vpop.f32.mrb[0].mxu0
      %v651 = vadd.f32 0.0, %v650
      %v652 = vpop.f32.mrb[0].mxu0
      %v653 = vpop.f32.mrb[0].mxu0
      %v654 = vadd.f32 0.0, %v653
      %v655 = vpop.f32.mrb[0].mxu0
      %656 = vmatprep.mubr.bf16.mxu0 0
      %657 = vmatmul.mubr.bf16.gmra.mrb[0].mxu0 %v502
      %v658 = vpop.f32.mrb[0].mxu0
      %v659 = vadd.f32 0.0, %v658
      %v660 = vpop.f32.mrb[0].mxu0
      %v661 = vpop.f32.mrb[0].mxu0
      %v662 = vadd.f32 0.0, %v661
      %v663 = vpop.f32.mrb[0].mxu0
      %664 = vdwg.mxu0
      %v697 = vunpack.c.l.b16 %v301
      %v698 = vunpack.c.l.b16 %v302
      %v699 = vunpack.c.l.b16 %v303
      %v700 = vunpack.c.l.b16 %v304
      %v701 = vunpack.c.l.b16 %v305
      %v702 = vunpack.c.l.b16 %v306
      %v703 = vunpack.c.l.b16 %v307
      %v704 = vunpack.c.l.b16 %v308
      %v705 = vunpack.c.l.b16 %v309
      %v706 = vunpack.c.l.b16 %v310
      %v707 = vunpack.c.l.b16 %v311
      %v708 = vunpack.c.l.b16 %v312
      %v709 = vunpack.c.l.b16 %v313
      %v710 = vunpack.c.l.b16 %v314
      %v711 = vunpack.c.l.b16 %v315
      %v712 = vunpack.c.l.b16 %v316
      %v713 = vunpack.c.l.b16 %v317
      %v714 = vunpack.c.l.b16 %v318
      %v715 = vunpack.c.l.b16 %v319
      %v716 = vunpack.c.l.b16 %v320
      %v717 = vunpack.c.l.b16 %v321
      %v718 = vunpack.c.l.b16 %v322
      %v719 = vunpack.c.l.b16 %v323
      %v720 = vunpack.c.l.b16 %v324
      %v721 = vunpack.c.l.b16 %v325
      %v722 = vunpack.c.l.b16 %v326
      %v723 = vunpack.c.l.b16 %v327
      %v724 = vunpack.c.l.b16 %v328
      %v725 = vunpack.c.l.b16 %v329
      %v726 = vunpack.c.l.b16 %v330
      %v727 = vunpack.c.l.b16 %v331
      %v728 = vunpack.c.l.b16 %v332
      %v729 = vpack.c.b16 %v698, %v697
      %v730 = vpack.c.b16 %v700, %v699
      %v731 = vpack.c.b16 %v702, %v701
      %v732 = vpack.c.b16 %v704, %v703
      %v733 = vpack.c.b16 %v706, %v705
      %v734 = vpack.c.b16 %v708, %v707
      %v735 = vpack.c.b16 %v710, %v709
      %v736 = vpack.c.b16 %v712, %v711
      %v737 = vpack.c.b16 %v714, %v713
      %v738 = vpack.c.b16 %v716, %v715
      %v739 = vpack.c.b16 %v718, %v717
      %v740 = vpack.c.b16 %v720, %v719
      %v741 = vpack.c.b16 %v722, %v721
      %v742 = vpack.c.b16 %v724, %v723
      %v743 = vpack.c.b16 %v726, %v725
      %v744 = vpack.c.b16 %v728, %v727
      %v747 = vunpack.c.l.b16 %v333
      %v748 = vunpack.c.l.b16 %v334
      %v749 = vpack.c.b16 %v748, %v747
      %v752 = vsel %vm455, %v729, 0
      %v755 = vsel %vm455, %v730, 0
      %v758 = vsel %vm455, %v731, 0
      %v761 = vsel %vm455, %v732, 0
      %v764 = vsel %vm455, %v733, 0
      %v767 = vsel %vm455, %v734, 0
      %v770 = vsel %vm455, %v735, 0
      %v773 = vsel %vm455, %v736, 0
      %v776 = vsel %vm455, %v737, 0
      %v779 = vsel %vm455, %v738, 0
      %v782 = vsel %vm455, %v739, 0
      %v785 = vsel %vm455, %v740, 0
      %v788 = vsel %vm455, %v741, 0
      %v791 = vsel %vm455, %v742, 0
      %v794 = vsel %vm455, %v743, 0
      %v797 = vsel %vm455, %v744, 0
      %799 = vmatprep.subr.bf16.mxu0 0
      %800 = vmatpush1.bf16.msra.mxu0 %v749
      %801 = vmatprep.subr.bf16.mxu0 0
      %802 = vmatpush1.bf16.msra.mxu0 0
      %803 = vmatprep.subr.bf16.mxu0 0
      %804 = vmatpush1.bf16.msra.mxu0 0
      %805 = vmatprep.subr.bf16.mxu0 0
      %806 = vmatpush1.bf16.msra.mxu0 0
      %807 = vmatprep.subr.bf16.mxu0 0
      %808 = vmatpush1.bf16.msra.mxu0 0
      %809 = vmatprep.subr.bf16.mxu0 0
      %810 = vmatpush1.bf16.msra.mxu0 0
      %811 = vmatprep.subr.bf16.mxu0 0
      %812 = vmatpush1.bf16.msra.mxu0 0
      %813 = vmatprep.subr.bf16.mxu0 0
      %814 = vmatpush1.bf16.msra.mxu0 0
      %815 = vmatprep.subr.bf16.mxu0 0
      %816 = vmatpush1.bf16.msra.mxu0 0
      %817 = vmatprep.subr.bf16.mxu0 0
      %818 = vmatpush1.bf16.msra.mxu0 0
      %819 = vmatprep.subr.bf16.mxu0 0
      %820 = vmatpush1.bf16.msra.mxu0 0
      %821 = vmatprep.subr.bf16.mxu0 0
      %822 = vmatpush1.bf16.msra.mxu0 0
      %823 = vmatprep.subr.bf16.mxu0 0
      %824 = vmatpush1.bf16.msra.mxu0 0
      %825 = vmatprep.subr.bf16.mxu0 0
      %826 = vmatpush1.bf16.msra.mxu0 0
      %827 = vmatprep.subr.bf16.mxu0 0
      %828 = vmatpush1.bf16.msra.mxu0 0
      %829 = vmatprep.subr.bf16.mxu0 0
      %830 = vmatpush1.bf16.msra.mxu0 0
      %831 = vmatprep.mubr.bf16.mxu0 0
      %832 = vmatmul.mubr.bf16.gmra.mrb[0].mxu0 %v752
      %v833 = vpop.f32.mrb[0].mxu0
      %v834 = vadd.f32 %v539, %v833
      %v835 = vpop.f32.mrb[0].mxu0
      %v836 = vpop.f32.mrb[0].mxu0
      %v837 = vadd.f32 %v542, %v836
      %v838 = vpop.f32.mrb[0].mxu0
      %839 = vmatprep.mubr.bf16.mxu0 0
      %840 = vmatmul.mubr.bf16.gmra.mrb[0].mxu0 %v755
      %v841 = vpop.f32.mrb[0].mxu0
      %v842 = vadd.f32 %v547, %v841
      %v843 = vpop.f32.mrb[0].mxu0
      %v844 = vpop.f32.mrb[0].mxu0
      %v845 = vadd.f32 %v550, %v844
      %v846 = vpop.f32.mrb[0].mxu0
      %847 = vmatprep.mubr.bf16.mxu0 0
      %848 = vmatmul.mubr.bf16.gmra.mrb[0].mxu0 %v758
      %v849 = vpop.f32.mrb[0].mxu0
      %v850 = vadd.f32 %v555, %v849
      %v851 = vpop.f32.mrb[0].mxu0
      %v852 = vpop.f32.mrb[0].mxu0
      %v853 = vadd.f32 %v558, %v852
      %v854 = vpop.f32.mrb[0].mxu0
      %855 = vmatprep.mubr.bf16.mxu0 0
      %856 = vmatmul.mubr.bf16.gmra.mrb[0].mxu0 %v761
      %v857 = vpop.f32.mrb[0].mxu0
      %v858 = vadd.f32 %v563, %v857
      %v859 = vpop.f32.mrb[0].mxu0
      %v860 = vpop.f32.mrb[0].mxu0
      %v861 = vadd.f32 %v566, %v860
      %v862 = vpop.f32.mrb[0].mxu0
      %863 = vmatprep.mubr.bf16.mxu0 0
      %864 = vmatmul.mubr.bf16.gmra.mrb[0].mxu0 %v764
      %v865 = vpop.f32.mrb[0].mxu0
      %v866 = vadd.f32 %v571, %v865
      %v867 = vpop.f32.mrb[0].mxu0
      %v868 = vpop.f32.mrb[0].mxu0
      %v869 = vadd.f32 %v574, %v868
      %v870 = vpop.f32.mrb[0].mxu0
      %871 = vmatprep.mubr.bf16.mxu0 0
      %872 = vmatmul.mubr.bf16.gmra.mrb[0].mxu0 %v767
      %v873 = vpop.f32.mrb[0].mxu0
      %v874 = vadd.f32 %v579, %v873
      %v875 = vpop.f32.mrb[0].mxu0
      %v876 = vpop.f32.mrb[0].mxu0
      %v877 = vadd.f32 %v582, %v876
      %v878 = vpop.f32.mrb[0].mxu0
      %879 = vmatprep.mubr.bf16.mxu0 0
      %880 = vmatmul.mubr.bf16.gmra.mrb[0].mxu0 %v770
      %v881 = vpop.f32.mrb[0].mxu0
      %v882 = vadd.f32 %v587, %v881
      %v883 = vpop.f32.mrb[0].mxu0
      %v884 = vpop.f32.mrb[0].mxu0
      %v885 = vadd.f32 %v590, %v884
      %v886 = vpop.f32.mrb[0].mxu0
      %887 = vmatprep.mubr.bf16.mxu0 0
      %888 = vmatmul.mubr.bf16.gmra.mrb[0].mxu0 %v773
      %v889 = vpop.f32.mrb[0].mxu0
      %v890 = vadd.f32 %v595, %v889
      %v891 = vpop.f32.mrb[0].mxu0
      %v892 = vpop.f32.mrb[0].mxu0
      %v893 = vadd.f32 %v598, %v892
      %v894 = vpop.f32.mrb[0].mxu0
      %895 = vmatprep.mubr.bf16.mxu0 0
      %896 = vmatmul.mubr.bf16.gmra.mrb[0].mxu0 %v776
      %v897 = vpop.f32.mrb[0].mxu0
      %v898 = vadd.f32 %v603, %v897
      %v899 = vpop.f32.mrb[0].mxu0
      %v900 = vpop.f32.mrb[0].mxu0
      %v901 = vadd.f32 %v606, %v900
      %v902 = vpop.f32.mrb[0].mxu0
      %903 = vmatprep.mubr.bf16.mxu0 0
      %904 = vmatmul.mubr.bf16.gmra.mrb[0].mxu0 %v779
      %v905 = vpop.f32.mrb[0].mxu0
      %v906 = vadd.f32 %v611, %v905
      %v907 = vpop.f32.mrb[0].mxu0
      %v908 = vpop.f32.mrb[0].mxu0
      %v909 = vadd.f32 %v614, %v908
      %v910 = vpop.f32.mrb[0].mxu0
      %911 = vmatprep.mubr.bf16.mxu0 0
      %912 = vmatmul.mubr.bf16.gmra.mrb[0].mxu0 %v782
      %v913 = vpop.f32.mrb[0].mxu0
      %v914 = vadd.f32 %v619, %v913
      %v915 = vpop.f32.mrb[0].mxu0
      %v916 = vpop.f32.mrb[0].mxu0
      %v917 = vadd.f32 %v622, %v916
      %v918 = vpop.f32.mrb[0].mxu0
      %919 = vmatprep.mubr.bf16.mxu0 0
      %920 = vmatmul.mubr.bf16.gmra.mrb[0].mxu0 %v785
      %v921 = vpop.f32.mrb[0].mxu0
      %v922 = vadd.f32 %v627, %v921
      %v923 = vpop.f32.mrb[0].mxu0
      %v924 = vpop.f32.mrb[0].mxu0
      %v925 = vadd.f32 %v630, %v924
      %v926 = vpop.f32.mrb[0].mxu0
      %927 = vmatprep.mubr.bf16.mxu0 0
      %928 = vmatmul.mubr.bf16.gmra.mrb[0].mxu0 %v788
      %v929 = vpop.f32.mrb[0].mxu0
      %v930 = vadd.f32 %v635, %v929
      %v931 = vpop.f32.mrb[0].mxu0
      %v932 = vpop.f32.mrb[0].mxu0
      %v933 = vadd.f32 %v638, %v932
      %v934 = vpop.f32.mrb[0].mxu0
      %935 = vmatprep.mubr.bf16.mxu0 0
      %936 = vmatmul.mubr.bf16.gmra.mrb[0].mxu0 %v791
      %v937 = vpop.f32.mrb[0].mxu0
      %v938 = vadd.f32 %v643, %v937
      %v939 = vpop.f32.mrb[0].mxu0
      %v940 = vpop.f32.mrb[0].mxu0
      %v941 = vadd.f32 %v646, %v940
      %v942 = vpop.f32.mrb[0].mxu0
      %943 = vmatprep.mubr.bf16.mxu0 0
      %944 = vmatmul.mubr.bf16.gmra.mrb[0].mxu0 %v794
      %v945 = vpop.f32.mrb[0].mxu0
      %v946 = vadd.f32 %v651, %v945
      %v947 = vpop.f32.mrb[0].mxu0
      %v948 = vpop.f32.mrb[0].mxu0
      %v949 = vadd.f32 %v654, %v948
      %v950 = vpop.f32.mrb[0].mxu0
      %951 = vmatprep.mubr.bf16.mxu0 0
      %952 = vmatmul.mubr.bf16.gmra.mrb[0].mxu0 %v797
      %v953 = vpop.f32.mrb[0].mxu0
      %v954 = vadd.f32 %v659, %v953
      %v955 = vpop.f32.mrb[0].mxu0
      %v956 = vpop.f32.mrb[0].mxu0
      %v957 = vadd.f32 %v662, %v956
      %v958 = vpop.f32.mrb[0].mxu0
      %959 = vdwg.mxu0
      %v960 = vld [vmem:[%s4] sm:$0x1]
      %v962 = vlaneseq
      %v963 = vshrl.u32 %v962, 7
      %v964 = vsub.s32 0, %v963
      %v965 = vrot.slane %v960, %v964
      %v967 = vadd.f32 %v834, %v965
      %v968 = vadd.f32 %v837, %v965
      %v969 = vadd.f32 %v842, %v965
      %v970 = vadd.f32 %v845, %v965
      %v971 = vadd.f32 %v850, %v965
      %v972 = vadd.f32 %v853, %v965
      %v973 = vadd.f32 %v858, %v965
      %v974 = vadd.f32 %v861, %v965
      %v975 = vadd.f32 %v866, %v965
      %v976 = vadd.f32 %v869, %v965
      %v977 = vadd.f32 %v874, %v965
      %v978 = vadd.f32 %v877, %v965
      %v979 = vadd.f32 %v882, %v965
      %v980 = vadd.f32 %v885, %v965
      %v981 = vadd.f32 %v890, %v965
      %v982 = vadd.f32 %v893, %v965
      %v983 = vadd.f32 %v898, %v965
      %v984 = vadd.f32 %v901, %v965
      %v985 = vadd.f32 %v906, %v965
      %v986 = vadd.f32 %v909, %v965
      %v987 = vadd.f32 %v914, %v965
      %v988 = vadd.f32 %v917, %v965
      %v989 = vadd.f32 %v922, %v965
      %v990 = vadd.f32 %v925, %v965
      %v991 = vadd.f32 %v930, %v965
      %v992 = vadd.f32 %v933, %v965
      %v993 = vadd.f32 %v938, %v965
      %v994 = vadd.f32 %v941, %v965
      %v995 = vadd.f32 %v946, %v965
      %v996 = vadd.f32 %v949, %v965
      %v997 = vadd.f32 %v954, %v965
      %v998 = vadd.f32 %v957, %v965
      %v999 = vpack.c.bf16 %v968, %v967
      %v1000 = vpack.c.bf16 %v970, %v969
      %v1001 = vpack.c.bf16 %v972, %v971
      %v1002 = vpack.c.bf16 %v974, %v973
      %v1003 = vpack.c.bf16 %v976, %v975
      %v1004 = vpack.c.bf16 %v978, %v977
      %v1005 = vpack.c.bf16 %v980, %v979
      %v1006 = vpack.c.bf16 %v982, %v981
      %v1007 = vpack.c.bf16 %v984, %v983
      %v1008 = vpack.c.bf16 %v986, %v985
      %v1009 = vpack.c.bf16 %v988, %v987
      %v1010 = vpack.c.bf16 %v990, %v989
      %v1011 = vpack.c.bf16 %v992, %v991
      %v1012 = vpack.c.bf16 %v994, %v993
      %v1013 = vpack.c.bf16 %v996, %v995
      %v1014 = vpack.c.bf16 %v998, %v997
      %v1031 = vunpack.c.l.b16 %v999
      %v1032 = vunpack.c.h.b16 %v999
      %v1033 = vunpack.c.l.b16 %v1000
      %v1034 = vunpack.c.h.b16 %v1000
      %v1035 = vunpack.c.l.b16 %v1001
      %v1036 = vunpack.c.h.b16 %v1001
      %v1037 = vunpack.c.l.b16 %v1002
      %v1038 = vunpack.c.h.b16 %v1002
      %v1039 = vunpack.c.l.b16 %v1003
      %v1040 = vunpack.c.h.b16 %v1003
      %v1041 = vunpack.c.l.b16 %v1004
      %v1042 = vunpack.c.h.b16 %v1004
      %v1043 = vunpack.c.l.b16 %v1005
      %v1044 = vunpack.c.h.b16 %v1005
      %v1045 = vunpack.c.l.b16 %v1006
      %v1046 = vunpack.c.h.b16 %v1006
      %v1047 = vunpack.c.l.b16 %v1007
      %v1048 = vunpack.c.h.b16 %v1007
      %v1049 = vunpack.c.l.b16 %v1008
      %v1050 = vunpack.c.h.b16 %v1008
      %v1051 = vunpack.c.l.b16 %v1009
      %v1052 = vunpack.c.h.b16 %v1009
      %v1053 = vunpack.c.l.b16 %v1010
      %v1054 = vunpack.c.h.b16 %v1010
      %v1055 = vunpack.c.l.b16 %v1011
      %v1056 = vunpack.c.h.b16 %v1011
      %v1057 = vunpack.c.l.b16 %v1012
      %v1058 = vunpack.c.h.b16 %v1012
      %v1059 = vunpack.c.l.b16 %v1013
      %v1060 = vunpack.c.h.b16 %v1013
      %v1061 = vunpack.c.l.b16 %v1014
      %v1062 = vunpack.c.h.b16 %v1014
      %v1063 = vpack.c.b16 %v1031, %v1031
      %v1064 = vpack.c.b16 %v1032, %v1032
      %v1065 = vpack.c.b16 %v1033, %v1033
      %v1066 = vpack.c.b16 %v1034, %v1034
      %v1067 = vpack.c.b16 %v1035, %v1035
      %v1068 = vpack.c.b16 %v1036, %v1036
      %v1069 = vpack.c.b16 %v1037, %v1037
      %v1070 = vpack.c.b16 %v1038, %v1038
      %v1071 = vpack.c.b16 %v1039, %v1039
      %v1072 = vpack.c.b16 %v1040, %v1040
      %v1073 = vpack.c.b16 %v1041, %v1041
      %v1074 = vpack.c.b16 %v1042, %v1042
      %v1075 = vpack.c.b16 %v1043, %v1043
      %v1076 = vpack.c.b16 %v1044, %v1044
      %v1077 = vpack.c.b16 %v1045, %v1045
      %v1078 = vpack.c.b16 %v1046, %v1046
      %v1079 = vpack.c.b16 %v1047, %v1047
      %v1080 = vpack.c.b16 %v1048, %v1048
      %v1081 = vpack.c.b16 %v1049, %v1049
      %v1082 = vpack.c.b16 %v1050, %v1050
      %v1083 = vpack.c.b16 %v1051, %v1051
      %v1084 = vpack.c.b16 %v1052, %v1052
      %v1085 = vpack.c.b16 %v1053, %v1053
      %v1086 = vpack.c.b16 %v1054, %v1054
      %v1087 = vpack.c.b16 %v1055, %v1055
      %v1088 = vpack.c.b16 %v1056, %v1056
      %v1089 = vpack.c.b16 %v1057, %v1057
      %v1090 = vpack.c.b16 %v1058, %v1058
      %v1091 = vpack.c.b16 %v1059, %v1059
      %v1092 = vpack.c.b16 %v1060, %v1060
      %v1093 = vpack.c.b16 %v1061, %v1061
      %v1094 = vpack.c.b16 %v1062, %v1062
      %vm1127 = vcmask 257024
      %1128 = vst.msk [vmem:[%s298] sm:$0xf] %vm1127, %v1063
      %1129 = vst.msk [vmem:[%s298 + $0x4] sm:$0xf] %vm1127, %v1064
      %1130 = vst.msk [vmem:[%s298 + $0x8] sm:$0xf] %vm1127, %v1065
      %1131 = vst.msk [vmem:[%s298 + $0xc] sm:$0xf] %vm1127, %v1066
      %1132 = vst.msk [vmem:[%s298 + $0x10] sm:$0xf] %vm1127, %v1067
      %1133 = vst.msk [vmem:[%s298 + $0x14] sm:$0xf] %vm1127, %v1068
      %1134 = vst.msk [vmem:[%s298 + $0x18] sm:$0xf] %vm1127, %v1069
      %1135 = vst.msk [vmem:[%s298 + $0x1c] sm:$0xf] %vm1127, %v1070
      %1136 = vst.msk [vmem:[%s298 + $0x20] sm:$0xf] %vm1127, %v1071
      %1137 = vst.msk [vmem:[%s298 + $0x24] sm:$0xf] %vm1127, %v1072
      %1138 = vst.msk [vmem:[%s298 + $0x28] sm:$0xf] %vm1127, %v1073
      %1139 = vst.msk [vmem:[%s298 + $0x2c] sm:$0xf] %vm1127, %v1074
      %1140 = vst.msk [vmem:[%s298 + $0x30] sm:$0xf] %vm1127, %v1075
      %1141 = vst.msk [vmem:[%s298 + $0x34] sm:$0xf] %vm1127, %v1076
      %1142 = vst.msk [vmem:[%s298 + $0x38] sm:$0xf] %vm1127, %v1077
      %1143 = vst.msk [vmem:[%s298 + $0x3c] sm:$0xf] %vm1127, %v1078
      %1144 = vst.msk [vmem:[%s298 + $0x40] sm:$0xf] %vm1127, %v1079
      %1145 = vst.msk [vmem:[%s298 + $0x44] sm:$0xf] %vm1127, %v1080
      %1146 = vst.msk [vmem:[%s298 + $0x48] sm:$0xf] %vm1127, %v1081
      %1147 = vst.msk [vmem:[%s298 + $0x4c] sm:$0xf] %vm1127, %v1082
      %1148 = vst.msk [vmem:[%s298 + $0x50] sm:$0xf] %vm1127, %v1083
      %1149 = vst.msk [vmem:[%s298 + $0x54] sm:$0xf] %vm1127, %v1084
      %1150 = vst.msk [vmem:[%s298 + $0x58] sm:$0xf] %vm1127, %v1085
      %1151 = vst.msk [vmem:[%s298 + $0x5c] sm:$0xf] %vm1127, %v1086
      %1152 = vst.msk [vmem:[%s298 + $0x60] sm:$0xf] %vm1127, %v1087
      %1153 = vst.msk [vmem:[%s298 + $0x64] sm:$0xf] %vm1127, %v1088
      %1154 = vst.msk [vmem:[%s298 + $0x68] sm:$0xf] %vm1127, %v1089
      %1155 = vst.msk [vmem:[%s298 + $0x6c] sm:$0xf] %vm1127, %v1090
      %1156 = vst.msk [vmem:[%s298 + $0x70] sm:$0xf] %vm1127, %v1091
      %1157 = vst.msk [vmem:[%s298 + $0x74] sm:$0xf] %vm1127, %v1092
      %1158 = vst.msk [vmem:[%s298 + $0x78] sm:$0xf] %vm1127, %v1093
      %1159 = vst.msk [vmem:[%s298 + $0x7c] sm:$0xf] %vm1127, %v1094
      %s1160 = smul.u32 32, %s21
      %p1161 = scmp.lt.s32.totalorder %s20, 1
      %s1162 = scalar_select %p1161, %s20, 1
      %p1163 = scmp.lt.s32.totalorder %s1160, 31
      %s1164 = scalar_select %p1163, %s1160, 31
      %s1165 = smul.addr %s1162, 32
      %s1166 = sadd.s32 %s1164, %s1165
      %s1167 = smul.addr %s1166, 4
      %s1168 = scalar_lea.vmem %s5, %s1167
      // Predicated region
      $region41: #{sffi_forward.41} parent=39 // pred_check
        %p1169 = pneg %p167
      $region42: #{sffi_forward.41} parent=39 // pred_check_branch
        %1171 = sbr.rel (%p1169) target = $region44
      $region43: #{sffi_forward.41} parent=39 // pred_region
        %s1172 = smul.u32 32, %s21
      $region44: #{sffi_forward.41} parent=39 // pred_fallthru
        _
    $region40: #{sffi_forward.41} parent=5 // pred_fallthru
      _
    %p1173 = scmp.le.s32.totalorder 2, %s11
    // Predicated region
    $region45: #{sffi_forward.41} parent=5 // pred_check
      %p1174 = pneg %p1173
    $region46: #{sffi_forward.41} parent=5 // pred_check_branch
      %1176 = sbr.rel (%p1174) target = $region48
    $region47: #{sffi_forward.41} parent=5 // pred_region
      %s1177 = ssub.s32 %s11, 2
      // Predicated region
      $region49: #{sffi_forward.41} parent=47 // pred_check
        %p1178 = pneg %p173
      $region50: #{sffi_forward.41} parent=47 // pred_check_branch
        %1180 = sbr.rel (%p1178) target = $region52
      $region51: #{sffi_forward.41} parent=47 // pred_region
        %s1181 = smul.u32 32, %s23
        %p1182 = scmp.lt.s32.totalorder %s22, 1
        %s1183 = scalar_select %p1182, %s22, 1
        %p1184 = scmp.lt.s32.totalorder %s1181, 31
        %s1185 = scalar_select %p1184, %s1181, 31
        %s1186 = smul.addr %s1183, 32
        %s1187 = sadd.s32 %s1185, %s1186
        %s1188 = smul.addr %s1187, 4
        %s1189 = scalar_lea.vmem %s5, %s1188
      $region52: #{sffi_forward.41} parent=47 // pred_fallthru
        _
    $region48: #{sffi_forward.41} parent=5 // pred_fallthru
      _
  $region6: #{sffi_forward.41} parent=0 // loop_footer
    %s15 = sadd.s32 1, %s11
  $region7: #{sffi_forward.41} parent=0 // loop_footer_branch
    %10 = sbr.rel target = $region3
  $region8: #{sffi_forward.41} parent=0 // loop_exit
    _

// kernel: sffi_forward.53
$region0: #{sffi_forward.53}
  #allocation0 [shape = 'u32[]', space=smem, size = 0x4, offset = 0x4, fixed_abs, tag = 'smem constant byte address 0x4 - core index']
  #allocation1 [shape = 'u32[144,128]{1,0:T(1,128)}', space=vmem, size = 0x12000, scoped, tag = 'internal scratch']
  %s0 = inlined_call_operand.vmem [shape: bf16[2,256,16], index: 0, kind: input, shape index: {}]
  %s1 = inlined_call_operand.vmem [shape: bf16[2,256,16], index: 1, kind: input, shape index: {}]
  %s2 = inlined_call_operand.vmem [shape: bf16[2,256,32], index: 2, kind: input, shape index: {}]
  %s3 = inlined_call_operand.vmem [shape: bf16[16,32], index: 3, kind: input, shape index: {}]
  %s4 = inlined_call_operand.vmem [shape: bf16[16,32], index: 4, kind: input, shape index: {}]
  %s5 = inlined_call_operand.vmem [shape: f32[1,32], index: 5, kind: input, shape index: {}]
  %s6 = inlined_call_operand.vmem [shape: bf16[2,256,32], index: 6, kind: output, shape index: {}]
  %s7 = sld [smem:[#allocation0]]
  $region57: #{sffi_forward.53} parent=0
    _
  %s9 = ssub.s32 1, %s7
  %s10 = scalar_select 0, %s9, %s7
  loop: start=0, step=1, limit=4
  $region2: #{sffi_forward.53} parent=0 // loop_pre_header
    _
  $region3: #{sffi_forward.53} parent=0 // loop_header
    %s12 = sphi 0, %s16
    %p13 = scmp.ge.s32.totalorder %s12, 4
    %s19 = sphi 0, %s31
    %s20 = sphi 0, %s27
    %s21 = sphi 0, %s19
    %s22 = sphi 0, %s20
    %s23 = sphi 0, %s21
    %s24 = sphi 0, %s22
    %s36 = sphi 0, %s38
    %s39 = sphi 0, %s36
    %s40 = sphi 0, %s39
    %s56 = sphi 0, %s40
    %s64 = sphi 0, %s66
    %s67 = sphi 0, %s64
    %s68 = sphi 0, %s67
    %s84 = sphi 0, %s68
    %s92 = sphi 0, %s94
    %s95 = sphi 0, %s92
    %s96 = sphi 0, %s95
    %s112 = sphi 0, %s96
    %s116 = sphi 0, %s116
    %s118 = sphi 0, %s116
    %s119 = sphi 0, %s118
    %s133 = sphi 0, %s119
    %s137 = sphi 0, %s137
    %s139 = sphi 0, %s137
    %s140 = sphi 0, %s139
    %s154 = sphi 0, %s140
    %s158 = sphi 0, %s158
    %s160 = sphi 0, %s158
    %s161 = sphi 0, %s160
    %s175 = sphi 0, %s161
    %s183 = sphi 0, %s185
    %s186 = sphi 0, %s183
    %s187 = sphi 0, %s186
    %s203 = sphi 0, %s187
  $region4: #{sffi_forward.53} parent=0 // loop_header_branch
    %15 = sbr.rel (%p13) target = $region8
  $region5: #{sffi_forward.53} parent=0 // loop_body
    %s17 = ssub.s32 %s12, 1
    %s18 = ssub.s32 %s12, 2
    %s25 = sadd.s32 1, %s20
    %p26 = scmp.ge.s32.totalorder %s25, 1
    %s27 = scalar_select %p26, 0, %s25
    %s28 = sadd.s32 1, %s19
    %s29 = scalar_select %p26, %s28, %s19
    %p30 = scmp.ge.s32.totalorder %s29, 2
    %s31 = scalar_select %p30, 0, %s29
    %s32 = ssub.s32 %s19, %s31
    %s33 = ssub.s32 %s20, %s27
    %s34 = sor.u32 %s32, %s33
    %p35 = scmp.eq.s32.totalorder %s34, 0
    %s37 = sadd.s32 %s36, 1
    %s38 = scalar_select %p35, %s36, %s37
    %p41 = pneg %p35
    %p42 = scmp.eq.s32.totalorder %s12, 1
    %p43 = por %p41, %p42
    %p44 = scmp.ne.s32.totalorder %s36, %s39
    %p45 = scmp.eq.s32.totalorder %s12, 0
    %p46 = por %p44, %p45
    %p47 = scmp.ne.s32.totalorder %s36, %s39
    %p48 = scmp.eq.s32.totalorder %s17, 1
    %p49 = por %p47, %p48
    %p50 = scmp.ne.s32.totalorder %s39, %s40
    %p51 = scmp.eq.s32.totalorder %s17, 0
    %p52 = por %p50, %p51
    %p53 = scmp.ne.s32.totalorder %s39, %s40
    %p54 = scmp.eq.s32.totalorder %s18, 1
    %p55 = por %p53, %p54
    %p57 = scmp.ne.s32.totalorder %s40, %s56
    %p58 = scmp.eq.s32.totalorder %s18, 0
    %p59 = por %p57, %p58
    %s60 = ssub.s32 %s19, %s31
    %s61 = ssub.s32 %s20, %s27
    %s62 = sor.u32 %s60, %s61
    %p63 = scmp.eq.s32.totalorder %s62, 0
    %s65 = sadd.s32 %s64, 1
    %s66 = scalar_select %p63, %s64, %s65
    %p69 = pneg %p63
    %p70 = scmp.eq.s32.totalorder %s12, 1
    %p71 = por %p69, %p70
    %p72 = scmp.ne.s32.totalorder %s64, %s67
    %p73 = scmp.eq.s32.totalorder %s12, 0
    %p74 = por %p72, %p73
    %p75 = scmp.ne.s32.totalorder %s64, %s67
    %p76 = scmp.eq.s32.totalorder %s17, 1
    %p77 = por %p75, %p76
    %p78 = scmp.ne.s32.totalorder %s67, %s68
    %p79 = scmp.eq.s32.totalorder %s17, 0
    %p80 = por %p78, %p79
    %p81 = scmp.ne.s32.totalorder %s67, %s68
    %p82 = scmp.eq.s32.totalorder %s18, 1
    %p83 = por %p81, %p82
    %p85 = scmp.ne.s32.totalorder %s68, %s84
    %p86 = scmp.eq.s32.totalorder %s18, 0
    %p87 = por %p85, %p86
    %s88 = ssub.s32 %s19, %s31
    %s89 = ssub.s32 %s20, %s27
    %s90 = sor.u32 %s88, %s89
    %p91 = scmp.eq.s32.totalorder %s90, 0
    %s93 = sadd.s32 %s92, 1
    %s94 = scalar_select %p91, %s92, %s93
    %p97 = pneg %p91
    %p98 = scmp.eq.s32.totalorder %s12, 1
    %p99 = por %p97, %p98
    %p100 = scmp.ne.s32.totalorder %s92, %s95
    %p101 = scmp.eq.s32.totalorder %s12, 0
    %p102 = por %p100, %p101
    %p103 = scmp.ne.s32.totalorder %s92, %s95
    %p104 = scmp.eq.s32.totalorder %s17, 1
    %p105 = por %p103, %p104
    %p106 = scmp.ne.s32.totalorder %s95, %s96
    %p107 = scmp.eq.s32.totalorder %s17, 0
    %p108 = por %p106, %p107
    %p109 = scmp.ne.s32.totalorder %s95, %s96
    %p110 = scmp.eq.s32.totalorder %s18, 1
    %p111 = por %p109, %p110
    %p113 = scmp.ne.s32.totalorder %s96, %s112
    %p114 = scmp.eq.s32.totalorder %s18, 0
    %p115 = por %p113, %p114
    %s117 = sadd.s32 %s116, 1
    %p120 = scmp.eq.s32.totalorder %s12, 1
    %p121 = scmp.ne.s32.totalorder %s116, %s118
    %p122 = scmp.eq.s32.totalorder %s12, 0
    %p123 = por %p121, %p122
    %p124 = scmp.ne.s32.totalorder %s116, %s118
    %p125 = scmp.eq.s32.totalorder %s17, 1
    %p126 = por %p124, %p125
    %p127 = scmp.ne.s32.totalorder %s118, %s119
    %p128 = scmp.eq.s32.totalorder %s17, 0
    %p129 = por %p127, %p128
    %p130 = scmp.ne.s32.totalorder %s118, %s119
    %p131 = scmp.eq.s32.totalorder %s18, 1
    %p132 = por %p130, %p131
    %p134 = scmp.ne.s32.totalorder %s119, %s133
    %p135 = scmp.eq.s32.totalorder %s18, 0
    %p136 = por %p134, %p135
    %s138 = sadd.s32 %s137, 1
    %p141 = scmp.eq.s32.totalorder %s12, 1
    %p142 = scmp.ne.s32.totalorder %s137, %s139
    %p143 = scmp.eq.s32.totalorder %s12, 0
    %p144 = por %p142, %p143
    %p145 = scmp.ne.s32.totalorder %s137, %s139
    %p146 = scmp.eq.s32.totalorder %s17, 1
    %p147 = por %p145, %p146
    %p148 = scmp.ne.s32.totalorder %s139, %s140
    %p149 = scmp.eq.s32.totalorder %s17, 0
    %p150 = por %p148, %p149
    %p151 = scmp.ne.s32.totalorder %s139, %s140
    %p152 = scmp.eq.s32.totalorder %s18, 1
    %p153 = por %p151, %p152
    %p155 = scmp.ne.s32.totalorder %s140, %s154
    %p156 = scmp.eq.s32.totalorder %s18, 0
    %p157 = por %p155, %p156
    %s159 = sadd.s32 %s158, 1
    %p162 = scmp.eq.s32.totalorder %s12, 1
    %p163 = scmp.ne.s32.totalorder %s158, %s160
    %p164 = scmp.eq.s32.totalorder %s12, 0
    %p165 = por %p163, %p164
    %p166 = scmp.ne.s32.totalorder %s158, %s160
    %p167 = scmp.eq.s32.totalorder %s17, 1
    %p168 = por %p166, %p167
    %p169 = scmp.ne.s32.totalorder %s160, %s161
    %p170 = scmp.eq.s32.totalorder %s17, 0
    %p171 = por %p169, %p170
    %p172 = scmp.ne.s32.totalorder %s160, %s161
    %p173 = scmp.eq.s32.totalorder %s18, 1
    %p174 = por %p172, %p173
    %p176 = scmp.ne.s32.totalorder %s161, %s175
    %p177 = scmp.eq.s32.totalorder %s18, 0
    %p178 = por %p176, %p177
    %s179 = ssub.s32 %s19, %s31
    %s180 = ssub.s32 %s20, %s27
    %s181 = sor.u32 %s179, %s180
    %p182 = scmp.eq.s32.totalorder %s181, 0
    %s184 = sadd.s32 %s183, 1
    %s185 = scalar_select %p182, %s183, %s184
    %p188 = pneg %p182
    %p189 = scmp.eq.s32.totalorder %s12, 1
    %p190 = por %p188, %p189
    %p191 = scmp.ne.s32.totalorder %s183, %s186
    %p192 = scmp.eq.s32.totalorder %s12, 0
    %p193 = por %p191, %p192
    %p194 = scmp.ne.s32.totalorder %s183, %s186
    %p195 = scmp.eq.s32.totalorder %s17, 1
    %p196 = por %p194, %p195
    %p197 = scmp.ne.s32.totalorder %s186, %s187
    %p198 = scmp.eq.s32.totalorder %s17, 0
    %p199 = por %p197, %p198
    %p200 = scmp.ne.s32.totalorder %s186, %s187
    %p201 = scmp.eq.s32.totalorder %s18, 1
    %p202 = por %p200, %p201
    %p204 = scmp.ne.s32.totalorder %s187, %s203
    %p205 = scmp.eq.s32.totalorder %s18, 0
    %p206 = por %p204, %p205
    %p207 = scmp.le.s32.totalorder 1, %s12
    %p208 = scmp.lt.s32.totalorder %s12, 3
    %p209 = pnand %p207, %p208
    %p210 = pneg %p209
    // Predicated region
    $region9: #{sffi_forward.53} parent=5 // pred_check
      _
    $region10: #{sffi_forward.53} parent=5 // pred_check_branch
      %212 = sbr.rel (%p209) target = $region12
    $region11: #{sffi_forward.53} parent=5 // pred_region
      %s213 = ssub.s32 %s12, 1
      // Predicated region
      $region13: #{sffi_forward.53} parent=11 // pred_check
        %p214 = pneg %p129
      $region14: #{sffi_forward.53} parent=11 // pred_check_branch
        %216 = sbr.rel (%p214) target = $region16
      $region15: #{sffi_forward.53} parent=11 // pred_region
        _
      $region16: #{sffi_forward.53} parent=11 // pred_fallthru
        _
      // Predicated region
      $region17: #{sffi_forward.53} parent=11 // pred_check
        %p217 = pneg %p150
      $region18: #{sffi_forward.53} parent=11 // pred_check_branch
        %219 = sbr.rel (%p217) target = $region20
      $region19: #{sffi_forward.53} parent=11 // pred_region
        _
      $region20: #{sffi_forward.53} parent=11 // pred_fallthru
        _
      // Predicated region
      $region21: #{sffi_forward.53} parent=11 // pred_check
        %p220 = pneg %p171
      $region22: #{sffi_forward.53} parent=11 // pred_check_branch
        %222 = sbr.rel (%p220) target = $region24
      $region23: #{sffi_forward.53} parent=11 // pred_region
        _
      $region24: #{sffi_forward.53} parent=11 // pred_fallthru
        _
    $region12: #{sffi_forward.53} parent=5 // pred_fallthru
      _
    %p223 = scmp.lt.s32.totalorder %s12, 2
    // Predicated region
    $region25: #{sffi_forward.53} parent=5 // pred_check
      %p224 = pneg %p223
    $region26: #{sffi_forward.53} parent=5 // pred_check_branch
      %226 = sbr.rel (%p224) target = $region28
    $region27: #{sffi_forward.53} parent=5 // pred_region
      // Predicated region
      $region29: #{sffi_forward.53} parent=27 // pred_check
        %p227 = pneg %p46
      $region30: #{sffi_forward.53} parent=27 // pred_check_branch
        %229 = sbr.rel (%p227) target = $region32
      $region31: #{sffi_forward.53} parent=27 // pred_region
        %s230 = smul.u32 32, %s20
        %p231 = scmp.lt.s32.totalorder %s19, 1
        %s232 = scalar_select %p231, %s19, 1
        %p233 = scmp.lt.s32.totalorder %s230, 31
        %s234 = scalar_select %p233, %s230, 31
        %s235 = smul.addr %s232, 32
        %s236 = sadd.s32 %s234, %s235
        %s237 = smul.addr %s236, 4
        %s238 = scalar_lea.vmem %s0, %s237
        %s239 = smul.u32 32, %s20
      $region32: #{sffi_forward.53} parent=27 // pred_fallthru
        _
      // Predicated region
      $region33: #{sffi_forward.53} parent=27 // pred_check
        %p240 = pneg %p74
      $region34: #{sffi_forward.53} parent=27 // pred_check_branch
        %242 = sbr.rel (%p240) target = $region36
      $region35: #{sffi_forward.53} parent=27 // pred_region
        %s243 = smul.u32 32, %s20
        %p244 = scmp.lt.s32.totalorder %s19, 1
        %s245 = scalar_select %p244, %s19, 1
        %p246 = scmp.lt.s32.totalorder %s243, 31
        %s247 = scalar_select %p246, %s243, 31
        %s248 = smul.addr %s245, 32
        %s249 = sadd.s32 %s247, %s248
        %s250 = smul.addr %s249, 4
        %s251 = scalar_lea.vmem %s1, %s250
        %s252 = smul.u32 32, %s20
      $region36: #{sffi_forward.53} parent=27 // pred_fallthru
        _
      // Predicated region
      $region37: #{sffi_forward.53} parent=27 // pred_check
        %p253 = pneg %p102
      $region38: #{sffi_forward.53} parent=27 // pred_check_branch
        %255 = sbr.rel (%p253) target = $region40
      $region39: #{sffi_forward.53} parent=27 // pred_region
        %s256 = smul.u32 32, %s20
        %p257 = scmp.lt.s32.totalorder %s19, 1
        %s258 = scalar_select %p257, %s19, 1
        %p259 = scmp.lt.s32.totalorder %s256, 31
        %s260 = scalar_select %p259, %s256, 31
        %s261 = smul.addr %s258, 32
        %s262 = sadd.s32 %s260, %s261
        %s263 = smul.addr %s262, 4
        %s264 = scalar_lea.vmem %s2, %s263
        %s265 = smul.u32 32, %s20
      $region40: #{sffi_forward.53} parent=27 // pred_fallthru
        _
    $region28: #{sffi_forward.53} parent=5 // pred_fallthru
      _
    %p266 = scmp.le.s32.totalorder 1, %s12
    %p267 = scmp.lt.s32.totalorder %s12, 3
    %p268 = pnand %p266, %p267
    %p269 = pneg %p268
    // Predicated region
    $region41: #{sffi_forward.53} parent=5 // pred_check
      _
    $region42: #{sffi_forward.53} parent=5 // pred_check_branch
      %271 = sbr.rel (%p268) target = $region44
    $region43: #{sffi_forward.53} parent=5 // pred_region
      %s272 = ssub.s32 %s12, 1
      %s273 = smul.u32 32, %s22
      %p274 = scmp.lt.s32.totalorder %s21, 1
      %s275 = scalar_select %p274, %s21, 1
      %p276 = scmp.lt.s32.totalorder %s273, 31
      %s277 = scalar_select %p276, %s273, 31
      %s278 = smul.addr %s275, 32
      %s279 = sadd.s32 %s277, %s278
      %s280 = smul.addr %s279, 4
      %s281 = scalar_lea.vmem %s0, %s280
      %p282 = pneg %p52
      %p283 = pneg %p49
      %s284 = smul.u32 32, %s22
      %p285 = scmp.lt.s32.totalorder %s21, 1
      %s286 = scalar_select %p285, %s21, 1
      %p287 = scmp.lt.s32.totalorder %s284, 31
      %s288 = scalar_select %p287, %s284, 31
      %s289 = smul.addr %s286, 32
      %s290 = sadd.s32 %s288, %s289
      %s291 = smul.addr %s290, 4
      %s292 = scalar_lea.vmem %s1, %s291
      %p293 = pneg %p80
      %p294 = pneg %p77
      %s295 = smul.u32 32, %s22
      %p296 = scmp.lt.s32.totalorder %s21, 1
      %s297 = scalar_select %p296, %s21, 1
      %p298 = scmp.lt.s32.totalorder %s295, 31
      %s299 = scalar_select %p298, %s295, 31
      %s300 = smul.addr %s297, 32
      %s301 = sadd.s32 %s299, %s300
      %s302 = smul.addr %s301, 4
      %s303 = scalar_lea.vmem %s2, %s302
      %p304 = pneg %p108
      %p305 = pneg %p105
      %p306 = pneg %p129
      %p307 = pneg %p126
      %p308 = pneg %p150
      %p309 = pneg %p147
      %p310 = pneg %p171
      %p311 = pneg %p168
      %p312 = pneg %p199
      %p313 = pneg %p196
      %s314 = smul.u32 32, %s22
      %p315 = scmp.lt.s32.totalorder %s21, 1
      %s316 = scalar_select %p315, %s21, 1
      %p317 = scmp.lt.s32.totalorder %s314, 31
      %s318 = scalar_select %p317, %s314, 31
      %s319 = smul.addr %s316, 32
      %s320 = sadd.s32 %s318, %s319
      %s321 = smul.addr %s320, 4
      %s322 = scalar_lea.vmem %s6, %s321
      %s323 = smul.u32 32, %s22
      %p324 = scmp.lt.s32.totalorder %s21, 1
      %s325 = scalar_select %p324, %s21, 1
      %p326 = scmp.lt.s32.totalorder %s323, 31
      %s327 = scalar_select %p326, %s323, 31
      %s328 = smul.addr %s325, 32
      %s329 = sadd.s32 %s327, %s328
      %s330 = smul.addr %s329, 4
      %s331 = scalar_lea.vmem %s0, %s330
      %s332 = smul.u32 32, %s22
      %s333 = smul.u32 32, %s22
      %p334 = scmp.lt.s32.totalorder %s21, 1
      %s335 = scalar_select %p334, %s21, 1
      %p336 = scmp.lt.s32.totalorder %s333, 31
      %s337 = scalar_select %p336, %s333, 31
      %s338 = smul.addr %s335, 32
      %s339 = sadd.s32 %s337, %s338
      %s340 = smul.addr %s339, 4
      %s341 = scalar_lea.vmem %s1, %s340
      %s342 = smul.u32 32, %s22
      %s343 = smul.u32 32, %s22
      %p344 = scmp.lt.s32.totalorder %s21, 1
      %s345 = scalar_select %p344, %s21, 1
      %p346 = scmp.lt.s32.totalorder %s343, 31
      %s347 = scalar_select %p346, %s343, 31
      %s348 = smul.addr %s345, 32
      %s349 = sadd.s32 %s347, %s348
      %s350 = smul.addr %s349, 4
      %s351 = scalar_lea.vmem %s2, %s350
      %s352 = smul.u32 32, %s22
      %s353 = smul.u32 32, %s22
      %p354 = scmp.lt.s32.totalorder %s21, 1
      %s355 = scalar_select %p354, %s21, 1
      %p356 = scmp.lt.s32.totalorder %s353, 31
      %s357 = scalar_select %p356, %s353, 31
      %s358 = smul.addr %s355, 32
      %s359 = sadd.s32 %s357, %s358
      %s360 = smul.addr %s359, 4
      %s361 = scalar_lea.vmem %s6, %s360
      %s362 = smul.u32 32, %s22
      %v364 = vld [vmem:[%s331] sm:$0xf]
      %v365 = vld [vmem:[%s331 + $0x4] sm:$0xf]
      %v366 = vld [vmem:[%s331 + $0x8] sm:$0xf]
      %v367 = vld [vmem:[%s331 + $0xc] sm:$0xf]
      %v368 = vld [vmem:[%s331 + $0x10] sm:$0xf]
      %v369 = vld [vmem:[%s331 + $0x14] sm:$0xf]
      %v370 = vld [vmem:[%s331 + $0x18] sm:$0xf]
      %v371 = vld [vmem:[%s331 + $0x1c] sm:$0xf]
      %v372 = vld [vmem:[%s331 + $0x20] sm:$0xf]
      %v373 = vld [vmem:[%s331 + $0x24] sm:$0xf]
      %v374 = vld [vmem:[%s331 + $0x28] sm:$0xf]
      %v375 = vld [vmem:[%s331 + $0x2c] sm:$0xf]
      %v376 = vld [vmem:[%s331 + $0x30] sm:$0xf]
      %v377 = vld [vmem:[%s331 + $0x34] sm:$0xf]
      %v378 = vld [vmem:[%s331 + $0x38] sm:$0xf]
      %v379 = vld [vmem:[%s331 + $0x3c] sm:$0xf]
      %v380 = vld [vmem:[%s331 + $0x40] sm:$0xf]
      %v381 = vld [vmem:[%s331 + $0x44] sm:$0xf]
      %v382 = vld [vmem:[%s331 + $0x48] sm:$0xf]
      %v383 = vld [vmem:[%s331 + $0x4c] sm:$0xf]
      %v384 = vld [vmem:[%s331 + $0x50] sm:$0xf]
      %v385 = vld [vmem:[%s331 + $0x54] sm:$0xf]
      %v386 = vld [vmem:[%s331 + $0x58] sm:$0xf]
      %v387 = vld [vmem:[%s331 + $0x5c] sm:$0xf]
      %v388 = vld [vmem:[%s331 + $0x60] sm:$0xf]
      %v389 = vld [vmem:[%s331 + $0x64] sm:$0xf]
      %v390 = vld [vmem:[%s331 + $0x68] sm:$0xf]
      %v391 = vld [vmem:[%s331 + $0x6c] sm:$0xf]
      %v392 = vld [vmem:[%s331 + $0x70] sm:$0xf]
      %v393 = vld [vmem:[%s331 + $0x74] sm:$0xf]
      %v394 = vld [vmem:[%s331 + $0x78] sm:$0xf]
      %v395 = vld [vmem:[%s331 + $0x7c] sm:$0xf]
      %v396 = vld [vmem:[%s3] sm:$0xf]
      %v397 = vld [vmem:[%s3 + $0x4] sm:$0xf]
      %v398 = vld [vmem:[%s341] sm:$0xf]
      %v399 = vld [vmem:[%s341 + $0x4] sm:$0xf]
      %v400 = vld [vmem:[%s341 + $0x8] sm:$0xf]
      %v401 = vld [vmem:[%s341 + $0xc] sm:$0xf]
      %v402 = vld [vmem:[%s341 + $0x10] sm:$0xf]
      %v403 = vld [vmem:[%s341 + $0x14] sm:$0xf]
      %v404 = vld [vmem:[%s341 + $0x18] sm:$0xf]
      %v405 = vld [vmem:[%s341 + $0x1c] sm:$0xf]
      %v406 = vld [vmem:[%s341 + $0x20] sm:$0xf]
      %v407 = vld [vmem:[%s341 + $0x24] sm:$0xf]
      %v408 = vld [vmem:[%s341 + $0x28] sm:$0xf]
      %v409 = vld [vmem:[%s341 + $0x2c] sm:$0xf]
      %v410 = vld [vmem:[%s341 + $0x30] sm:$0xf]
      %v411 = vld [vmem:[%s341 + $0x34] sm:$0xf]
      %v412 = vld [vmem:[%s341 + $0x38] sm:$0xf]
      %v413 = vld [vmem:[%s341 + $0x3c] sm:$0xf]
      %v414 = vld [vmem:[%s341 + $0x40] sm:$0xf]
      %v415 = vld [vmem:[%s341 + $0x44] sm:$0xf]
      %v416 = vld [vmem:[%s341 + $0x48] sm:$0xf]
      %v417 = vld [vmem:[%s341 + $0x4c] sm:$0xf]
      %v418 = vld [vmem:[%s341 + $0x50] sm:$0xf]
      %v419 = vld [vmem:[%s341 + $0x54] sm:$0xf]
      %v420 = vld [vmem:[%s341 + $0x58] sm:$0xf]
      %v421 = vld [vmem:[%s341 + $0x5c] sm:$0xf]
      %v422 = vld [vmem:[%s341 + $0x60] sm:$0xf]
      %v423 = vld [vmem:[%s341 + $0x64] sm:$0xf]
      %v424 = vld [vmem:[%s341 + $0x68] sm:$0xf]
      %v425 = vld [vmem:[%s341 + $0x6c] sm:$0xf]
      %v426 = vld [vmem:[%s341 + $0x70] sm:$0xf]
      %v427 = vld [vmem:[%s341 + $0x74] sm:$0xf]
      %v428 = vld [vmem:[%s341 + $0x78] sm:$0xf]
      %v429 = vld [vmem:[%s341 + $0x7c] sm:$0xf]
      %v430 = vld [vmem:[%s4] sm:$0xf]
      %v431 = vld [vmem:[%s4 + $0x4] sm:$0xf]
      %v464 = vunpack.c.l.b16 %v398
      %v465 = vunpack.c.l.b16 %v399
      %v466 = vunpack.c.l.b16 %v400
      %v467 = vunpack.c.l.b16 %v401
      %v468 = vunpack.c.l.b16 %v402
      %v469 = vunpack.c.l.b16 %v403
      %v470 = vunpack.c.l.b16 %v404
      %v471 = vunpack.c.l.b16 %v405
      %v472 = vunpack.c.l.b16 %v406
      %v473 = vunpack.c.l.b16 %v407
      %v474 = vunpack.c.l.b16 %v408
      %v475 = vunpack.c.l.b16 %v409
      %v476 = vunpack.c.l.b16 %v410
      %v477 = vunpack.c.l.b16 %v411
      %v478 = vunpack.c.l.b16 %v412
      %v479 = vunpack.c.l.b16 %v413
      %v480 = vunpack.c.l.b16 %v414
      %v481 = vunpack.c.l.b16 %v415
      %v482 = vunpack.c.l.b16 %v416
      %v483 = vunpack.c.l.b16 %v417
      %v484 = vunpack.c.l.b16 %v418
      %v485 = vunpack.c.l.b16 %v419
      %v486 = vunpack.c.l.b16 %v420
      %v487 = vunpack.c.l.b16 %v421
      %v488 = vunpack.c.l.b16 %v422
      %v489 = vunpack.c.l.b16 %v423
      %v490 = vunpack.c.l.b16 %v424
      %v491 = vunpack.c.l.b16 %v425
      %v492 = vunpack.c.l.b16 %v426
      %v493 = vunpack.c.l.b16 %v427
      %v494 = vunpack.c.l.b16 %v428
      %v495 = vunpack.c.l.b16 %v429
      %v496 = vpack.c.b16 %v465, %v464
      %v497 = vpack.c.b16 %v467, %v466
      %v498 = vpack.c.b16 %v469, %v468
      %v499 = vpack.c.b16 %v471, %v470
      %v500 = vpack.c.b16 %v473, %v472
      %v501 = vpack.c.b16 %v475, %v474
      %v502 = vpack.c.b16 %v477, %v476
      %v503 = vpack.c.b16 %v479, %v478
      %v504 = vpack.c.b16 %v481, %v480
      %v505 = vpack.c.b16 %v483, %v482
      %v506 = vpack.c.b16 %v485, %v484
      %v507 = vpack.c.b16 %v487, %v486
      %v508 = vpack.c.b16 %v489, %v488
      %v509 = vpack.c.b16 %v491, %v490
      %v510 = vpack.c.b16 %v493, %v492
      %v511 = vpack.c.b16 %v495, %v494
      %v514 = vunpack.c.l.b16 %v430
      %v515 = vunpack.c.l.b16 %v431
      %v516 = vpack.c.b16 %v515, %v514
      %vm518 = vcmask 130048
      %v520 = vsel %vm518, %v496, 0
      %v523 = vsel %vm518, %v497, 0
      %v526 = vsel %vm518, %v498, 0
      %v529 = vsel %vm518, %v499, 0
      %v532 = vsel %vm518, %v500, 0
      %v535 = vsel %vm518, %v501, 0
      %v538 = vsel %vm518, %v502, 0
      %v541 = vsel %vm518, %v503, 0
      %v544 = vsel %vm518, %v504, 0
      %v547 = vsel %vm518, %v505, 0
      %v550 = vsel %vm518, %v506, 0
      %v553 = vsel %vm518, %v507, 0
      %v556 = vsel %vm518, %v508, 0
      %v559 = vsel %vm518, %v509, 0
      %v562 = vsel %vm518, %v510, 0
      %v565 = vsel %vm518, %v511, 0
      %567 = vmatprep.subr.bf16.mxu0 0
      %568 = vmatpush1.bf16.msra.mxu0 %v516
      %569 = vmatprep.subr.bf16.mxu0 0
      %570 = vmatpush1.bf16.msra.mxu0 0
      %571 = vmatprep.subr.bf16.mxu0 0
      %572 = vmatpush1.bf16.msra.mxu0 0
      %573 = vmatprep.subr.bf16.mxu0 0
      %574 = vmatpush1.bf16.msra.mxu0 0
      %575 = vmatprep.subr.bf16.mxu0 0
      %576 = vmatpush1.bf16.msra.mxu0 0
      %577 = vmatprep.subr.bf16.mxu0 0
      %578 = vmatpush1.bf16.msra.mxu0 0
      %579 = vmatprep.subr.bf16.mxu0 0
      %580 = vmatpush1.bf16.msra.mxu0 0
      %581 = vmatprep.subr.bf16.mxu0 0
      %582 = vmatpush1.bf16.msra.mxu0 0
      %583 = vmatprep.subr.bf16.mxu0 0
      %584 = vmatpush1.bf16.msra.mxu0 0
      %585 = vmatprep.subr.bf16.mxu0 0
      %586 = vmatpush1.bf16.msra.mxu0 0
      %587 = vmatprep.subr.bf16.mxu0 0
      %588 = vmatpush1.bf16.msra.mxu0 0
      %589 = vmatprep.subr.bf16.mxu0 0
      %590 = vmatpush1.bf16.msra.mxu0 0
      %591 = vmatprep.subr.bf16.mxu0 0
      %592 = vmatpush1.bf16.msra.mxu0 0
      %593 = vmatprep.subr.bf16.mxu0 0
      %594 = vmatpush1.bf16.msra.mxu0 0
      %595 = vmatprep.subr.bf16.mxu0 0
      %596 = vmatpush1.bf16.msra.mxu0 0
      %597 = vmatprep.subr.bf16.mxu0 0
      %598 = vmatpush1.bf16.msra.mxu0 0
      %599 = vmatprep.mubr.bf16.mxu0 0
      %600 = vmatmul.mubr.bf16.gmra.mrb[0].mxu0 %v520
      %v601 = vpop.f32.mrb[0].mxu0
      %v602 = vadd.f32 0.0, %v601
      %v603 = vpop.f32.mrb[0].mxu0
      %v604 = vpop.f32.mrb[0].mxu0
      %v605 = vadd.f32 0.0, %v604
      %v606 = vpop.f32.mrb[0].mxu0
      %607 = vmatprep.mubr.bf16.mxu0 0
      %608 = vmatmul.mubr.bf16.gmra.mrb[0].mxu0 %v523
      %v609 = vpop.f32.mrb[0].mxu0
      %v610 = vadd.f32 0.0, %v609
      %v611 = vpop.f32.mrb[0].mxu0
      %v612 = vpop.f32.mrb[0].mxu0
      %v613 = vadd.f32 0.0, %v612
      %v614 = vpop.f32.mrb[0].mxu0
      %615 = vmatprep.mubr.bf16.mxu0 0
      %616 = vmatmul.mubr.bf16.gmra.mrb[0].mxu0 %v526
      %v617 = vpop.f32.mrb[0].mxu0
      %v618 = vadd.f32 0.0, %v617
      %v619 = vpop.f32.mrb[0].mxu0
      %v620 = vpop.f32.mrb[0].mxu0
      %v621 = vadd.f32 0.0, %v620
      %v622 = vpop.f32.mrb[0].mxu0
      %623 = vmatprep.mubr.bf16.mxu0 0
      %624 = vmatmul.mubr.bf16.gmra.mrb[0].mxu0 %v529
      %v625 = vpop.f32.mrb[0].mxu0
      %v626 = vadd.f32 0.0, %v625
      %v627 = vpop.f32.mrb[0].mxu0
      %v628 = vpop.f32.mrb[0].mxu0
      %v629 = vadd.f32 0.0, %v628
      %v630 = vpop.f32.mrb[0].mxu0
      %631 = vmatprep.mubr.bf16.mxu0 0
      %632 = vmatmul.mubr.bf16.gmra.mrb[0].mxu0 %v532
      %v633 = vpop.f32.mrb[0].mxu0
      %v634 = vadd.f32 0.0, %v633
      %v635 = vpop.f32.mrb[0].mxu0
      %v636 = vpop.f32.mrb[0].mxu0
      %v637 = vadd.f32 0.0, %v636
      %v638 = vpop.f32.mrb[0].mxu0
      %639 = vmatprep.mubr.bf16.mxu0 0
      %640 = vmatmul.mubr.bf16.gmra.mrb[0].mxu0 %v535
      %v641 = vpop.f32.mrb[0].mxu0
      %v642 = vadd.f32 0.0, %v641
      %v643 = vpop.f32.mrb[0].mxu0
      %v644 = vpop.f32.mrb[0].mxu0
      %v645 = vadd.f32 0.0, %v644
      %v646 = vpop.f32.mrb[0].mxu0
      %647 = vmatprep.mubr.bf16.mxu0 0
      %648 = vmatmul.mubr.bf16.gmra.mrb[0].mxu0 %v538
      %v649 = vpop.f32.mrb[0].mxu0
      %v650 = vadd.f32 0.0, %v649
      %v651 = vpop.f32.mrb[0].mxu0
      %v652 = vpop.f32.mrb[0].mxu0
      %v653 = vadd.f32 0.0, %v652
      %v654 = vpop.f32.mrb[0].mxu0
      %655 = vmatprep.mubr.bf16.mxu0 0
      %656 = vmatmul.mubr.bf16.gmra.mrb[0].mxu0 %v541
      %v657 = vpop.f32.mrb[0].mxu0
      %v658 = vadd.f32 0.0, %v657
      %v659 = vpop.f32.mrb[0].mxu0
      %v660 = vpop.f32.mrb[0].mxu0
      %v661 = vadd.f32 0.0, %v660
      %v662 = vpop.f32.mrb[0].mxu0
      %663 = vmatprep.mubr.bf16.mxu0 0
      %664 = vmatmul.mubr.bf16.gmra.mrb[0].mxu0 %v544
      %v665 = vpop.f32.mrb[0].mxu0
      %v666 = vadd.f32 0.0, %v665
      %v667 = vpop.f32.mrb[0].mxu0
      %v668 = vpop.f32.mrb[0].mxu0
      %v669 = vadd.f32 0.0, %v668
      %v670 = vpop.f32.mrb[0].mxu0
      %671 = vmatprep.mubr.bf16.mxu0 0
      %672 = vmatmul.mubr.bf16.gmra.mrb[0].mxu0 %v547
      %v673 = vpop.f32.mrb[0].mxu0
      %v674 = vadd.f32 0.0, %v673
      %v675 = vpop.f32.mrb[0].mxu0
      %v676 = vpop.f32.mrb[0].mxu0
      %v677 = vadd.f32 0.0, %v676
      %v678 = vpop.f32.mrb[0].mxu0
      %679 = vmatprep.mubr.bf16.mxu0 0
      %680 = vmatmul.mubr.bf16.gmra.mrb[0].mxu0 %v550
      %v681 = vpop.f32.mrb[0].mxu0
      %v682 = vadd.f32 0.0, %v681
      %v683 = vpop.f32.mrb[0].mxu0
      %v684 = vpop.f32.mrb[0].mxu0
      %v685 = vadd.f32 0.0, %v684
      %v686 = vpop.f32.mrb[0].mxu0
      %687 = vmatprep.mubr.bf16.mxu0 0
      %688 = vmatmul.mubr.bf16.gmra.mrb[0].mxu0 %v553
      %v689 = vpop.f32.mrb[0].mxu0
      %v690 = vadd.f32 0.0, %v689
      %v691 = vpop.f32.mrb[0].mxu0
      %v692 = vpop.f32.mrb[0].mxu0
      %v693 = vadd.f32 0.0, %v692
      %v694 = vpop.f32.mrb[0].mxu0
      %695 = vmatprep.mubr.bf16.mxu0 0
      %696 = vmatmul.mubr.bf16.gmra.mrb[0].mxu0 %v556
      %v697 = vpop.f32.mrb[0].mxu0
      %v698 = vadd.f32 0.0, %v697
      %v699 = vpop.f32.mrb[0].mxu0
      %v700 = vpop.f32.mrb[0].mxu0
      %v701 = vadd.f32 0.0, %v700
      %v702 = vpop.f32.mrb[0].mxu0
      %703 = vmatprep.mubr.bf16.mxu0 0
      %704 = vmatmul.mubr.bf16.gmra.mrb[0].mxu0 %v559
      %v705 = vpop.f32.mrb[0].mxu0
      %v706 = vadd.f32 0.0, %v705
      %v707 = vpop.f32.mrb[0].mxu0
      %v708 = vpop.f32.mrb[0].mxu0
      %v709 = vadd.f32 0.0, %v708
      %v710 = vpop.f32.mrb[0].mxu0
      %711 = vmatprep.mubr.bf16.mxu0 0
      %712 = vmatmul.mubr.bf16.gmra.mrb[0].mxu0 %v562
      %v713 = vpop.f32.mrb[0].mxu0
      %v714 = vadd.f32 0.0, %v713
      %v715 = vpop.f32.mrb[0].mxu0
      %v716 = vpop.f32.mrb[0].mxu0
      %v717 = vadd.f32 0.0, %v716
      %v718 = vpop.f32.mrb[0].mxu0
      %719 = vmatprep.mubr.bf16.mxu0 0
      %720 = vmatmul.mubr.bf16.gmra.mrb[0].mxu0 %v565
      %v721 = vpop.f32.mrb[0].mxu0
      %v722 = vadd.f32 0.0, %v721
      %v723 = vpop.f32.mrb[0].mxu0
      %v724 = vpop.f32.mrb[0].mxu0
      %v725 = vadd.f32 0.0, %v724
      %v726 = vpop.f32.mrb[0].mxu0
      %727 = vdwg.mxu0
      %v760 = vunpack.c.l.b16 %v364
      %v761 = vunpack.c.l.b16 %v365
      %v762 = vunpack.c.l.b16 %v366
      %v763 = vunpack.c.l.b16 %v367
      %v764 = vunpack.c.l.b16 %v368
      %v765 = vunpack.c.l.b16 %v369
      %v766 = vunpack.c.l.b16 %v370
      %v767 = vunpack.c.l.b16 %v371
      %v768 = vunpack.c.l.b16 %v372
      %v769 = vunpack.c.l.b16 %v373
      %v770 = vunpack.c.l.b16 %v374
      %v771 = vunpack.c.l.b16 %v375
      %v772 = vunpack.c.l.b16 %v376
      %v773 = vunpack.c.l.b16 %v377
      %v774 = vunpack.c.l.b16 %v378
      %v775 = vunpack.c.l.b16 %v379
      %v776 = vunpack.c.l.b16 %v380
      %v777 = vunpack.c.l.b16 %v381
      %v778 = vunpack.c.l.b16 %v382
      %v779 = vunpack.c.l.b16 %v383
      %v780 = vunpack.c.l.b16 %v384
      %v781 = vunpack.c.l.b16 %v385
      %v782 = vunpack.c.l.b16 %v386
      %v783 = vunpack.c.l.b16 %v387
      %v784 = vunpack.c.l.b16 %v388
      %v785 = vunpack.c.l.b16 %v389
      %v786 = vunpack.c.l.b16 %v390
      %v787 = vunpack.c.l.b16 %v391
      %v788 = vunpack.c.l.b16 %v392
      %v789 = vunpack.c.l.b16 %v393
      %v790 = vunpack.c.l.b16 %v394
      %v791 = vunpack.c.l.b16 %v395
      %v792 = vpack.c.b16 %v761, %v760
      %v793 = vpack.c.b16 %v763, %v762
      %v794 = vpack.c.b16 %v765, %v764
      %v795 = vpack.c.b16 %v767, %v766
      %v796 = vpack.c.b16 %v769, %v768
      %v797 = vpack.c.b16 %v771, %v770
      %v798 = vpack.c.b16 %v773, %v772
      %v799 = vpack.c.b16 %v775, %v774
      %v800 = vpack.c.b16 %v777, %v776
      %v801 = vpack.c.b16 %v779, %v778
      %v802 = vpack.c.b16 %v781, %v780
      %v803 = vpack.c.b16 %v783, %v782
      %v804 = vpack.c.b16 %v785, %v784
      %v805 = vpack.c.b16 %v787, %v786
      %v806 = vpack.c.b16 %v789, %v788
      %v807 = vpack.c.b16 %v791, %v790
      %v810 = vunpack.c.l.b16 %v396
      %v811 = vunpack.c.l.b16 %v397
      %v812 = vpack.c.b16 %v811, %v810
      %v815 = vsel %vm518, %v792, 0
      %v818 = vsel %vm518, %v793, 0
      %v821 = vsel %vm518, %v794, 0
      %v824 = vsel %vm518, %v795, 0
      %v827 = vsel %vm518, %v796, 0
      %v830 = vsel %vm518, %v797, 0
      %v833 = vsel %vm518, %v798, 0
      %v836 = vsel %vm518, %v799, 0
      %v839 = vsel %vm518, %v800, 0
      %v842 = vsel %vm518, %v801, 0
      %v845 = vsel %vm518, %v802, 0
      %v848 = vsel %vm518, %v803, 0
      %v851 = vsel %vm518, %v804, 0
      %v854 = vsel %vm518, %v805, 0
      %v857 = vsel %vm518, %v806, 0
      %v860 = vsel %vm518, %v807, 0
      %862 = vmatprep.subr.bf16.mxu0 0
      %863 = vmatpush1.bf16.msra.mxu0 %v812
      %864 = vmatprep.subr.bf16.mxu0 0
      %865 = vmatpush1.bf16.msra.mxu0 0
      %866 = vmatprep.subr.bf16.mxu0 0
      %867 = vmatpush1.bf16.msra.mxu0 0
      %868 = vmatprep.subr.bf16.mxu0 0
      %869 = vmatpush1.bf16.msra.mxu0 0
      %870 = vmatprep.subr.bf16.mxu0 0
      %871 = vmatpush1.bf16.msra.mxu0 0
      %872 = vmatprep.subr.bf16.mxu0 0
      %873 = vmatpush1.bf16.msra.mxu0 0
      %874 = vmatprep.subr.bf16.mxu0 0
      %875 = vmatpush1.bf16.msra.mxu0 0
      %876 = vmatprep.subr.bf16.mxu0 0
      %877 = vmatpush1.bf16.msra.mxu0 0
      %878 = vmatprep.subr.bf16.mxu0 0
      %879 = vmatpush1.bf16.msra.mxu0 0
      %880 = vmatprep.subr.bf16.mxu0 0
      %881 = vmatpush1.bf16.msra.mxu0 0
      %882 = vmatprep.subr.bf16.mxu0 0
      %883 = vmatpush1.bf16.msra.mxu0 0
      %884 = vmatprep.subr.bf16.mxu0 0
      %885 = vmatpush1.bf16.msra.mxu0 0
      %886 = vmatprep.subr.bf16.mxu0 0
      %887 = vmatpush1.bf16.msra.mxu0 0
      %888 = vmatprep.subr.bf16.mxu0 0
      %889 = vmatpush1.bf16.msra.mxu0 0
      %890 = vmatprep.subr.bf16.mxu0 0
      %891 = vmatpush1.bf16.msra.mxu0 0
      %892 = vmatprep.subr.bf16.mxu0 0
      %893 = vmatpush1.bf16.msra.mxu0 0
      %894 = vmatprep.mubr.bf16.mxu0 0
      %895 = vmatmul.mubr.bf16.gmra.mrb[0].mxu0 %v815
      %v896 = vpop.f32.mrb[0].mxu0
      %v897 = vadd.f32 %v602, %v896
      %v898 = vpop.f32.mrb[0].mxu0
      %v899 = vpop.f32.mrb[0].mxu0
      %v900 = vadd.f32 %v605, %v899
      %v901 = vpop.f32.mrb[0].mxu0
      %902 = vmatprep.mubr.bf16.mxu0 0
      %903 = vmatmul.mubr.bf16.gmra.mrb[0].mxu0 %v818
      %v904 = vpop.f32.mrb[0].mxu0
      %v905 = vadd.f32 %v610, %v904
      %v906 = vpop.f32.mrb[0].mxu0
      %v907 = vpop.f32.mrb[0].mxu0
      %v908 = vadd.f32 %v613, %v907
      %v909 = vpop.f32.mrb[0].mxu0
      %910 = vmatprep.mubr.bf16.mxu0 0
      %911 = vmatmul.mubr.bf16.gmra.mrb[0].mxu0 %v821
      %v912 = vpop.f32.mrb[0].mxu0
      %v913 = vadd.f32 %v618, %v912
      %v914 = vpop.f32.mrb[0].mxu0
      %v915 = vpop.f32.mrb[0].mxu0
      %v916 = vadd.f32 %v621, %v915
      %v917 = vpop.f32.mrb[0].mxu0
      %918 = vmatprep.mubr.bf16.mxu0 0
      %919 = vmatmul.mubr.bf16.gmra.mrb[0].mxu0 %v824
      %v920 = vpop.f32.mrb[0].mxu0
      %v921 = vadd.f32 %v626, %v920
      %v922 = vpop.f32.mrb[0].mxu0
      %v923 = vpop.f32.mrb[0].mxu0
      %v924 = vadd.f32 %v629, %v923
      %v925 = vpop.f32.mrb[0].mxu0
      %926 = vmatprep.mubr.bf16.mxu0 0
      %927 = vmatmul.mubr.bf16.gmra.mrb[0].mxu0 %v827
      %v928 = vpop.f32.mrb[0].mxu0
      %v929 = vadd.f32 %v634, %v928
      %v930 = vpop.f32.mrb[0].mxu0
      %v931 = vpop.f32.mrb[0].mxu0
      %v932 = vadd.f32 %v637, %v931
      %v933 = vpop.f32.mrb[0].mxu0
      %934 = vmatprep.mubr.bf16.mxu0 0
      %935 = vmatmul.mubr.bf16.gmra.mrb[0].mxu0 %v830
      %v936 = vpop.f32.mrb[0].mxu0
      %v937 = vadd.f32 %v642, %v936
      %v938 = vpop.f32.mrb[0].mxu0
      %v939 = vpop.f32.mrb[0].mxu0
      %v940 = vadd.f32 %v645, %v939
      %v941 = vpop.f32.mrb[0].mxu0
      %942 = vmatprep.mubr.bf16.mxu0 0
      %943 = vmatmul.mubr.bf16.gmra.mrb[0].mxu0 %v833
      %v944 = vpop.f32.mrb[0].mxu0
      %v945 = vadd.f32 %v650, %v944
      %v946 = vpop.f32.mrb[0].mxu0
      %v947 = vpop.f32.mrb[0].mxu0
      %v948 = vadd.f32 %v653, %v947
      %v949 = vpop.f32.mrb[0].mxu0
      %950 = vmatprep.mubr.bf16.mxu0 0
      %951 = vmatmul.mubr.bf16.gmra.mrb[0].mxu0 %v836
      %v952 = vpop.f32.mrb[0].mxu0
      %v953 = vadd.f32 %v658, %v952
      %v954 = vpop.f32.mrb[0].mxu0
      %v955 = vpop.f32.mrb[0].mxu0
      %v956 = vadd.f32 %v661, %v955
      %v957 = vpop.f32.mrb[0].mxu0
      %958 = vmatprep.mubr.bf16.mxu0 0
      %959 = vmatmul.mubr.bf16.gmra.mrb[0].mxu0 %v839
      %v960 = vpop.f32.mrb[0].mxu0
      %v961 = vadd.f32 %v666, %v960
      %v962 = vpop.f32.mrb[0].mxu0
      %v963 = vpop.f32.mrb[0].mxu0
      %v964 = vadd.f32 %v669, %v963
      %v965 = vpop.f32.mrb[0].mxu0
      %966 = vmatprep.mubr.bf16.mxu0 0
      %967 = vmatmul.mubr.bf16.gmra.mrb[0].mxu0 %v842
      %v968 = vpop.f32.mrb[0].mxu0
      %v969 = vadd.f32 %v674, %v968
      %v970 = vpop.f32.mrb[0].mxu0
      %v971 = vpop.f32.mrb[0].mxu0
      %v972 = vadd.f32 %v677, %v971
      %v973 = vpop.f32.mrb[0].mxu0
      %974 = vmatprep.mubr.bf16.mxu0 0
      %975 = vmatmul.mubr.bf16.gmra.mrb[0].mxu0 %v845
      %v976 = vpop.f32.mrb[0].mxu0
      %v977 = vadd.f32 %v682, %v976
      %v978 = vpop.f32.mrb[0].mxu0
      %v979 = vpop.f32.mrb[0].mxu0
      %v980 = vadd.f32 %v685, %v979
      %v981 = vpop.f32.mrb[0].mxu0
      %982 = vmatprep.mubr.bf16.mxu0 0
      %983 = vmatmul.mubr.bf16.gmra.mrb[0].mxu0 %v848
      %v984 = vpop.f32.mrb[0].mxu0
      %v985 = vadd.f32 %v690, %v984
      %v986 = vpop.f32.mrb[0].mxu0
      %v987 = vpop.f32.mrb[0].mxu0
      %v988 = vadd.f32 %v693, %v987
      %v989 = vpop.f32.mrb[0].mxu0
      %990 = vmatprep.mubr.bf16.mxu0 0
      %991 = vmatmul.mubr.bf16.gmra.mrb[0].mxu0 %v851
      %v992 = vpop.f32.mrb[0].mxu0
      %v993 = vadd.f32 %v698, %v992
      %v994 = vpop.f32.mrb[0].mxu0
      %v995 = vpop.f32.mrb[0].mxu0
      %v996 = vadd.f32 %v701, %v995
      %v997 = vpop.f32.mrb[0].mxu0
      %998 = vmatprep.mubr.bf16.mxu0 0
      %999 = vmatmul.mubr.bf16.gmra.mrb[0].mxu0 %v854
      %v1000 = vpop.f32.mrb[0].mxu0
      %v1001 = vadd.f32 %v706, %v1000
      %v1002 = vpop.f32.mrb[0].mxu0
      %v1003 = vpop.f32.mrb[0].mxu0
      %v1004 = vadd.f32 %v709, %v1003
      %v1005 = vpop.f32.mrb[0].mxu0
      %1006 = vmatprep.mubr.bf16.mxu0 0
      %1007 = vmatmul.mubr.bf16.gmra.mrb[0].mxu0 %v857
      %v1008 = vpop.f32.mrb[0].mxu0
      %v1009 = vadd.f32 %v714, %v1008
      %v1010 = vpop.f32.mrb[0].mxu0
      %v1011 = vpop.f32.mrb[0].mxu0
      %v1012 = vadd.f32 %v717, %v1011
      %v1013 = vpop.f32.mrb[0].mxu0
      %1014 = vmatprep.mubr.bf16.mxu0 0
      %1015 = vmatmul.mubr.bf16.gmra.mrb[0].mxu0 %v860
      %v1016 = vpop.f32.mrb[0].mxu0
      %v1017 = vadd.f32 %v722, %v1016
      %v1018 = vpop.f32.mrb[0].mxu0
      %v1019 = vpop.f32.mrb[0].mxu0
      %v1020 = vadd.f32 %v725, %v1019
      %v1021 = vpop.f32.mrb[0].mxu0
      %1022 = vdwg.mxu0
      %v1023 = vld [vmem:[%s5] sm:$0x1]
      %v1025 = vlaneseq
      %v1026 = vshrl.u32 %v1025, 7
      %v1027 = vsub.s32 0, %v1026
      %v1028 = vrot.slane %v1023, %v1027
      %v1030 = vadd.f32 %v897, %v1028
      %v1031 = vadd.f32 %v900, %v1028
      %v1032 = vadd.f32 %v905, %v1028
      %v1033 = vadd.f32 %v908, %v1028
      %v1034 = vadd.f32 %v913, %v1028
      %v1035 = vadd.f32 %v916, %v1028
      %v1036 = vadd.f32 %v921, %v1028
      %v1037 = vadd.f32 %v924, %v1028
      %v1038 = vadd.f32 %v929, %v1028
      %v1039 = vadd.f32 %v932, %v1028
      %v1040 = vadd.f32 %v937, %v1028
      %v1041 = vadd.f32 %v940, %v1028
      %v1042 = vadd.f32 %v945, %v1028
      %v1043 = vadd.f32 %v948, %v1028
      %v1044 = vadd.f32 %v953, %v1028
      %v1045 = vadd.f32 %v956, %v1028
      %v1046 = vadd.f32 %v961, %v1028
      %v1047 = vadd.f32 %v964, %v1028
      %v1048 = vadd.f32 %v969, %v1028
      %v1049 = vadd.f32 %v972, %v1028
      %v1050 = vadd.f32 %v977, %v1028
      %v1051 = vadd.f32 %v980, %v1028
      %v1052 = vadd.f32 %v985, %v1028
      %v1053 = vadd.f32 %v988, %v1028
      %v1054 = vadd.f32 %v993, %v1028
      %v1055 = vadd.f32 %v996, %v1028
      %v1056 = vadd.f32 %v1001, %v1028
      %v1057 = vadd.f32 %v1004, %v1028
      %v1058 = vadd.f32 %v1009, %v1028
      %v1059 = vadd.f32 %v1012, %v1028
      %v1060 = vadd.f32 %v1017, %v1028
      %v1061 = vadd.f32 %v1020, %v1028
      %v1062 = vld [vmem:[%s351] sm:$0xf]
      %v1063 = vld [vmem:[%s351 + $0x4] sm:$0xf]
      %v1064 = vld [vmem:[%s351 + $0x8] sm:$0xf]
      %v1065 = vld [vmem:[%s351 + $0xc] sm:$0xf]
      %v1066 = vld [vmem:[%s351 + $0x10] sm:$0xf]
      %v1067 = vld [vmem:[%s351 + $0x14] sm:$0xf]
      %v1068 = vld [vmem:[%s351 + $0x18] sm:$0xf]
      %v1069 = vld [vmem:[%s351 + $0x1c] sm:$0xf]
      %v1070 = vld [vmem:[%s351 + $0x20] sm:$0xf]
      %v1071 = vld [vmem:[%s351 + $0x24] sm:$0xf]
      %v1072 = vld [vmem:[%s351 + $0x28] sm:$0xf]
      %v1073 = vld [vmem:[%s351 + $0x2c] sm:$0xf]
      %v1074 = vld [vmem:[%s351 + $0x30] sm:$0xf]
      %v1075 = vld [vmem:[%s351 + $0x34] sm:$0xf]
      %v1076 = vld [vmem:[%s351 + $0x38] sm:$0xf]
      %v1077 = vld [vmem:[%s351 + $0x3c] sm:$0xf]
      %v1078 = vld [vmem:[%s351 + $0x40] sm:$0xf]
      %v1079 = vld [vmem:[%s351 + $0x44] sm:$0xf]
      %v1080 = vld [vmem:[%s351 + $0x48] sm:$0xf]
      %v1081 = vld [vmem:[%s351 + $0x4c] sm:$0xf]
      %v1082 = vld [vmem:[%s351 + $0x50] sm:$0xf]
      %v1083 = vld [vmem:[%s351 + $0x54] sm:$0xf]
      %v1084 = vld [vmem:[%s351 + $0x58] sm:$0xf]
      %v1085 = vld [vmem:[%s351 + $0x5c] sm:$0xf]
      %v1086 = vld [vmem:[%s351 + $0x60] sm:$0xf]
      %v1087 = vld [vmem:[%s351 + $0x64] sm:$0xf]
      %v1088 = vld [vmem:[%s351 + $0x68] sm:$0xf]
      %v1089 = vld [vmem:[%s351 + $0x6c] sm:$0xf]
      %v1090 = vld [vmem:[%s351 + $0x70] sm:$0xf]
      %v1091 = vld [vmem:[%s351 + $0x74] sm:$0xf]
      %v1092 = vld [vmem:[%s351 + $0x78] sm:$0xf]
      %v1093 = vld [vmem:[%s351 + $0x7c] sm:$0xf]
      %v1094 = vunpack.c.l.bf16 %v1062
      %v1095 = vunpack.c.l.bf16 %v1063
      %v1096 = vunpack.c.l.bf16 %v1064
      %v1097 = vunpack.c.l.bf16 %v1065
      %v1098 = vunpack.c.l.bf16 %v1066
      %v1099 = vunpack.c.l.bf16 %v1067
      %v1100 = vunpack.c.l.bf16 %v1068
      %v1101 = vunpack.c.l.bf16 %v1069
      %v1102 = vunpack.c.l.bf16 %v1070
      %v1103 = vunpack.c.l.bf16 %v1071
      %v1104 = vunpack.c.l.bf16 %v1072
      %v1105 = vunpack.c.l.bf16 %v1073
      %v1106 = vunpack.c.l.bf16 %v1074
      %v1107 = vunpack.c.l.bf16 %v1075
      %v1108 = vunpack.c.l.bf16 %v1076
      %v1109 = vunpack.c.l.bf16 %v1077
      %v1110 = vunpack.c.l.bf16 %v1078
      %v1111 = vunpack.c.l.bf16 %v1079
      %v1112 = vunpack.c.l.bf16 %v1080
      %v1113 = vunpack.c.l.bf16 %v1081
      %v1114 = vunpack.c.l.bf16 %v1082
      %v1115 = vunpack.c.l.bf16 %v1083
      %v1116 = vunpack.c.l.bf16 %v1084
      %v1117 = vunpack.c.l.bf16 %v1085
      %v1118 = vunpack.c.l.bf16 %v1086
      %v1119 = vunpack.c.l.bf16 %v1087
      %v1120 = vunpack.c.l.bf16 %v1088
      %v1121 = vunpack.c.l.bf16 %v1089
      %v1122 = vunpack.c.l.bf16 %v1090
      %v1123 = vunpack.c.l.bf16 %v1091
      %v1124 = vunpack.c.l.bf16 %v1092
      %v1125 = vunpack.c.l.bf16 %v1093
      %v1126 = vadd.f32 %v1030, %v1094
      %v1127 = vadd.f32 %v1031, %v1095
      %v1128 = vadd.f32 %v1032, %v1096
      %v1129 = vadd.f32 %v1033, %v1097
      %v1130 = vadd.f32 %v1034, %v1098
      %v1131 = vadd.f32 %v1035, %v1099
      %v1132 = vadd.f32 %v1036, %v1100
      %v1133 = vadd.f32 %v1037, %v1101
      %v1134 = vadd.f32 %v1038, %v1102
      %v1135 = vadd.f32 %v1039, %v1103
      %v1136 = vadd.f32 %v1040, %v1104
      %v1137 = vadd.f32 %v1041, %v1105
      %v1138 = vadd.f32 %v1042, %v1106
      %v1139 = vadd.f32 %v1043, %v1107
      %v1140 = vadd.f32 %v1044, %v1108
      %v1141 = vadd.f32 %v1045, %v1109
      %v1142 = vadd.f32 %v1046, %v1110
      %v1143 = vadd.f32 %v1047, %v1111
      %v1144 = vadd.f32 %v1048, %v1112
      %v1145 = vadd.f32 %v1049, %v1113
      %v1146 = vadd.f32 %v1050, %v1114
      %v1147 = vadd.f32 %v1051, %v1115
      %v1148 = vadd.f32 %v1052, %v1116
      %v1149 = vadd.f32 %v1053, %v1117
      %v1150 = vadd.f32 %v1054, %v1118
      %v1151 = vadd.f32 %v1055, %v1119
      %v1152 = vadd.f32 %v1056, %v1120
      %v1153 = vadd.f32 %v1057, %v1121
      %v1154 = vadd.f32 %v1058, %v1122
      %v1155 = vadd.f32 %v1059, %v1123
      %v1156 = vadd.f32 %v1060, %v1124
      %v1157 = vadd.f32 %v1061, %v1125
      %v1158 = vpack.c.bf16 %v1127, %v1126
      %v1159 = vpack.c.bf16 %v1129, %v1128
      %v1160 = vpack.c.bf16 %v1131, %v1130
      %v1161 = vpack.c.bf16 %v1133, %v1132
      %v1162 = vpack.c.bf16 %v1135, %v1134
      %v1163 = vpack.c.bf16 %v1137, %v1136
      %v1164 = vpack.c.bf16 %v1139, %v1138
      %v1165 = vpack.c.bf16 %v1141, %v1140
      %v1166 = vpack.c.bf16 %v1143, %v1142
      %v1167 = vpack.c.bf16 %v1145, %v1144
      %v1168 = vpack.c.bf16 %v1147, %v1146
      %v1169 = vpack.c.bf16 %v1149, %v1148
      %v1170 = vpack.c.bf16 %v1151, %v1150
      %v1171 = vpack.c.bf16 %v1153, %v1152
      %v1172 = vpack.c.bf16 %v1155, %v1154
      %v1173 = vpack.c.bf16 %v1157, %v1156
      %v1190 = vunpack.c.l.b16 %v1158
      %v1191 = vunpack.c.h.b16 %v1158
      %v1192 = vunpack.c.l.b16 %v1159
      %v1193 = vunpack.c.h.b16 %v1159
      %v1194 = vunpack.c.l.b16 %v1160
      %v1195 = vunpack.c.h.b16 %v1160
      %v1196 = vunpack.c.l.b16 %v1161
      %v1197 = vunpack.c.h.b16 %v1161
      %v1198 = vunpack.c.l.b16 %v1162
      %v1199 = vunpack.c.h.b16 %v1162
      %v1200 = vunpack.c.l.b16 %v1163
      %v1201 = vunpack.c.h.b16 %v1163
      %v1202 = vunpack.c.l.b16 %v1164
      %v1203 = vunpack.c.h.b16 %v1164
      %v1204 = vunpack.c.l.b16 %v1165
      %v1205 = vunpack.c.h.b16 %v1165
      %v1206 = vunpack.c.l.b16 %v1166
      %v1207 = vunpack.c.h.b16 %v1166
      %v1208 = vunpack.c.l.b16 %v1167
      %v1209 = vunpack.c.h.b16 %v1167
      %v1210 = vunpack.c.l.b16 %v1168
      %v1211 = vunpack.c.h.b16 %v1168
      %v1212 = vunpack.c.l.b16 %v1169
      %v1213 = vunpack.c.h.b16 %v1169
      %v1214 = vunpack.c.l.b16 %v1170
      %v1215 = vunpack.c.h.b16 %v1170
      %v1216 = vunpack.c.l.b16 %v1171
      %v1217 = vunpack.c.h.b16 %v1171
      %v1218 = vunpack.c.l.b16 %v1172
      %v1219 = vunpack.c.h.b16 %v1172
      %v1220 = vunpack.c.l.b16 %v1173
      %v1221 = vunpack.c.h.b16 %v1173
      %v1222 = vpack.c.b16 %v1190, %v1190
      %v1223 = vpack.c.b16 %v1191, %v1191
      %v1224 = vpack.c.b16 %v1192, %v1192
      %v1225 = vpack.c.b16 %v1193, %v1193
      %v1226 = vpack.c.b16 %v1194, %v1194
      %v1227 = vpack.c.b16 %v1195, %v1195
      %v1228 = vpack.c.b16 %v1196, %v1196
      %v1229 = vpack.c.b16 %v1197, %v1197
      %v1230 = vpack.c.b16 %v1198, %v1198
      %v1231 = vpack.c.b16 %v1199, %v1199
      %v1232 = vpack.c.b16 %v1200, %v1200
      %v1233 = vpack.c.b16 %v1201, %v1201
      %v1234 = vpack.c.b16 %v1202, %v1202
      %v1235 = vpack.c.b16 %v1203, %v1203
      %v1236 = vpack.c.b16 %v1204, %v1204
      %v1237 = vpack.c.b16 %v1205, %v1205
      %v1238 = vpack.c.b16 %v1206, %v1206
      %v1239 = vpack.c.b16 %v1207, %v1207
      %v1240 = vpack.c.b16 %v1208, %v1208
      %v1241 = vpack.c.b16 %v1209, %v1209
      %v1242 = vpack.c.b16 %v1210, %v1210
      %v1243 = vpack.c.b16 %v1211, %v1211
      %v1244 = vpack.c.b16 %v1212, %v1212
      %v1245 = vpack.c.b16 %v1213, %v1213
      %v1246 = vpack.c.b16 %v1214, %v1214
      %v1247 = vpack.c.b16 %v1215, %v1215
      %v1248 = vpack.c.b16 %v1216, %v1216
      %v1249 = vpack.c.b16 %v1217, %v1217
      %v1250 = vpack.c.b16 %v1218, %v1218
      %v1251 = vpack.c.b16 %v1219, %v1219
      %v1252 = vpack.c.b16 %v1220, %v1220
      %v1253 = vpack.c.b16 %v1221, %v1221
      %vm1286 = vcmask 257024
      %1287 = vst.msk [vmem:[%s361] sm:$0xf] %vm1286, %v1222
      %1288 = vst.msk [vmem:[%s361 + $0x4] sm:$0xf] %vm1286, %v1223
      %1289 = vst.msk [vmem:[%s361 + $0x8] sm:$0xf] %vm1286, %v1224
      %1290 = vst.msk [vmem:[%s361 + $0xc] sm:$0xf] %vm1286, %v1225
      %1291 = vst.msk [vmem:[%s361 + $0x10] sm:$0xf] %vm1286, %v1226
      %1292 = vst.msk [vmem:[%s361 + $0x14] sm:$0xf] %vm1286, %v1227
      %1293 = vst.msk [vmem:[%s361 + $0x18] sm:$0xf] %vm1286, %v1228
      %1294 = vst.msk [vmem:[%s361 + $0x1c] sm:$0xf] %vm1286, %v1229
      %1295 = vst.msk [vmem:[%s361 + $0x20] sm:$0xf] %vm1286, %v1230
      %1296 = vst.msk [vmem:[%s361 + $0x24] sm:$0xf] %vm1286, %v1231
      %1297 = vst.msk [vmem:[%s361 + $0x28] sm:$0xf] %vm1286, %v1232
      %1298 = vst.msk [vmem:[%s361 + $0x2c] sm:$0xf] %vm1286, %v1233
      %1299 = vst.msk [vmem:[%s361 + $0x30] sm:$0xf] %vm1286, %v1234
      %1300 = vst.msk [vmem:[%s361 + $0x34] sm:$0xf] %vm1286, %v1235
      %1301 = vst.msk [vmem:[%s361 + $0x38] sm:$0xf] %vm1286, %v1236
      %1302 = vst.msk [vmem:[%s361 + $0x3c] sm:$0xf] %vm1286, %v1237
      %1303 = vst.msk [vmem:[%s361 + $0x40] sm:$0xf] %vm1286, %v1238
      %1304 = vst.msk [vmem:[%s361 + $0x44] sm:$0xf] %vm1286, %v1239
      %1305 = vst.msk [vmem:[%s361 + $0x48] sm:$0xf] %vm1286, %v1240
      %1306 = vst.msk [vmem:[%s361 + $0x4c] sm:$0xf] %vm1286, %v1241
      %1307 = vst.msk [vmem:[%s361 + $0x50] sm:$0xf] %vm1286, %v1242
      %1308 = vst.msk [vmem:[%s361 + $0x54] sm:$0xf] %vm1286, %v1243
      %1309 = vst.msk [vmem:[%s361 + $0x58] sm:$0xf] %vm1286, %v1244
      %1310 = vst.msk [vmem:[%s361 + $0x5c] sm:$0xf] %vm1286, %v1245
      %1311 = vst.msk [vmem:[%s361 + $0x60] sm:$0xf] %vm1286, %v1246
      %1312 = vst.msk [vmem:[%s361 + $0x64] sm:$0xf] %vm1286, %v1247
      %1313 = vst.msk [vmem:[%s361 + $0x68] sm:$0xf] %vm1286, %v1248
      %1314 = vst.msk [vmem:[%s361 + $0x6c] sm:$0xf] %vm1286, %v1249
      %1315 = vst.msk [vmem:[%s361 + $0x70] sm:$0xf] %vm1286, %v1250
      %1316 = vst.msk [vmem:[%s361 + $0x74] sm:$0xf] %vm1286, %v1251
      %1317 = vst.msk [vmem:[%s361 + $0x78] sm:$0xf] %vm1286, %v1252
      %1318 = vst.msk [vmem:[%s361 + $0x7c] sm:$0xf] %vm1286, %v1253
      %s1319 = smul.u32 32, %s22
      %p1320 = scmp.lt.s32.totalorder %s21, 1
      %s1321 = scalar_select %p1320, %s21, 1
      %p1322 = scmp.lt.s32.totalorder %s1319, 31
      %s1323 = scalar_select %p1322, %s1319, 31
      %s1324 = smul.addr %s1321, 32
      %s1325 = sadd.s32 %s1323, %s1324
      %s1326 = smul.addr %s1325, 4
      %s1327 = scalar_lea.vmem %s6, %s1326
      // Predicated region
      $region45: #{sffi_forward.53} parent=43 // pred_check
        %p1328 = pneg %p196
      $region46: #{sffi_forward.53} parent=43 // pred_check_branch
        %1330 = sbr.rel (%p1328) target = $region48
      $region47: #{sffi_forward.53} parent=43 // pred_region
        %s1331 = smul.u32 32, %s22
      $region48: #{sffi_forward.53} parent=43 // pred_fallthru
        _
    $region44: #{sffi_forward.53} parent=5 // pred_fallthru
      _
    %p1332 = scmp.le.s32.totalorder 2, %s12
    // Predicated region
    $region49: #{sffi_forward.53} parent=5 // pred_check
      %p1333 = pneg %p1332
    $region50: #{sffi_forward.53} parent=5 // pred_check_branch
      %1335 = sbr.rel (%p1333) target = $region52
    $region51: #{sffi_forward.53} parent=5 // pred_region
      %s1336 = ssub.s32 %s12, 2
      // Predicated region
      $region53: #{sffi_forward.53} parent=51 // pred_check
        %p1337 = pneg %p202
      $region54: #{sffi_forward.53} parent=51 // pred_check_branch
        %1339 = sbr.rel (%p1337) target = $region56
      $region55: #{sffi_forward.53} parent=51 // pred_region
        %s1340 = smul.u32 32, %s24
        %p1341 = scmp.lt.s32.totalorder %s23, 1
        %s1342 = scalar_select %p1341, %s23, 1
        %p1343 = scmp.lt.s32.totalorder %s1340, 31
        %s1344 = scalar_select %p1343, %s1340, 31
        %s1345 = smul.addr %s1342, 32
        %s1346 = sadd.s32 %s1344, %s1345
        %s1347 = smul.addr %s1346, 4
        %s1348 = scalar_lea.vmem %s6, %s1347
      $region56: #{sffi_forward.53} parent=51 // pred_fallthru
        _
    $region52: #{sffi_forward.53} parent=5 // pred_fallthru
      _
  $region6: #{sffi_forward.53} parent=0 // loop_footer
    %s16 = sadd.s32 1, %s12
  $region7: #{sffi_forward.53} parent=0 // loop_footer_branch
    %11 = sbr.rel target = $region3
  $region8: #{sffi_forward.53} parent=0 // loop_exit
    _

// kernel: sffi_forward.40
$region0: #{sffi_forward.40}
  #allocation0 [shape = 'u32[]', space=smem, size = 0x4, offset = 0x4, fixed_abs, tag = 'smem constant byte address 0x4 - core index']
  #allocation1 [shape = 'u32[144,128]{1,0:T(1,128)}', space=vmem, size = 0x12000, scoped, tag = 'internal scratch']
  %s0 = inlined_call_operand.vmem [shape: bf16[2,1,288,96], index: 0, kind: input, shape index: {}]
  %s1 = inlined_call_operand.vmem [shape: bf16[3,96,32], index: 1, kind: input, shape index: {}]
  %s2 = inlined_call_operand.vmem [shape: f32[1,32], index: 2, kind: input, shape index: {}]
  %s3 = inlined_call_operand.vmem [shape: bf16[32,16], index: 3, kind: input, shape index: {}]
  %s4 = inlined_call_operand.vmem [shape: bf16[2,1,256,16], index: 4, kind: output, shape index: {}]
  %s5 = sld [smem:[#allocation0]]
  $region49: #{sffi_forward.40} parent=0
    _
  %s7 = ssub.s32 1, %s5
  %s8 = scalar_select 0, %s7, %s5
  loop: start=0, step=1, limit=4
  $region2: #{sffi_forward.40} parent=0 // loop_pre_header
    _
  $region3: #{sffi_forward.40} parent=0 // loop_header
    %s10 = sphi 0, %s14
    %p11 = scmp.ge.s32.totalorder %s10, 4
    %s17 = sphi 0, %s29
    %s18 = sphi 0, %s25
    %s19 = sphi 0, %s17
    %s20 = sphi 0, %s18
    %s21 = sphi 0, %s19
    %s22 = sphi 0, %s20
    %s34 = sphi 0, %s36
    %s37 = sphi 0, %s34
    %s38 = sphi 0, %s37
    %s54 = sphi 0, %s38
    %s58 = sphi 0, %s58
    %s60 = sphi 0, %s58
    %s61 = sphi 0, %s60
    %s75 = sphi 0, %s61
    %s79 = sphi 0, %s79
    %s81 = sphi 0, %s79
    %s82 = sphi 0, %s81
    %s96 = sphi 0, %s82
    %s100 = sphi 0, %s100
    %s102 = sphi 0, %s100
    %s103 = sphi 0, %s102
    %s117 = sphi 0, %s103
    %s125 = sphi 0, %s127
    %s128 = sphi 0, %s125
    %s129 = sphi 0, %s128
    %s145 = sphi 0, %s129
  $region4: #{sffi_forward.40} parent=0 // loop_header_branch
    %13 = sbr.rel (%p11) target = $region8
  $region5: #{sffi_forward.40} parent=0 // loop_body
    %s15 = ssub.s32 %s10, 1
    %s16 = ssub.s32 %s10, 2
    %s23 = sadd.s32 1, %s18
    %p24 = scmp.ge.s32.totalorder %s23, 1
    %s25 = scalar_select %p24, 0, %s23
    %s26 = sadd.s32 1, %s17
    %s27 = scalar_select %p24, %s26, %s17
    %p28 = scmp.ge.s32.totalorder %s27, 2
    %s29 = scalar_select %p28, 0, %s27
    %s30 = ssub.s32 %s17, %s29
    %s31 = ssub.s32 %s18, %s25
    %s32 = sor.u32 %s30, %s31
    %p33 = scmp.eq.s32.totalorder %s32, 0
    %s35 = sadd.s32 %s34, 1
    %s36 = scalar_select %p33, %s34, %s35
    %p39 = pneg %p33
    %p40 = scmp.eq.s32.totalorder %s10, 1
    %p41 = por %p39, %p40
    %p42 = scmp.ne.s32.totalorder %s34, %s37
    %p43 = scmp.eq.s32.totalorder %s10, 0
    %p44 = por %p42, %p43
    %p45 = scmp.ne.s32.totalorder %s34, %s37
    %p46 = scmp.eq.s32.totalorder %s15, 1
    %p47 = por %p45, %p46
    %p48 = scmp.ne.s32.totalorder %s37, %s38
    %p49 = scmp.eq.s32.totalorder %s15, 0
    %p50 = por %p48, %p49
    %p51 = scmp.ne.s32.totalorder %s37, %s38
    %p52 = scmp.eq.s32.totalorder %s16, 1
    %p53 = por %p51, %p52
    %p55 = scmp.ne.s32.totalorder %s38, %s54
    %p56 = scmp.eq.s32.totalorder %s16, 0
    %p57 = por %p55, %p56
    %s59 = sadd.s32 %s58, 1
    %p62 = scmp.eq.s32.totalorder %s10, 1
    %p63 = scmp.ne.s32.totalorder %s58, %s60
    %p64 = scmp.eq.s32.totalorder %s10, 0
    %p65 = por %p63, %p64
    %p66 = scmp.ne.s32.totalorder %s58, %s60
    %p67 = scmp.eq.s32.totalorder %s15, 1
    %p68 = por %p66, %p67
    %p69 = scmp.ne.s32.totalorder %s60, %s61
    %p70 = scmp.eq.s32.totalorder %s15, 0
    %p71 = por %p69, %p70
    %p72 = scmp.ne.s32.totalorder %s60, %s61
    %p73 = scmp.eq.s32.totalorder %s16, 1
    %p74 = por %p72, %p73
    %p76 = scmp.ne.s32.totalorder %s61, %s75
    %p77 = scmp.eq.s32.totalorder %s16, 0
    %p78 = por %p76, %p77
    %s80 = sadd.s32 %s79, 1
    %p83 = scmp.eq.s32.totalorder %s10, 1
    %p84 = scmp.ne.s32.totalorder %s79, %s81
    %p85 = scmp.eq.s32.totalorder %s10, 0
    %p86 = por %p84, %p85
    %p87 = scmp.ne.s32.totalorder %s79, %s81
    %p88 = scmp.eq.s32.totalorder %s15, 1
    %p89 = por %p87, %p88
    %p90 = scmp.ne.s32.totalorder %s81, %s82
    %p91 = scmp.eq.s32.totalorder %s15, 0
    %p92 = por %p90, %p91
    %p93 = scmp.ne.s32.totalorder %s81, %s82
    %p94 = scmp.eq.s32.totalorder %s16, 1
    %p95 = por %p93, %p94
    %p97 = scmp.ne.s32.totalorder %s82, %s96
    %p98 = scmp.eq.s32.totalorder %s16, 0
    %p99 = por %p97, %p98
    %s101 = sadd.s32 %s100, 1
    %p104 = scmp.eq.s32.totalorder %s10, 1
    %p105 = scmp.ne.s32.totalorder %s100, %s102
    %p106 = scmp.eq.s32.totalorder %s10, 0
    %p107 = por %p105, %p106
    %p108 = scmp.ne.s32.totalorder %s100, %s102
    %p109 = scmp.eq.s32.totalorder %s15, 1
    %p110 = por %p108, %p109
    %p111 = scmp.ne.s32.totalorder %s102, %s103
    %p112 = scmp.eq.s32.totalorder %s15, 0
    %p113 = por %p111, %p112
    %p114 = scmp.ne.s32.totalorder %s102, %s103
    %p115 = scmp.eq.s32.totalorder %s16, 1
    %p116 = por %p114, %p115
    %p118 = scmp.ne.s32.totalorder %s103, %s117
    %p119 = scmp.eq.s32.totalorder %s16, 0
    %p120 = por %p118, %p119
    %s121 = ssub.s32 %s17, %s29
    %s122 = ssub.s32 %s18, %s25
    %s123 = sor.u32 %s121, %s122
    %p124 = scmp.eq.s32.totalorder %s123, 0
    %s126 = sadd.s32 %s125, 1
    %s127 = scalar_select %p124, %s125, %s126
    %p130 = pneg %p124
    %p131 = scmp.eq.s32.totalorder %s10, 1
    %p132 = por %p130, %p131
    %p133 = scmp.ne.s32.totalorder %s125, %s128
    %p134 = scmp.eq.s32.totalorder %s10, 0
    %p135 = por %p133, %p134
    %p136 = scmp.ne.s32.totalorder %s125, %s128
    %p137 = scmp.eq.s32.totalorder %s15, 1
    %p138 = por %p136, %p137
    %p139 = scmp.ne.s32.totalorder %s128, %s129
    %p140 = scmp.eq.s32.totalorder %s15, 0
    %p141 = por %p139, %p140
    %p142 = scmp.ne.s32.totalorder %s128, %s129
    %p143 = scmp.eq.s32.totalorder %s16, 1
    %p144 = por %p142, %p143
    %p146 = scmp.ne.s32.totalorder %s129, %s145
    %p147 = scmp.eq.s32.totalorder %s16, 0
    %p148 = por %p146, %p147
    %p149 = scmp.le.s32.totalorder 1, %s10
    %p150 = scmp.lt.s32.totalorder %s10, 3
    %p151 = pnand %p149, %p150
    %p152 = pneg %p151
    // Predicated region
    $region9: #{sffi_forward.40} parent=5 // pred_check
      _
    $region10: #{sffi_forward.40} parent=5 // pred_check_branch
      %154 = sbr.rel (%p151) target = $region12
    $region11: #{sffi_forward.40} parent=5 // pred_region
      %s155 = ssub.s32 %s10, 1
      // Predicated region
      $region13: #{sffi_forward.40} parent=11 // pred_check
        %p156 = pneg %p71
      $region14: #{sffi_forward.40} parent=11 // pred_check_branch
        %158 = sbr.rel (%p156) target = $region16
      $region15: #{sffi_forward.40} parent=11 // pred_region
        _
      $region16: #{sffi_forward.40} parent=11 // pred_fallthru
        _
      // Predicated region
      $region17: #{sffi_forward.40} parent=11 // pred_check
        %p159 = pneg %p92
      $region18: #{sffi_forward.40} parent=11 // pred_check_branch
        %161 = sbr.rel (%p159) target = $region20
      $region19: #{sffi_forward.40} parent=11 // pred_region
        _
      $region20: #{sffi_forward.40} parent=11 // pred_fallthru
        _
      // Predicated region
      $region21: #{sffi_forward.40} parent=11 // pred_check
        %p162 = pneg %p113
      $region22: #{sffi_forward.40} parent=11 // pred_check_branch
        %164 = sbr.rel (%p162) target = $region24
      $region23: #{sffi_forward.40} parent=11 // pred_region
        _
      $region24: #{sffi_forward.40} parent=11 // pred_fallthru
        _
    $region12: #{sffi_forward.40} parent=5 // pred_fallthru
      _
    %p165 = scmp.lt.s32.totalorder %s10, 2
    // Predicated region
    $region25: #{sffi_forward.40} parent=5 // pred_check
      %p166 = pneg %p165
    $region26: #{sffi_forward.40} parent=5 // pred_check_branch
      %168 = sbr.rel (%p166) target = $region28
    $region27: #{sffi_forward.40} parent=5 // pred_region
      // Predicated region
      $region29: #{sffi_forward.40} parent=27 // pred_check
        %p169 = pneg %p44
      $region30: #{sffi_forward.40} parent=27 // pred_check_branch
        %171 = sbr.rel (%p169) target = $region32
      $region31: #{sffi_forward.40} parent=27 // pred_region
        %p172 = scmp.lt.s32.totalorder %s17, 1
        %s173 = scalar_select %p172, %s17, 1
        %p174 = scmp.lt.s32.totalorder %s18, 0
        %s175 = scalar_select %p174, %s18, 0
        %s176 = smul.addr %s175, 36
        %s177 = smul.addr %s173, 36
        %s178 = sadd.s32 %s176, %s177
        %s179 = smul.addr %s178, 4
        %s180 = scalar_lea.vmem %s0, %s179
      $region32: #{sffi_forward.40} parent=27 // pred_fallthru
        _
    $region28: #{sffi_forward.40} parent=5 // pred_fallthru
      _
    %p181 = scmp.le.s32.totalorder 1, %s10
    %p182 = scmp.lt.s32.totalorder %s10, 3
    %p183 = pnand %p181, %p182
    %p184 = pneg %p183
    // Predicated region
    $region33: #{sffi_forward.40} parent=5 // pred_check
      _
    $region34: #{sffi_forward.40} parent=5 // pred_check_branch
      %186 = sbr.rel (%p183) target = $region36
    $region35: #{sffi_forward.40} parent=5 // pred_region
      %s187 = ssub.s32 %s10, 1
      %p188 = scmp.lt.s32.totalorder %s19, 1
      %s189 = scalar_select %p188, %s19, 1
      %p190 = scmp.lt.s32.totalorder %s20, 0
      %s191 = scalar_select %p190, %s20, 0
      %s192 = smul.addr %s191, 36
      %s193 = smul.addr %s189, 36
      %s194 = sadd.s32 %s192, %s193
      %s195 = smul.addr %s194, 4
      %s196 = scalar_lea.vmem %s0, %s195
      %p197 = pneg %p50
      %p198 = pneg %p47
      %p199 = pneg %p71
      %p200 = pneg %p68
      %p201 = pneg %p92
      %p202 = pneg %p89
      %p203 = pneg %p113
      %p204 = pneg %p110
      %p205 = pneg %p141
      %p206 = pneg %p138
      %p207 = scmp.lt.s32.totalorder %s19, 1
      %s208 = scalar_select %p207, %s19, 1
      %p209 = scmp.lt.s32.totalorder %s20, 0
      %s210 = scalar_select %p209, %s20, 0
      %s211 = smul.addr %s210, 32
      %s212 = smul.addr %s208, 32
      %s213 = sadd.s32 %s211, %s212
      %s214 = smul.addr %s213, 4
      %s215 = scalar_lea.vmem %s4, %s214
      %p216 = scmp.lt.s32.totalorder %s19, 1
      %s217 = scalar_select %p216, %s19, 1
      %p218 = scmp.lt.s32.totalorder %s20, 0
      %s219 = scalar_select %p218, %s20, 0
      %s220 = smul.addr %s219, 36
      %s221 = smul.addr %s217, 36
      %s222 = sadd.s32 %s220, %s221
      %s223 = smul.addr %s222, 4
      %s224 = scalar_lea.vmem %s0, %s223
      %p225 = scmp.lt.s32.totalorder %s19, 1
      %s226 = scalar_select %p225, %s19, 1
      %p227 = scmp.lt.s32.totalorder %s20, 0
      %s228 = scalar_select %p227, %s20, 0
      %s229 = smul.addr %s228, 32
      %s230 = smul.addr %s226, 32
      %s231 = sadd.s32 %s229, %s230
      %s232 = smul.addr %s231, 4
      %s233 = scalar_lea.vmem %s4, %s232
      %v235 = vld [vmem:[%s224] sm:$0xf]
      %v236 = vld [vmem:[%s224 + $0x4] sm:$0xf]
      %v237 = vld [vmem:[%s224 + $0x8] sm:$0xf]
      %v238 = vld [vmem:[%s224 + $0xc] sm:$0xf]
      %v239 = vld [vmem:[%s224 + $0x10] sm:$0xf]
      %v240 = vld [vmem:[%s224 + $0x14] sm:$0xf]
      %v241 = vld [vmem:[%s224 + $0x18] sm:$0xf]
      %v242 = vld [vmem:[%s224 + $0x1c] sm:$0xf]
      %v243 = vld [vmem:[%s224 + $0x20] sm:$0xf]
      %v244 = vld [vmem:[%s224 + $0x24] sm:$0xf]
      %v245 = vld [vmem:[%s224 + $0x28] sm:$0xf]
      %v246 = vld [vmem:[%s224 + $0x2c] sm:$0xf]
      %v247 = vld [vmem:[%s224 + $0x30] sm:$0xf]
      %v248 = vld [vmem:[%s224 + $0x34] sm:$0xf]
      %v249 = vld [vmem:[%s224 + $0x38] sm:$0xf]
      %v250 = vld [vmem:[%s224 + $0x3c] sm:$0xf]
      %v251 = vld [vmem:[%s224 + $0x40] sm:$0xf]
      %v252 = vld [vmem:[%s224 + $0x44] sm:$0xf]
      %v253 = vld [vmem:[%s224 + $0x48] sm:$0xf]
      %v254 = vld [vmem:[%s224 + $0x4c] sm:$0xf]
      %v255 = vld [vmem:[%s224 + $0x50] sm:$0xf]
      %v256 = vld [vmem:[%s224 + $0x54] sm:$0xf]
      %v257 = vld [vmem:[%s224 + $0x58] sm:$0xf]
      %v258 = vld [vmem:[%s224 + $0x5c] sm:$0xf]
      %v259 = vld [vmem:[%s224 + $0x60] sm:$0xf]
      %v260 = vld [vmem:[%s224 + $0x64] sm:$0xf]
      %v261 = vld [vmem:[%s224 + $0x68] sm:$0xf]
      %v262 = vld [vmem:[%s224 + $0x6c] sm:$0xf]
      %v263 = vld [vmem:[%s224 + $0x70] sm:$0xf]
      %v264 = vld [vmem:[%s224 + $0x74] sm:$0xf]
      %v265 = vld [vmem:[%s224 + $0x78] sm:$0xf]
      %v266 = vld [vmem:[%s224 + $0x7c] sm:$0xf]
      %v267 = vld [vmem:[%s1] sm:$0xf]
      %v268 = vld [vmem:[%s1 + $0x4] sm:$0xf]
      %v269 = vld [vmem:[%s1 + $0x8] sm:$0xf]
      %v270 = vld [vmem:[%s1 + $0xc] sm:$0xf]
      %v271 = vld [vmem:[%s1 + $0x10] sm:$0xf]
      %v272 = vld [vmem:[%s1 + $0x14] sm:$0xf]
      %v273 = vld [vmem:[%s1 + $0x18] sm:$0xf]
      %v274 = vld [vmem:[%s1 + $0x1c] sm:$0xf]
      %v275 = vld [vmem:[%s1 + $0x20] sm:$0xf]
      %v276 = vld [vmem:[%s1 + $0x24] sm:$0xf]
      %v277 = vld [vmem:[%s1 + $0x28] sm:$0xf]
      %v278 = vld [vmem:[%s1 + $0x2c] sm:$0xf]
      %v279 = vld [vmem:[%s224 + $0x80] sm:$0xf]
      %v280 = vld [vmem:[%s224 + $0x84] sm:$0xf]
      %s281 = scalar_lea.vmem %s1, 48
      %v282 = vld [vmem:[%s281] sm:$0xf]
      %v283 = vld [vmem:[%s281 + $0x4] sm:$0xf]
      %v284 = vld [vmem:[%s281 + $0x8] sm:$0xf]
      %v285 = vld [vmem:[%s281 + $0xc] sm:$0xf]
      %v286 = vld [vmem:[%s281 + $0x10] sm:$0xf]
      %v287 = vld [vmem:[%s281 + $0x14] sm:$0xf]
      %v288 = vld [vmem:[%s281 + $0x18] sm:$0xf]
      %v289 = vld [vmem:[%s281 + $0x1c] sm:$0xf]
      %v290 = vld [vmem:[%s281 + $0x20] sm:$0xf]
      %v291 = vld [vmem:[%s281 + $0x24] sm:$0xf]
      %v292 = vld [vmem:[%s281 + $0x28] sm:$0xf]
      %v293 = vld [vmem:[%s281 + $0x2c] sm:$0xf]
      %v326 = vunpack.c.l.b16 %v237
      %v327 = vunpack.c.l.b16 %v238
      %v328 = vunpack.c.l.b16 %v239
      %v329 = vunpack.c.l.b16 %v240
      %v330 = vunpack.c.l.b16 %v241
      %v331 = vunpack.c.l.b16 %v242
      %v332 = vunpack.c.l.b16 %v243
      %v333 = vunpack.c.l.b16 %v244
      %v334 = vunpack.c.l.b16 %v245
      %v335 = vunpack.c.l.b16 %v246
      %v336 = vunpack.c.l.b16 %v247
      %v337 = vunpack.c.l.b16 %v248
      %v338 = vunpack.c.l.b16 %v249
      %v339 = vunpack.c.l.b16 %v250
      %v340 = vunpack.c.l.b16 %v251
      %v341 = vunpack.c.l.b16 %v252
      %v342 = vunpack.c.l.b16 %v253
      %v343 = vunpack.c.l.b16 %v254
      %v344 = vunpack.c.l.b16 %v255
      %v345 = vunpack.c.l.b16 %v256
      %v346 = vunpack.c.l.b16 %v257
      %v347 = vunpack.c.l.b16 %v258
      %v348 = vunpack.c.l.b16 %v259
      %v349 = vunpack.c.l.b16 %v260
      %v350 = vunpack.c.l.b16 %v261
      %v351 = vunpack.c.l.b16 %v262
      %v352 = vunpack.c.l.b16 %v263
      %v353 = vunpack.c.l.b16 %v264
      %v354 = vunpack.c.l.b16 %v265
      %v355 = vunpack.c.l.b16 %v266
      %v356 = vunpack.c.l.b16 %v279
      %v357 = vunpack.c.l.b16 %v280
      %v358 = vpack.c.b16 %v327, %v326
      %v359 = vpack.c.b16 %v329, %v328
      %v360 = vpack.c.b16 %v331, %v330
      %v361 = vpack.c.b16 %v333, %v332
      %v362 = vpack.c.b16 %v335, %v334
      %v363 = vpack.c.b16 %v337, %v336
      %v364 = vpack.c.b16 %v339, %v338
      %v365 = vpack.c.b16 %v341, %v340
      %v366 = vpack.c.b16 %v343, %v342
      %v367 = vpack.c.b16 %v345, %v344
      %v368 = vpack.c.b16 %v347, %v346
      %v369 = vpack.c.b16 %v349, %v348
      %v370 = vpack.c.b16 %v351, %v350
      %v371 = vpack.c.b16 %v353, %v352
      %v372 = vpack.c.b16 %v355, %v354
      %v373 = vpack.c.b16 %v357, %v356
      %v386 = vunpack.c.l.b16 %v282
      %v387 = vunpack.c.l.b16 %v283
      %v388 = vunpack.c.l.b16 %v284
      %v389 = vunpack.c.l.b16 %v285
      %v390 = vunpack.c.l.b16 %v286
      %v391 = vunpack.c.l.b16 %v287
      %v392 = vunpack.c.l.b16 %v288
      %v393 = vunpack.c.l.b16 %v289
      %v394 = vunpack.c.l.b16 %v290
      %v395 = vunpack.c.l.b16 %v291
      %v396 = vunpack.c.l.b16 %v292
      %v397 = vunpack.c.l.b16 %v293
      %v398 = vpack.c.b16 %v387, %v386
      %v399 = vpack.c.b16 %v389, %v388
      %v400 = vpack.c.b16 %v391, %v390
      %v401 = vpack.c.b16 %v393, %v392
      %v402 = vpack.c.b16 %v395, %v394
      %v403 = vpack.c.b16 %v397, %v396
      %vm410 = vcmask 785408
      %v412 = vsel %vm410, %v358, 0
      %v415 = vsel %vm410, %v359, 0
      %v418 = vsel %vm410, %v360, 0
      %v421 = vsel %vm410, %v361, 0
      %v424 = vsel %vm410, %v362, 0
      %v427 = vsel %vm410, %v363, 0
      %v430 = vsel %vm410, %v364, 0
      %v433 = vsel %vm410, %v365, 0
      %v436 = vsel %vm410, %v366, 0
      %v439 = vsel %vm410, %v367, 0
      %v442 = vsel %vm410, %v368, 0
      %v445 = vsel %vm410, %v369, 0
      %v448 = vsel %vm410, %v370, 0
      %v451 = vsel %vm410, %v371, 0
      %v454 = vsel %vm410, %v372, 0
      %v457 = vsel %vm410, %v373, 0
      %459 = vmatprep.subr.bf16.mxu0 0
      %460 = vmatpush1.bf16.msra.mxu0 %v398
      %461 = vmatprep.subr.bf16.mxu0 0
      %462 = vmatpush1.bf16.msra.mxu0 %v399
      %463 = vmatprep.subr.bf16.mxu0 0
      %464 = vmatpush1.bf16.msra.mxu0 %v400
      %465 = vmatprep.subr.bf16.mxu0 0
      %466 = vmatpush1.bf16.msra.mxu0 %v401
      %467 = vmatprep.subr.bf16.mxu0 0
      %468 = vmatpush1.bf16.msra.mxu0 %v402
      %469 = vmatprep.subr.bf16.mxu0 0
      %470 = vmatpush1.bf16.msra.mxu0 %v403
      %471 = vmatprep.subr.bf16.mxu0 0
      %472 = vmatpush1.bf16.msra.mxu0 0
      %473 = vmatprep.subr.bf16.mxu0 0
      %474 = vmatpush1.bf16.msra.mxu0 0
      %475 = vmatprep.subr.bf16.mxu0 0
      %476 = vmatpush1.bf16.msra.mxu0 0
      %477 = vmatprep.subr.bf16.mxu0 0
      %478 = vmatpush1.bf16.msra.mxu0 0
      %479 = vmatprep.subr.bf16.mxu0 0
      %480 = vmatpush1.bf16.msra.mxu0 0
      %481 = vmatprep.subr.bf16.mxu0 0
      %482 = vmatpush1.bf16.msra.mxu0 0
      %483 = vmatprep.subr.bf16.mxu0 0
      %484 = vmatpush1.bf16.msra.mxu0 0
      %485 = vmatprep.subr.bf16.mxu0 0
      %486 = vmatpush1.bf16.msra.mxu0 0
      %487 = vmatprep.subr.bf16.mxu0 0
      %488 = vmatpush1.bf16.msra.mxu0 0
      %489 = vmatprep.subr.bf16.mxu0 0
      %490 = vmatpush1.bf16.msra.mxu0 0
      %491 = vmatprep.mubr.bf16.mxu0 0
      %492 = vmatmul.mubr.bf16.gmra.mrb[0].mxu0 %v412
      %v493 = vpop.f32.mrb[0].mxu0
      %v494 = vadd.f32 0.0, %v493
      %v495 = vpop.f32.mrb[0].mxu0
      %v496 = vpop.f32.mrb[0].mxu0
      %v497 = vadd.f32 0.0, %v496
      %v498 = vpop.f32.mrb[0].mxu0
      %499 = vmatprep.mubr.bf16.mxu0 0
      %500 = vmatmul.mubr.bf16.gmra.mrb[0].mxu0 %v415
      %v501 = vpop.f32.mrb[0].mxu0
      %v502 = vadd.f32 0.0, %v501
      %v503 = vpop.f32.mrb[0].mxu0
      %v504 = vpop.f32.mrb[0].mxu0
      %v505 = vadd.f32 0.0, %v504
      %v506 = vpop.f32.mrb[0].mxu0
      %507 = vmatprep.mubr.bf16.mxu0 0
      %508 = vmatmul.mubr.bf16.gmra.mrb[0].mxu0 %v418
      %v509 = vpop.f32.mrb[0].mxu0
      %v510 = vadd.f32 0.0, %v509
      %v511 = vpop.f32.mrb[0].mxu0
      %v512 = vpop.f32.mrb[0].mxu0
      %v513 = vadd.f32 0.0, %v512
      %v514 = vpop.f32.mrb[0].mxu0
      %515 = vmatprep.mubr.bf16.mxu0 0
      %516 = vmatmul.mubr.bf16.gmra.mrb[0].mxu0 %v421
      %v517 = vpop.f32.mrb[0].mxu0
      %v518 = vadd.f32 0.0, %v517
      %v519 = vpop.f32.mrb[0].mxu0
      %v520 = vpop.f32.mrb[0].mxu0
      %v521 = vadd.f32 0.0, %v520
      %v522 = vpop.f32.mrb[0].mxu0
      %523 = vmatprep.mubr.bf16.mxu0 0
      %524 = vmatmul.mubr.bf16.gmra.mrb[0].mxu0 %v424
      %v525 = vpop.f32.mrb[0].mxu0
      %v526 = vadd.f32 0.0, %v525
      %v527 = vpop.f32.mrb[0].mxu0
      %v528 = vpop.f32.mrb[0].mxu0
      %v529 = vadd.f32 0.0, %v528
      %v530 = vpop.f32.mrb[0].mxu0
      %531 = vmatprep.mubr.bf16.mxu0 0
      %532 = vmatmul.mubr.bf16.gmra.mrb[0].mxu0 %v427
      %v533 = vpop.f32.mrb[0].mxu0
      %v534 = vadd.f32 0.0, %v533
      %v535 = vpop.f32.mrb[0].mxu0
      %v536 = vpop.f32.mrb[0].mxu0
      %v537 = vadd.f32 0.0, %v536
      %v538 = vpop.f32.mrb[0].mxu0
      %539 = vmatprep.mubr.bf16.mxu0 0
      %540 = vmatmul.mubr.bf16.gmra.mrb[0].mxu0 %v430
      %v541 = vpop.f32.mrb[0].mxu0
      %v542 = vadd.f32 0.0, %v541
      %v543 = vpop.f32.mrb[0].mxu0
      %v544 = vpop.f32.mrb[0].mxu0
      %v545 = vadd.f32 0.0, %v544
      %v546 = vpop.f32.mrb[0].mxu0
      %547 = vmatprep.mubr.bf16.mxu0 0
      %548 = vmatmul.mubr.bf16.gmra.mrb[0].mxu0 %v433
      %v549 = vpop.f32.mrb[0].mxu0
      %v550 = vadd.f32 0.0, %v549
      %v551 = vpop.f32.mrb[0].mxu0
      %v552 = vpop.f32.mrb[0].mxu0
      %v553 = vadd.f32 0.0, %v552
      %v554 = vpop.f32.mrb[0].mxu0
      %555 = vmatprep.mubr.bf16.mxu0 0
      %556 = vmatmul.mubr.bf16.gmra.mrb[0].mxu0 %v436
      %v557 = vpop.f32.mrb[0].mxu0
      %v558 = vadd.f32 0.0, %v557
      %v559 = vpop.f32.mrb[0].mxu0
      %v560 = vpop.f32.mrb[0].mxu0
      %v561 = vadd.f32 0.0, %v560
      %v562 = vpop.f32.mrb[0].mxu0
      %563 = vmatprep.mubr.bf16.mxu0 0
      %564 = vmatmul.mubr.bf16.gmra.mrb[0].mxu0 %v439
      %v565 = vpop.f32.mrb[0].mxu0
      %v566 = vadd.f32 0.0, %v565
      %v567 = vpop.f32.mrb[0].mxu0
      %v568 = vpop.f32.mrb[0].mxu0
      %v569 = vadd.f32 0.0, %v568
      %v570 = vpop.f32.mrb[0].mxu0
      %571 = vmatprep.mubr.bf16.mxu0 0
      %572 = vmatmul.mubr.bf16.gmra.mrb[0].mxu0 %v442
      %v573 = vpop.f32.mrb[0].mxu0
      %v574 = vadd.f32 0.0, %v573
      %v575 = vpop.f32.mrb[0].mxu0
      %v576 = vpop.f32.mrb[0].mxu0
      %v577 = vadd.f32 0.0, %v576
      %v578 = vpop.f32.mrb[0].mxu0
      %579 = vmatprep.mubr.bf16.mxu0 0
      %580 = vmatmul.mubr.bf16.gmra.mrb[0].mxu0 %v445
      %v581 = vpop.f32.mrb[0].mxu0
      %v582 = vadd.f32 0.0, %v581
      %v583 = vpop.f32.mrb[0].mxu0
      %v584 = vpop.f32.mrb[0].mxu0
      %v585 = vadd.f32 0.0, %v584
      %v586 = vpop.f32.mrb[0].mxu0
      %587 = vmatprep.mubr.bf16.mxu0 0
      %588 = vmatmul.mubr.bf16.gmra.mrb[0].mxu0 %v448
      %v589 = vpop.f32.mrb[0].mxu0
      %v590 = vadd.f32 0.0, %v589
      %v591 = vpop.f32.mrb[0].mxu0
      %v592 = vpop.f32.mrb[0].mxu0
      %v593 = vadd.f32 0.0, %v592
      %v594 = vpop.f32.mrb[0].mxu0
      %595 = vmatprep.mubr.bf16.mxu0 0
      %596 = vmatmul.mubr.bf16.gmra.mrb[0].mxu0 %v451
      %v597 = vpop.f32.mrb[0].mxu0
      %v598 = vadd.f32 0.0, %v597
      %v599 = vpop.f32.mrb[0].mxu0
      %v600 = vpop.f32.mrb[0].mxu0
      %v601 = vadd.f32 0.0, %v600
      %v602 = vpop.f32.mrb[0].mxu0
      %603 = vmatprep.mubr.bf16.mxu0 0
      %604 = vmatmul.mubr.bf16.gmra.mrb[0].mxu0 %v454
      %v605 = vpop.f32.mrb[0].mxu0
      %v606 = vadd.f32 0.0, %v605
      %v607 = vpop.f32.mrb[0].mxu0
      %v608 = vpop.f32.mrb[0].mxu0
      %v609 = vadd.f32 0.0, %v608
      %v610 = vpop.f32.mrb[0].mxu0
      %611 = vmatprep.mubr.bf16.mxu0 0
      %612 = vmatmul.mubr.bf16.gmra.mrb[0].mxu0 %v457
      %v613 = vpop.f32.mrb[0].mxu0
      %v614 = vadd.f32 0.0, %v613
      %v615 = vpop.f32.mrb[0].mxu0
      %v616 = vpop.f32.mrb[0].mxu0
      %v617 = vadd.f32 0.0, %v616
      %v618 = vpop.f32.mrb[0].mxu0
      %619 = vdwg.mxu0
      %v622 = vunpack.c.l.b16 %v235
      %v623 = vunpack.c.l.b16 %v236
      %v624 = vpack.c.b16 %v623, %v622
      %v637 = vunpack.c.l.b16 %v267
      %v638 = vunpack.c.l.b16 %v268
      %v639 = vunpack.c.l.b16 %v269
      %v640 = vunpack.c.l.b16 %v270
      %v641 = vunpack.c.l.b16 %v271
      %v642 = vunpack.c.l.b16 %v272
      %v643 = vunpack.c.l.b16 %v273
      %v644 = vunpack.c.l.b16 %v274
      %v645 = vunpack.c.l.b16 %v275
      %v646 = vunpack.c.l.b16 %v276
      %v647 = vunpack.c.l.b16 %v277
      %v648 = vunpack.c.l.b16 %v278
      %v649 = vpack.c.b16 %v638, %v637
      %v650 = vpack.c.b16 %v640, %v639
      %v651 = vpack.c.b16 %v642, %v641
      %v652 = vpack.c.b16 %v644, %v643
      %v653 = vpack.c.b16 %v646, %v645
      %v654 = vpack.c.b16 %v648, %v647
      %v662 = vsel %vm410, %v624, 0
      %664 = vmatprep.subr.bf16.mxu0 0
      %665 = vmatpush1.bf16.msra.mxu0 %v649
      %666 = vmatprep.subr.bf16.mxu0 0
      %667 = vmatpush1.bf16.msra.mxu0 %v650
      %668 = vmatprep.subr.bf16.mxu0 0
      %669 = vmatpush1.bf16.msra.mxu0 %v651
      %670 = vmatprep.subr.bf16.mxu0 0
      %671 = vmatpush1.bf16.msra.mxu0 %v652
      %672 = vmatprep.subr.bf16.mxu0 0
      %673 = vmatpush1.bf16.msra.mxu0 %v653
      %674 = vmatprep.subr.bf16.mxu0 0
      %675 = vmatpush1.bf16.msra.mxu0 %v654
      %676 = vmatprep.subr.bf16.mxu0 0
      %677 = vmatpush1.bf16.msra.mxu0 0
      %678 = vmatprep.subr.bf16.mxu0 0
      %679 = vmatpush1.bf16.msra.mxu0 0
      %680 = vmatprep.subr.bf16.mxu0 0
      %681 = vmatpush1.bf16.msra.mxu0 0
      %682 = vmatprep.subr.bf16.mxu0 0
      %683 = vmatpush1.bf16.msra.mxu0 0
      %684 = vmatprep.subr.bf16.mxu0 0
      %685 = vmatpush1.bf16.msra.mxu0 0
      %686 = vmatprep.subr.bf16.mxu0 0
      %687 = vmatpush1.bf16.msra.mxu0 0
      %688 = vmatprep.subr.bf16.mxu0 0
      %689 = vmatpush1.bf16.msra.mxu0 0
      %690 = vmatprep.subr.bf16.mxu0 0
      %691 = vmatpush1.bf16.msra.mxu0 0
      %692 = vmatprep.subr.bf16.mxu0 0
      %693 = vmatpush1.bf16.msra.mxu0 0
      %694 = vmatprep.subr.bf16.mxu0 0
      %695 = vmatpush1.bf16.msra.mxu0 0
      %696 = vmatprep.mubr.bf16.mxu0 0
      %697 = vmatmul.mubr.bf16.gmra.mrb[0].mxu0 %v662
      %v698 = vpop.f32.mrb[0].mxu0
      %v699 = vadd.f32 %v494, %v698
      %v700 = vpop.f32.mrb[0].mxu0
      %v701 = vpop.f32.mrb[0].mxu0
      %v702 = vadd.f32 %v497, %v701
      %v703 = vpop.f32.mrb[0].mxu0
      %704 = vmatprep.mubr.bf16.mxu0 0
      %705 = vmatmul.mubr.bf16.gmra.mrb[0].mxu0 %v412
      %v706 = vpop.f32.mrb[0].mxu0
      %v707 = vadd.f32 %v502, %v706
      %v708 = vpop.f32.mrb[0].mxu0
      %v709 = vpop.f32.mrb[0].mxu0
      %v710 = vadd.f32 %v505, %v709
      %v711 = vpop.f32.mrb[0].mxu0
      %712 = vmatprep.mubr.bf16.mxu0 0
      %713 = vmatmul.mubr.bf16.gmra.mrb[0].mxu0 %v415
      %v714 = vpop.f32.mrb[0].mxu0
      %v715 = vadd.f32 %v510, %v714
      %v716 = vpop.f32.mrb[0].mxu0
      %v717 = vpop.f32.mrb[0].mxu0
      %v718 = vadd.f32 %v513, %v717
      %v719 = vpop.f32.mrb[0].mxu0
      %720 = vmatprep.mubr.bf16.mxu0 0
      %721 = vmatmul.mubr.bf16.gmra.mrb[0].mxu0 %v418
      %v722 = vpop.f32.mrb[0].mxu0
      %v723 = vadd.f32 %v518, %v722
      %v724 = vpop.f32.mrb[0].mxu0
      %v725 = vpop.f32.mrb[0].mxu0
      %v726 = vadd.f32 %v521, %v725
      %v727 = vpop.f32.mrb[0].mxu0
      %728 = vmatprep.mubr.bf16.mxu0 0
      %729 = vmatmul.mubr.bf16.gmra.mrb[0].mxu0 %v421
      %v730 = vpop.f32.mrb[0].mxu0
      %v731 = vadd.f32 %v526, %v730
      %v732 = vpop.f32.mrb[0].mxu0
      %v733 = vpop.f32.mrb[0].mxu0
      %v734 = vadd.f32 %v529, %v733
      %v735 = vpop.f32.mrb[0].mxu0
      %736 = vmatprep.mubr.bf16.mxu0 0
      %737 = vmatmul.mubr.bf16.gmra.mrb[0].mxu0 %v424
      %v738 = vpop.f32.mrb[0].mxu0
      %v739 = vadd.f32 %v534, %v738
      %v740 = vpop.f32.mrb[0].mxu0
      %v741 = vpop.f32.mrb[0].mxu0
      %v742 = vadd.f32 %v537, %v741
      %v743 = vpop.f32.mrb[0].mxu0
      %744 = vmatprep.mubr.bf16.mxu0 0
      %745 = vmatmul.mubr.bf16.gmra.mrb[0].mxu0 %v427
      %v746 = vpop.f32.mrb[0].mxu0
      %v747 = vadd.f32 %v542, %v746
      %v748 = vpop.f32.mrb[0].mxu0
      %v749 = vpop.f32.mrb[0].mxu0
      %v750 = vadd.f32 %v545, %v749
      %v751 = vpop.f32.mrb[0].mxu0
      %752 = vmatprep.mubr.bf16.mxu0 0
      %753 = vmatmul.mubr.bf16.gmra.mrb[0].mxu0 %v430
      %v754 = vpop.f32.mrb[0].mxu0
      %v755 = vadd.f32 %v550, %v754
      %v756 = vpop.f32.mrb[0].mxu0
      %v757 = vpop.f32.mrb[0].mxu0
      %v758 = vadd.f32 %v553, %v757
      %v759 = vpop.f32.mrb[0].mxu0
      %760 = vmatprep.mubr.bf16.mxu0 0
      %761 = vmatmul.mubr.bf16.gmra.mrb[0].mxu0 %v433
      %v762 = vpop.f32.mrb[0].mxu0
      %v763 = vadd.f32 %v558, %v762
      %v764 = vpop.f32.mrb[0].mxu0
      %v765 = vpop.f32.mrb[0].mxu0
      %v766 = vadd.f32 %v561, %v765
      %v767 = vpop.f32.mrb[0].mxu0
      %768 = vmatprep.mubr.bf16.mxu0 0
      %769 = vmatmul.mubr.bf16.gmra.mrb[0].mxu0 %v436
      %v770 = vpop.f32.mrb[0].mxu0
      %v771 = vadd.f32 %v566, %v770
      %v772 = vpop.f32.mrb[0].mxu0
      %v773 = vpop.f32.mrb[0].mxu0
      %v774 = vadd.f32 %v569, %v773
      %v775 = vpop.f32.mrb[0].mxu0
      %776 = vmatprep.mubr.bf16.mxu0 0
      %777 = vmatmul.mubr.bf16.gmra.mrb[0].mxu0 %v439
      %v778 = vpop.f32.mrb[0].mxu0
      %v779 = vadd.f32 %v574, %v778
      %v780 = vpop.f32.mrb[0].mxu0
      %v781 = vpop.f32.mrb[0].mxu0
      %v782 = vadd.f32 %v577, %v781
      %v783 = vpop.f32.mrb[0].mxu0
      %784 = vmatprep.mubr.bf16.mxu0 0
      %785 = vmatmul.mubr.bf16.gmra.mrb[0].mxu0 %v442
      %v786 = vpop.f32.mrb[0].mxu0
      %v787 = vadd.f32 %v582, %v786
      %v788 = vpop.f32.mrb[0].mxu0
      %v789 = vpop.f32.mrb[0].mxu0
      %v790 = vadd.f32 %v585, %v789
      %v791 = vpop.f32.mrb[0].mxu0
      %792 = vmatprep.mubr.bf16.mxu0 0
      %793 = vmatmul.mubr.bf16.gmra.mrb[0].mxu0 %v445
      %v794 = vpop.f32.mrb[0].mxu0
      %v795 = vadd.f32 %v590, %v794
      %v796 = vpop.f32.mrb[0].mxu0
      %v797 = vpop.f32.mrb[0].mxu0
      %v798 = vadd.f32 %v593, %v797
      %v799 = vpop.f32.mrb[0].mxu0
      %800 = vmatprep.mubr.bf16.mxu0 0
      %801 = vmatmul.mubr.bf16.gmra.mrb[0].mxu0 %v448
      %v802 = vpop.f32.mrb[0].mxu0
      %v803 = vadd.f32 %v598, %v802
      %v804 = vpop.f32.mrb[0].mxu0
      %v805 = vpop.f32.mrb[0].mxu0
      %v806 = vadd.f32 %v601, %v805
      %v807 = vpop.f32.mrb[0].mxu0
      %808 = vmatprep.mubr.bf16.mxu0 0
      %809 = vmatmul.mubr.bf16.gmra.mrb[0].mxu0 %v451
      %v810 = vpop.f32.mrb[0].mxu0
      %v811 = vadd.f32 %v606, %v810
      %v812 = vpop.f32.mrb[0].mxu0
      %v813 = vpop.f32.mrb[0].mxu0
      %v814 = vadd.f32 %v609, %v813
      %v815 = vpop.f32.mrb[0].mxu0
      %816 = vmatprep.mubr.bf16.mxu0 0
      %817 = vmatmul.mubr.bf16.gmra.mrb[0].mxu0 %v454
      %v818 = vpop.f32.mrb[0].mxu0
      %v819 = vadd.f32 %v614, %v818
      %v820 = vpop.f32.mrb[0].mxu0
      %v821 = vpop.f32.mrb[0].mxu0
      %v822 = vadd.f32 %v617, %v821
      %v823 = vpop.f32.mrb[0].mxu0
      %824 = vdwg.mxu0
      %v825 = vld [vmem:[%s224 + $0x10] sm:$0xf]
      %v826 = vld [vmem:[%s224 + $0x14] sm:$0xf]
      %v827 = vld [vmem:[%s224 + $0x18] sm:$0xf]
      %v828 = vld [vmem:[%s224 + $0x1c] sm:$0xf]
      %v829 = vld [vmem:[%s224 + $0x20] sm:$0xf]
      %v830 = vld [vmem:[%s224 + $0x24] sm:$0xf]
      %v831 = vld [vmem:[%s224 + $0x28] sm:$0xf]
      %v832 = vld [vmem:[%s224 + $0x2c] sm:$0xf]
      %v833 = vld [vmem:[%s224 + $0x30] sm:$0xf]
      %v834 = vld [vmem:[%s224 + $0x34] sm:$0xf]
      %v835 = vld [vmem:[%s224 + $0x38] sm:$0xf]
      %v836 = vld [vmem:[%s224 + $0x3c] sm:$0xf]
      %v837 = vld [vmem:[%s224 + $0x40] sm:$0xf]
      %v838 = vld [vmem:[%s224 + $0x44] sm:$0xf]
      %v839 = vld [vmem:[%s224 + $0x48] sm:$0xf]
      %v840 = vld [vmem:[%s224 + $0x4c] sm:$0xf]
      %v841 = vld [vmem:[%s224 + $0x50] sm:$0xf]
      %v842 = vld [vmem:[%s224 + $0x54] sm:$0xf]
      %v843 = vld [vmem:[%s224 + $0x58] sm:$0xf]
      %v844 = vld [vmem:[%s224 + $0x5c] sm:$0xf]
      %v845 = vld [vmem:[%s224 + $0x60] sm:$0xf]
      %v846 = vld [vmem:[%s224 + $0x64] sm:$0xf]
      %v847 = vld [vmem:[%s224 + $0x68] sm:$0xf]
      %v848 = vld [vmem:[%s224 + $0x6c] sm:$0xf]
      %v849 = vld [vmem:[%s224 + $0x70] sm:$0xf]
      %v850 = vld [vmem:[%s224 + $0x74] sm:$0xf]
      %v851 = vld [vmem:[%s224 + $0x78] sm:$0xf]
      %v852 = vld [vmem:[%s224 + $0x7c] sm:$0xf]
      %v853 = vld [vmem:[%s224 + $0x80] sm:$0xf]
      %v854 = vld [vmem:[%s224 + $0x84] sm:$0xf]
      %v855 = vld [vmem:[%s224 + $0x88] sm:$0xf]
      %v856 = vld [vmem:[%s224 + $0x8c] sm:$0xf]
      %s857 = scalar_lea.vmem %s1, 96
      %v858 = vld [vmem:[%s857] sm:$0xf]
      %v859 = vld [vmem:[%s857 + $0x4] sm:$0xf]
      %v860 = vld [vmem:[%s857 + $0x8] sm:$0xf]
      %v861 = vld [vmem:[%s857 + $0xc] sm:$0xf]
      %v862 = vld [vmem:[%s857 + $0x10] sm:$0xf]
      %v863 = vld [vmem:[%s857 + $0x14] sm:$0xf]
      %v864 = vld [vmem:[%s857 + $0x18] sm:$0xf]
      %v865 = vld [vmem:[%s857 + $0x1c] sm:$0xf]
      %v866 = vld [vmem:[%s857 + $0x20] sm:$0xf]
      %v867 = vld [vmem:[%s857 + $0x24] sm:$0xf]
      %v868 = vld [vmem:[%s857 + $0x28] sm:$0xf]
      %v869 = vld [vmem:[%s857 + $0x2c] sm:$0xf]
      %v902 = vunpack.c.l.b16 %v825
      %v903 = vunpack.c.l.b16 %v826
      %v904 = vunpack.c.l.b16 %v827
      %v905 = vunpack.c.l.b16 %v828
      %v906 = vunpack.c.l.b16 %v829
      %v907 = vunpack.c.l.b16 %v830
      %v908 = vunpack.c.l.b16 %v831
      %v909 = vunpack.c.l.b16 %v832
      %v910 = vunpack.c.l.b16 %v833
      %v911 = vunpack.c.l.b16 %v834
      %v912 = vunpack.c.l.b16 %v835
      %v913 = vunpack.c.l.b16 %v836
      %v914 = vunpack.c.l.b16 %v837
      %v915 = vunpack.c.l.b16 %v838
      %v916 = vunpack.c.l.b16 %v839
      %v917 = vunpack.c.l.b16 %v840
      %v918 = vunpack.c.l.b16 %v841
      %v919 = vunpack.c.l.b16 %v842
      %v920 = vunpack.c.l.b16 %v843
      %v921 = vunpack.c.l.b16 %v844
      %v922 = vunpack.c.l.b16 %v845
      %v923 = vunpack.c.l.b16 %v846
      %v924 = vunpack.c.l.b16 %v847
      %v925 = vunpack.c.l.b16 %v848
      %v926 = vunpack.c.l.b16 %v849
      %v927 = vunpack.c.l.b16 %v850
      %v928 = vunpack.c.l.b16 %v851
      %v929 = vunpack.c.l.b16 %v852
      %v930 = vunpack.c.l.b16 %v853
      %v931 = vunpack.c.l.b16 %v854
      %v932 = vunpack.c.l.b16 %v855
      %v933 = vunpack.c.l.b16 %v856
      %v934 = vpack.c.b16 %v903, %v902
      %v935 = vpack.c.b16 %v905, %v904
      %v936 = vpack.c.b16 %v907, %v906
      %v937 = vpack.c.b16 %v909, %v908
      %v938 = vpack.c.b16 %v911, %v910
      %v939 = vpack.c.b16 %v913, %v912
      %v940 = vpack.c.b16 %v915, %v914
      %v941 = vpack.c.b16 %v917, %v916
      %v942 = vpack.c.b16 %v919, %v918
      %v943 = vpack.c.b16 %v921, %v920
      %v944 = vpack.c.b16 %v923, %v922
      %v945 = vpack.c.b16 %v925, %v924
      %v946 = vpack.c.b16 %v927, %v926
      %v947 = vpack.c.b16 %v929, %v928
      %v948 = vpack.c.b16 %v931, %v930
      %v949 = vpack.c.b16 %v933, %v932
      %v962 = vunpack.c.l.b16 %v858
      %v963 = vunpack.c.l.b16 %v859
      %v964 = vunpack.c.l.b16 %v860
      %v965 = vunpack.c.l.b16 %v861
      %v966 = vunpack.c.l.b16 %v862
      %v967 = vunpack.c.l.b16 %v863
      %v968 = vunpack.c.l.b16 %v864
      %v969 = vunpack.c.l.b16 %v865
      %v970 = vunpack.c.l.b16 %v866
      %v971 = vunpack.c.l.b16 %v867
      %v972 = vunpack.c.l.b16 %v868
      %v973 = vunpack.c.l.b16 %v869
      %v974 = vpack.c.b16 %v963, %v962
      %v975 = vpack.c.b16 %v965, %v964
      %v976 = vpack.c.b16 %v967, %v966
      %v977 = vpack.c.b16 %v969, %v968
      %v978 = vpack.c.b16 %v971, %v970
      %v979 = vpack.c.b16 %v973, %v972
      %v987 = vsel %vm410, %v934, 0
      %v990 = vsel %vm410, %v935, 0
      %v993 = vsel %vm410, %v936, 0
      %v996 = vsel %vm410, %v937, 0
      %v999 = vsel %vm410, %v938, 0
      %v1002 = vsel %vm410, %v939, 0
      %v1005 = vsel %vm410, %v940, 0
      %v1008 = vsel %vm410, %v941, 0
      %v1011 = vsel %vm410, %v942, 0
      %v1014 = vsel %vm410, %v943, 0
      %v1017 = vsel %vm410, %v944, 0
      %v1020 = vsel %vm410, %v945, 0
      %v1023 = vsel %vm410, %v946, 0
      %v1026 = vsel %vm410, %v947, 0
      %v1029 = vsel %vm410, %v948, 0
      %v1032 = vsel %vm410, %v949, 0
      %1034 = vmatprep.subr.bf16.mxu0 0
      %1035 = vmatpush1.bf16.msra.mxu0 %v974
      %1036 = vmatprep.subr.bf16.mxu0 0
      %1037 = vmatpush1.bf16.msra.mxu0 %v975
      %1038 = vmatprep.subr.bf16.mxu0 0
      %1039 = vmatpush1.bf16.msra.mxu0 %v976
      %1040 = vmatprep.subr.bf16.mxu0 0
      %1041 = vmatpush1.bf16.msra.mxu0 %v977
      %1042 = vmatprep.subr.bf16.mxu0 0
      %1043 = vmatpush1.bf16.msra.mxu0 %v978
      %1044 = vmatprep.subr.bf16.mxu0 0
      %1045 = vmatpush1.bf16.msra.mxu0 %v979
      %1046 = vmatprep.subr.bf16.mxu0 0
      %1047 = vmatpush1.bf16.msra.mxu0 0
      %1048 = vmatprep.subr.bf16.mxu0 0
      %1049 = vmatpush1.bf16.msra.mxu0 0
      %1050 = vmatprep.subr.bf16.mxu0 0
      %1051 = vmatpush1.bf16.msra.mxu0 0
      %1052 = vmatprep.subr.bf16.mxu0 0
      %1053 = vmatpush1.bf16.msra.mxu0 0
      %1054 = vmatprep.subr.bf16.mxu0 0
      %1055 = vmatpush1.bf16.msra.mxu0 0
      %1056 = vmatprep.subr.bf16.mxu0 0
      %1057 = vmatpush1.bf16.msra.mxu0 0
      %1058 = vmatprep.subr.bf16.mxu0 0
      %1059 = vmatpush1.bf16.msra.mxu0 0
      %1060 = vmatprep.subr.bf16.mxu0 0
      %1061 = vmatpush1.bf16.msra.mxu0 0
      %1062 = vmatprep.subr.bf16.mxu0 0
      %1063 = vmatpush1.bf16.msra.mxu0 0
      %1064 = vmatprep.subr.bf16.mxu0 0
      %1065 = vmatpush1.bf16.msra.mxu0 0
      %1066 = vmatprep.mubr.bf16.mxu0 0
      %1067 = vmatmul.mubr.bf16.gmra.mrb[0].mxu0 %v987
      %v1068 = vpop.f32.mrb[0].mxu0
      %v1069 = vadd.f32 0.0, %v1068
      %v1070 = vpop.f32.mrb[0].mxu0
      %v1071 = vpop.f32.mrb[0].mxu0
      %v1072 = vadd.f32 0.0, %v1071
      %v1073 = vpop.f32.mrb[0].mxu0
      %1074 = vmatprep.mubr.bf16.mxu0 0
      %1075 = vmatmul.mubr.bf16.gmra.mrb[0].mxu0 %v990
      %v1076 = vpop.f32.mrb[0].mxu0
      %v1077 = vadd.f32 0.0, %v1076
      %v1078 = vpop.f32.mrb[0].mxu0
      %v1079 = vpop.f32.mrb[0].mxu0
      %v1080 = vadd.f32 0.0, %v1079
      %v1081 = vpop.f32.mrb[0].mxu0
      %1082 = vmatprep.mubr.bf16.mxu0 0
      %1083 = vmatmul.mubr.bf16.gmra.mrb[0].mxu0 %v993
      %v1084 = vpop.f32.mrb[0].mxu0
      %v1085 = vadd.f32 0.0, %v1084
      %v1086 = vpop.f32.mrb[0].mxu0
      %v1087 = vpop.f32.mrb[0].mxu0
      %v1088 = vadd.f32 0.0, %v1087
      %v1089 = vpop.f32.mrb[0].mxu0
      %1090 = vmatprep.mubr.bf16.mxu0 0
      %1091 = vmatmul.mubr.bf16.gmra.mrb[0].mxu0 %v996
      %v1092 = vpop.f32.mrb[0].mxu0
      %v1093 = vadd.f32 0.0, %v1092
      %v1094 = vpop.f32.mrb[0].mxu0
      %v1095 = vpop.f32.mrb[0].mxu0
      %v1096 = vadd.f32 0.0, %v1095
      %v1097 = vpop.f32.mrb[0].mxu0
      %1098 = vmatprep.mubr.bf16.mxu0 0
      %1099 = vmatmul.mubr.bf16.gmra.mrb[0].mxu0 %v999
      %v1100 = vpop.f32.mrb[0].mxu0
      %v1101 = vadd.f32 0.0, %v1100
      %v1102 = vpop.f32.mrb[0].mxu0
      %v1103 = vpop.f32.mrb[0].mxu0
      %v1104 = vadd.f32 0.0, %v1103
      %v1105 = vpop.f32.mrb[0].mxu0
      %1106 = vmatprep.mubr.bf16.mxu0 0
      %1107 = vmatmul.mubr.bf16.gmra.mrb[0].mxu0 %v1002
      %v1108 = vpop.f32.mrb[0].mxu0
      %v1109 = vadd.f32 0.0, %v1108
      %v1110 = vpop.f32.mrb[0].mxu0
      %v1111 = vpop.f32.mrb[0].mxu0
      %v1112 = vadd.f32 0.0, %v1111
      %v1113 = vpop.f32.mrb[0].mxu0
      %1114 = vmatprep.mubr.bf16.mxu0 0
      %1115 = vmatmul.mubr.bf16.gmra.mrb[0].mxu0 %v1005
      %v1116 = vpop.f32.mrb[0].mxu0
      %v1117 = vadd.f32 0.0, %v1116
      %v1118 = vpop.f32.mrb[0].mxu0
      %v1119 = vpop.f32.mrb[0].mxu0
      %v1120 = vadd.f32 0.0, %v1119
      %v1121 = vpop.f32.mrb[0].mxu0
      %1122 = vmatprep.mubr.bf16.mxu0 0
      %1123 = vmatmul.mubr.bf16.gmra.mrb[0].mxu0 %v1008
      %v1124 = vpop.f32.mrb[0].mxu0
      %v1125 = vadd.f32 0.0, %v1124
      %v1126 = vpop.f32.mrb[0].mxu0
      %v1127 = vpop.f32.mrb[0].mxu0
      %v1128 = vadd.f32 0.0, %v1127
      %v1129 = vpop.f32.mrb[0].mxu0
      %1130 = vmatprep.mubr.bf16.mxu0 0
      %1131 = vmatmul.mubr.bf16.gmra.mrb[0].mxu0 %v1011
      %v1132 = vpop.f32.mrb[0].mxu0
      %v1133 = vadd.f32 0.0, %v1132
      %v1134 = vpop.f32.mrb[0].mxu0
      %v1135 = vpop.f32.mrb[0].mxu0
      %v1136 = vadd.f32 0.0, %v1135
      %v1137 = vpop.f32.mrb[0].mxu0
      %1138 = vmatprep.mubr.bf16.mxu0 0
      %1139 = vmatmul.mubr.bf16.gmra.mrb[0].mxu0 %v1014
      %v1140 = vpop.f32.mrb[0].mxu0
      %v1141 = vadd.f32 0.0, %v1140
      %v1142 = vpop.f32.mrb[0].mxu0
      %v1143 = vpop.f32.mrb[0].mxu0
      %v1144 = vadd.f32 0.0, %v1143
      %v1145 = vpop.f32.mrb[0].mxu0
      %1146 = vmatprep.mubr.bf16.mxu0 0
      %1147 = vmatmul.mubr.bf16.gmra.mrb[0].mxu0 %v1017
      %v1148 = vpop.f32.mrb[0].mxu0
      %v1149 = vadd.f32 0.0, %v1148
      %v1150 = vpop.f32.mrb[0].mxu0
      %v1151 = vpop.f32.mrb[0].mxu0
      %v1152 = vadd.f32 0.0, %v1151
      %v1153 = vpop.f32.mrb[0].mxu0
      %1154 = vmatprep.mubr.bf16.mxu0 0
      %1155 = vmatmul.mubr.bf16.gmra.mrb[0].mxu0 %v1020
      %v1156 = vpop.f32.mrb[0].mxu0
      %v1157 = vadd.f32 0.0, %v1156
      %v1158 = vpop.f32.mrb[0].mxu0
      %v1159 = vpop.f32.mrb[0].mxu0
      %v1160 = vadd.f32 0.0, %v1159
      %v1161 = vpop.f32.mrb[0].mxu0
      %1162 = vmatprep.mubr.bf16.mxu0 0
      %1163 = vmatmul.mubr.bf16.gmra.mrb[0].mxu0 %v1023
      %v1164 = vpop.f32.mrb[0].mxu0
      %v1165 = vadd.f32 0.0, %v1164
      %v1166 = vpop.f32.mrb[0].mxu0
      %v1167 = vpop.f32.mrb[0].mxu0
      %v1168 = vadd.f32 0.0, %v1167
      %v1169 = vpop.f32.mrb[0].mxu0
      %1170 = vmatprep.mubr.bf16.mxu0 0
      %1171 = vmatmul.mubr.bf16.gmra.mrb[0].mxu0 %v1026
      %v1172 = vpop.f32.mrb[0].mxu0
      %v1173 = vadd.f32 0.0, %v1172
      %v1174 = vpop.f32.mrb[0].mxu0
      %v1175 = vpop.f32.mrb[0].mxu0
      %v1176 = vadd.f32 0.0, %v1175
      %v1177 = vpop.f32.mrb[0].mxu0
      %1178 = vmatprep.mubr.bf16.mxu0 0
      %1179 = vmatmul.mubr.bf16.gmra.mrb[0].mxu0 %v1029
      %v1180 = vpop.f32.mrb[0].mxu0
      %v1181 = vadd.f32 0.0, %v1180
      %v1182 = vpop.f32.mrb[0].mxu0
      %v1183 = vpop.f32.mrb[0].mxu0
      %v1184 = vadd.f32 0.0, %v1183
      %v1185 = vpop.f32.mrb[0].mxu0
      %1186 = vmatprep.mubr.bf16.mxu0 0
      %1187 = vmatmul.mubr.bf16.gmra.mrb[0].mxu0 %v1032
      %v1188 = vpop.f32.mrb[0].mxu0
      %v1189 = vadd.f32 0.0, %v1188
      %v1190 = vpop.f32.mrb[0].mxu0
      %v1191 = vpop.f32.mrb[0].mxu0
      %v1192 = vadd.f32 0.0, %v1191
      %v1193 = vpop.f32.mrb[0].mxu0
      %1194 = vdwg.mxu0
      %v1195 = vadd.f32 %v699, %v1069
      %v1196 = vadd.f32 %v702, %v1072
      %v1197 = vadd.f32 %v707, %v1077
      %v1198 = vadd.f32 %v710, %v1080
      %v1199 = vadd.f32 %v715, %v1085
      %v1200 = vadd.f32 %v718, %v1088
      %v1201 = vadd.f32 %v723, %v1093
      %v1202 = vadd.f32 %v726, %v1096
      %v1203 = vadd.f32 %v731, %v1101
      %v1204 = vadd.f32 %v734, %v1104
      %v1205 = vadd.f32 %v739, %v1109
      %v1206 = vadd.f32 %v742, %v1112
      %v1207 = vadd.f32 %v747, %v1117
      %v1208 = vadd.f32 %v750, %v1120
      %v1209 = vadd.f32 %v755, %v1125
      %v1210 = vadd.f32 %v758, %v1128
      %v1211 = vadd.f32 %v763, %v1133
      %v1212 = vadd.f32 %v766, %v1136
      %v1213 = vadd.f32 %v771, %v1141
      %v1214 = vadd.f32 %v774, %v1144
      %v1215 = vadd.f32 %v779, %v1149
      %v1216 = vadd.f32 %v782, %v1152
      %v1217 = vadd.f32 %v787, %v1157
      %v1218 = vadd.f32 %v790, %v1160
      %v1219 = vadd.f32 %v795, %v1165
      %v1220 = vadd.f32 %v798, %v1168
      %v1221 = vadd.f32 %v803, %v1173
      %v1222 = vadd.f32 %v806, %v1176
      %v1223 = vadd.f32 %v811, %v1181
      %v1224 = vadd.f32 %v814, %v1184
      %v1225 = vadd.f32 %v819, %v1189
      %v1226 = vadd.f32 %v822, %v1192
      %v1227 = vld [vmem:[%s2] sm:$0x1]
      %v1229 = vlaneseq
      %v1230 = vshrl.u32 %v1229, 7
      %v1231 = vsub.s32 0, %v1230
      %v1232 = vrot.slane %v1227, %v1231
      %v1234 = vadd.f32 %v1195, %v1232
      %v1235 = vadd.f32 %v1196, %v1232
      %v1236 = vadd.f32 %v1197, %v1232
      %v1237 = vadd.f32 %v1198, %v1232
      %v1238 = vadd.f32 %v1199, %v1232
      %v1239 = vadd.f32 %v1200, %v1232
      %v1240 = vadd.f32 %v1201, %v1232
      %v1241 = vadd.f32 %v1202, %v1232
      %v1242 = vadd.f32 %v1203, %v1232
      %v1243 = vadd.f32 %v1204, %v1232
      %v1244 = vadd.f32 %v1205, %v1232
      %v1245 = vadd.f32 %v1206, %v1232
      %v1246 = vadd.f32 %v1207, %v1232
      %v1247 = vadd.f32 %v1208, %v1232
      %v1248 = vadd.f32 %v1209, %v1232
      %v1249 = vadd.f32 %v1210, %v1232
      %v1250 = vadd.f32 %v1211, %v1232
      %v1251 = vadd.f32 %v1212, %v1232
      %v1252 = vadd.f32 %v1213, %v1232
      %v1253 = vadd.f32 %v1214, %v1232
      %v1254 = vadd.f32 %v1215, %v1232
      %v1255 = vadd.f32 %v1216, %v1232
      %v1256 = vadd.f32 %v1217, %v1232
      %v1257 = vadd.f32 %v1218, %v1232
      %v1258 = vadd.f32 %v1219, %v1232
      %v1259 = vadd.f32 %v1220, %v1232
      %v1260 = vadd.f32 %v1221, %v1232
      %v1261 = vadd.f32 %v1222, %v1232
      %v1262 = vadd.f32 %v1223, %v1232
      %v1263 = vadd.f32 %v1224, %v1232
      %v1264 = vadd.f32 %v1225, %v1232
      %v1265 = vadd.f32 %v1226, %v1232
      %vm1266 = vcmp.ge.f32.partialorder %v1234, 0.0
      %vm1267 = vcmp.ge.f32.partialorder %v1235, 0.0
      %vm1268 = vcmp.ge.f32.partialorder %v1236, 0.0
      %vm1269 = vcmp.ge.f32.partialorder %v1237, 0.0
      %vm1270 = vcmp.ge.f32.partialorder %v1238, 0.0
      %vm1271 = vcmp.ge.f32.partialorder %v1239, 0.0
      %vm1272 = vcmp.ge.f32.partialorder %v1240, 0.0
      %vm1273 = vcmp.ge.f32.partialorder %v1241, 0.0
      %vm1274 = vcmp.ge.f32.partialorder %v1242, 0.0
      %vm1275 = vcmp.ge.f32.partialorder %v1243, 0.0
      %vm1276 = vcmp.ge.f32.partialorder %v1244, 0.0
      %vm1277 = vcmp.ge.f32.partialorder %v1245, 0.0
      %vm1278 = vcmp.ge.f32.partialorder %v1246, 0.0
      %vm1279 = vcmp.ge.f32.partialorder %v1247, 0.0
      %vm1280 = vcmp.ge.f32.partialorder %v1248, 0.0
      %vm1281 = vcmp.ge.f32.partialorder %v1249, 0.0
      %vm1282 = vcmp.ge.f32.partialorder %v1250, 0.0
      %vm1283 = vcmp.ge.f32.partialorder %v1251, 0.0
      %vm1284 = vcmp.ge.f32.partialorder %v1252, 0.0
      %vm1285 = vcmp.ge.f32.partialorder %v1253, 0.0
      %vm1286 = vcmp.ge.f32.partialorder %v1254, 0.0
      %vm1287 = vcmp.ge.f32.partialorder %v1255, 0.0
      %vm1288 = vcmp.ge.f32.partialorder %v1256, 0.0
      %vm1289 = vcmp.ge.f32.partialorder %v1257, 0.0
      %vm1290 = vcmp.ge.f32.partialorder %v1258, 0.0
      %vm1291 = vcmp.ge.f32.partialorder %v1259, 0.0
      %vm1292 = vcmp.ge.f32.partialorder %v1260, 0.0
      %vm1293 = vcmp.ge.f32.partialorder %v1261, 0.0
      %vm1294 = vcmp.ge.f32.partialorder %v1262, 0.0
      %vm1295 = vcmp.ge.f32.partialorder %v1263, 0.0
      %vm1296 = vcmp.ge.f32.partialorder %v1264, 0.0
      %vm1297 = vcmp.ge.f32.partialorder %v1265, 0.0
      %v1298 = vmul.f32 %v1234, 0.01
      %v1299 = vmul.f32 %v1235, 0.01
      %v1300 = vmul.f32 %v1236, 0.01
      %v1301 = vmul.f32 %v1237, 0.01
      %v1302 = vmul.f32 %v1238, 0.01
      %v1303 = vmul.f32 %v1239, 0.01
      %v1304 = vmul.f32 %v1240, 0.01
      %v1305 = vmul.f32 %v1241, 0.01
      %v1306 = vmul.f32 %v1242, 0.01
      %v1307 = vmul.f32 %v1243, 0.01
      %v1308 = vmul.f32 %v1244, 0.01
      %v1309 = vmul.f32 %v1245, 0.01
      %v1310 = vmul.f32 %v1246, 0.01
      %v1311 = vmul.f32 %v1247, 0.01
      %v1312 = vmul.f32 %v1248, 0.01
      %v1313 = vmul.f32 %v1249, 0.01
      %v1314 = vmul.f32 %v1250, 0.01
      %v1315 = vmul.f32 %v1251, 0.01
      %v1316 = vmul.f32 %v1252, 0.01
      %v1317 = vmul.f32 %v1253, 0.01
      %v1318 = vmul.f32 %v1254, 0.01
      %v1319 = vmul.f32 %v1255, 0.01
      %v1320 = vmul.f32 %v1256, 0.01
      %v1321 = vmul.f32 %v1257, 0.01
      %v1322 = vmul.f32 %v1258, 0.01
      %v1323 = vmul.f32 %v1259, 0.01
      %v1324 = vmul.f32 %v1260, 0.01
      %v1325 = vmul.f32 %v1261, 0.01
      %v1326 = vmul.f32 %v1262, 0.01
      %v1327 = vmul.f32 %v1263, 0.01
      %v1328 = vmul.f32 %v1264, 0.01
      %v1329 = vmul.f32 %v1265, 0.01
      %v1330 = vsel %vm1266, %v1234, %v1298
      %v1331 = vsel %vm1267, %v1235, %v1299
      %v1332 = vsel %vm1268, %v1236, %v1300
      %v1333 = vsel %vm1269, %v1237, %v1301
      %v1334 = vsel %vm1270, %v1238, %v1302
      %v1335 = vsel %vm1271, %v1239, %v1303
      %v1336 = vsel %vm1272, %v1240, %v1304
      %v1337 = vsel %vm1273, %v1241, %v1305
      %v1338 = vsel %vm1274, %v1242, %v1306
      %v1339 = vsel %vm1275, %v1243, %v1307
      %v1340 = vsel %vm1276, %v1244, %v1308
      %v1341 = vsel %vm1277, %v1245, %v1309
      %v1342 = vsel %vm1278, %v1246, %v1310
      %v1343 = vsel %vm1279, %v1247, %v1311
      %v1344 = vsel %vm1280, %v1248, %v1312
      %v1345 = vsel %vm1281, %v1249, %v1313
      %v1346 = vsel %vm1282, %v1250, %v1314
      %v1347 = vsel %vm1283, %v1251, %v1315
      %v1348 = vsel %vm1284, %v1252, %v1316
      %v1349 = vsel %vm1285, %v1253, %v1317
      %v1350 = vsel %vm1286, %v1254, %v1318
      %v1351 = vsel %vm1287, %v1255, %v1319
      %v1352 = vsel %vm1288, %v1256, %v1320
      %v1353 = vsel %vm1289, %v1257, %v1321
      %v1354 = vsel %vm1290, %v1258, %v1322
      %v1355 = vsel %vm1291, %v1259, %v1323
      %v1356 = vsel %vm1292, %v1260, %v1324
      %v1357 = vsel %vm1293, %v1261, %v1325
      %v1358 = vsel %vm1294, %v1262, %v1326
      %v1359 = vsel %vm1295, %v1263, %v1327
      %v1360 = vsel %vm1296, %v1264, %v1328
      %v1361 = vsel %vm1297, %v1265, %v1329
      %v1362 = vpack.c.bf16 %v1331, %v1330
      %v1363 = vpack.c.bf16 %v1333, %v1332
      %v1364 = vpack.c.bf16 %v1335, %v1334
      %v1365 = vpack.c.bf16 %v1337, %v1336
      %v1366 = vpack.c.bf16 %v1339, %v1338
      %v1367 = vpack.c.bf16 %v1341, %v1340
      %v1368 = vpack.c.bf16 %v1343, %v1342
      %v1369 = vpack.c.bf16 %v1345, %v1344
      %v1370 = vpack.c.bf16 %v1347, %v1346
      %v1371 = vpack.c.bf16 %v1349, %v1348
      %v1372 = vpack.c.bf16 %v1351, %v1350
      %v1373 = vpack.c.bf16 %v1353, %v1352
      %v1374 = vpack.c.bf16 %v1355, %v1354
      %v1375 = vpack.c.bf16 %v1357, %v1356
      %v1376 = vpack.c.bf16 %v1359, %v1358
      %v1377 = vpack.c.bf16 %v1361, %v1360
      %v1378 = vld [vmem:[%s3] sm:$0xf]
      %v1379 = vld [vmem:[%s3 + $0x4] sm:$0xf]
      %v1380 = vld [vmem:[%s3 + $0x8] sm:$0xf]
      %v1381 = vld [vmem:[%s3 + $0xc] sm:$0xf]
      %v1386 = vunpack.c.l.b16 %v1378
      %v1387 = vunpack.c.l.b16 %v1379
      %v1388 = vunpack.c.l.b16 %v1380
      %v1389 = vunpack.c.l.b16 %v1381
      %v1390 = vpack.c.b16 %v1387, %v1386
      %v1391 = vpack.c.b16 %v1389, %v1388
      %vm1394 = vcmask 261120
      %v1396 = vsel %vm1394, %v1362, 0
      %v1399 = vsel %vm1394, %v1363, 0
      %v1402 = vsel %vm1394, %v1364, 0
      %v1405 = vsel %vm1394, %v1365, 0
      %v1408 = vsel %vm1394, %v1366, 0
      %v1411 = vsel %vm1394, %v1367, 0
      %v1414 = vsel %vm1394, %v1368, 0
      %v1417 = vsel %vm1394, %v1369, 0
      %v1420 = vsel %vm1394, %v1370, 0
      %v1423 = vsel %vm1394, %v1371, 0
      %v1426 = vsel %vm1394, %v1372, 0
      %v1429 = vsel %vm1394, %v1373, 0
      %v1432 = vsel %vm1394, %v1374, 0
      %v1435 = vsel %vm1394, %v1375, 0
      %v1438 = vsel %vm1394, %v1376, 0
      %v1441 = vsel %vm1394, %v1377, 0
      %1443 = vmatprep.subr.bf16.mxu0 0
      %1444 = vmatpush1.bf16.msra.mxu0 %v1390
      %1445 = vmatprep.subr.bf16.mxu0 0
      %1446 = vmatpush1.bf16.msra.mxu0 %v1391
      %1447 = vmatprep.subr.bf16.mxu0 0
      %1448 = vmatpush1.bf16.msra.mxu0 0
      %1449 = vmatprep.subr.bf16.mxu0 0
      %1450 = vmatpush1.bf16.msra.mxu0 0
      %1451 = vmatprep.subr.bf16.mxu0 0
      %1452 = vmatpush1.bf16.msra.mxu0 0
      %1453 = vmatprep.subr.bf16.mxu0 0
      %1454 = vmatpush1.bf16.msra.mxu0 0
      %1455 = vmatprep.subr.bf16.mxu0 0
      %1456 = vmatpush1.bf16.msra.mxu0 0
      %1457 = vmatprep.subr.bf16.mxu0 0
      %1458 = vmatpush1.bf16.msra.mxu0 0
      %1459 = vmatprep.subr.bf16.mxu0 0
      %1460 = vmatpush1.bf16.msra.mxu0 0
      %1461 = vmatprep.subr.bf16.mxu0 0
      %1462 = vmatpush1.bf16.msra.mxu0 0
      %1463 = vmatprep.subr.bf16.mxu0 0
      %1464 = vmatpush1.bf16.msra.mxu0 0
      %1465 = vmatprep.subr.bf16.mxu0 0
      %1466 = vmatpush1.bf16.msra.mxu0 0
      %1467 = vmatprep.subr.bf16.mxu0 0
      %1468 = vmatpush1.bf16.msra.mxu0 0
      %1469 = vmatprep.subr.bf16.mxu0 0
      %1470 = vmatpush1.bf16.msra.mxu0 0
      %1471 = vmatprep.subr.bf16.mxu0 0
      %1472 = vmatpush1.bf16.msra.mxu0 0
      %1473 = vmatprep.subr.bf16.mxu0 0
      %1474 = vmatpush1.bf16.msra.mxu0 0
      %1475 = vmatprep.mubr.bf16.mxu0 0
      %1476 = vmatmul.mubr.bf16.gmra.mrb[0].mxu0 %v1396
      %v1477 = vpop.f32.mrb[0].mxu0
      %v1478 = vadd.f32 0.0, %v1477
      %v1479 = vpop.f32.mrb[0].mxu0
      %v1480 = vpop.f32.mrb[0].mxu0
      %v1481 = vadd.f32 0.0, %v1480
      %v1482 = vpop.f32.mrb[0].mxu0
      %1483 = vmatprep.mubr.bf16.mxu0 0
      %1484 = vmatmul.mubr.bf16.gmra.mrb[0].mxu0 %v1399
      %v1485 = vpop.f32.mrb[0].mxu0
      %v1486 = vadd.f32 0.0, %v1485
      %v1487 = vpop.f32.mrb[0].mxu0
      %v1488 = vpop.f32.mrb[0].mxu0
      %v1489 = vadd.f32 0.0, %v1488
      %v1490 = vpop.f32.mrb[0].mxu0
      %1491 = vmatprep.mubr.bf16.mxu0 0
      %1492 = vmatmul.mubr.bf16.gmra.mrb[0].mxu0 %v1402
      %v1493 = vpop.f32.mrb[0].mxu0
      %v1494 = vadd.f32 0.0, %v1493
      %v1495 = vpop.f32.mrb[0].mxu0
      %v1496 = vpop.f32.mrb[0].mxu0
      %v1497 = vadd.f32 0.0, %v1496
      %v1498 = vpop.f32.mrb[0].mxu0
      %1499 = vmatprep.mubr.bf16.mxu0 0
      %1500 = vmatmul.mubr.bf16.gmra.mrb[0].mxu0 %v1405
      %v1501 = vpop.f32.mrb[0].mxu0
      %v1502 = vadd.f32 0.0, %v1501
      %v1503 = vpop.f32.mrb[0].mxu0
      %v1504 = vpop.f32.mrb[0].mxu0
      %v1505 = vadd.f32 0.0, %v1504
      %v1506 = vpop.f32.mrb[0].mxu0
      %1507 = vmatprep.mubr.bf16.mxu0 0
      %1508 = vmatmul.mubr.bf16.gmra.mrb[0].mxu0 %v1408
      %v1509 = vpop.f32.mrb[0].mxu0
      %v1510 = vadd.f32 0.0, %v1509
      %v1511 = vpop.f32.mrb[0].mxu0
      %v1512 = vpop.f32.mrb[0].mxu0
      %v1513 = vadd.f32 0.0, %v1512
      %v1514 = vpop.f32.mrb[0].mxu0
      %1515 = vmatprep.mubr.bf16.mxu0 0
      %1516 = vmatmul.mubr.bf16.gmra.mrb[0].mxu0 %v1411
      %v1517 = vpop.f32.mrb[0].mxu0
      %v1518 = vadd.f32 0.0, %v1517
      %v1519 = vpop.f32.mrb[0].mxu0
      %v1520 = vpop.f32.mrb[0].mxu0
      %v1521 = vadd.f32 0.0, %v1520
      %v1522 = vpop.f32.mrb[0].mxu0
      %1523 = vmatprep.mubr.bf16.mxu0 0
      %1524 = vmatmul.mubr.bf16.gmra.mrb[0].mxu0 %v1414
      %v1525 = vpop.f32.mrb[0].mxu0
      %v1526 = vadd.f32 0.0, %v1525
      %v1527 = vpop.f32.mrb[0].mxu0
      %v1528 = vpop.f32.mrb[0].mxu0
      %v1529 = vadd.f32 0.0, %v1528
      %v1530 = vpop.f32.mrb[0].mxu0
      %1531 = vmatprep.mubr.bf16.mxu0 0
      %1532 = vmatmul.mubr.bf16.gmra.mrb[0].mxu0 %v1417
      %v1533 = vpop.f32.mrb[0].mxu0
      %v1534 = vadd.f32 0.0, %v1533
      %v1535 = vpop.f32.mrb[0].mxu0
      %v1536 = vpop.f32.mrb[0].mxu0
      %v1537 = vadd.f32 0.0, %v1536
      %v1538 = vpop.f32.mrb[0].mxu0
      %1539 = vmatprep.mubr.bf16.mxu0 0
      %1540 = vmatmul.mubr.bf16.gmra.mrb[0].mxu0 %v1420
      %v1541 = vpop.f32.mrb[0].mxu0
      %v1542 = vadd.f32 0.0, %v1541
      %v1543 = vpop.f32.mrb[0].mxu0
      %v1544 = vpop.f32.mrb[0].mxu0
      %v1545 = vadd.f32 0.0, %v1544
      %v1546 = vpop.f32.mrb[0].mxu0
      %1547 = vmatprep.mubr.bf16.mxu0 0
      %1548 = vmatmul.mubr.bf16.gmra.mrb[0].mxu0 %v1423
      %v1549 = vpop.f32.mrb[0].mxu0
      %v1550 = vadd.f32 0.0, %v1549
      %v1551 = vpop.f32.mrb[0].mxu0
      %v1552 = vpop.f32.mrb[0].mxu0
      %v1553 = vadd.f32 0.0, %v1552
      %v1554 = vpop.f32.mrb[0].mxu0
      %1555 = vmatprep.mubr.bf16.mxu0 0
      %1556 = vmatmul.mubr.bf16.gmra.mrb[0].mxu0 %v1426
      %v1557 = vpop.f32.mrb[0].mxu0
      %v1558 = vadd.f32 0.0, %v1557
      %v1559 = vpop.f32.mrb[0].mxu0
      %v1560 = vpop.f32.mrb[0].mxu0
      %v1561 = vadd.f32 0.0, %v1560
      %v1562 = vpop.f32.mrb[0].mxu0
      %1563 = vmatprep.mubr.bf16.mxu0 0
      %1564 = vmatmul.mubr.bf16.gmra.mrb[0].mxu0 %v1429
      %v1565 = vpop.f32.mrb[0].mxu0
      %v1566 = vadd.f32 0.0, %v1565
      %v1567 = vpop.f32.mrb[0].mxu0
      %v1568 = vpop.f32.mrb[0].mxu0
      %v1569 = vadd.f32 0.0, %v1568
      %v1570 = vpop.f32.mrb[0].mxu0
      %1571 = vmatprep.mubr.bf16.mxu0 0
      %1572 = vmatmul.mubr.bf16.gmra.mrb[0].mxu0 %v1432
      %v1573 = vpop.f32.mrb[0].mxu0
      %v1574 = vadd.f32 0.0, %v1573
      %v1575 = vpop.f32.mrb[0].mxu0
      %v1576 = vpop.f32.mrb[0].mxu0
      %v1577 = vadd.f32 0.0, %v1576
      %v1578 = vpop.f32.mrb[0].mxu0
      %1579 = vmatprep.mubr.bf16.mxu0 0
      %1580 = vmatmul.mubr.bf16.gmra.mrb[0].mxu0 %v1435
      %v1581 = vpop.f32.mrb[0].mxu0
      %v1582 = vadd.f32 0.0, %v1581
      %v1583 = vpop.f32.mrb[0].mxu0
      %v1584 = vpop.f32.mrb[0].mxu0
      %v1585 = vadd.f32 0.0, %v1584
      %v1586 = vpop.f32.mrb[0].mxu0
      %1587 = vmatprep.mubr.bf16.mxu0 0
      %1588 = vmatmul.mubr.bf16.gmra.mrb[0].mxu0 %v1438
      %v1589 = vpop.f32.mrb[0].mxu0
      %v1590 = vadd.f32 0.0, %v1589
      %v1591 = vpop.f32.mrb[0].mxu0
      %v1592 = vpop.f32.mrb[0].mxu0
      %v1593 = vadd.f32 0.0, %v1592
      %v1594 = vpop.f32.mrb[0].mxu0
      %1595 = vmatprep.mubr.bf16.mxu0 0
      %1596 = vmatmul.mubr.bf16.gmra.mrb[0].mxu0 %v1441
      %v1597 = vpop.f32.mrb[0].mxu0
      %v1598 = vadd.f32 0.0, %v1597
      %v1599 = vpop.f32.mrb[0].mxu0
      %v1600 = vpop.f32.mrb[0].mxu0
      %v1601 = vadd.f32 0.0, %v1600
      %v1602 = vpop.f32.mrb[0].mxu0
      %1603 = vdwg.mxu0
      %v1604 = vpack.c.bf16 %v1481, %v1478
      %v1605 = vpack.c.bf16 %v1489, %v1486
      %v1606 = vpack.c.bf16 %v1497, %v1494
      %v1607 = vpack.c.bf16 %v1505, %v1502
      %v1608 = vpack.c.bf16 %v1513, %v1510
      %v1609 = vpack.c.bf16 %v1521, %v1518
      %v1610 = vpack.c.bf16 %v1529, %v1526
      %v1611 = vpack.c.bf16 %v1537, %v1534
      %v1612 = vpack.c.bf16 %v1545, %v1542
      %v1613 = vpack.c.bf16 %v1553, %v1550
      %v1614 = vpack.c.bf16 %v1561, %v1558
      %v1615 = vpack.c.bf16 %v1569, %v1566
      %v1616 = vpack.c.bf16 %v1577, %v1574
      %v1617 = vpack.c.bf16 %v1585, %v1582
      %v1618 = vpack.c.bf16 %v1593, %v1590
      %v1619 = vpack.c.bf16 %v1601, %v1598
      %v1636 = vunpack.c.l.b16 %v1604
      %v1637 = vunpack.c.h.b16 %v1604
      %v1638 = vunpack.c.l.b16 %v1605
      %v1639 = vunpack.c.h.b16 %v1605
      %v1640 = vunpack.c.l.b16 %v1606
      %v1641 = vunpack.c.h.b16 %v1606
      %v1642 = vunpack.c.l.b16 %v1607
      %v1643 = vunpack.c.h.b16 %v1607
      %v1644 = vunpack.c.l.b16 %v1608
      %v1645 = vunpack.c.h.b16 %v1608
      %v1646 = vunpack.c.l.b16 %v1609
      %v1647 = vunpack.c.h.b16 %v1609
      %v1648 = vunpack.c.l.b16 %v1610
      %v1649 = vunpack.c.h.b16 %v1610
      %v1650 = vunpack.c.l.b16 %v1611
      %v1651 = vunpack.c.h.b16 %v1611
      %v1652 = vunpack.c.l.b16 %v1612
      %v1653 = vunpack.c.h.b16 %v1612
      %v1654 = vunpack.c.l.b16 %v1613
      %v1655 = vunpack.c.h.b16 %v1613
      %v1656 = vunpack.c.l.b16 %v1614
      %v1657 = vunpack.c.h.b16 %v1614
      %v1658 = vunpack.c.l.b16 %v1615
      %v1659 = vunpack.c.h.b16 %v1615
      %v1660 = vunpack.c.l.b16 %v1616
      %v1661 = vunpack.c.h.b16 %v1616
      %v1662 = vunpack.c.l.b16 %v1617
      %v1663 = vunpack.c.h.b16 %v1617
      %v1664 = vunpack.c.l.b16 %v1618
      %v1665 = vunpack.c.h.b16 %v1618
      %v1666 = vunpack.c.l.b16 %v1619
      %v1667 = vunpack.c.h.b16 %v1619
      %v1668 = vpack.c.b16 %v1636, %v1636
      %v1669 = vpack.c.b16 %v1637, %v1637
      %v1670 = vpack.c.b16 %v1638, %v1638
      %v1671 = vpack.c.b16 %v1639, %v1639
      %v1672 = vpack.c.b16 %v1640, %v1640
      %v1673 = vpack.c.b16 %v1641, %v1641
      %v1674 = vpack.c.b16 %v1642, %v1642
      %v1675 = vpack.c.b16 %v1643, %v1643
      %v1676 = vpack.c.b16 %v1644, %v1644
      %v1677 = vpack.c.b16 %v1645, %v1645
      %v1678 = vpack.c.b16 %v1646, %v1646
      %v1679 = vpack.c.b16 %v1647, %v1647
      %v1680 = vpack.c.b16 %v1648, %v1648
      %v1681 = vpack.c.b16 %v1649, %v1649
      %v1682 = vpack.c.b16 %v1650, %v1650
      %v1683 = vpack.c.b16 %v1651, %v1651
      %v1684 = vpack.c.b16 %v1652, %v1652
      %v1685 = vpack.c.b16 %v1653, %v1653
      %v1686 = vpack.c.b16 %v1654, %v1654
      %v1687 = vpack.c.b16 %v1655, %v1655
      %v1688 = vpack.c.b16 %v1656, %v1656
      %v1689 = vpack.c.b16 %v1657, %v1657
      %v1690 = vpack.c.b16 %v1658, %v1658
      %v1691 = vpack.c.b16 %v1659, %v1659
      %v1692 = vpack.c.b16 %v1660, %v1660
      %v1693 = vpack.c.b16 %v1661, %v1661
      %v1694 = vpack.c.b16 %v1662, %v1662
      %v1695 = vpack.c.b16 %v1663, %v1663
      %v1696 = vpack.c.b16 %v1664, %v1664
      %v1697 = vpack.c.b16 %v1665, %v1665
      %v1698 = vpack.c.b16 %v1666, %v1666
      %v1699 = vpack.c.b16 %v1667, %v1667
      %vm1732 = vcmask 125952
      %1733 = vst.msk [vmem:[%s233] sm:$0xf] %vm1732, %v1668
      %1734 = vst.msk [vmem:[%s233 + $0x4] sm:$0xf] %vm1732, %v1669
      %1735 = vst.msk [vmem:[%s233 + $0x8] sm:$0xf] %vm1732, %v1670
      %1736 = vst.msk [vmem:[%s233 + $0xc] sm:$0xf] %vm1732, %v1671
      %1737 = vst.msk [vmem:[%s233 + $0x10] sm:$0xf] %vm1732, %v1672
      %1738 = vst.msk [vmem:[%s233 + $0x14] sm:$0xf] %vm1732, %v1673
      %1739 = vst.msk [vmem:[%s233 + $0x18] sm:$0xf] %vm1732, %v1674
      %1740 = vst.msk [vmem:[%s233 + $0x1c] sm:$0xf] %vm1732, %v1675
      %1741 = vst.msk [vmem:[%s233 + $0x20] sm:$0xf] %vm1732, %v1676
      %1742 = vst.msk [vmem:[%s233 + $0x24] sm:$0xf] %vm1732, %v1677
      %1743 = vst.msk [vmem:[%s233 + $0x28] sm:$0xf] %vm1732, %v1678
      %1744 = vst.msk [vmem:[%s233 + $0x2c] sm:$0xf] %vm1732, %v1679
      %1745 = vst.msk [vmem:[%s233 + $0x30] sm:$0xf] %vm1732, %v1680
      %1746 = vst.msk [vmem:[%s233 + $0x34] sm:$0xf] %vm1732, %v1681
      %1747 = vst.msk [vmem:[%s233 + $0x38] sm:$0xf] %vm1732, %v1682
      %1748 = vst.msk [vmem:[%s233 + $0x3c] sm:$0xf] %vm1732, %v1683
      %1749 = vst.msk [vmem:[%s233 + $0x40] sm:$0xf] %vm1732, %v1684
      %1750 = vst.msk [vmem:[%s233 + $0x44] sm:$0xf] %vm1732, %v1685
      %1751 = vst.msk [vmem:[%s233 + $0x48] sm:$0xf] %vm1732, %v1686
      %1752 = vst.msk [vmem:[%s233 + $0x4c] sm:$0xf] %vm1732, %v1687
      %1753 = vst.msk [vmem:[%s233 + $0x50] sm:$0xf] %vm1732, %v1688
      %1754 = vst.msk [vmem:[%s233 + $0x54] sm:$0xf] %vm1732, %v1689
      %1755 = vst.msk [vmem:[%s233 + $0x58] sm:$0xf] %vm1732, %v1690
      %1756 = vst.msk [vmem:[%s233 + $0x5c] sm:$0xf] %vm1732, %v1691
      %1757 = vst.msk [vmem:[%s233 + $0x60] sm:$0xf] %vm1732, %v1692
      %1758 = vst.msk [vmem:[%s233 + $0x64] sm:$0xf] %vm1732, %v1693
      %1759 = vst.msk [vmem:[%s233 + $0x68] sm:$0xf] %vm1732, %v1694
      %1760 = vst.msk [vmem:[%s233 + $0x6c] sm:$0xf] %vm1732, %v1695
      %1761 = vst.msk [vmem:[%s233 + $0x70] sm:$0xf] %vm1732, %v1696
      %1762 = vst.msk [vmem:[%s233 + $0x74] sm:$0xf] %vm1732, %v1697
      %1763 = vst.msk [vmem:[%s233 + $0x78] sm:$0xf] %vm1732, %v1698
      %1764 = vst.msk [vmem:[%s233 + $0x7c] sm:$0xf] %vm1732, %v1699
      %p1765 = scmp.lt.s32.totalorder %s19, 1
      %s1766 = scalar_select %p1765, %s19, 1
      %p1767 = scmp.lt.s32.totalorder %s20, 0
      %s1768 = scalar_select %p1767, %s20, 0
      %s1769 = smul.addr %s1768, 32
      %s1770 = smul.addr %s1766, 32
      %s1771 = sadd.s32 %s1769, %s1770
      %s1772 = smul.addr %s1771, 4
      %s1773 = scalar_lea.vmem %s4, %s1772
      // Predicated region
      $region37: #{sffi_forward.40} parent=35 // pred_check
        %p1774 = pneg %p138
      $region38: #{sffi_forward.40} parent=35 // pred_check_branch
        %1776 = sbr.rel (%p1774) target = $region40
      $region39: #{sffi_forward.40} parent=35 // pred_region
        _
      $region40: #{sffi_forward.40} parent=35 // pred_fallthru
        _
    $region36: #{sffi_forward.40} parent=5 // pred_fallthru
      _
    %p1777 = scmp.le.s32.totalorder 2, %s10
    // Predicated region
    $region41: #{sffi_forward.40} parent=5 // pred_check
      %p1778 = pneg %p1777
    $region42: #{sffi_forward.40} parent=5 // pred_check_branch
      %1780 = sbr.rel (%p1778) target = $region44
    $region43: #{sffi_forward.40} parent=5 // pred_region
      %s1781 = ssub.s32 %s10, 2
      // Predicated region
      $region45: #{sffi_forward.40} parent=43 // pred_check
        %p1782 = pneg %p144
      $region46: #{sffi_forward.40} parent=43 // pred_check_branch
        %1784 = sbr.rel (%p1782) target = $region48
      $region47: #{sffi_forward.40} parent=43 // pred_region
        %p1785 = scmp.lt.s32.totalorder %s21, 1
        %s1786 = scalar_select %p1785, %s21, 1
        %p1787 = scmp.lt.s32.totalorder %s22, 0
        %s1788 = scalar_select %p1787, %s22, 0
        %s1789 = smul.addr %s1788, 32
        %s1790 = smul.addr %s1786, 32
        %s1791 = sadd.s32 %s1789, %s1790
        %s1792 = smul.addr %s1791, 4
        %s1793 = scalar_lea.vmem %s4, %s1792
      $region48: #{sffi_forward.40} parent=43 // pred_fallthru
        _
    $region44: #{sffi_forward.40} parent=5 // pred_fallthru
      _
  $region6: #{sffi_forward.40} parent=0 // loop_footer
    %s14 = sadd.s32 1, %s10
  $region7: #{sffi_forward.40} parent=0 // loop_footer_branch
    %9 = sbr.rel target = $region3
  $region8: #{sffi_forward.40} parent=0 // loop_exit
    _

// kernel: sffi_forward.73
$region0: #{sffi_forward.73}
  #allocation0 [shape = 'u32[]', space=smem, size = 0x4, offset = 0x4, fixed_abs, tag = 'smem constant byte address 0x4 - core index']
  #allocation1 [shape = 'u32[144,128]{1,0:T(1,128)}', space=vmem, size = 0x12000, scoped, tag = 'internal scratch']
  %s0 = inlined_call_operand.vmem [shape: bf16[2,1,288,96], index: 0, kind: input, shape index: {}]
  %s1 = inlined_call_operand.vmem [shape: bf16[3,96,8], index: 1, kind: input, shape index: {}]
  %s2 = inlined_call_operand.vmem [shape: f32[1,8], index: 2, kind: input, shape index: {}]
  %s3 = inlined_call_operand.vmem [shape: bf16[8,1], index: 3, kind: input, shape index: {}]
  %s4 = inlined_call_operand.vmem [shape: f32[2,1,256,1], index: 4, kind: output, shape index: {}]
  %s5 = sld [smem:[#allocation0]]
  $region49: #{sffi_forward.73} parent=0
    _
  %s7 = ssub.s32 1, %s5
  %s8 = scalar_select 0, %s7, %s5
  loop: start=0, step=1, limit=4
  $region2: #{sffi_forward.73} parent=0 // loop_pre_header
    _
  $region3: #{sffi_forward.73} parent=0 // loop_header
    %s10 = sphi 0, %s14
    %p11 = scmp.ge.s32.totalorder %s10, 4
    %s17 = sphi 0, %s29
    %s18 = sphi 0, %s25
    %s19 = sphi 0, %s17
    %s20 = sphi 0, %s18
    %s21 = sphi 0, %s19
    %s22 = sphi 0, %s20
    %s34 = sphi 0, %s36
    %s37 = sphi 0, %s34
    %s38 = sphi 0, %s37
    %s54 = sphi 0, %s38
    %s58 = sphi 0, %s58
    %s60 = sphi 0, %s58
    %s61 = sphi 0, %s60
    %s75 = sphi 0, %s61
    %s79 = sphi 0, %s79
    %s81 = sphi 0, %s79
    %s82 = sphi 0, %s81
    %s96 = sphi 0, %s82
    %s100 = sphi 0, %s100
    %s102 = sphi 0, %s100
    %s103 = sphi 0, %s102
    %s117 = sphi 0, %s103
    %s125 = sphi 0, %s127
    %s128 = sphi 0, %s125
    %s129 = sphi 0, %s128
    %s145 = sphi 0, %s129
  $region4: #{sffi_forward.73} parent=0 // loop_header_branch
    %13 = sbr.rel (%p11) target = $region8
  $region5: #{sffi_forward.73} parent=0 // loop_body
    %s15 = ssub.s32 %s10, 1
    %s16 = ssub.s32 %s10, 2
    %s23 = sadd.s32 1, %s18
    %p24 = scmp.ge.s32.totalorder %s23, 1
    %s25 = scalar_select %p24, 0, %s23
    %s26 = sadd.s32 1, %s17
    %s27 = scalar_select %p24, %s26, %s17
    %p28 = scmp.ge.s32.totalorder %s27, 2
    %s29 = scalar_select %p28, 0, %s27
    %s30 = ssub.s32 %s17, %s29
    %s31 = ssub.s32 %s18, %s25
    %s32 = sor.u32 %s30, %s31
    %p33 = scmp.eq.s32.totalorder %s32, 0
    %s35 = sadd.s32 %s34, 1
    %s36 = scalar_select %p33, %s34, %s35
    %p39 = pneg %p33
    %p40 = scmp.eq.s32.totalorder %s10, 1
    %p41 = por %p39, %p40
    %p42 = scmp.ne.s32.totalorder %s34, %s37
    %p43 = scmp.eq.s32.totalorder %s10, 0
    %p44 = por %p42, %p43
    %p45 = scmp.ne.s32.totalorder %s34, %s37
    %p46 = scmp.eq.s32.totalorder %s15, 1
    %p47 = por %p45, %p46
    %p48 = scmp.ne.s32.totalorder %s37, %s38
    %p49 = scmp.eq.s32.totalorder %s15, 0
    %p50 = por %p48, %p49
    %p51 = scmp.ne.s32.totalorder %s37, %s38
    %p52 = scmp.eq.s32.totalorder %s16, 1
    %p53 = por %p51, %p52
    %p55 = scmp.ne.s32.totalorder %s38, %s54
    %p56 = scmp.eq.s32.totalorder %s16, 0
    %p57 = por %p55, %p56
    %s59 = sadd.s32 %s58, 1
    %p62 = scmp.eq.s32.totalorder %s10, 1
    %p63 = scmp.ne.s32.totalorder %s58, %s60
    %p64 = scmp.eq.s32.totalorder %s10, 0
    %p65 = por %p63, %p64
    %p66 = scmp.ne.s32.totalorder %s58, %s60
    %p67 = scmp.eq.s32.totalorder %s15, 1
    %p68 = por %p66, %p67
    %p69 = scmp.ne.s32.totalorder %s60, %s61
    %p70 = scmp.eq.s32.totalorder %s15, 0
    %p71 = por %p69, %p70
    %p72 = scmp.ne.s32.totalorder %s60, %s61
    %p73 = scmp.eq.s32.totalorder %s16, 1
    %p74 = por %p72, %p73
    %p76 = scmp.ne.s32.totalorder %s61, %s75
    %p77 = scmp.eq.s32.totalorder %s16, 0
    %p78 = por %p76, %p77
    %s80 = sadd.s32 %s79, 1
    %p83 = scmp.eq.s32.totalorder %s10, 1
    %p84 = scmp.ne.s32.totalorder %s79, %s81
    %p85 = scmp.eq.s32.totalorder %s10, 0
    %p86 = por %p84, %p85
    %p87 = scmp.ne.s32.totalorder %s79, %s81
    %p88 = scmp.eq.s32.totalorder %s15, 1
    %p89 = por %p87, %p88
    %p90 = scmp.ne.s32.totalorder %s81, %s82
    %p91 = scmp.eq.s32.totalorder %s15, 0
    %p92 = por %p90, %p91
    %p93 = scmp.ne.s32.totalorder %s81, %s82
    %p94 = scmp.eq.s32.totalorder %s16, 1
    %p95 = por %p93, %p94
    %p97 = scmp.ne.s32.totalorder %s82, %s96
    %p98 = scmp.eq.s32.totalorder %s16, 0
    %p99 = por %p97, %p98
    %s101 = sadd.s32 %s100, 1
    %p104 = scmp.eq.s32.totalorder %s10, 1
    %p105 = scmp.ne.s32.totalorder %s100, %s102
    %p106 = scmp.eq.s32.totalorder %s10, 0
    %p107 = por %p105, %p106
    %p108 = scmp.ne.s32.totalorder %s100, %s102
    %p109 = scmp.eq.s32.totalorder %s15, 1
    %p110 = por %p108, %p109
    %p111 = scmp.ne.s32.totalorder %s102, %s103
    %p112 = scmp.eq.s32.totalorder %s15, 0
    %p113 = por %p111, %p112
    %p114 = scmp.ne.s32.totalorder %s102, %s103
    %p115 = scmp.eq.s32.totalorder %s16, 1
    %p116 = por %p114, %p115
    %p118 = scmp.ne.s32.totalorder %s103, %s117
    %p119 = scmp.eq.s32.totalorder %s16, 0
    %p120 = por %p118, %p119
    %s121 = ssub.s32 %s17, %s29
    %s122 = ssub.s32 %s18, %s25
    %s123 = sor.u32 %s121, %s122
    %p124 = scmp.eq.s32.totalorder %s123, 0
    %s126 = sadd.s32 %s125, 1
    %s127 = scalar_select %p124, %s125, %s126
    %p130 = pneg %p124
    %p131 = scmp.eq.s32.totalorder %s10, 1
    %p132 = por %p130, %p131
    %p133 = scmp.ne.s32.totalorder %s125, %s128
    %p134 = scmp.eq.s32.totalorder %s10, 0
    %p135 = por %p133, %p134
    %p136 = scmp.ne.s32.totalorder %s125, %s128
    %p137 = scmp.eq.s32.totalorder %s15, 1
    %p138 = por %p136, %p137
    %p139 = scmp.ne.s32.totalorder %s128, %s129
    %p140 = scmp.eq.s32.totalorder %s15, 0
    %p141 = por %p139, %p140
    %p142 = scmp.ne.s32.totalorder %s128, %s129
    %p143 = scmp.eq.s32.totalorder %s16, 1
    %p144 = por %p142, %p143
    %p146 = scmp.ne.s32.totalorder %s129, %s145
    %p147 = scmp.eq.s32.totalorder %s16, 0
    %p148 = por %p146, %p147
    %p149 = scmp.le.s32.totalorder 1, %s10
    %p150 = scmp.lt.s32.totalorder %s10, 3
    %p151 = pnand %p149, %p150
    %p152 = pneg %p151
    // Predicated region
    $region9: #{sffi_forward.73} parent=5 // pred_check
      _
    $region10: #{sffi_forward.73} parent=5 // pred_check_branch
      %154 = sbr.rel (%p151) target = $region12
    $region11: #{sffi_forward.73} parent=5 // pred_region
      %s155 = ssub.s32 %s10, 1
      // Predicated region
      $region13: #{sffi_forward.73} parent=11 // pred_check
        %p156 = pneg %p71
      $region14: #{sffi_forward.73} parent=11 // pred_check_branch
        %158 = sbr.rel (%p156) target = $region16
      $region15: #{sffi_forward.73} parent=11 // pred_region
        _
      $region16: #{sffi_forward.73} parent=11 // pred_fallthru
        _
      // Predicated region
      $region17: #{sffi_forward.73} parent=11 // pred_check
        %p159 = pneg %p92
      $region18: #{sffi_forward.73} parent=11 // pred_check_branch
        %161 = sbr.rel (%p159) target = $region20
      $region19: #{sffi_forward.73} parent=11 // pred_region
        _
      $region20: #{sffi_forward.73} parent=11 // pred_fallthru
        _
      // Predicated region
      $region21: #{sffi_forward.73} parent=11 // pred_check
        %p162 = pneg %p113
      $region22: #{sffi_forward.73} parent=11 // pred_check_branch
        %164 = sbr.rel (%p162) target = $region24
      $region23: #{sffi_forward.73} parent=11 // pred_region
        _
      $region24: #{sffi_forward.73} parent=11 // pred_fallthru
        _
    $region12: #{sffi_forward.73} parent=5 // pred_fallthru
      _
    %p165 = scmp.lt.s32.totalorder %s10, 2
    // Predicated region
    $region25: #{sffi_forward.73} parent=5 // pred_check
      %p166 = pneg %p165
    $region26: #{sffi_forward.73} parent=5 // pred_check_branch
      %168 = sbr.rel (%p166) target = $region28
    $region27: #{sffi_forward.73} parent=5 // pred_region
      // Predicated region
      $region29: #{sffi_forward.73} parent=27 // pred_check
        %p169 = pneg %p44
      $region30: #{sffi_forward.73} parent=27 // pred_check_branch
        %171 = sbr.rel (%p169) target = $region32
      $region31: #{sffi_forward.73} parent=27 // pred_region
        %p172 = scmp.lt.s32.totalorder %s17, 1
        %s173 = scalar_select %p172, %s17, 1
        %p174 = scmp.lt.s32.totalorder %s18, 0
        %s175 = scalar_select %p174, %s18, 0
        %s176 = smul.addr %s175, 36
        %s177 = smul.addr %s173, 36
        %s178 = sadd.s32 %s176, %s177
        %s179 = smul.addr %s178, 4
        %s180 = scalar_lea.vmem %s0, %s179
      $region32: #{sffi_forward.73} parent=27 // pred_fallthru
        _
    $region28: #{sffi_forward.73} parent=5 // pred_fallthru
      _
    %p181 = scmp.le.s32.totalorder 1, %s10
    %p182 = scmp.lt.s32.totalorder %s10, 3
    %p183 = pnand %p181, %p182
    %p184 = pneg %p183
    // Predicated region
    $region33: #{sffi_forward.73} parent=5 // pred_check
      _
    $region34: #{sffi_forward.73} parent=5 // pred_check_branch
      %186 = sbr.rel (%p183) target = $region36
    $region35: #{sffi_forward.73} parent=5 // pred_region
      %s187 = ssub.s32 %s10, 1
      %p188 = scmp.lt.s32.totalorder %s19, 1
      %s189 = scalar_select %p188, %s19, 1
      %p190 = scmp.lt.s32.totalorder %s20, 0
      %s191 = scalar_select %p190, %s20, 0
      %s192 = smul.addr %s191, 36
      %s193 = smul.addr %s189, 36
      %s194 = sadd.s32 %s192, %s193
      %s195 = smul.addr %s194, 4
      %s196 = scalar_lea.vmem %s0, %s195
      %p197 = pneg %p50
      %p198 = pneg %p47
      %p199 = pneg %p71
      %p200 = pneg %p68
      %p201 = pneg %p92
      %p202 = pneg %p89
      %p203 = pneg %p113
      %p204 = pneg %p110
      %p205 = pneg %p141
      %p206 = pneg %p138
      %p207 = scmp.lt.s32.totalorder %s19, 1
      %s208 = scalar_select %p207, %s19, 1
      %p209 = scmp.lt.s32.totalorder %s20, 0
      %s210 = scalar_select %p209, %s20, 0
      %s211 = smul.addr %s210, 32
      %s212 = smul.addr %s208, 32
      %s213 = sadd.s32 %s211, %s212
      %s214 = smul.addr %s213, 8
      %s215 = scalar_lea.vmem %s4, %s214
      %p216 = scmp.lt.s32.totalorder %s19, 1
      %s217 = scalar_select %p216, %s19, 1
      %p218 = scmp.lt.s32.totalorder %s20, 0
      %s219 = scalar_select %p218, %s20, 0
      %s220 = smul.addr %s219, 36
      %s221 = smul.addr %s217, 36
      %s222 = sadd.s32 %s220, %s221
      %s223 = smul.addr %s222, 4
      %s224 = scalar_lea.vmem %s0, %s223
      %p225 = scmp.lt.s32.totalorder %s19, 1
      %s226 = scalar_select %p225, %s19, 1
      %p227 = scmp.lt.s32.totalorder %s20, 0
      %s228 = scalar_select %p227, %s20, 0
      %s229 = smul.addr %s228, 32
      %s230 = smul.addr %s226, 32
      %s231 = sadd.s32 %s229, %s230
      %s232 = smul.addr %s231, 8
      %s233 = scalar_lea.vmem %s4, %s232
      %v235 = vld [vmem:[%s224] sm:$0xf]
      %v236 = vld [vmem:[%s224 + $0x4] sm:$0xf]
      %v237 = vld [vmem:[%s224 + $0x8] sm:$0xf]
      %v238 = vld [vmem:[%s224 + $0xc] sm:$0xf]
      %v239 = vld [vmem:[%s224 + $0x10] sm:$0xf]
      %v240 = vld [vmem:[%s224 + $0x14] sm:$0xf]
      %v241 = vld [vmem:[%s224 + $0x18] sm:$0xf]
      %v242 = vld [vmem:[%s224 + $0x1c] sm:$0xf]
      %v243 = vld [vmem:[%s224 + $0x20] sm:$0xf]
      %v244 = vld [vmem:[%s224 + $0x24] sm:$0xf]
      %v245 = vld [vmem:[%s224 + $0x28] sm:$0xf]
      %v246 = vld [vmem:[%s224 + $0x2c] sm:$0xf]
      %v247 = vld [vmem:[%s224 + $0x30] sm:$0xf]
      %v248 = vld [vmem:[%s224 + $0x34] sm:$0xf]
      %v249 = vld [vmem:[%s224 + $0x38] sm:$0xf]
      %v250 = vld [vmem:[%s224 + $0x3c] sm:$0xf]
      %v251 = vld [vmem:[%s224 + $0x40] sm:$0xf]
      %v252 = vld [vmem:[%s224 + $0x44] sm:$0xf]
      %v253 = vld [vmem:[%s224 + $0x48] sm:$0xf]
      %v254 = vld [vmem:[%s224 + $0x4c] sm:$0xf]
      %v255 = vld [vmem:[%s224 + $0x50] sm:$0xf]
      %v256 = vld [vmem:[%s224 + $0x54] sm:$0xf]
      %v257 = vld [vmem:[%s224 + $0x58] sm:$0xf]
      %v258 = vld [vmem:[%s224 + $0x5c] sm:$0xf]
      %v259 = vld [vmem:[%s224 + $0x60] sm:$0xf]
      %v260 = vld [vmem:[%s224 + $0x64] sm:$0xf]
      %v261 = vld [vmem:[%s224 + $0x68] sm:$0xf]
      %v262 = vld [vmem:[%s224 + $0x6c] sm:$0xf]
      %v263 = vld [vmem:[%s224 + $0x70] sm:$0xf]
      %v264 = vld [vmem:[%s224 + $0x74] sm:$0xf]
      %v265 = vld [vmem:[%s224 + $0x78] sm:$0xf]
      %v266 = vld [vmem:[%s224 + $0x7c] sm:$0xf]
      %v267 = vld [vmem:[%s1] sm:$0xf]
      %v268 = vld [vmem:[%s1 + $0x4] sm:$0xf]
      %v269 = vld [vmem:[%s1 + $0x8] sm:$0xf]
      %v270 = vld [vmem:[%s1 + $0xc] sm:$0xf]
      %v271 = vld [vmem:[%s1 + $0x10] sm:$0xf]
      %v272 = vld [vmem:[%s1 + $0x14] sm:$0xf]
      %v273 = vld [vmem:[%s1 + $0x18] sm:$0xf]
      %v274 = vld [vmem:[%s1 + $0x1c] sm:$0xf]
      %v275 = vld [vmem:[%s1 + $0x20] sm:$0xf]
      %v276 = vld [vmem:[%s1 + $0x24] sm:$0xf]
      %v277 = vld [vmem:[%s1 + $0x28] sm:$0xf]
      %v278 = vld [vmem:[%s1 + $0x2c] sm:$0xf]
      %v279 = vld [vmem:[%s224 + $0x80] sm:$0xf]
      %v280 = vld [vmem:[%s224 + $0x84] sm:$0xf]
      %s281 = scalar_lea.vmem %s1, 48
      %v282 = vld [vmem:[%s281] sm:$0xf]
      %v283 = vld [vmem:[%s281 + $0x4] sm:$0xf]
      %v284 = vld [vmem:[%s281 + $0x8] sm:$0xf]
      %v285 = vld [vmem:[%s281 + $0xc] sm:$0xf]
      %v286 = vld [vmem:[%s281 + $0x10] sm:$0xf]
      %v287 = vld [vmem:[%s281 + $0x14] sm:$0xf]
      %v288 = vld [vmem:[%s281 + $0x18] sm:$0xf]
      %v289 = vld [vmem:[%s281 + $0x1c] sm:$0xf]
      %v290 = vld [vmem:[%s281 + $0x20] sm:$0xf]
      %v291 = vld [vmem:[%s281 + $0x24] sm:$0xf]
      %v292 = vld [vmem:[%s281 + $0x28] sm:$0xf]
      %v293 = vld [vmem:[%s281 + $0x2c] sm:$0xf]
      %v326 = vunpack.c.l.b16 %v237
      %v327 = vunpack.c.l.b16 %v238
      %v328 = vunpack.c.l.b16 %v239
      %v329 = vunpack.c.l.b16 %v240
      %v330 = vunpack.c.l.b16 %v241
      %v331 = vunpack.c.l.b16 %v242
      %v332 = vunpack.c.l.b16 %v243
      %v333 = vunpack.c.l.b16 %v244
      %v334 = vunpack.c.l.b16 %v245
      %v335 = vunpack.c.l.b16 %v246
      %v336 = vunpack.c.l.b16 %v247
      %v337 = vunpack.c.l.b16 %v248
      %v338 = vunpack.c.l.b16 %v249
      %v339 = vunpack.c.l.b16 %v250
      %v340 = vunpack.c.l.b16 %v251
      %v341 = vunpack.c.l.b16 %v252
      %v342 = vunpack.c.l.b16 %v253
      %v343 = vunpack.c.l.b16 %v254
      %v344 = vunpack.c.l.b16 %v255
      %v345 = vunpack.c.l.b16 %v256
      %v346 = vunpack.c.l.b16 %v257
      %v347 = vunpack.c.l.b16 %v258
      %v348 = vunpack.c.l.b16 %v259
      %v349 = vunpack.c.l.b16 %v260
      %v350 = vunpack.c.l.b16 %v261
      %v351 = vunpack.c.l.b16 %v262
      %v352 = vunpack.c.l.b16 %v263
      %v353 = vunpack.c.l.b16 %v264
      %v354 = vunpack.c.l.b16 %v265
      %v355 = vunpack.c.l.b16 %v266
      %v356 = vunpack.c.l.b16 %v279
      %v357 = vunpack.c.l.b16 %v280
      %v358 = vpack.c.b16 %v327, %v326
      %v359 = vpack.c.b16 %v329, %v328
      %v360 = vpack.c.b16 %v331, %v330
      %v361 = vpack.c.b16 %v333, %v332
      %v362 = vpack.c.b16 %v335, %v334
      %v363 = vpack.c.b16 %v337, %v336
      %v364 = vpack.c.b16 %v339, %v338
      %v365 = vpack.c.b16 %v341, %v340
      %v366 = vpack.c.b16 %v343, %v342
      %v367 = vpack.c.b16 %v345, %v344
      %v368 = vpack.c.b16 %v347, %v346
      %v369 = vpack.c.b16 %v349, %v348
      %v370 = vpack.c.b16 %v351, %v350
      %v371 = vpack.c.b16 %v353, %v352
      %v372 = vpack.c.b16 %v355, %v354
      %v373 = vpack.c.b16 %v357, %v356
      %v386 = vunpack.c.l.b16 %v282
      %v387 = vunpack.c.l.b16 %v283
      %v388 = vunpack.c.l.b16 %v284
      %v389 = vunpack.c.l.b16 %v285
      %v390 = vunpack.c.l.b16 %v286
      %v391 = vunpack.c.l.b16 %v287
      %v392 = vunpack.c.l.b16 %v288
      %v393 = vunpack.c.l.b16 %v289
      %v394 = vunpack.c.l.b16 %v290
      %v395 = vunpack.c.l.b16 %v291
      %v396 = vunpack.c.l.b16 %v292
      %v397 = vunpack.c.l.b16 %v293
      %v398 = vpack.c.b16 %v387, %v386
      %v399 = vpack.c.b16 %v389, %v388
      %v400 = vpack.c.b16 %v391, %v390
      %v401 = vpack.c.b16 %v393, %v392
      %v402 = vpack.c.b16 %v395, %v394
      %v403 = vpack.c.b16 %v397, %v396
      %vm410 = vcmask 785408
      %v412 = vsel %vm410, %v358, 0
      %v415 = vsel %vm410, %v359, 0
      %v418 = vsel %vm410, %v360, 0
      %v421 = vsel %vm410, %v361, 0
      %v424 = vsel %vm410, %v362, 0
      %v427 = vsel %vm410, %v363, 0
      %v430 = vsel %vm410, %v364, 0
      %v433 = vsel %vm410, %v365, 0
      %v436 = vsel %vm410, %v366, 0
      %v439 = vsel %vm410, %v367, 0
      %v442 = vsel %vm410, %v368, 0
      %v445 = vsel %vm410, %v369, 0
      %v448 = vsel %vm410, %v370, 0
      %v451 = vsel %vm410, %v371, 0
      %v454 = vsel %vm410, %v372, 0
      %v457 = vsel %vm410, %v373, 0
      %459 = vmatprep.subr.bf16.mxu0 0
      %460 = vmatpush1.bf16.msra.mxu0 %v398
      %461 = vmatprep.subr.bf16.mxu0 0
      %462 = vmatpush1.bf16.msra.mxu0 %v399
      %463 = vmatprep.subr.bf16.mxu0 0
      %464 = vmatpush1.bf16.msra.mxu0 %v400
      %465 = vmatprep.subr.bf16.mxu0 0
      %466 = vmatpush1.bf16.msra.mxu0 %v401
      %467 = vmatprep.subr.bf16.mxu0 0
      %468 = vmatpush1.bf16.msra.mxu0 %v402
      %469 = vmatprep.subr.bf16.mxu0 0
      %470 = vmatpush1.bf16.msra.mxu0 %v403
      %471 = vmatprep.subr.bf16.mxu0 0
      %472 = vmatpush1.bf16.msra.mxu0 0
      %473 = vmatprep.subr.bf16.mxu0 0
      %474 = vmatpush1.bf16.msra.mxu0 0
      %475 = vmatprep.subr.bf16.mxu0 0
      %476 = vmatpush1.bf16.msra.mxu0 0
      %477 = vmatprep.subr.bf16.mxu0 0
      %478 = vmatpush1.bf16.msra.mxu0 0
      %479 = vmatprep.subr.bf16.mxu0 0
      %480 = vmatpush1.bf16.msra.mxu0 0
      %481 = vmatprep.subr.bf16.mxu0 0
      %482 = vmatpush1.bf16.msra.mxu0 0
      %483 = vmatprep.subr.bf16.mxu0 0
      %484 = vmatpush1.bf16.msra.mxu0 0
      %485 = vmatprep.subr.bf16.mxu0 0
      %486 = vmatpush1.bf16.msra.mxu0 0
      %487 = vmatprep.subr.bf16.mxu0 0
      %488 = vmatpush1.bf16.msra.mxu0 0
      %489 = vmatprep.subr.bf16.mxu0 0
      %490 = vmatpush1.bf16.msra.mxu0 0
      %491 = vmatprep.mubr.bf16.mxu0 0
      %492 = vmatmul.mubr.bf16.gmra.mrb[0].mxu0 %v412
      %v493 = vpop.f32.mrb[0].mxu0
      %v494 = vadd.f32 0.0, %v493
      %v495 = vpop.f32.mrb[0].mxu0
      %v496 = vpop.f32.mrb[0].mxu0
      %v497 = vadd.f32 0.0, %v496
      %v498 = vpop.f32.mrb[0].mxu0
      %499 = vmatprep.mubr.bf16.mxu0 0
      %500 = vmatmul.mubr.bf16.gmra.mrb[0].mxu0 %v415
      %v501 = vpop.f32.mrb[0].mxu0
      %v502 = vadd.f32 0.0, %v501
      %v503 = vpop.f32.mrb[0].mxu0
      %v504 = vpop.f32.mrb[0].mxu0
      %v505 = vadd.f32 0.0, %v504
      %v506 = vpop.f32.mrb[0].mxu0
      %507 = vmatprep.mubr.bf16.mxu0 0
      %508 = vmatmul.mubr.bf16.gmra.mrb[0].mxu0 %v418
      %v509 = vpop.f32.mrb[0].mxu0
      %v510 = vadd.f32 0.0, %v509
      %v511 = vpop.f32.mrb[0].mxu0
      %v512 = vpop.f32.mrb[0].mxu0
      %v513 = vadd.f32 0.0, %v512
      %v514 = vpop.f32.mrb[0].mxu0
      %515 = vmatprep.mubr.bf16.mxu0 0
      %516 = vmatmul.mubr.bf16.gmra.mrb[0].mxu0 %v421
      %v517 = vpop.f32.mrb[0].mxu0
      %v518 = vadd.f32 0.0, %v517
      %v519 = vpop.f32.mrb[0].mxu0
      %v520 = vpop.f32.mrb[0].mxu0
      %v521 = vadd.f32 0.0, %v520
      %v522 = vpop.f32.mrb[0].mxu0
      %523 = vmatprep.mubr.bf16.mxu0 0
      %524 = vmatmul.mubr.bf16.gmra.mrb[0].mxu0 %v424
      %v525 = vpop.f32.mrb[0].mxu0
      %v526 = vadd.f32 0.0, %v525
      %v527 = vpop.f32.mrb[0].mxu0
      %v528 = vpop.f32.mrb[0].mxu0
      %v529 = vadd.f32 0.0, %v528
      %v530 = vpop.f32.mrb[0].mxu0
      %531 = vmatprep.mubr.bf16.mxu0 0
      %532 = vmatmul.mubr.bf16.gmra.mrb[0].mxu0 %v427
      %v533 = vpop.f32.mrb[0].mxu0
      %v534 = vadd.f32 0.0, %v533
      %v535 = vpop.f32.mrb[0].mxu0
      %v536 = vpop.f32.mrb[0].mxu0
      %v537 = vadd.f32 0.0, %v536
      %v538 = vpop.f32.mrb[0].mxu0
      %539 = vmatprep.mubr.bf16.mxu0 0
      %540 = vmatmul.mubr.bf16.gmra.mrb[0].mxu0 %v430
      %v541 = vpop.f32.mrb[0].mxu0
      %v542 = vadd.f32 0.0, %v541
      %v543 = vpop.f32.mrb[0].mxu0
      %v544 = vpop.f32.mrb[0].mxu0
      %v545 = vadd.f32 0.0, %v544
      %v546 = vpop.f32.mrb[0].mxu0
      %547 = vmatprep.mubr.bf16.mxu0 0
      %548 = vmatmul.mubr.bf16.gmra.mrb[0].mxu0 %v433
      %v549 = vpop.f32.mrb[0].mxu0
      %v550 = vadd.f32 0.0, %v549
      %v551 = vpop.f32.mrb[0].mxu0
      %v552 = vpop.f32.mrb[0].mxu0
      %v553 = vadd.f32 0.0, %v552
      %v554 = vpop.f32.mrb[0].mxu0
      %555 = vmatprep.mubr.bf16.mxu0 0
      %556 = vmatmul.mubr.bf16.gmra.mrb[0].mxu0 %v436
      %v557 = vpop.f32.mrb[0].mxu0
      %v558 = vadd.f32 0.0, %v557
      %v559 = vpop.f32.mrb[0].mxu0
      %v560 = vpop.f32.mrb[0].mxu0
      %v561 = vadd.f32 0.0, %v560
      %v562 = vpop.f32.mrb[0].mxu0
      %563 = vmatprep.mubr.bf16.mxu0 0
      %564 = vmatmul.mubr.bf16.gmra.mrb[0].mxu0 %v439
      %v565 = vpop.f32.mrb[0].mxu0
      %v566 = vadd.f32 0.0, %v565
      %v567 = vpop.f32.mrb[0].mxu0
      %v568 = vpop.f32.mrb[0].mxu0
      %v569 = vadd.f32 0.0, %v568
      %v570 = vpop.f32.mrb[0].mxu0
      %571 = vmatprep.mubr.bf16.mxu0 0
      %572 = vmatmul.mubr.bf16.gmra.mrb[0].mxu0 %v442
      %v573 = vpop.f32.mrb[0].mxu0
      %v574 = vadd.f32 0.0, %v573
      %v575 = vpop.f32.mrb[0].mxu0
      %v576 = vpop.f32.mrb[0].mxu0
      %v577 = vadd.f32 0.0, %v576
      %v578 = vpop.f32.mrb[0].mxu0
      %579 = vmatprep.mubr.bf16.mxu0 0
      %580 = vmatmul.mubr.bf16.gmra.mrb[0].mxu0 %v445
      %v581 = vpop.f32.mrb[0].mxu0
      %v582 = vadd.f32 0.0, %v581
      %v583 = vpop.f32.mrb[0].mxu0
      %v584 = vpop.f32.mrb[0].mxu0
      %v585 = vadd.f32 0.0, %v584
      %v586 = vpop.f32.mrb[0].mxu0
      %587 = vmatprep.mubr.bf16.mxu0 0
      %588 = vmatmul.mubr.bf16.gmra.mrb[0].mxu0 %v448
      %v589 = vpop.f32.mrb[0].mxu0
      %v590 = vadd.f32 0.0, %v589
      %v591 = vpop.f32.mrb[0].mxu0
      %v592 = vpop.f32.mrb[0].mxu0
      %v593 = vadd.f32 0.0, %v592
      %v594 = vpop.f32.mrb[0].mxu0
      %595 = vmatprep.mubr.bf16.mxu0 0
      %596 = vmatmul.mubr.bf16.gmra.mrb[0].mxu0 %v451
      %v597 = vpop.f32.mrb[0].mxu0
      %v598 = vadd.f32 0.0, %v597
      %v599 = vpop.f32.mrb[0].mxu0
      %v600 = vpop.f32.mrb[0].mxu0
      %v601 = vadd.f32 0.0, %v600
      %v602 = vpop.f32.mrb[0].mxu0
      %603 = vmatprep.mubr.bf16.mxu0 0
      %604 = vmatmul.mubr.bf16.gmra.mrb[0].mxu0 %v454
      %v605 = vpop.f32.mrb[0].mxu0
      %v606 = vadd.f32 0.0, %v605
      %v607 = vpop.f32.mrb[0].mxu0
      %v608 = vpop.f32.mrb[0].mxu0
      %v609 = vadd.f32 0.0, %v608
      %v610 = vpop.f32.mrb[0].mxu0
      %611 = vmatprep.mubr.bf16.mxu0 0
      %612 = vmatmul.mubr.bf16.gmra.mrb[0].mxu0 %v457
      %v613 = vpop.f32.mrb[0].mxu0
      %v614 = vadd.f32 0.0, %v613
      %v615 = vpop.f32.mrb[0].mxu0
      %v616 = vpop.f32.mrb[0].mxu0
      %v617 = vadd.f32 0.0, %v616
      %v618 = vpop.f32.mrb[0].mxu0
      %619 = vdwg.mxu0
      %v622 = vunpack.c.l.b16 %v235
      %v623 = vunpack.c.l.b16 %v236
      %v624 = vpack.c.b16 %v623, %v622
      %v637 = vunpack.c.l.b16 %v267
      %v638 = vunpack.c.l.b16 %v268
      %v639 = vunpack.c.l.b16 %v269
      %v640 = vunpack.c.l.b16 %v270
      %v641 = vunpack.c.l.b16 %v271
      %v642 = vunpack.c.l.b16 %v272
      %v643 = vunpack.c.l.b16 %v273
      %v644 = vunpack.c.l.b16 %v274
      %v645 = vunpack.c.l.b16 %v275
      %v646 = vunpack.c.l.b16 %v276
      %v647 = vunpack.c.l.b16 %v277
      %v648 = vunpack.c.l.b16 %v278
      %v649 = vpack.c.b16 %v638, %v637
      %v650 = vpack.c.b16 %v640, %v639
      %v651 = vpack.c.b16 %v642, %v641
      %v652 = vpack.c.b16 %v644, %v643
      %v653 = vpack.c.b16 %v646, %v645
      %v654 = vpack.c.b16 %v648, %v647
      %v662 = vsel %vm410, %v624, 0
      %664 = vmatprep.subr.bf16.mxu0 0
      %665 = vmatpush1.bf16.msra.mxu0 %v649
      %666 = vmatprep.subr.bf16.mxu0 0
      %667 = vmatpush1.bf16.msra.mxu0 %v650
      %668 = vmatprep.subr.bf16.mxu0 0
      %669 = vmatpush1.bf16.msra.mxu0 %v651
      %670 = vmatprep.subr.bf16.mxu0 0
      %671 = vmatpush1.bf16.msra.mxu0 %v652
      %672 = vmatprep.subr.bf16.mxu0 0
      %673 = vmatpush1.bf16.msra.mxu0 %v653
      %674 = vmatprep.subr.bf16.mxu0 0
      %675 = vmatpush1.bf16.msra.mxu0 %v654
      %676 = vmatprep.subr.bf16.mxu0 0
      %677 = vmatpush1.bf16.msra.mxu0 0
      %678 = vmatprep.subr.bf16.mxu0 0
      %679 = vmatpush1.bf16.msra.mxu0 0
      %680 = vmatprep.subr.bf16.mxu0 0
      %681 = vmatpush1.bf16.msra.mxu0 0
      %682 = vmatprep.subr.bf16.mxu0 0
      %683 = vmatpush1.bf16.msra.mxu0 0
      %684 = vmatprep.subr.bf16.mxu0 0
      %685 = vmatpush1.bf16.msra.mxu0 0
      %686 = vmatprep.subr.bf16.mxu0 0
      %687 = vmatpush1.bf16.msra.mxu0 0
      %688 = vmatprep.subr.bf16.mxu0 0
      %689 = vmatpush1.bf16.msra.mxu0 0
      %690 = vmatprep.subr.bf16.mxu0 0
      %691 = vmatpush1.bf16.msra.mxu0 0
      %692 = vmatprep.subr.bf16.mxu0 0
      %693 = vmatpush1.bf16.msra.mxu0 0
      %694 = vmatprep.subr.bf16.mxu0 0
      %695 = vmatpush1.bf16.msra.mxu0 0
      %696 = vmatprep.mubr.bf16.mxu0 0
      %697 = vmatmul.mubr.bf16.gmra.mrb[0].mxu0 %v662
      %v698 = vpop.f32.mrb[0].mxu0
      %v699 = vadd.f32 %v494, %v698
      %v700 = vpop.f32.mrb[0].mxu0
      %v701 = vpop.f32.mrb[0].mxu0
      %v702 = vadd.f32 %v497, %v701
      %v703 = vpop.f32.mrb[0].mxu0
      %704 = vmatprep.mubr.bf16.mxu0 0
      %705 = vmatmul.mubr.bf16.gmra.mrb[0].mxu0 %v412
      %v706 = vpop.f32.mrb[0].mxu0
      %v707 = vadd.f32 %v502, %v706
      %v708 = vpop.f32.mrb[0].mxu0
      %v709 = vpop.f32.mrb[0].mxu0
      %v710 = vadd.f32 %v505, %v709
      %v711 = vpop.f32.mrb[0].mxu0
      %712 = vmatprep.mubr.bf16.mxu0 0
      %713 = vmatmul.mubr.bf16.gmra.mrb[0].mxu0 %v415
      %v714 = vpop.f32.mrb[0].mxu0
      %v715 = vadd.f32 %v510, %v714
      %v716 = vpop.f32.mrb[0].mxu0
      %v717 = vpop.f32.mrb[0].mxu0
      %v718 = vadd.f32 %v513, %v717
      %v719 = vpop.f32.mrb[0].mxu0
      %720 = vmatprep.mubr.bf16.mxu0 0
      %721 = vmatmul.mubr.bf16.gmra.mrb[0].mxu0 %v418
      %v722 = vpop.f32.mrb[0].mxu0
      %v723 = vadd.f32 %v518, %v722
      %v724 = vpop.f32.mrb[0].mxu0
      %v725 = vpop.f32.mrb[0].mxu0
      %v726 = vadd.f32 %v521, %v725
      %v727 = vpop.f32.mrb[0].mxu0
      %728 = vmatprep.mubr.bf16.mxu0 0
      %729 = vmatmul.mubr.bf16.gmra.mrb[0].mxu0 %v421
      %v730 = vpop.f32.mrb[0].mxu0
      %v731 = vadd.f32 %v526, %v730
      %v732 = vpop.f32.mrb[0].mxu0
      %v733 = vpop.f32.mrb[0].mxu0
      %v734 = vadd.f32 %v529, %v733
      %v735 = vpop.f32.mrb[0].mxu0
      %736 = vmatprep.mubr.bf16.mxu0 0
      %737 = vmatmul.mubr.bf16.gmra.mrb[0].mxu0 %v424
      %v738 = vpop.f32.mrb[0].mxu0
      %v739 = vadd.f32 %v534, %v738
      %v740 = vpop.f32.mrb[0].mxu0
      %v741 = vpop.f32.mrb[0].mxu0
      %v742 = vadd.f32 %v537, %v741
      %v743 = vpop.f32.mrb[0].mxu0
      %744 = vmatprep.mubr.bf16.mxu0 0
      %745 = vmatmul.mubr.bf16.gmra.mrb[0].mxu0 %v427
      %v746 = vpop.f32.mrb[0].mxu0
      %v747 = vadd.f32 %v542, %v746
      %v748 = vpop.f32.mrb[0].mxu0
      %v749 = vpop.f32.mrb[0].mxu0
      %v750 = vadd.f32 %v545, %v749
      %v751 = vpop.f32.mrb[0].mxu0
      %752 = vmatprep.mubr.bf16.mxu0 0
      %753 = vmatmul.mubr.bf16.gmra.mrb[0].mxu0 %v430
      %v754 = vpop.f32.mrb[0].mxu0
      %v755 = vadd.f32 %v550, %v754
      %v756 = vpop.f32.mrb[0].mxu0
      %v757 = vpop.f32.mrb[0].mxu0
      %v758 = vadd.f32 %v553, %v757
      %v759 = vpop.f32.mrb[0].mxu0
      %760 = vmatprep.mubr.bf16.mxu0 0
      %761 = vmatmul.mubr.bf16.gmra.mrb[0].mxu0 %v433
      %v762 = vpop.f32.mrb[0].mxu0
      %v763 = vadd.f32 %v558, %v762
      %v764 = vpop.f32.mrb[0].mxu0
      %v765 = vpop.f32.mrb[0].mxu0
      %v766 = vadd.f32 %v561, %v765
      %v767 = vpop.f32.mrb[0].mxu0
      %768 = vmatprep.mubr.bf16.mxu0 0
      %769 = vmatmul.mubr.bf16.gmra.mrb[0].mxu0 %v436
      %v770 = vpop.f32.mrb[0].mxu0
      %v771 = vadd.f32 %v566, %v770
      %v772 = vpop.f32.mrb[0].mxu0
      %v773 = vpop.f32.mrb[0].mxu0
      %v774 = vadd.f32 %v569, %v773
      %v775 = vpop.f32.mrb[0].mxu0
      %776 = vmatprep.mubr.bf16.mxu0 0
      %777 = vmatmul.mubr.bf16.gmra.mrb[0].mxu0 %v439
      %v778 = vpop.f32.mrb[0].mxu0
      %v779 = vadd.f32 %v574, %v778
      %v780 = vpop.f32.mrb[0].mxu0
      %v781 = vpop.f32.mrb[0].mxu0
      %v782 = vadd.f32 %v577, %v781
      %v783 = vpop.f32.mrb[0].mxu0
      %784 = vmatprep.mubr.bf16.mxu0 0
      %785 = vmatmul.mubr.bf16.gmra.mrb[0].mxu0 %v442
      %v786 = vpop.f32.mrb[0].mxu0
      %v787 = vadd.f32 %v582, %v786
      %v788 = vpop.f32.mrb[0].mxu0
      %v789 = vpop.f32.mrb[0].mxu0
      %v790 = vadd.f32 %v585, %v789
      %v791 = vpop.f32.mrb[0].mxu0
      %792 = vmatprep.mubr.bf16.mxu0 0
      %793 = vmatmul.mubr.bf16.gmra.mrb[0].mxu0 %v445
      %v794 = vpop.f32.mrb[0].mxu0
      %v795 = vadd.f32 %v590, %v794
      %v796 = vpop.f32.mrb[0].mxu0
      %v797 = vpop.f32.mrb[0].mxu0
      %v798 = vadd.f32 %v593, %v797
      %v799 = vpop.f32.mrb[0].mxu0
      %800 = vmatprep.mubr.bf16.mxu0 0
      %801 = vmatmul.mubr.bf16.gmra.mrb[0].mxu0 %v448
      %v802 = vpop.f32.mrb[0].mxu0
      %v803 = vadd.f32 %v598, %v802
      %v804 = vpop.f32.mrb[0].mxu0
      %v805 = vpop.f32.mrb[0].mxu0
      %v806 = vadd.f32 %v601, %v805
      %v807 = vpop.f32.mrb[0].mxu0
      %808 = vmatprep.mubr.bf16.mxu0 0
      %809 = vmatmul.mubr.bf16.gmra.mrb[0].mxu0 %v451
      %v810 = vpop.f32.mrb[0].mxu0
      %v811 = vadd.f32 %v606, %v810
      %v812 = vpop.f32.mrb[0].mxu0
      %v813 = vpop.f32.mrb[0].mxu0
      %v814 = vadd.f32 %v609, %v813
      %v815 = vpop.f32.mrb[0].mxu0
      %816 = vmatprep.mubr.bf16.mxu0 0
      %817 = vmatmul.mubr.bf16.gmra.mrb[0].mxu0 %v454
      %v818 = vpop.f32.mrb[0].mxu0
      %v819 = vadd.f32 %v614, %v818
      %v820 = vpop.f32.mrb[0].mxu0
      %v821 = vpop.f32.mrb[0].mxu0
      %v822 = vadd.f32 %v617, %v821
      %v823 = vpop.f32.mrb[0].mxu0
      %824 = vdwg.mxu0
      %v825 = vld [vmem:[%s224 + $0x10] sm:$0xf]
      %v826 = vld [vmem:[%s224 + $0x14] sm:$0xf]
      %v827 = vld [vmem:[%s224 + $0x18] sm:$0xf]
      %v828 = vld [vmem:[%s224 + $0x1c] sm:$0xf]
      %v829 = vld [vmem:[%s224 + $0x20] sm:$0xf]
      %v830 = vld [vmem:[%s224 + $0x24] sm:$0xf]
      %v831 = vld [vmem:[%s224 + $0x28] sm:$0xf]
      %v832 = vld [vmem:[%s224 + $0x2c] sm:$0xf]
      %v833 = vld [vmem:[%s224 + $0x30] sm:$0xf]
      %v834 = vld [vmem:[%s224 + $0x34] sm:$0xf]
      %v835 = vld [vmem:[%s224 + $0x38] sm:$0xf]
      %v836 = vld [vmem:[%s224 + $0x3c] sm:$0xf]
      %v837 = vld [vmem:[%s224 + $0x40] sm:$0xf]
      %v838 = vld [vmem:[%s224 + $0x44] sm:$0xf]
      %v839 = vld [vmem:[%s224 + $0x48] sm:$0xf]
      %v840 = vld [vmem:[%s224 + $0x4c] sm:$0xf]
      %v841 = vld [vmem:[%s224 + $0x50] sm:$0xf]
      %v842 = vld [vmem:[%s224 + $0x54] sm:$0xf]
      %v843 = vld [vmem:[%s224 + $0x58] sm:$0xf]
      %v844 = vld [vmem:[%s224 + $0x5c] sm:$0xf]
      %v845 = vld [vmem:[%s224 + $0x60] sm:$0xf]
      %v846 = vld [vmem:[%s224 + $0x64] sm:$0xf]
      %v847 = vld [vmem:[%s224 + $0x68] sm:$0xf]
      %v848 = vld [vmem:[%s224 + $0x6c] sm:$0xf]
      %v849 = vld [vmem:[%s224 + $0x70] sm:$0xf]
      %v850 = vld [vmem:[%s224 + $0x74] sm:$0xf]
      %v851 = vld [vmem:[%s224 + $0x78] sm:$0xf]
      %v852 = vld [vmem:[%s224 + $0x7c] sm:$0xf]
      %v853 = vld [vmem:[%s224 + $0x80] sm:$0xf]
      %v854 = vld [vmem:[%s224 + $0x84] sm:$0xf]
      %v855 = vld [vmem:[%s224 + $0x88] sm:$0xf]
      %v856 = vld [vmem:[%s224 + $0x8c] sm:$0xf]
      %s857 = scalar_lea.vmem %s1, 96
      %v858 = vld [vmem:[%s857] sm:$0xf]
      %v859 = vld [vmem:[%s857 + $0x4] sm:$0xf]
      %v860 = vld [vmem:[%s857 + $0x8] sm:$0xf]
      %v861 = vld [vmem:[%s857 + $0xc] sm:$0xf]
      %v862 = vld [vmem:[%s857 + $0x10] sm:$0xf]
      %v863 = vld [vmem:[%s857 + $0x14] sm:$0xf]
      %v864 = vld [vmem:[%s857 + $0x18] sm:$0xf]
      %v865 = vld [vmem:[%s857 + $0x1c] sm:$0xf]
      %v866 = vld [vmem:[%s857 + $0x20] sm:$0xf]
      %v867 = vld [vmem:[%s857 + $0x24] sm:$0xf]
      %v868 = vld [vmem:[%s857 + $0x28] sm:$0xf]
      %v869 = vld [vmem:[%s857 + $0x2c] sm:$0xf]
      %v902 = vunpack.c.l.b16 %v825
      %v903 = vunpack.c.l.b16 %v826
      %v904 = vunpack.c.l.b16 %v827
      %v905 = vunpack.c.l.b16 %v828
      %v906 = vunpack.c.l.b16 %v829
      %v907 = vunpack.c.l.b16 %v830
      %v908 = vunpack.c.l.b16 %v831
      %v909 = vunpack.c.l.b16 %v832
      %v910 = vunpack.c.l.b16 %v833
      %v911 = vunpack.c.l.b16 %v834
      %v912 = vunpack.c.l.b16 %v835
      %v913 = vunpack.c.l.b16 %v836
      %v914 = vunpack.c.l.b16 %v837
      %v915 = vunpack.c.l.b16 %v838
      %v916 = vunpack.c.l.b16 %v839
      %v917 = vunpack.c.l.b16 %v840
      %v918 = vunpack.c.l.b16 %v841
      %v919 = vunpack.c.l.b16 %v842
      %v920 = vunpack.c.l.b16 %v843
      %v921 = vunpack.c.l.b16 %v844
      %v922 = vunpack.c.l.b16 %v845
      %v923 = vunpack.c.l.b16 %v846
      %v924 = vunpack.c.l.b16 %v847
      %v925 = vunpack.c.l.b16 %v848
      %v926 = vunpack.c.l.b16 %v849
      %v927 = vunpack.c.l.b16 %v850
      %v928 = vunpack.c.l.b16 %v851
      %v929 = vunpack.c.l.b16 %v852
      %v930 = vunpack.c.l.b16 %v853
      %v931 = vunpack.c.l.b16 %v854
      %v932 = vunpack.c.l.b16 %v855
      %v933 = vunpack.c.l.b16 %v856
      %v934 = vpack.c.b16 %v903, %v902
      %v935 = vpack.c.b16 %v905, %v904
      %v936 = vpack.c.b16 %v907, %v906
      %v937 = vpack.c.b16 %v909, %v908
      %v938 = vpack.c.b16 %v911, %v910
      %v939 = vpack.c.b16 %v913, %v912
      %v940 = vpack.c.b16 %v915, %v914
      %v941 = vpack.c.b16 %v917, %v916
      %v942 = vpack.c.b16 %v919, %v918
      %v943 = vpack.c.b16 %v921, %v920
      %v944 = vpack.c.b16 %v923, %v922
      %v945 = vpack.c.b16 %v925, %v924
      %v946 = vpack.c.b16 %v927, %v926
      %v947 = vpack.c.b16 %v929, %v928
      %v948 = vpack.c.b16 %v931, %v930
      %v949 = vpack.c.b16 %v933, %v932
      %v962 = vunpack.c.l.b16 %v858
      %v963 = vunpack.c.l.b16 %v859
      %v964 = vunpack.c.l.b16 %v860
      %v965 = vunpack.c.l.b16 %v861
      %v966 = vunpack.c.l.b16 %v862
      %v967 = vunpack.c.l.b16 %v863
      %v968 = vunpack.c.l.b16 %v864
      %v969 = vunpack.c.l.b16 %v865
      %v970 = vunpack.c.l.b16 %v866
      %v971 = vunpack.c.l.b16 %v867
      %v972 = vunpack.c.l.b16 %v868
      %v973 = vunpack.c.l.b16 %v869
      %v974 = vpack.c.b16 %v963, %v962
      %v975 = vpack.c.b16 %v965, %v964
      %v976 = vpack.c.b16 %v967, %v966
      %v977 = vpack.c.b16 %v969, %v968
      %v978 = vpack.c.b16 %v971, %v970
      %v979 = vpack.c.b16 %v973, %v972
      %v987 = vsel %vm410, %v934, 0
      %v990 = vsel %vm410, %v935, 0
      %v993 = vsel %vm410, %v936, 0
      %v996 = vsel %vm410, %v937, 0
      %v999 = vsel %vm410, %v938, 0
      %v1002 = vsel %vm410, %v939, 0
      %v1005 = vsel %vm410, %v940, 0
      %v1008 = vsel %vm410, %v941, 0
      %v1011 = vsel %vm410, %v942, 0
      %v1014 = vsel %vm410, %v943, 0
      %v1017 = vsel %vm410, %v944, 0
      %v1020 = vsel %vm410, %v945, 0
      %v1023 = vsel %vm410, %v946, 0
      %v1026 = vsel %vm410, %v947, 0
      %v1029 = vsel %vm410, %v948, 0
      %v1032 = vsel %vm410, %v949, 0
      %1034 = vmatprep.subr.bf16.mxu0 0
      %1035 = vmatpush1.bf16.msra.mxu0 %v974
      %1036 = vmatprep.subr.bf16.mxu0 0
      %1037 = vmatpush1.bf16.msra.mxu0 %v975
      %1038 = vmatprep.subr.bf16.mxu0 0
      %1039 = vmatpush1.bf16.msra.mxu0 %v976
      %1040 = vmatprep.subr.bf16.mxu0 0
      %1041 = vmatpush1.bf16.msra.mxu0 %v977
      %1042 = vmatprep.subr.bf16.mxu0 0
      %1043 = vmatpush1.bf16.msra.mxu0 %v978
      %1044 = vmatprep.subr.bf16.mxu0 0
      %1045 = vmatpush1.bf16.msra.mxu0 %v979
      %1046 = vmatprep.subr.bf16.mxu0 0
      %1047 = vmatpush1.bf16.msra.mxu0 0
      %1048 = vmatprep.subr.bf16.mxu0 0
      %1049 = vmatpush1.bf16.msra.mxu0 0
      %1050 = vmatprep.subr.bf16.mxu0 0
      %1051 = vmatpush1.bf16.msra.mxu0 0
      %1052 = vmatprep.subr.bf16.mxu0 0
      %1053 = vmatpush1.bf16.msra.mxu0 0
      %1054 = vmatprep.subr.bf16.mxu0 0
      %1055 = vmatpush1.bf16.msra.mxu0 0
      %1056 = vmatprep.subr.bf16.mxu0 0
      %1057 = vmatpush1.bf16.msra.mxu0 0
      %1058 = vmatprep.subr.bf16.mxu0 0
      %1059 = vmatpush1.bf16.msra.mxu0 0
      %1060 = vmatprep.subr.bf16.mxu0 0
      %1061 = vmatpush1.bf16.msra.mxu0 0
      %1062 = vmatprep.subr.bf16.mxu0 0
      %1063 = vmatpush1.bf16.msra.mxu0 0
      %1064 = vmatprep.subr.bf16.mxu0 0
      %1065 = vmatpush1.bf16.msra.mxu0 0
      %1066 = vmatprep.mubr.bf16.mxu0 0
      %1067 = vmatmul.mubr.bf16.gmra.mrb[0].mxu0 %v987
      %v1068 = vpop.f32.mrb[0].mxu0
      %v1069 = vadd.f32 0.0, %v1068
      %v1070 = vpop.f32.mrb[0].mxu0
      %v1071 = vpop.f32.mrb[0].mxu0
      %v1072 = vadd.f32 0.0, %v1071
      %v1073 = vpop.f32.mrb[0].mxu0
      %1074 = vmatprep.mubr.bf16.mxu0 0
      %1075 = vmatmul.mubr.bf16.gmra.mrb[0].mxu0 %v990
      %v1076 = vpop.f32.mrb[0].mxu0
      %v1077 = vadd.f32 0.0, %v1076
      %v1078 = vpop.f32.mrb[0].mxu0
      %v1079 = vpop.f32.mrb[0].mxu0
      %v1080 = vadd.f32 0.0, %v1079
      %v1081 = vpop.f32.mrb[0].mxu0
      %1082 = vmatprep.mubr.bf16.mxu0 0
      %1083 = vmatmul.mubr.bf16.gmra.mrb[0].mxu0 %v993
      %v1084 = vpop.f32.mrb[0].mxu0
      %v1085 = vadd.f32 0.0, %v1084
      %v1086 = vpop.f32.mrb[0].mxu0
      %v1087 = vpop.f32.mrb[0].mxu0
      %v1088 = vadd.f32 0.0, %v1087
      %v1089 = vpop.f32.mrb[0].mxu0
      %1090 = vmatprep.mubr.bf16.mxu0 0
      %1091 = vmatmul.mubr.bf16.gmra.mrb[0].mxu0 %v996
      %v1092 = vpop.f32.mrb[0].mxu0
      %v1093 = vadd.f32 0.0, %v1092
      %v1094 = vpop.f32.mrb[0].mxu0
      %v1095 = vpop.f32.mrb[0].mxu0
      %v1096 = vadd.f32 0.0, %v1095
      %v1097 = vpop.f32.mrb[0].mxu0
      %1098 = vmatprep.mubr.bf16.mxu0 0
      %1099 = vmatmul.mubr.bf16.gmra.mrb[0].mxu0 %v999
      %v1100 = vpop.f32.mrb[0].mxu0
      %v1101 = vadd.f32 0.0, %v1100
      %v1102 = vpop.f32.mrb[0].mxu0
      %v1103 = vpop.f32.mrb[0].mxu0
      %v1104 = vadd.f32 0.0, %v1103
      %v1105 = vpop.f32.mrb[0].mxu0
      %1106 = vmatprep.mubr.bf16.mxu0 0
      %1107 = vmatmul.mubr.bf16.gmra.mrb[0].mxu0 %v1002
      %v1108 = vpop.f32.mrb[0].mxu0
      %v1109 = vadd.f32 0.0, %v1108
      %v1110 = vpop.f32.mrb[0].mxu0
      %v1111 = vpop.f32.mrb[0].mxu0
      %v1112 = vadd.f32 0.0, %v1111
      %v1113 = vpop.f32.mrb[0].mxu0
      %1114 = vmatprep.mubr.bf16.mxu0 0
      %1115 = vmatmul.mubr.bf16.gmra.mrb[0].mxu0 %v1005
      %v1116 = vpop.f32.mrb[0].mxu0
      %v1117 = vadd.f32 0.0, %v1116
      %v1118 = vpop.f32.mrb[0].mxu0
      %v1119 = vpop.f32.mrb[0].mxu0
      %v1120 = vadd.f32 0.0, %v1119
      %v1121 = vpop.f32.mrb[0].mxu0
      %1122 = vmatprep.mubr.bf16.mxu0 0
      %1123 = vmatmul.mubr.bf16.gmra.mrb[0].mxu0 %v1008
      %v1124 = vpop.f32.mrb[0].mxu0
      %v1125 = vadd.f32 0.0, %v1124
      %v1126 = vpop.f32.mrb[0].mxu0
      %v1127 = vpop.f32.mrb[0].mxu0
      %v1128 = vadd.f32 0.0, %v1127
      %v1129 = vpop.f32.mrb[0].mxu0
      %1130 = vmatprep.mubr.bf16.mxu0 0
      %1131 = vmatmul.mubr.bf16.gmra.mrb[0].mxu0 %v1011
      %v1132 = vpop.f32.mrb[0].mxu0
      %v1133 = vadd.f32 0.0, %v1132
      %v1134 = vpop.f32.mrb[0].mxu0
      %v1135 = vpop.f32.mrb[0].mxu0
      %v1136 = vadd.f32 0.0, %v1135
      %v1137 = vpop.f32.mrb[0].mxu0
      %1138 = vmatprep.mubr.bf16.mxu0 0
      %1139 = vmatmul.mubr.bf16.gmra.mrb[0].mxu0 %v1014
      %v1140 = vpop.f32.mrb[0].mxu0
      %v1141 = vadd.f32 0.0, %v1140
      %v1142 = vpop.f32.mrb[0].mxu0
      %v1143 = vpop.f32.mrb[0].mxu0
      %v1144 = vadd.f32 0.0, %v1143
      %v1145 = vpop.f32.mrb[0].mxu0
      %1146 = vmatprep.mubr.bf16.mxu0 0
      %1147 = vmatmul.mubr.bf16.gmra.mrb[0].mxu0 %v1017
      %v1148 = vpop.f32.mrb[0].mxu0
      %v1149 = vadd.f32 0.0, %v1148
      %v1150 = vpop.f32.mrb[0].mxu0
      %v1151 = vpop.f32.mrb[0].mxu0
      %v1152 = vadd.f32 0.0, %v1151
      %v1153 = vpop.f32.mrb[0].mxu0
      %1154 = vmatprep.mubr.bf16.mxu0 0
      %1155 = vmatmul.mubr.bf16.gmra.mrb[0].mxu0 %v1020
      %v1156 = vpop.f32.mrb[0].mxu0
      %v1157 = vadd.f32 0.0, %v1156
      %v1158 = vpop.f32.mrb[0].mxu0
      %v1159 = vpop.f32.mrb[0].mxu0
      %v1160 = vadd.f32 0.0, %v1159
      %v1161 = vpop.f32.mrb[0].mxu0
      %1162 = vmatprep.mubr.bf16.mxu0 0
      %1163 = vmatmul.mubr.bf16.gmra.mrb[0].mxu0 %v1023
      %v1164 = vpop.f32.mrb[0].mxu0
      %v1165 = vadd.f32 0.0, %v1164
      %v1166 = vpop.f32.mrb[0].mxu0
      %v1167 = vpop.f32.mrb[0].mxu0
      %v1168 = vadd.f32 0.0, %v1167
      %v1169 = vpop.f32.mrb[0].mxu0
      %1170 = vmatprep.mubr.bf16.mxu0 0
      %1171 = vmatmul.mubr.bf16.gmra.mrb[0].mxu0 %v1026
      %v1172 = vpop.f32.mrb[0].mxu0
      %v1173 = vadd.f32 0.0, %v1172
      %v1174 = vpop.f32.mrb[0].mxu0
      %v1175 = vpop.f32.mrb[0].mxu0
      %v1176 = vadd.f32 0.0, %v1175
      %v1177 = vpop.f32.mrb[0].mxu0
      %1178 = vmatprep.mubr.bf16.mxu0 0
      %1179 = vmatmul.mubr.bf16.gmra.mrb[0].mxu0 %v1029
      %v1180 = vpop.f32.mrb[0].mxu0
      %v1181 = vadd.f32 0.0, %v1180
      %v1182 = vpop.f32.mrb[0].mxu0
      %v1183 = vpop.f32.mrb[0].mxu0
      %v1184 = vadd.f32 0.0, %v1183
      %v1185 = vpop.f32.mrb[0].mxu0
      %1186 = vmatprep.mubr.bf16.mxu0 0
      %1187 = vmatmul.mubr.bf16.gmra.mrb[0].mxu0 %v1032
      %v1188 = vpop.f32.mrb[0].mxu0
      %v1189 = vadd.f32 0.0, %v1188
      %v1190 = vpop.f32.mrb[0].mxu0
      %v1191 = vpop.f32.mrb[0].mxu0
      %v1192 = vadd.f32 0.0, %v1191
      %v1193 = vpop.f32.mrb[0].mxu0
      %1194 = vdwg.mxu0
      %v1195 = vadd.f32 %v699, %v1069
      %v1196 = vadd.f32 %v702, %v1072
      %v1197 = vadd.f32 %v707, %v1077
      %v1198 = vadd.f32 %v710, %v1080
      %v1199 = vadd.f32 %v715, %v1085
      %v1200 = vadd.f32 %v718, %v1088
      %v1201 = vadd.f32 %v723, %v1093
      %v1202 = vadd.f32 %v726, %v1096
      %v1203 = vadd.f32 %v731, %v1101
      %v1204 = vadd.f32 %v734, %v1104
      %v1205 = vadd.f32 %v739, %v1109
      %v1206 = vadd.f32 %v742, %v1112
      %v1207 = vadd.f32 %v747, %v1117
      %v1208 = vadd.f32 %v750, %v1120
      %v1209 = vadd.f32 %v755, %v1125
      %v1210 = vadd.f32 %v758, %v1128
      %v1211 = vadd.f32 %v763, %v1133
      %v1212 = vadd.f32 %v766, %v1136
      %v1213 = vadd.f32 %v771, %v1141
      %v1214 = vadd.f32 %v774, %v1144
      %v1215 = vadd.f32 %v779, %v1149
      %v1216 = vadd.f32 %v782, %v1152
      %v1217 = vadd.f32 %v787, %v1157
      %v1218 = vadd.f32 %v790, %v1160
      %v1219 = vadd.f32 %v795, %v1165
      %v1220 = vadd.f32 %v798, %v1168
      %v1221 = vadd.f32 %v803, %v1173
      %v1222 = vadd.f32 %v806, %v1176
      %v1223 = vadd.f32 %v811, %v1181
      %v1224 = vadd.f32 %v814, %v1184
      %v1225 = vadd.f32 %v819, %v1189
      %v1226 = vadd.f32 %v822, %v1192
      %v1227 = vld [vmem:[%s2] sm:$0x1]
      %v1229 = vlaneseq
      %v1230 = vshrl.u32 %v1229, 7
      %v1231 = vsub.s32 0, %v1230
      %v1232 = vrot.slane %v1227, %v1231
      %v1234 = vadd.f32 %v1195, %v1232
      %v1235 = vadd.f32 %v1196, %v1232
      %v1236 = vadd.f32 %v1197, %v1232
      %v1237 = vadd.f32 %v1198, %v1232
      %v1238 = vadd.f32 %v1199, %v1232
      %v1239 = vadd.f32 %v1200, %v1232
      %v1240 = vadd.f32 %v1201, %v1232
      %v1241 = vadd.f32 %v1202, %v1232
      %v1242 = vadd.f32 %v1203, %v1232
      %v1243 = vadd.f32 %v1204, %v1232
      %v1244 = vadd.f32 %v1205, %v1232
      %v1245 = vadd.f32 %v1206, %v1232
      %v1246 = vadd.f32 %v1207, %v1232
      %v1247 = vadd.f32 %v1208, %v1232
      %v1248 = vadd.f32 %v1209, %v1232
      %v1249 = vadd.f32 %v1210, %v1232
      %v1250 = vadd.f32 %v1211, %v1232
      %v1251 = vadd.f32 %v1212, %v1232
      %v1252 = vadd.f32 %v1213, %v1232
      %v1253 = vadd.f32 %v1214, %v1232
      %v1254 = vadd.f32 %v1215, %v1232
      %v1255 = vadd.f32 %v1216, %v1232
      %v1256 = vadd.f32 %v1217, %v1232
      %v1257 = vadd.f32 %v1218, %v1232
      %v1258 = vadd.f32 %v1219, %v1232
      %v1259 = vadd.f32 %v1220, %v1232
      %v1260 = vadd.f32 %v1221, %v1232
      %v1261 = vadd.f32 %v1222, %v1232
      %v1262 = vadd.f32 %v1223, %v1232
      %v1263 = vadd.f32 %v1224, %v1232
      %v1264 = vadd.f32 %v1225, %v1232
      %v1265 = vadd.f32 %v1226, %v1232
      %v1266 = vmax.f32 %v1234, 0.0
      %v1267 = vmax.f32 %v1235, 0.0
      %v1268 = vmax.f32 %v1236, 0.0
      %v1269 = vmax.f32 %v1237, 0.0
      %v1270 = vmax.f32 %v1238, 0.0
      %v1271 = vmax.f32 %v1239, 0.0
      %v1272 = vmax.f32 %v1240, 0.0
      %v1273 = vmax.f32 %v1241, 0.0
      %v1274 = vmax.f32 %v1242, 0.0
      %v1275 = vmax.f32 %v1243, 0.0
      %v1276 = vmax.f32 %v1244, 0.0
      %v1277 = vmax.f32 %v1245, 0.0
      %v1278 = vmax.f32 %v1246, 0.0
      %v1279 = vmax.f32 %v1247, 0.0
      %v1280 = vmax.f32 %v1248, 0.0
      %v1281 = vmax.f32 %v1249, 0.0
      %v1282 = vmax.f32 %v1250, 0.0
      %v1283 = vmax.f32 %v1251, 0.0
      %v1284 = vmax.f32 %v1252, 0.0
      %v1285 = vmax.f32 %v1253, 0.0
      %v1286 = vmax.f32 %v1254, 0.0
      %v1287 = vmax.f32 %v1255, 0.0
      %v1288 = vmax.f32 %v1256, 0.0
      %v1289 = vmax.f32 %v1257, 0.0
      %v1290 = vmax.f32 %v1258, 0.0
      %v1291 = vmax.f32 %v1259, 0.0
      %v1292 = vmax.f32 %v1260, 0.0
      %v1293 = vmax.f32 %v1261, 0.0
      %v1294 = vmax.f32 %v1262, 0.0
      %v1295 = vmax.f32 %v1263, 0.0
      %v1296 = vmax.f32 %v1264, 0.0
      %v1297 = vmax.f32 %v1265, 0.0
      %v1298 = vpack.c.bf16 %v1267, %v1266
      %v1299 = vpack.c.bf16 %v1269, %v1268
      %v1300 = vpack.c.bf16 %v1271, %v1270
      %v1301 = vpack.c.bf16 %v1273, %v1272
      %v1302 = vpack.c.bf16 %v1275, %v1274
      %v1303 = vpack.c.bf16 %v1277, %v1276
      %v1304 = vpack.c.bf16 %v1279, %v1278
      %v1305 = vpack.c.bf16 %v1281, %v1280
      %v1306 = vpack.c.bf16 %v1283, %v1282
      %v1307 = vpack.c.bf16 %v1285, %v1284
      %v1308 = vpack.c.bf16 %v1287, %v1286
      %v1309 = vpack.c.bf16 %v1289, %v1288
      %v1310 = vpack.c.bf16 %v1291, %v1290
      %v1311 = vpack.c.bf16 %v1293, %v1292
      %v1312 = vpack.c.bf16 %v1295, %v1294
      %v1313 = vpack.c.bf16 %v1297, %v1296
      %v1314 = vld [vmem:[%s3] sm:$0xf]
      %vm1315 = vcmask 64512
      %v1317 = vsel %vm1315, %v1298, 0
      %v1320 = vsel %vm1315, %v1299, 0
      %v1323 = vsel %vm1315, %v1300, 0
      %v1326 = vsel %vm1315, %v1301, 0
      %v1329 = vsel %vm1315, %v1302, 0
      %v1332 = vsel %vm1315, %v1303, 0
      %v1335 = vsel %vm1315, %v1304, 0
      %v1338 = vsel %vm1315, %v1305, 0
      %v1341 = vsel %vm1315, %v1306, 0
      %v1344 = vsel %vm1315, %v1307, 0
      %v1347 = vsel %vm1315, %v1308, 0
      %v1350 = vsel %vm1315, %v1309, 0
      %v1353 = vsel %vm1315, %v1310, 0
      %v1356 = vsel %vm1315, %v1311, 0
      %v1359 = vsel %vm1315, %v1312, 0
      %v1362 = vsel %vm1315, %v1313, 0
      %vm1364 = vcmask 1043456
      %v1366 = vsel %vm1364, %v1314, 0
      %1368 = vmatprep.subr.bf16.mxu0 0
      %1369 = vmatpush1.bf16.msra.mxu0 %v1366
      %1370 = vmatprep.subr.bf16.mxu0 0
      %1371 = vmatpush1.bf16.msra.mxu0 0
      %1372 = vmatprep.subr.bf16.mxu0 0
      %1373 = vmatpush1.bf16.msra.mxu0 0
      %1374 = vmatprep.subr.bf16.mxu0 0
      %1375 = vmatpush1.bf16.msra.mxu0 0
      %1376 = vmatprep.subr.bf16.mxu0 0
      %1377 = vmatpush1.bf16.msra.mxu0 0
      %1378 = vmatprep.subr.bf16.mxu0 0
      %1379 = vmatpush1.bf16.msra.mxu0 0
      %1380 = vmatprep.subr.bf16.mxu0 0
      %1381 = vmatpush1.bf16.msra.mxu0 0
      %1382 = vmatprep.subr.bf16.mxu0 0
      %1383 = vmatpush1.bf16.msra.mxu0 0
      %1384 = vmatprep.subr.bf16.mxu0 0
      %1385 = vmatpush1.bf16.msra.mxu0 0
      %1386 = vmatprep.subr.bf16.mxu0 0
      %1387 = vmatpush1.bf16.msra.mxu0 0
      %1388 = vmatprep.subr.bf16.mxu0 0
      %1389 = vmatpush1.bf16.msra.mxu0 0
      %1390 = vmatprep.subr.bf16.mxu0 0
      %1391 = vmatpush1.bf16.msra.mxu0 0
      %1392 = vmatprep.subr.bf16.mxu0 0
      %1393 = vmatpush1.bf16.msra.mxu0 0
      %1394 = vmatprep.subr.bf16.mxu0 0
      %1395 = vmatpush1.bf16.msra.mxu0 0
      %1396 = vmatprep.subr.bf16.mxu0 0
      %1397 = vmatpush1.bf16.msra.mxu0 0
      %1398 = vmatprep.subr.bf16.mxu0 0
      %1399 = vmatpush1.bf16.msra.mxu0 0
      %1400 = vmatprep.mubr.bf16.mxu0 0
      %1401 = vmatmul.mubr.bf16.gmra.mrb[0].mxu0 %v1317
      %v1402 = vpop.f32.mrb[0].mxu0
      %v1403 = vadd.f32 0.0, %v1402
      %v1404 = vpop.f32.mrb[0].mxu0
      %v1405 = vpop.f32.mrb[0].mxu0
      %v1406 = vadd.f32 0.0, %v1405
      %v1407 = vpop.f32.mrb[0].mxu0
      %1408 = vmatprep.mubr.bf16.mxu0 0
      %1409 = vmatmul.mubr.bf16.gmra.mrb[0].mxu0 %v1320
      %v1410 = vpop.f32.mrb[0].mxu0
      %v1411 = vadd.f32 0.0, %v1410
      %v1412 = vpop.f32.mrb[0].mxu0
      %v1413 = vpop.f32.mrb[0].mxu0
      %v1414 = vadd.f32 0.0, %v1413
      %v1415 = vpop.f32.mrb[0].mxu0
      %1416 = vmatprep.mubr.bf16.mxu0 0
      %1417 = vmatmul.mubr.bf16.gmra.mrb[0].mxu0 %v1323
      %v1418 = vpop.f32.mrb[0].mxu0
      %v1419 = vadd.f32 0.0, %v1418
      %v1420 = vpop.f32.mrb[0].mxu0
      %v1421 = vpop.f32.mrb[0].mxu0
      %v1422 = vadd.f32 0.0, %v1421
      %v1423 = vpop.f32.mrb[0].mxu0
      %1424 = vmatprep.mubr.bf16.mxu0 0
      %1425 = vmatmul.mubr.bf16.gmra.mrb[0].mxu0 %v1326
      %v1426 = vpop.f32.mrb[0].mxu0
      %v1427 = vadd.f32 0.0, %v1426
      %v1428 = vpop.f32.mrb[0].mxu0
      %v1429 = vpop.f32.mrb[0].mxu0
      %v1430 = vadd.f32 0.0, %v1429
      %v1431 = vpop.f32.mrb[0].mxu0
      %1432 = vmatprep.mubr.bf16.mxu0 0
      %1433 = vmatmul.mubr.bf16.gmra.mrb[0].mxu0 %v1329
      %v1434 = vpop.f32.mrb[0].mxu0
      %v1435 = vadd.f32 0.0, %v1434
      %v1436 = vpop.f32.mrb[0].mxu0
      %v1437 = vpop.f32.mrb[0].mxu0
      %v1438 = vadd.f32 0.0, %v1437
      %v1439 = vpop.f32.mrb[0].mxu0
      %1440 = vmatprep.mubr.bf16.mxu0 0
      %1441 = vmatmul.mubr.bf16.gmra.mrb[0].mxu0 %v1332
      %v1442 = vpop.f32.mrb[0].mxu0
      %v1443 = vadd.f32 0.0, %v1442
      %v1444 = vpop.f32.mrb[0].mxu0
      %v1445 = vpop.f32.mrb[0].mxu0
      %v1446 = vadd.f32 0.0, %v1445
      %v1447 = vpop.f32.mrb[0].mxu0
      %1448 = vmatprep.mubr.bf16.mxu0 0
      %1449 = vmatmul.mubr.bf16.gmra.mrb[0].mxu0 %v1335
      %v1450 = vpop.f32.mrb[0].mxu0
      %v1451 = vadd.f32 0.0, %v1450
      %v1452 = vpop.f32.mrb[0].mxu0
      %v1453 = vpop.f32.mrb[0].mxu0
      %v1454 = vadd.f32 0.0, %v1453
      %v1455 = vpop.f32.mrb[0].mxu0
      %1456 = vmatprep.mubr.bf16.mxu0 0
      %1457 = vmatmul.mubr.bf16.gmra.mrb[0].mxu0 %v1338
      %v1458 = vpop.f32.mrb[0].mxu0
      %v1459 = vadd.f32 0.0, %v1458
      %v1460 = vpop.f32.mrb[0].mxu0
      %v1461 = vpop.f32.mrb[0].mxu0
      %v1462 = vadd.f32 0.0, %v1461
      %v1463 = vpop.f32.mrb[0].mxu0
      %1464 = vmatprep.mubr.bf16.mxu0 0
      %1465 = vmatmul.mubr.bf16.gmra.mrb[0].mxu0 %v1341
      %v1466 = vpop.f32.mrb[0].mxu0
      %v1467 = vadd.f32 0.0, %v1466
      %v1468 = vpop.f32.mrb[0].mxu0
      %v1469 = vpop.f32.mrb[0].mxu0
      %v1470 = vadd.f32 0.0, %v1469
      %v1471 = vpop.f32.mrb[0].mxu0
      %1472 = vmatprep.mubr.bf16.mxu0 0
      %1473 = vmatmul.mubr.bf16.gmra.mrb[0].mxu0 %v1344
      %v1474 = vpop.f32.mrb[0].mxu0
      %v1475 = vadd.f32 0.0, %v1474
      %v1476 = vpop.f32.mrb[0].mxu0
      %v1477 = vpop.f32.mrb[0].mxu0
      %v1478 = vadd.f32 0.0, %v1477
      %v1479 = vpop.f32.mrb[0].mxu0
      %1480 = vmatprep.mubr.bf16.mxu0 0
      %1481 = vmatmul.mubr.bf16.gmra.mrb[0].mxu0 %v1347
      %v1482 = vpop.f32.mrb[0].mxu0
      %v1483 = vadd.f32 0.0, %v1482
      %v1484 = vpop.f32.mrb[0].mxu0
      %v1485 = vpop.f32.mrb[0].mxu0
      %v1486 = vadd.f32 0.0, %v1485
      %v1487 = vpop.f32.mrb[0].mxu0
      %1488 = vmatprep.mubr.bf16.mxu0 0
      %1489 = vmatmul.mubr.bf16.gmra.mrb[0].mxu0 %v1350
      %v1490 = vpop.f32.mrb[0].mxu0
      %v1491 = vadd.f32 0.0, %v1490
      %v1492 = vpop.f32.mrb[0].mxu0
      %v1493 = vpop.f32.mrb[0].mxu0
      %v1494 = vadd.f32 0.0, %v1493
      %v1495 = vpop.f32.mrb[0].mxu0
      %1496 = vmatprep.mubr.bf16.mxu0 0
      %1497 = vmatmul.mubr.bf16.gmra.mrb[0].mxu0 %v1353
      %v1498 = vpop.f32.mrb[0].mxu0
      %v1499 = vadd.f32 0.0, %v1498
      %v1500 = vpop.f32.mrb[0].mxu0
      %v1501 = vpop.f32.mrb[0].mxu0
      %v1502 = vadd.f32 0.0, %v1501
      %v1503 = vpop.f32.mrb[0].mxu0
      %1504 = vmatprep.mubr.bf16.mxu0 0
      %1505 = vmatmul.mubr.bf16.gmra.mrb[0].mxu0 %v1356
      %v1506 = vpop.f32.mrb[0].mxu0
      %v1507 = vadd.f32 0.0, %v1506
      %v1508 = vpop.f32.mrb[0].mxu0
      %v1509 = vpop.f32.mrb[0].mxu0
      %v1510 = vadd.f32 0.0, %v1509
      %v1511 = vpop.f32.mrb[0].mxu0
      %1512 = vmatprep.mubr.bf16.mxu0 0
      %1513 = vmatmul.mubr.bf16.gmra.mrb[0].mxu0 %v1359
      %v1514 = vpop.f32.mrb[0].mxu0
      %v1515 = vadd.f32 0.0, %v1514
      %v1516 = vpop.f32.mrb[0].mxu0
      %v1517 = vpop.f32.mrb[0].mxu0
      %v1518 = vadd.f32 0.0, %v1517
      %v1519 = vpop.f32.mrb[0].mxu0
      %1520 = vmatprep.mubr.bf16.mxu0 0
      %1521 = vmatmul.mubr.bf16.gmra.mrb[0].mxu0 %v1362
      %v1522 = vpop.f32.mrb[0].mxu0
      %v1523 = vadd.f32 0.0, %v1522
      %v1524 = vpop.f32.mrb[0].mxu0
      %v1525 = vpop.f32.mrb[0].mxu0
      %v1526 = vadd.f32 0.0, %v1525
      %v1527 = vpop.f32.mrb[0].mxu0
      %1528 = vdwg.mxu0
      %vm1529 = vcmask 7168
      %1530 = vst.msk [vmem:[%s233] sm:$0xff] %vm1529, %v1403
      %1531 = vst.msk [vmem:[%s233 + $0x8] sm:$0xff] %vm1529, %v1406
      %1532 = vst.msk [vmem:[%s233 + $0x10] sm:$0xff] %vm1529, %v1411
      %1533 = vst.msk [vmem:[%s233 + $0x18] sm:$0xff] %vm1529, %v1414
      %1534 = vst.msk [vmem:[%s233 + $0x20] sm:$0xff] %vm1529, %v1419
      %1535 = vst.msk [vmem:[%s233 + $0x28] sm:$0xff] %vm1529, %v1422
      %1536 = vst.msk [vmem:[%s233 + $0x30] sm:$0xff] %vm1529, %v1427
      %1537 = vst.msk [vmem:[%s233 + $0x38] sm:$0xff] %vm1529, %v1430
      %1538 = vst.msk [vmem:[%s233 + $0x40] sm:$0xff] %vm1529, %v1435
      %1539 = vst.msk [vmem:[%s233 + $0x48] sm:$0xff] %vm1529, %v1438
      %1540 = vst.msk [vmem:[%s233 + $0x50] sm:$0xff] %vm1529, %v1443
      %1541 = vst.msk [vmem:[%s233 + $0x58] sm:$0xff] %vm1529, %v1446
      %1542 = vst.msk [vmem:[%s233 + $0x60] sm:$0xff] %vm1529, %v1451
      %1543 = vst.msk [vmem:[%s233 + $0x68] sm:$0xff] %vm1529, %v1454
      %1544 = vst.msk [vmem:[%s233 + $0x70] sm:$0xff] %vm1529, %v1459
      %1545 = vst.msk [vmem:[%s233 + $0x78] sm:$0xff] %vm1529, %v1462
      %1546 = vst.msk [vmem:[%s233 + $0x80] sm:$0xff] %vm1529, %v1467
      %1547 = vst.msk [vmem:[%s233 + $0x88] sm:$0xff] %vm1529, %v1470
      %1548 = vst.msk [vmem:[%s233 + $0x90] sm:$0xff] %vm1529, %v1475
      %1549 = vst.msk [vmem:[%s233 + $0x98] sm:$0xff] %vm1529, %v1478
      %1550 = vst.msk [vmem:[%s233 + $0xa0] sm:$0xff] %vm1529, %v1483
      %1551 = vst.msk [vmem:[%s233 + $0xa8] sm:$0xff] %vm1529, %v1486
      %1552 = vst.msk [vmem:[%s233 + $0xb0] sm:$0xff] %vm1529, %v1491
      %1553 = vst.msk [vmem:[%s233 + $0xb8] sm:$0xff] %vm1529, %v1494
      %1554 = vst.msk [vmem:[%s233 + $0xc0] sm:$0xff] %vm1529, %v1499
      %1555 = vst.msk [vmem:[%s233 + $0xc8] sm:$0xff] %vm1529, %v1502
      %1556 = vst.msk [vmem:[%s233 + $0xd0] sm:$0xff] %vm1529, %v1507
      %1557 = vst.msk [vmem:[%s233 + $0xd8] sm:$0xff] %vm1529, %v1510
      %1558 = vst.msk [vmem:[%s233 + $0xe0] sm:$0xff] %vm1529, %v1515
      %1559 = vst.msk [vmem:[%s233 + $0xe8] sm:$0xff] %vm1529, %v1518
      %1560 = vst.msk [vmem:[%s233 + $0xf0] sm:$0xff] %vm1529, %v1523
      %1561 = vst.msk [vmem:[%s233 + $0xf8] sm:$0xff] %vm1529, %v1526
      %p1562 = scmp.lt.s32.totalorder %s19, 1
      %s1563 = scalar_select %p1562, %s19, 1
      %p1564 = scmp.lt.s32.totalorder %s20, 0
      %s1565 = scalar_select %p1564, %s20, 0
      %s1566 = smul.addr %s1565, 32
      %s1567 = smul.addr %s1563, 32
      %s1568 = sadd.s32 %s1566, %s1567
      %s1569 = smul.addr %s1568, 8
      %s1570 = scalar_lea.vmem %s4, %s1569
      // Predicated region
      $region37: #{sffi_forward.73} parent=35 // pred_check
        %p1571 = pneg %p138
      $region38: #{sffi_forward.73} parent=35 // pred_check_branch
        %1573 = sbr.rel (%p1571) target = $region40
      $region39: #{sffi_forward.73} parent=35 // pred_region
        _
      $region40: #{sffi_forward.73} parent=35 // pred_fallthru
        _
    $region36: #{sffi_forward.73} parent=5 // pred_fallthru
      _
    %p1574 = scmp.le.s32.totalorder 2, %s10
    // Predicated region
    $region41: #{sffi_forward.73} parent=5 // pred_check
      %p1575 = pneg %p1574
    $region42: #{sffi_forward.73} parent=5 // pred_check_branch
      %1577 = sbr.rel (%p1575) target = $region44
    $region43: #{sffi_forward.73} parent=5 // pred_region
      %s1578 = ssub.s32 %s10, 2
      // Predicated region
      $region45: #{sffi_forward.73} parent=43 // pred_check
        %p1579 = pneg %p144
      $region46: #{sffi_forward.73} parent=43 // pred_check_branch
        %1581 = sbr.rel (%p1579) target = $region48
      $region47: #{sffi_forward.73} parent=43 // pred_region
        %p1582 = scmp.lt.s32.totalorder %s21, 1
        %s1583 = scalar_select %p1582, %s21, 1
        %p1584 = scmp.lt.s32.totalorder %s22, 0
        %s1585 = scalar_select %p1584, %s22, 0
        %s1586 = smul.addr %s1585, 32
        %s1587 = smul.addr %s1583, 32
        %s1588 = sadd.s32 %s1586, %s1587
        %s1589 = smul.addr %s1588, 8
        %s1590 = scalar_lea.vmem %s4, %s1589
      $region48: #{sffi_forward.73} parent=43 // pred_fallthru
        _
    $region44: #{sffi_forward.73} parent=5 // pred_fallthru
      _
  $region6: #{sffi_forward.73} parent=0 // loop_footer
    %s14 = sadd.s32 1, %s10
  $region7: #{sffi_forward.73} parent=0 // loop_footer_branch
    %9 = sbr.rel target = $region3
  $region8: #{sffi_forward.73} parent=0 // loop_exit
    _

</llo_original>
